<compile_context>
chip_gen: v5e
topology: v5e:2x2
jax: 0.10.0
libtpu: 0.0.40
codegen_flags: <defaults>
</compile_context>

<pallas_src>
import numpy as np
import jax
import jax.numpy as jnp
from jax.experimental import pallas as pl
from jax.experimental.pallas import tpu as pltpu

TR_NHEAD = 4           # nhead of the TransformerEncoderLayer (hard-coded in the module)
BN_EPS = 1e-5          # BatchNorm1d eval mode with fresh running stats (mean=0, var=1)
LN_EPS = 1e-5          # torch.nn.LayerNorm default eps

# rows of the packed (NUM_VECS, D) per-level vector table (biases / LN params / gates bias)
(_V_BV1, _V_BV2, _V_BQ, _V_BK, _V_BV, _V_OUTB, _V_LN1G, _V_LN1B, _V_FF1B, _V_FF2B,
 _V_LN2G, _V_LN2B, _V_BHID, _V_BLAST, _NUM_VECS) = range(15)

_W_NAMES = ('w3', 'wv2', 'watt', 'wqvc', 'wk', 'wqk', 'qkv_w', 'out_w',
            'ff1_w', 'ff2_w', 'whid', 'wlast')


# --------------------------------------------------------------------------------------
# small helpers
# --------------------------------------------------------------------------------------
def _round_up(x, m):
    return (x + m - 1) // m * m


def _batch_ids(counts):
    counts = np.asarray(counts)
    return jnp.asarray(np.repeat(np.arange(len(counts)), counts).astype(np.int32))


def _mdot(a, w):
    """MXU matmul: bf16 operands, f32 accumulate."""
    return jnp.dot(a.astype(jnp.bfloat16), w.astype(jnp.bfloat16),
                   preferred_element_type=jnp.float32)


def _meinsum(eq, a, b):
    return jnp.einsum(eq, a.astype(jnp.bfloat16), b.astype(jnp.bfloat16),
                      preferred_element_type=jnp.float32)


def _layernorm(x, g, b):
    mu = jnp.mean(x, axis=-1, keepdims=True)
    var = jnp.mean(jnp.square(x - mu), axis=-1, keepdims=True)
    return (x - mu) * jax.lax.rsqrt(var + LN_EPS) * g + b


# --------------------------------------------------------------------------------------
# shared math (used both inside the Pallas kernel and by the pure-JAX reference)
# --------------------------------------------------------------------------------------
def _pyramid_level_math(gf, tg, L, ns, w, nhead=TR_NHEAD):
    """Fused per-level forward for `tg` sequences of L RoI-grid points, ns neighbors each.

    gf: (tg*L*ns, Cin) grouped features, channels = [rel_xyz(3) | point features].
    Returns (cls, reg), each (tg, L, D)."""
    D = w['wv2'].shape[0]
    H = w['watt'].shape[1]
    hd = D // H
    tm = tg * L
    rows = tm * ns
    relu = lambda x: jnp.maximum(x, 0.0)
    vecs = w['vecs']
    vrow = lambda i: vecs[i:i + 1, :]

    # ---------------- grouped attention pooling ----------------
    big = _mdot(gf, w['w3'])                          # fused [pos | key | value-conv1]
    pos = relu(big[:, :D])
    key = relu(big[:, D:2 * D])
    val = relu(big[:, 2 * D:] + vrow(_V_BV1))         # conv + folded BN + ReLU
    val = relu(_mdot(val, w['wv2']) + vrow(_V_BV2))   # conv + folded BN + ReLU
    poskey = pos * key

    pos3 = pos.reshape(tm, ns, D)
    key3 = key.reshape(tm, ns, D)
    pk3 = poskey.reshape(tm, ns, D)
    val3 = val.reshape(tm, ns, D)

    inv_ns = 1.0 / float(ns)
    pos_m = jnp.sum(pos3, axis=1) * inv_ns            # == .mean(2) in torch
    key_m = jnp.sum(key3, axis=1) * inv_ns
    pk_m = jnp.sum(pk3, axis=1) * inv_ns

    qv_c = jax.nn.sigmoid(_mdot(pos_m, w['wqvc']))    # fused q_coef | v_coef (N = 2D)
    q_c, v_c = qv_c[:, :D], qv_c[:, D:]
    k_c = jax.nn.sigmoid(_mdot(key_m, w['wk']))
    qk_c = jax.nn.sigmoid(_mdot(pk_m, w['wqk']))

    val3 = val3 + pos3 * v_c[:, None, :]
    att_emb = pos3 * q_c[:, None, :] + key3 * k_c[:, None, :] + pk3 * qk_c[:, None, :]

    logits = _mdot(att_emb.reshape(rows, D), w['watt']).reshape(tm, ns, H)
    logits = logits - jnp.max(logits, axis=1, keepdims=True)
    e = jnp.exp(logits)
    prob = e / jnp.sum(e, axis=1, keepdims=True)      # softmax over neighbors

    # head expansion (torch unsqueeze/repeat/reshape) as lane broadcast + sublane reduce;
    # no K=4 MXU matmul.
    parts = [jnp.sum(prob[:, :, h:h + 1] * val3[:, :, h * hd:(h + 1) * hd], axis=1)
             for h in range(H)]
    attend = jnp.concatenate(parts, axis=-1)          # (tm, D)

    # --------- TransformerEncoderLayer (post-norm, eval dropout=identity) ---------
    src = attend.reshape(tg, L, D)
    x2 = attend                                       # (tm, D)
    qk2 = (src + w['pos_emb'][None, :, :]).reshape(tm, D)   # q = k = src + pos

    qk_big = _mdot(qk2, w['qkv_w'][:, :2 * D])        # fused q|k in-proj (N = 2D)
    q = (qk_big[:, :D] + vrow(_V_BQ)).reshape(tg, L, D)
    k = (qk_big[:, D:] + vrow(_V_BK)).reshape(tg, L, D)
    v = (_mdot(x2, w['qkv_w'][:, 2 * D:]) + vrow(_V_BV)).reshape(tg, L, D)

    thd = D // nhead
    scale = 1.0 / float(np.sqrt(thd))
    ctx_parts = []
    for h in range(nhead):                            # static loop over 4 heads
        sl = slice(h * thd, (h + 1) * thd)
        lg = _meinsum('bld,bmd->blm', q[:, :, sl] * scale, k[:, :, sl])   # (tg, L, L)
        lg = lg - jnp.max(lg, axis=-1, keepdims=True)
        e2 = jnp.exp(lg)
        p2 = e2 / jnp.sum(e2, axis=-1, keepdims=True)
        ctx_parts.append(_meinsum('blm,bmd->bld', p2, v[:, :, sl]))       # (tg, L, thd)
    ctx = jnp.concatenate(ctx_parts, axis=-1).reshape(tm, D)
    attn_out = _mdot(ctx, w['out_w']) + vrow(_V_OUTB)  # single K=D out-projection

    x = _layernorm(x2 + attn_out, vrow(_V_LN1G), vrow(_V_LN1B))
    ff = _mdot(relu(_mdot(x, w['ff1_w']) + vrow(_V_FF1B)), w['ff2_w']) + vrow(_V_FF2B)
    y = _layernorm(x + ff, vrow(_V_LN2G), vrow(_V_LN2B))

    # cls / reg weight modules: hidden packed [Wc1 | Wr1], last layer block-diag padded
    hid = relu(_mdot(y, w['whid']) + vrow(_V_BHID))
    gates = jax.nn.sigmoid(_mdot(hid, w['wlast']) + vrow(_V_BLAST))       # (tm, D) padded
    cls = (y * gates[:, 0:1]).reshape(tg, L, D)
    reg = (y * gates[:, 1:2]).reshape(tg, L, D)
    return cls, reg


# --------------------------------------------------------------------------------------
# fused Pallas kernel: grouped attention pooling + transformer + gating, tiled over
# sequences (batch_size * num_rois)
# --------------------------------------------------------------------------------------
def _pyramid_kernel(gf_ref, pos_ref, vecs_ref,
                    w3_ref, wv2_ref, watt_ref, wqvc_ref, wk_ref, wqk_ref,
                    qkvw_ref, outw_ref, ff1w_ref, ff2w_ref, whid_ref, wlast_ref,
                    cls_ref, reg_ref):
    tg, L, _ = cls_ref.shape
    lns = gf_ref.shape[1]
    cin = gf_ref.shape[2]
    ns = lns // L
    w = dict(zip(_W_NAMES, (w3_ref[...], wv2_ref[...], watt_ref[...], wqvc_ref[...],
                            wk_ref[...], wqk_ref[...], qkvw_ref[...], outw_ref[...],
                            ff1w_ref[...], ff2w_ref[...], whid_ref[...], wlast_ref[...])))
    w['vecs'] = vecs_ref[...]
    w['pos_emb'] = pos_ref[...]
    gf = gf_ref[...].reshape(tg * lns, cin)
    cls, reg = _pyramid_level_math(gf, tg, L, ns, w, TR_NHEAD)
    cls_ref[...] = cls
    reg_ref[...] = reg


def fused_pyramid_level(grouped, p, G, L, *, target_rows=2048):
    """grouped: (G*L, ns, cin). Returns (cls, reg), each (G, L, D=128) float32."""
    M, ns, cin = grouped.shape
    assert M == G * L
    D = p['wv2'].shape[0]
    per_seq = L * ns

    # sequence tile: big enough to amortize the ~0.35us/step overhead, grid >= 2 so both
    # TensorCores (v7x) get work.
    tg = max(1, min(G, max(1, target_rows // per_seq)))
    if tg >= G and G > 1:
        tg = (G + 1) // 2
    Gp = _round_up(G, tg)

    gf = grouped.astype(jnp.bfloat16).reshape(G, per_seq, cin)
    if Gp != G:
        gf = jnp.pad(gf, ((0, Gp - G), (0, 0), (0, 0)))

    weights = tuple(p[n] for n in _W_NAMES)
    w_specs = [pl.BlockSpec(w.shape, lambda i: (0, 0)) for w in weights]

    # rough VMEM budget: double-buffered I/O + weights + f32 working set, with headroom,
    # clamped to v7x's 64 MiB physical VMEM.
    rows = tg * per_seq
    est = (2 * rows * cin * 2
           + 2 * 2 * tg * L * D * 4
           + 2 * sum(int(w.size) * w.dtype.itemsize for w in weights)
           + 2 * (int(p['vecs'].size) + int(p['pos_emb'].size)) * 4
           + 6 * rows * 3 * D * 4)
    vmem_limit = int(min(max(2 * est, 32 * 2 ** 20), 64 * 2 ** 20))

    out_spec = pl.BlockSpec((tg, L, D), lambda i: (i, 0, 0))
    cls_f, reg_f = pl.pallas_call(
        _pyramid_kernel,
        out_shape=(jax.ShapeDtypeStruct((Gp, L, D), jnp.float32),
                   jax.ShapeDtypeStruct((Gp, L, D), jnp.float32)),
        grid=(Gp // tg,),
        in_specs=[pl.BlockSpec((tg, per_seq, cin), lambda i: (i, 0, 0)),
                  pl.BlockSpec(p['pos_emb'].shape, lambda i: (0, 0)),
                  pl.BlockSpec(p['vecs'].shape, lambda i: (0, 0))] + w_specs,
        out_specs=(out_spec, out_spec),
        compiler_params=pltpu.CompilerParams(
            dimension_semantics=("parallel",), vmem_limit_bytes=vmem_limit),
    )(gf, p['pos_emb'], p['vecs'], *weights)
    return cls_f[:G], reg_f[:G]


def _pyramid_level_ref(grouped, p, G, L):
    """Pure-JAX reference (same math, same bf16 matmul casts, no Pallas)."""
    M, ns, cin = grouped.shape
    gf = grouped.astype(jnp.bfloat16).reshape(M * ns, cin)
    w = {n: p[n] for n in _W_NAMES}
    w['vecs'] = p['vecs']
    w['pos_emb'] = p['pos_emb']
    return _pyramid_level_math(gf, G, L, ns, w, TR_NHEAD)


# --------------------------------------------------------------------------------------
# grouper glue (plain JAX)
# --------------------------------------------------------------------------------------
def query_and_group_pyramid(xyz, xyz_bid, new_xyz, new_xyz_r, new_bid, features, nsample):
    # TODO(synk): pointnet2_utils.QueryAndGroupPyramidAttention is a custom CUDA op;
    # dense JAX reimplementation (per-query-radius ball query, first-nsample fill,
    # empty queries zeroed).
    N = xyz.shape[0]
    diff = new_xyz[:, None, :] - xyz[None, :, :]                    # (M, N, 3)
    d2 = jnp.sum(diff * diff, axis=-1)
    valid = (d2 <= new_xyz_r ** 2) & (new_bid[:, None] == xyz_bid[None, :])
    order = jnp.arange(N, dtype=jnp.int32)
    score = jnp.where(valid, N - order, -order)                     # valid & low index first
    _, idx = jax.lax.top_k(score, nsample)                          # (M, ns)
    slot_valid = jnp.take_along_axis(valid, idx, axis=1)
    idx = jnp.where(slot_valid, idx, idx[:, 0:1])                   # duplicate first neighbor
    has_any = slot_valid[:, 0:1]
    grouped_xyz = xyz[idx] - new_xyz[:, None, :]                    # (M, ns, 3) relative
    grouped = jnp.concatenate([grouped_xyz, features[idx]], axis=-1)
    grouped = jnp.where(has_any[:, :, None], grouped, 0.0)
    empty_mask = jnp.logical_not(has_any[:, 0])
    return grouped, empty_mask


# --------------------------------------------------------------------------------------
# parameter init (matches module init: kaiming conv/linear, zero bias, fresh BN/LN stats,
# zero pos embeddings; dropout layers are identity in eval mode). Matmul weights are bf16.
# --------------------------------------------------------------------------------------
def init_params(key, num_levels, input_channels, num_heads, head_dims, grid_sizes):
    D = num_heads * head_dims
    cin = input_channels + 3
    bn_s = float(1.0 / np.sqrt(1.0 + BN_EPS))                       # fold BN scale into W
    bf16 = jnp.bfloat16
    keys = jax.random.split(key, num_levels)
    params = []
    for lvl in range(num_levels):
        L = grid_sizes[lvl] ** 3
        ks = jax.random.split(keys[lvl], 20)

        def kn(k, fan_in, shape):
            return jax.random.normal(k, shape, dtype=jnp.float32) * np.sqrt(2.0 / fan_in)

        # fused [pos | key | value-conv1] projection; pos rows zero-padded to cin
        w3 = jnp.zeros((cin, 3 * D), jnp.float32)
        w3 = w3.at[0:3, 0:D].set(kn(ks[0], 3, (3, D)))
        w3 = w3.at[:, D:2 * D].set(kn(ks[1], cin, (cin, D)))
        w3 = w3.at[:, 2 * D:].set(kn(ks[2], cin, (cin, D)) * bn_s)

        wq = kn(ks[5], D, (D, D))
        wvc = kn(ks[8], D, (D, D))

        # cls/reg modules packed: hidden [Wc1 | Wr1]; last layer block-diag, lane-padded
        wc1 = kn(ks[13], D, (D, D // 2))
        wr1 = kn(ks[14], D, (D, D // 2))
        wc2 = np.asarray(kn(ks[15], D // 2, (D // 2, 1)))
        wr2 = np.asarray(kn(ks[16], D // 2, (D // 2, 1)))
        wlast = np.zeros((D, D), np.float32)
        wlast[:D // 2, 0] = wc2[:, 0]
        wlast[D // 2:, 1] = wr2[:, 0]

        # packed per-level vector table (all biases zero at init, LN gammas = 1)
        vecs = jnp.zeros((_NUM_VECS, D), jnp.float32)
        vecs = vecs.at[_V_LN1G].set(1.0).at[_V_LN2G].set(1.0)

        p = dict(
            w3=w3.astype(bf16),
            wv2=(kn(ks[3], D, (D, D)) * bn_s).astype(bf16),
            watt=kn(ks[4], D, (D, num_heads)).astype(bf16),
            wqvc=jnp.concatenate([wq, wvc], axis=1).astype(bf16),
            wk=kn(ks[6], D, (D, D)).astype(bf16),
            wqk=kn(ks[7], D, (D, D)).astype(bf16),
            qkv_w=(jax.random.normal(ks[9], (D, 3 * D), jnp.float32)
                   * np.sqrt(1.0 / D)).astype(bf16),
            out_w=kn(ks[10], D, (D, D)).astype(bf16),
            ff1_w=kn(ks[11], D, (D, D)).astype(bf16),
            ff2_w=kn(ks[12], D, (D, D)).astype(bf16),
            whid=jnp.concatenate([wc1, wr1], axis=1).astype(bf16),
            wlast=jnp.asarray(wlast).astype(bf16),
            vecs=vecs,
            pos_emb=jnp.zeros((L, D), jnp.float32),
        )
        params.append(p)
    return params


# --------------------------------------------------------------------------------------
# full PyramidModule forward (tr_mode='Normal', eval mode)
# --------------------------------------------------------------------------------------
def pyramid_module_forward(xyz, xyz_batch_cnt, new_xyz_list, new_xyz_r_list,
                           new_xyz_batch_cnt_list, features, batch_size, num_rois,
                           nsamples, params, *, use_pallas=True):
    cls_list, reg_list = [], []
    xyz_bid = _batch_ids(xyz_batch_cnt)
    G = batch_size * num_rois
    for i in range(len(nsamples)):
        new_xyz = new_xyz_list[i].reshape(-1, 3)
        new_xyz_r = new_xyz_r_list[i].reshape(-1, 1)
        new_bid = _batch_ids(new_xyz_batch_cnt_list[i])
        grouped, _ = query_and_group_pyramid(
            xyz, xyz_bid, new_xyz, new_xyz_r, new_bid, features, nsamples[i])
        L = grouped.shape[0] // G
        if use_pallas:
            cls_f, reg_f = fused_pyramid_level(grouped, params[i], G, L)
        else:
            cls_f, reg_f = _pyramid_level_ref(grouped, params[i], G, L)
        cls_list.append(cls_f)
        reg_list.append(reg_f)
    return jnp.concatenate(cls_list, axis=1), jnp.concatenate(reg_list, axis=1)


# --------------------------------------------------------------------------------------
# demo
# --------------------------------------------------------------------------------------
if __name__ == "__main__":
    key = jax.random.PRNGKey(0)
    k_xyz, k_feat, k_new, k_r, k_param = jax.random.split(key, 5)

    # small config consistent with PyramidModule
    INPUT_CHANNELS = 29                 # module adds +3 -> 32 grouped channels
    NSAMPLES = (16, 16)
    GRID_SIZES = (2, 2)
    NUM_HEADS = 4
    HEAD_DIMS = 32                      # output_dims = 128 (lane-dense)
    BATCH_SIZE = 2
    NUM_ROIS = 4

    n_per_batch = 96
    N = n_per_batch * BATCH_SIZE
    xyz = jax.random.uniform(k_xyz, (N, 3), minval=-1.0, maxval=1.0, dtype=jnp.float32)
    features = jax.random.normal(k_feat, (N, INPUT_CHANNELS), dtype=jnp.float32)
    xyz_batch_cnt = np.full((BATCH_SIZE,), n_per_batch, np.int32)

    new_xyz_list, new_xyz_r_list, new_xyz_batch_cnt_list = [], [], []
    kn_keys = jax.random.split(k_new, len(NSAMPLES))
    kr_keys = jax.random.split(k_r, len(NSAMPLES))
    for lvl in range(len(NSAMPLES)):
        L = GRID_SIZES[lvl] ** 3
        m_per_batch = NUM_ROIS * L
        new_xyz_list.append(jax.random.uniform(
            kn_keys[lvl], (BATCH_SIZE, m_per_batch, 3), minval=-1.0, maxval=1.0,
            dtype=jnp.float32))
        new_xyz_r_list.append(jax.random.uniform(
            kr_keys[lvl], (BATCH_SIZE, m_per_batch, 1), minval=0.4, maxval=0.9,
            dtype=jnp.float32))
        new_xyz_batch_cnt_list.append(np.full((BATCH_SIZE,), m_per_batch, np.int32))

    params = init_params(k_param, len(NSAMPLES), INPUT_CHANNELS, NUM_HEADS, HEAD_DIMS,
                         GRID_SIZES)

    cls_out, reg_out = pyramid_module_forward(
        xyz, xyz_batch_cnt, new_xyz_list, new_xyz_r_list, new_xyz_batch_cnt_list,
        features, BATCH_SIZE, NUM_ROIS, NSAMPLES, params, use_pallas=True)
    jax.block_until_ready(cls_out)
    jax.block_until_ready(reg_out)

    D = NUM_HEADS * HEAD_DIMS
    L_total = sum(g ** 3 for g in GRID_SIZES)
    assert cls_out.shape == (BATCH_SIZE * NUM_ROIS, L_total, D)
    assert reg_out.shape == (BATCH_SIZE * NUM_ROIS, L_total, D)

    # pure-JAX reference (identical math incl. bf16 matmul casts, no Pallas)
    cls_ref, reg_ref = pyramid_module_forward(
        xyz, xyz_batch_cnt, new_xyz_list, new_xyz_r_list, new_xyz_batch_cnt_list,
        features, BATCH_SIZE, NUM_ROIS, NSAMPLES, params, use_pallas=False)
    np.testing.assert_allclose(np.asarray(cls_out), np.asarray(cls_ref), rtol=2e-3, atol=2e-3)
    np.testing.assert_allclose(np.asarray(reg_out), np.asarray(reg_ref), rtol=2e-3, atol=2e-3)

    print("KERNEL_OK")
</pallas_src>

<mosaic_0001>
module attributes {stable_mosaic.version = 11 : i64} {
  func.func @_pyramid_kernel(%arg0: i32, %arg1: memref<4x128x32xbf16, #tpu.memory_space<vmem>>, %arg2: memref<8x128xf32, #tpu.memory_space<vmem>>, %arg3: memref<14x128xf32, #tpu.memory_space<vmem>>, %arg4: memref<32x384xbf16, #tpu.memory_space<vmem>>, %arg5: memref<128x128xbf16, #tpu.memory_space<vmem>>, %arg6: memref<128x4xbf16, #tpu.memory_space<vmem>>, %arg7: memref<128x256xbf16, #tpu.memory_space<vmem>>, %arg8: memref<128x128xbf16, #tpu.memory_space<vmem>>, %arg9: memref<128x128xbf16, #tpu.memory_space<vmem>>, %arg10: memref<128x384xbf16, #tpu.memory_space<vmem>>, %arg11: memref<128x128xbf16, #tpu.memory_space<vmem>>, %arg12: memref<128x128xbf16, #tpu.memory_space<vmem>>, %arg13: memref<128x128xbf16, #tpu.memory_space<vmem>>, %arg14: memref<128x128xbf16, #tpu.memory_space<vmem>>, %arg15: memref<128x128xbf16, #tpu.memory_space<vmem>>, %arg16: memref<4x8x128xf32, #tpu.memory_space<vmem>>, %arg17: memref<4x8x128xf32, #tpu.memory_space<vmem>>) attributes {dimension_semantics = [#tpu.dimension_semantics<parallel>], iteration_bounds = array<i64: 2>, scalar_prefetch = 0 : i64, scratch_operands = 0 : i64, tpu.core_type = #tpu.core_type<tc>, window_params = [{transform_indices = @transform_0, window_bounds = array<i64: 4, 128, 32>}, {pipeline_mode = #tpu.pipeline_mode<synchronous>, transform_indices = @transform_1, window_bounds = array<i64: 8, 128>}, {pipeline_mode = #tpu.pipeline_mode<synchronous>, transform_indices = @transform_2, window_bounds = array<i64: 14, 128>}, {pipeline_mode = #tpu.pipeline_mode<synchronous>, transform_indices = @transform_3, window_bounds = array<i64: 32, 384>}, {pipeline_mode = #tpu.pipeline_mode<synchronous>, transform_indices = @transform_4, window_bounds = array<i64: 128, 128>}, {pipeline_mode = #tpu.pipeline_mode<synchronous>, transform_indices = @transform_5, window_bounds = array<i64: 128, 4>}, {pipeline_mode = #tpu.pipeline_mode<synchronous>, transform_indices = @transform_6, window_bounds = array<i64: 128, 256>}, {pipeline_mode = #tpu.pipeline_mode<synchronous>, transform_indices = @transform_7, window_bounds = array<i64: 128, 128>}, {pipeline_mode = #tpu.pipeline_mode<synchronous>, transform_indices = @transform_8, window_bounds = array<i64: 128, 128>}, {pipeline_mode = #tpu.pipeline_mode<synchronous>, transform_indices = @transform_9, window_bounds = array<i64: 128, 384>}, {pipeline_mode = #tpu.pipeline_mode<synchronous>, transform_indices = @transform_10, window_bounds = array<i64: 128, 128>}, {pipeline_mode = #tpu.pipeline_mode<synchronous>, transform_indices = @transform_11, window_bounds = array<i64: 128, 128>}, {pipeline_mode = #tpu.pipeline_mode<synchronous>, transform_indices = @transform_12, window_bounds = array<i64: 128, 128>}, {pipeline_mode = #tpu.pipeline_mode<synchronous>, transform_indices = @transform_13, window_bounds = array<i64: 128, 128>}, {pipeline_mode = #tpu.pipeline_mode<synchronous>, transform_indices = @transform_14, window_bounds = array<i64: 128, 128>}, {transform_indices = @transform_15, window_bounds = array<i64: 4, 8, 128>}, {transform_indices = @transform_16, window_bounds = array<i64: 4, 8, 128>}]} {
    %c0 = arith.constant 0 : index
    %c0_0 = arith.constant 0 : index
    %0 = vector.load %arg4[%c0, %c0_0] : memref<32x384xbf16, #tpu.memory_space<vmem>>, vector<32x384xbf16>
    %c0_1 = arith.constant 0 : index
    %c0_2 = arith.constant 0 : index
    %1 = vector.load %arg5[%c0_1, %c0_2] : memref<128x128xbf16, #tpu.memory_space<vmem>>, vector<128x128xbf16>
    %c0_3 = arith.constant 0 : index
    %c0_4 = arith.constant 0 : index
    %2 = vector.load %arg6[%c0_3, %c0_4] : memref<128x4xbf16, #tpu.memory_space<vmem>>, vector<128x4xbf16>
    %c0_5 = arith.constant 0 : index
    %c0_6 = arith.constant 0 : index
    %3 = vector.load %arg7[%c0_5, %c0_6] : memref<128x256xbf16, #tpu.memory_space<vmem>>, vector<128x256xbf16>
    %c0_7 = arith.constant 0 : index
    %c0_8 = arith.constant 0 : index
    %4 = vector.load %arg8[%c0_7, %c0_8] : memref<128x128xbf16, #tpu.memory_space<vmem>>, vector<128x128xbf16>
    %c0_9 = arith.constant 0 : index
    %c0_10 = arith.constant 0 : index
    %5 = vector.load %arg9[%c0_9, %c0_10] : memref<128x128xbf16, #tpu.memory_space<vmem>>, vector<128x128xbf16>
    %c0_11 = arith.constant 0 : index
    %c0_12 = arith.constant 0 : index
    %6 = vector.load %arg10[%c0_11, %c0_12] : memref<128x384xbf16, #tpu.memory_space<vmem>>, vector<128x384xbf16>
    %c0_13 = arith.constant 0 : index
    %c0_14 = arith.constant 0 : index
    %7 = vector.load %arg11[%c0_13, %c0_14] : memref<128x128xbf16, #tpu.memory_space<vmem>>, vector<128x128xbf16>
    %c0_15 = arith.constant 0 : index
    %c0_16 = arith.constant 0 : index
    %8 = vector.load %arg12[%c0_15, %c0_16] : memref<128x128xbf16, #tpu.memory_space<vmem>>, vector<128x128xbf16>
    %c0_17 = arith.constant 0 : index
    %c0_18 = arith.constant 0 : index
    %9 = vector.load %arg13[%c0_17, %c0_18] : memref<128x128xbf16, #tpu.memory_space<vmem>>, vector<128x128xbf16>
    %c0_19 = arith.constant 0 : index
    %c0_20 = arith.constant 0 : index
    %10 = vector.load %arg14[%c0_19, %c0_20] : memref<128x128xbf16, #tpu.memory_space<vmem>>, vector<128x128xbf16>
    %c0_21 = arith.constant 0 : index
    %c0_22 = arith.constant 0 : index
    %11 = vector.load %arg15[%c0_21, %c0_22] : memref<128x128xbf16, #tpu.memory_space<vmem>>, vector<128x128xbf16>
    %c0_23 = arith.constant 0 : index
    %c0_24 = arith.constant 0 : index
    %12 = vector.load %arg3[%c0_23, %c0_24] : memref<14x128xf32, #tpu.memory_space<vmem>>, vector<14x128xf32>
    %c0_25 = arith.constant 0 : index
    %c0_26 = arith.constant 0 : index
    %13 = vector.load %arg2[%c0_25, %c0_26] : memref<8x128xf32, #tpu.memory_space<vmem>>, vector<8x128xf32>
    %c0_27 = arith.constant 0 : index
    %c0_28 = arith.constant 0 : index
    %c0_29 = arith.constant 0 : index
    %14 = vector.load %arg1[%c0_27, %c0_28, %c0_29] : memref<4x128x32xbf16, #tpu.memory_space<vmem>>, vector<4x128x32xbf16>
    %15 = vector.shape_cast %14 : vector<4x128x32xbf16> to vector<512x32xbf16>
    %cst = arith.constant dense<0.000000e+00> : vector<512x384xf32>
    %16 = tpu.matmul %15, %0, %cst {dimension_numbers = #tpu.dot_dimension_numbers<[1], [0], [0], [1], [0, 0, 1, 1], [], []>} : vector<512x32xbf16>, vector<32x384xbf16>, vector<512x384xf32> -> vector<512x384xf32>
    %17 = vector.extract_strided_slice %16 {offsets = [0, 0], sizes = [512, 128], strides = [1, 1]} : vector<512x384xf32> to vector<512x128xf32>
    %cst_30 = arith.constant 0.000000e+00 : f32
    %18 = vector.broadcast %cst_30 : f32 to vector<512x128xf32>
    %19 = arith.maximumf %17, %18 : vector<512x128xf32>
    %20 = vector.extract_strided_slice %16 {offsets = [0, 128], sizes = [512, 128], strides = [1, 1]} : vector<512x384xf32> to vector<512x128xf32>
    %cst_31 = arith.constant 0.000000e+00 : f32
    %21 = vector.broadcast %cst_31 : f32 to vector<512x128xf32>
    %22 = arith.maximumf %20, %21 : vector<512x128xf32>
    %23 = vector.extract_strided_slice %16 {offsets = [0, 256], sizes = [512, 128], strides = [1, 1]} : vector<512x384xf32> to vector<512x128xf32>
    %24 = vector.extract_strided_slice %12 {offsets = [0, 0], sizes = [1, 128], strides = [1, 1]} : vector<14x128xf32> to vector<1x128xf32>
    %25 = vector.broadcast %24 : vector<1x128xf32> to vector<512x128xf32>
    %26 = arith.addf %23, %25 : vector<512x128xf32>
    %cst_32 = arith.constant 0.000000e+00 : f32
    %27 = vector.broadcast %cst_32 : f32 to vector<512x128xf32>
    %28 = arith.maximumf %26, %27 : vector<512x128xf32>
    %29 = arith.truncf %28 : vector<512x128xf32> to vector<512x128xbf16>
    %cst_33 = arith.constant dense<0.000000e+00> : vector<512x128xf32>
    %30 = tpu.matmul %29, %1, %cst_33 {dimension_numbers = #tpu.dot_dimension_numbers<[1], [0], [0], [1], [0, 0, 1, 1], [], []>} : vector<512x128xbf16>, vector<128x128xbf16>, vector<512x128xf32> -> vector<512x128xf32>
    %31 = vector.extract_strided_slice %12 {offsets = [1, 0], sizes = [1, 128], strides = [1, 1]} : vector<14x128xf32> to vector<1x128xf32>
    %32 = vector.broadcast %31 : vector<1x128xf32> to vector<512x128xf32>
    %33 = arith.addf %30, %32 : vector<512x128xf32>
    %cst_34 = arith.constant 0.000000e+00 : f32
    %34 = vector.broadcast %cst_34 : f32 to vector<512x128xf32>
    %35 = arith.maximumf %33, %34 : vector<512x128xf32>
    %36 = arith.mulf %19, %22 : vector<512x128xf32>
    %37 = vector.shape_cast %19 : vector<512x128xf32> to vector<32x16x128xf32>
    %38 = vector.shape_cast %22 : vector<512x128xf32> to vector<32x16x128xf32>
    %39 = vector.shape_cast %36 : vector<512x128xf32> to vector<32x16x128xf32>
    %40 = vector.shape_cast %35 : vector<512x128xf32> to vector<32x16x128xf32>
    %cst_35 = arith.constant dense<0.000000e+00> : vector<32x128xf32>
    %41 = vector.multi_reduction <add>, %37, %cst_35 [1] : vector<32x16x128xf32> to vector<32x128xf32>
    %cst_36 = arith.constant 6.250000e-02 : f32
    %42 = vector.broadcast %cst_36 : f32 to vector<32x128xf32>
    %43 = arith.mulf %41, %42 : vector<32x128xf32>
    %cst_37 = arith.constant dense<0.000000e+00> : vector<32x128xf32>
    %44 = vector.multi_reduction <add>, %38, %cst_37 [1] : vector<32x16x128xf32> to vector<32x128xf32>
    %cst_38 = arith.constant 6.250000e-02 : f32
    %45 = vector.broadcast %cst_38 : f32 to vector<32x128xf32>
    %46 = arith.mulf %44, %45 : vector<32x128xf32>
    %cst_39 = arith.constant dense<0.000000e+00> : vector<32x128xf32>
    %47 = vector.multi_reduction <add>, %39, %cst_39 [1] : vector<32x16x128xf32> to vector<32x128xf32>
    %cst_40 = arith.constant 6.250000e-02 : f32
    %48 = vector.broadcast %cst_40 : f32 to vector<32x128xf32>
    %49 = arith.mulf %47, %48 : vector<32x128xf32>
    %50 = arith.truncf %43 : vector<32x128xf32> to vector<32x128xbf16>
    %cst_41 = arith.constant dense<0.000000e+00> : vector<32x256xf32>
    %51 = tpu.matmul %50, %3, %cst_41 {dimension_numbers = #tpu.dot_dimension_numbers<[1], [0], [0], [1], [0, 0, 1, 1], [], []>} : vector<32x128xbf16>, vector<128x256xbf16>, vector<32x256xf32> -> vector<32x256xf32>
    %52 = arith.negf %51 : vector<32x256xf32>
    %53 = math.exp %52 : vector<32x256xf32>
    %cst_42 = arith.constant 1.000000e+00 : f32
    %54 = vector.broadcast %cst_42 : f32 to vector<32x256xf32>
    %55 = arith.addf %54, %53 : vector<32x256xf32>
    %56 = arith.divf %54, %55 : vector<32x256xf32>
    %57 = vector.extract_strided_slice %56 {offsets = [0, 0], sizes = [32, 128], strides = [1, 1]} : vector<32x256xf32> to vector<32x128xf32>
    %58 = vector.extract_strided_slice %56 {offsets = [0, 128], sizes = [32, 128], strides = [1, 1]} : vector<32x256xf32> to vector<32x128xf32>
    %59 = arith.truncf %46 : vector<32x128xf32> to vector<32x128xbf16>
    %cst_43 = arith.constant dense<0.000000e+00> : vector<32x128xf32>
    %60 = tpu.matmul %59, %4, %cst_43 {dimension_numbers = #tpu.dot_dimension_numbers<[1], [0], [0], [1], [0, 0, 1, 1], [], []>} : vector<32x128xbf16>, vector<128x128xbf16>, vector<32x128xf32> -> vector<32x128xf32>
    %61 = arith.negf %60 : vector<32x128xf32>
    %62 = math.exp %61 : vector<32x128xf32>
    %cst_44 = arith.constant 1.000000e+00 : f32
    %63 = vector.broadcast %cst_44 : f32 to vector<32x128xf32>
    %64 = arith.addf %63, %62 : vector<32x128xf32>
    %65 = arith.divf %63, %64 : vector<32x128xf32>
    %66 = arith.truncf %49 : vector<32x128xf32> to vector<32x128xbf16>
    %cst_45 = arith.constant dense<0.000000e+00> : vector<32x128xf32>
    %67 = tpu.matmul %66, %5, %cst_45 {dimension_numbers = #tpu.dot_dimension_numbers<[1], [0], [0], [1], [0, 0, 1, 1], [], []>} : vector<32x128xbf16>, vector<128x128xbf16>, vector<32x128xf32> -> vector<32x128xf32>
    %68 = arith.negf %67 : vector<32x128xf32>
    %69 = math.exp %68 : vector<32x128xf32>
    %cst_46 = arith.constant 1.000000e+00 : f32
    %70 = vector.broadcast %cst_46 : f32 to vector<32x128xf32>
    %71 = arith.addf %70, %69 : vector<32x128xf32>
    %72 = arith.divf %70, %71 : vector<32x128xf32>
    %73 = vector.shape_cast %58 : vector<32x128xf32> to vector<32x1x128xf32>
    %74 = vector.broadcast %73 : vector<32x1x128xf32> to vector<32x16x128xf32>
    %75 = arith.mulf %37, %74 : vector<32x16x128xf32>
    %76 = arith.addf %40, %75 : vector<32x16x128xf32>
    %77 = vector.shape_cast %57 : vector<32x128xf32> to vector<32x1x128xf32>
    %78 = vector.broadcast %77 : vector<32x1x128xf32> to vector<32x16x128xf32>
    %79 = arith.mulf %37, %78 : vector<32x16x128xf32>
    %80 = vector.shape_cast %65 : vector<32x128xf32> to vector<32x1x128xf32>
    %81 = vector.broadcast %80 : vector<32x1x128xf32> to vector<32x16x128xf32>
    %82 = arith.mulf %38, %81 : vector<32x16x128xf32>
    %83 = arith.addf %79, %82 : vector<32x16x128xf32>
    %84 = vector.shape_cast %72 : vector<32x128xf32> to vector<32x1x128xf32>
    %85 = vector.broadcast %84 : vector<32x1x128xf32> to vector<32x16x128xf32>
    %86 = arith.mulf %39, %85 : vector<32x16x128xf32>
    %87 = arith.addf %83, %86 : vector<32x16x128xf32>
    %88 = vector.shape_cast %87 : vector<32x16x128xf32> to vector<512x128xf32>
    %89 = arith.truncf %88 : vector<512x128xf32> to vector<512x128xbf16>
    %cst_47 = arith.constant dense<0.000000e+00> : vector<512x4xf32>
    %90 = tpu.matmul %89, %2, %cst_47 {dimension_numbers = #tpu.dot_dimension_numbers<[1], [0], [0], [1], [0, 0, 1, 1], [], []>} : vector<512x128xbf16>, vector<128x4xbf16>, vector<512x4xf32> -> vector<512x4xf32>
    %91 = vector.shape_cast %90 : vector<512x4xf32> to vector<32x16x4xf32>
    %cst_48 = arith.constant dense<0xFF800000> : vector<32x4xf32>
    %92 = vector.multi_reduction <maximumf>, %91, %cst_48 [1] : vector<32x16x4xf32> to vector<32x4xf32>
    %93 = vector.shape_cast %92 : vector<32x4xf32> to vector<32x1x4xf32>
    %94 = vector.broadcast %93 : vector<32x1x4xf32> to vector<32x16x4xf32>
    %95 = arith.subf %91, %94 : vector<32x16x4xf32>
    %96 = math.exp %95 : vector<32x16x4xf32>
    %cst_49 = arith.constant dense<0.000000e+00> : vector<32x4xf32>
    %97 = vector.multi_reduction <add>, %96, %cst_49 [1] : vector<32x16x4xf32> to vector<32x4xf32>
    %98 = vector.shape_cast %97 : vector<32x4xf32> to vector<32x1x4xf32>
    %99 = vector.broadcast %98 : vector<32x1x4xf32> to vector<32x16x4xf32>
    %100 = arith.divf %96, %99 : vector<32x16x4xf32>
    %101 = vector.extract_strided_slice %100 {offsets = [0, 0, 0], sizes = [32, 16, 1], strides = [1, 1, 1]} : vector<32x16x4xf32> to vector<32x16x1xf32>
    %102 = vector.extract_strided_slice %76 {offsets = [0, 0, 0], sizes = [32, 16, 32], strides = [1, 1, 1]} : vector<32x16x128xf32> to vector<32x16x32xf32>
    %103 = vector.broadcast %101 : vector<32x16x1xf32> to vector<32x16x32xf32>
    %104 = arith.mulf %103, %102 : vector<32x16x32xf32>
    %cst_50 = arith.constant dense<0.000000e+00> : vector<32x32xf32>
    %105 = vector.multi_reduction <add>, %104, %cst_50 [1] : vector<32x16x32xf32> to vector<32x32xf32>
    %106 = vector.extract_strided_slice %100 {offsets = [0, 0, 1], sizes = [32, 16, 1], strides = [1, 1, 1]} : vector<32x16x4xf32> to vector<32x16x1xf32>
    %107 = vector.extract_strided_slice %76 {offsets = [0, 0, 32], sizes = [32, 16, 32], strides = [1, 1, 1]} : vector<32x16x128xf32> to vector<32x16x32xf32>
    %108 = vector.broadcast %106 : vector<32x16x1xf32> to vector<32x16x32xf32>
    %109 = arith.mulf %108, %107 : vector<32x16x32xf32>
    %cst_51 = arith.constant dense<0.000000e+00> : vector<32x32xf32>
    %110 = vector.multi_reduction <add>, %109, %cst_51 [1] : vector<32x16x32xf32> to vector<32x32xf32>
    %111 = vector.extract_strided_slice %100 {offsets = [0, 0, 2], sizes = [32, 16, 1], strides = [1, 1, 1]} : vector<32x16x4xf32> to vector<32x16x1xf32>
    %112 = vector.extract_strided_slice %76 {offsets = [0, 0, 64], sizes = [32, 16, 32], strides = [1, 1, 1]} : vector<32x16x128xf32> to vector<32x16x32xf32>
    %113 = vector.broadcast %111 : vector<32x16x1xf32> to vector<32x16x32xf32>
    %114 = arith.mulf %113, %112 : vector<32x16x32xf32>
    %cst_52 = arith.constant dense<0.000000e+00> : vector<32x32xf32>
    %115 = vector.multi_reduction <add>, %114, %cst_52 [1] : vector<32x16x32xf32> to vector<32x32xf32>
    %116 = vector.extract_strided_slice %100 {offsets = [0, 0, 3], sizes = [32, 16, 1], strides = [1, 1, 1]} : vector<32x16x4xf32> to vector<32x16x1xf32>
    %117 = vector.extract_strided_slice %76 {offsets = [0, 0, 96], sizes = [32, 16, 32], strides = [1, 1, 1]} : vector<32x16x128xf32> to vector<32x16x32xf32>
    %118 = vector.broadcast %116 : vector<32x16x1xf32> to vector<32x16x32xf32>
    %119 = arith.mulf %118, %117 : vector<32x16x32xf32>
    %cst_53 = arith.constant dense<0.000000e+00> : vector<32x32xf32>
    %120 = vector.multi_reduction <add>, %119, %cst_53 [1] : vector<32x16x32xf32> to vector<32x32xf32>
    %121 = tpu.concatenate %105, %110, %115, %120 in 1 : vector<32x32xf32>, vector<32x32xf32>, vector<32x32xf32>, vector<32x32xf32> -> vector<32x128xf32>
    %122 = vector.shape_cast %121 : vector<32x128xf32> to vector<4x8x128xf32>
    %123 = vector.shape_cast %13 : vector<8x128xf32> to vector<1x8x128xf32>
    %124 = vector.broadcast %123 : vector<1x8x128xf32> to vector<4x8x128xf32>
    %125 = arith.addf %122, %124 : vector<4x8x128xf32>
    %126 = vector.shape_cast %125 : vector<4x8x128xf32> to vector<32x128xf32>
    %127 = vector.extract_strided_slice %6 {offsets = [0, 0], sizes = [128, 256], strides = [1, 1]} : vector<128x384xbf16> to vector<128x256xbf16>
    %128 = arith.truncf %126 : vector<32x128xf32> to vector<32x128xbf16>
    %cst_54 = arith.constant dense<0.000000e+00> : vector<32x256xf32>
    %129 = tpu.matmul %128, %127, %cst_54 {dimension_numbers = #tpu.dot_dimension_numbers<[1], [0], [0], [1], [0, 0, 1, 1], [], []>} : vector<32x128xbf16>, vector<128x256xbf16>, vector<32x256xf32> -> vector<32x256xf32>
    %130 = vector.extract_strided_slice %129 {offsets = [0, 0], sizes = [32, 128], strides = [1, 1]} : vector<32x256xf32> to vector<32x128xf32>
    %131 = vector.extract_strided_slice %12 {offsets = [2, 0], sizes = [1, 128], strides = [1, 1]} : vector<14x128xf32> to vector<1x128xf32>
    %132 = vector.broadcast %131 : vector<1x128xf32> to vector<32x128xf32>
    %133 = arith.addf %130, %132 : vector<32x128xf32>
    %134 = vector.shape_cast %133 : vector<32x128xf32> to vector<4x8x128xf32>
    %135 = vector.extract_strided_slice %129 {offsets = [0, 128], sizes = [32, 128], strides = [1, 1]} : vector<32x256xf32> to vector<32x128xf32>
    %136 = vector.extract_strided_slice %12 {offsets = [3, 0], sizes = [1, 128], strides = [1, 1]} : vector<14x128xf32> to vector<1x128xf32>
    %137 = vector.broadcast %136 : vector<1x128xf32> to vector<32x128xf32>
    %138 = arith.addf %135, %137 : vector<32x128xf32>
    %139 = vector.shape_cast %138 : vector<32x128xf32> to vector<4x8x128xf32>
    %140 = vector.extract_strided_slice %6 {offsets = [0, 256], sizes = [128, 128], strides = [1, 1]} : vector<128x384xbf16> to vector<128x128xbf16>
    %141 = arith.truncf %121 : vector<32x128xf32> to vector<32x128xbf16>
    %cst_55 = arith.constant dense<0.000000e+00> : vector<32x128xf32>
    %142 = tpu.matmul %141, %140, %cst_55 {dimension_numbers = #tpu.dot_dimension_numbers<[1], [0], [0], [1], [0, 0, 1, 1], [], []>} : vector<32x128xbf16>, vector<128x128xbf16>, vector<32x128xf32> -> vector<32x128xf32>
    %143 = vector.extract_strided_slice %12 {offsets = [4, 0], sizes = [1, 128], strides = [1, 1]} : vector<14x128xf32> to vector<1x128xf32>
    %144 = vector.broadcast %143 : vector<1x128xf32> to vector<32x128xf32>
    %145 = arith.addf %142, %144 : vector<32x128xf32>
    %146 = vector.shape_cast %145 : vector<32x128xf32> to vector<4x8x128xf32>
    %147 = vector.extract_strided_slice %134 {offsets = [0, 0, 0], sizes = [4, 8, 32], strides = [1, 1, 1]} : vector<4x8x128xf32> to vector<4x8x32xf32>
    %cst_56 = arith.constant 0.176776692 : f32
    %148 = vector.broadcast %cst_56 : f32 to vector<4x8x32xf32>
    %149 = arith.mulf %147, %148 : vector<4x8x32xf32>
    %150 = vector.extract_strided_slice %139 {offsets = [0, 0, 0], sizes = [4, 8, 32], strides = [1, 1, 1]} : vector<4x8x128xf32> to vector<4x8x32xf32>
    %151 = arith.truncf %149 : vector<4x8x32xf32> to vector<4x8x32xbf16>
    %152 = arith.truncf %150 : vector<4x8x32xf32> to vector<4x8x32xbf16>
    "tpu.trace_start"() <{level = 10 : i32, message = "bld,bmd->blm"}> : () -> ()
    %cst_57 = arith.constant dense<0.000000e+00> : vector<4x8x8xf32>
    %153 = tpu.matmul %151, %152, %cst_57 {dimension_numbers = #tpu.dot_dimension_numbers<[2], [2], [1], [1], [0, 0, 0, 1, 1, 1], [0], [0]>} : vector<4x8x32xbf16>, vector<4x8x32xbf16>, vector<4x8x8xf32> -> vector<4x8x8xf32>
    "tpu.trace_stop"() : () -> ()
    %cst_58 = arith.constant dense<0xFF800000> : vector<4x8xf32>
    %154 = vector.multi_reduction <maximumf>, %153, %cst_58 [2] : vector<4x8x8xf32> to vector<4x8xf32>
    %155 = vector.shape_cast %154 : vector<4x8xf32> to vector<4x8x1xf32>
    %156 = vector.broadcast %155 : vector<4x8x1xf32> to vector<4x8x8xf32>
    %157 = arith.subf %153, %156 : vector<4x8x8xf32>
    %158 = math.exp %157 : vector<4x8x8xf32>
    %cst_59 = arith.constant dense<0.000000e+00> : vector<4x8xf32>
    %159 = vector.multi_reduction <add>, %158, %cst_59 [2] : vector<4x8x8xf32> to vector<4x8xf32>
    %160 = vector.shape_cast %159 : vector<4x8xf32> to vector<4x8x1xf32>
    %161 = vector.broadcast %160 : vector<4x8x1xf32> to vector<4x8x8xf32>
    %162 = arith.divf %158, %161 : vector<4x8x8xf32>
    %163 = vector.extract_strided_slice %146 {offsets = [0, 0, 0], sizes = [4, 8, 32], strides = [1, 1, 1]} : vector<4x8x128xf32> to vector<4x8x32xf32>
    %164 = arith.truncf %162 : vector<4x8x8xf32> to vector<4x8x8xbf16>
    %165 = arith.truncf %163 : vector<4x8x32xf32> to vector<4x8x32xbf16>
    "tpu.trace_start"() <{level = 10 : i32, message = "blm,bmd->bld"}> : () -> ()
    %cst_60 = arith.constant dense<0.000000e+00> : vector<4x8x32xf32>
    %166 = tpu.matmul %164, %165, %cst_60 {dimension_numbers = #tpu.dot_dimension_numbers<[2], [1], [1], [2], [0, 0, 0, 1, 1, 2], [0], [0]>} : vector<4x8x8xbf16>, vector<4x8x32xbf16>, vector<4x8x32xf32> -> vector<4x8x32xf32>
    "tpu.trace_stop"() : () -> ()
    %167 = vector.extract_strided_slice %134 {offsets = [0, 0, 32], sizes = [4, 8, 32], strides = [1, 1, 1]} : vector<4x8x128xf32> to vector<4x8x32xf32>
    %cst_61 = arith.constant 0.176776692 : f32
    %168 = vector.broadcast %cst_61 : f32 to vector<4x8x32xf32>
    %169 = arith.mulf %167, %168 : vector<4x8x32xf32>
    %170 = vector.extract_strided_slice %139 {offsets = [0, 0, 32], sizes = [4, 8, 32], strides = [1, 1, 1]} : vector<4x8x128xf32> to vector<4x8x32xf32>
    %171 = arith.truncf %169 : vector<4x8x32xf32> to vector<4x8x32xbf16>
    %172 = arith.truncf %170 : vector<4x8x32xf32> to vector<4x8x32xbf16>
    "tpu.trace_start"() <{level = 10 : i32, message = "bld,bmd->blm"}> : () -> ()
    %cst_62 = arith.constant dense<0.000000e+00> : vector<4x8x8xf32>
    %173 = tpu.matmul %171, %172, %cst_62 {dimension_numbers = #tpu.dot_dimension_numbers<[2], [2], [1], [1], [0, 0, 0, 1, 1, 1], [0], [0]>} : vector<4x8x32xbf16>, vector<4x8x32xbf16>, vector<4x8x8xf32> -> vector<4x8x8xf32>
    "tpu.trace_stop"() : () -> ()
    %cst_63 = arith.constant dense<0xFF800000> : vector<4x8xf32>
    %174 = vector.multi_reduction <maximumf>, %173, %cst_63 [2] : vector<4x8x8xf32> to vector<4x8xf32>
    %175 = vector.shape_cast %174 : vector<4x8xf32> to vector<4x8x1xf32>
    %176 = vector.broadcast %175 : vector<4x8x1xf32> to vector<4x8x8xf32>
    %177 = arith.subf %173, %176 : vector<4x8x8xf32>
    %178 = math.exp %177 : vector<4x8x8xf32>
    %cst_64 = arith.constant dense<0.000000e+00> : vector<4x8xf32>
    %179 = vector.multi_reduction <add>, %178, %cst_64 [2] : vector<4x8x8xf32> to vector<4x8xf32>
    %180 = vector.shape_cast %179 : vector<4x8xf32> to vector<4x8x1xf32>
    %181 = vector.broadcast %180 : vector<4x8x1xf32> to vector<4x8x8xf32>
    %182 = arith.divf %178, %181 : vector<4x8x8xf32>
    %183 = vector.extract_strided_slice %146 {offsets = [0, 0, 32], sizes = [4, 8, 32], strides = [1, 1, 1]} : vector<4x8x128xf32> to vector<4x8x32xf32>
    %184 = arith.truncf %182 : vector<4x8x8xf32> to vector<4x8x8xbf16>
    %185 = arith.truncf %183 : vector<4x8x32xf32> to vector<4x8x32xbf16>
    "tpu.trace_start"() <{level = 10 : i32, message = "blm,bmd->bld"}> : () -> ()
    %cst_65 = arith.constant dense<0.000000e+00> : vector<4x8x32xf32>
    %186 = tpu.matmul %184, %185, %cst_65 {dimension_numbers = #tpu.dot_dimension_numbers<[2], [1], [1], [2], [0, 0, 0, 1, 1, 2], [0], [0]>} : vector<4x8x8xbf16>, vector<4x8x32xbf16>, vector<4x8x32xf32> -> vector<4x8x32xf32>
    "tpu.trace_stop"() : () -> ()
    %187 = vector.extract_strided_slice %134 {offsets = [0, 0, 64], sizes = [4, 8, 32], strides = [1, 1, 1]} : vector<4x8x128xf32> to vector<4x8x32xf32>
    %cst_66 = arith.constant 0.176776692 : f32
    %188 = vector.broadcast %cst_66 : f32 to vector<4x8x32xf32>
    %189 = arith.mulf %187, %188 : vector<4x8x32xf32>
    %190 = vector.extract_strided_slice %139 {offsets = [0, 0, 64], sizes = [4, 8, 32], strides = [1, 1, 1]} : vector<4x8x128xf32> to vector<4x8x32xf32>
    %191 = arith.truncf %189 : vector<4x8x32xf32> to vector<4x8x32xbf16>
    %192 = arith.truncf %190 : vector<4x8x32xf32> to vector<4x8x32xbf16>
    "tpu.trace_start"() <{level = 10 : i32, message = "bld,bmd->blm"}> : () -> ()
    %cst_67 = arith.constant dense<0.000000e+00> : vector<4x8x8xf32>
    %193 = tpu.matmul %191, %192, %cst_67 {dimension_numbers = #tpu.dot_dimension_numbers<[2], [2], [1], [1], [0, 0, 0, 1, 1, 1], [0], [0]>} : vector<4x8x32xbf16>, vector<4x8x32xbf16>, vector<4x8x8xf32> -> vector<4x8x8xf32>
    "tpu.trace_stop"() : () -> ()
    %cst_68 = arith.constant dense<0xFF800000> : vector<4x8xf32>
    %194 = vector.multi_reduction <maximumf>, %193, %cst_68 [2] : vector<4x8x8xf32> to vector<4x8xf32>
    %195 = vector.shape_cast %194 : vector<4x8xf32> to vector<4x8x1xf32>
    %196 = vector.broadcast %195 : vector<4x8x1xf32> to vector<4x8x8xf32>
    %197 = arith.subf %193, %196 : vector<4x8x8xf32>
    %198 = math.exp %197 : vector<4x8x8xf32>
    %cst_69 = arith.constant dense<0.000000e+00> : vector<4x8xf32>
    %199 = vector.multi_reduction <add>, %198, %cst_69 [2] : vector<4x8x8xf32> to vector<4x8xf32>
    %200 = vector.shape_cast %199 : vector<4x8xf32> to vector<4x8x1xf32>
    %201 = vector.broadcast %200 : vector<4x8x1xf32> to vector<4x8x8xf32>
    %202 = arith.divf %198, %201 : vector<4x8x8xf32>
    %203 = vector.extract_strided_slice %146 {offsets = [0, 0, 64], sizes = [4, 8, 32], strides = [1, 1, 1]} : vector<4x8x128xf32> to vector<4x8x32xf32>
    %204 = arith.truncf %202 : vector<4x8x8xf32> to vector<4x8x8xbf16>
    %205 = arith.truncf %203 : vector<4x8x32xf32> to vector<4x8x32xbf16>
    "tpu.trace_start"() <{level = 10 : i32, message = "blm,bmd->bld"}> : () -> ()
    %cst_70 = arith.constant dense<0.000000e+00> : vector<4x8x32xf32>
    %206 = tpu.matmul %204, %205, %cst_70 {dimension_numbers = #tpu.dot_dimension_numbers<[2], [1], [1], [2], [0, 0, 0, 1, 1, 2], [0], [0]>} : vector<4x8x8xbf16>, vector<4x8x32xbf16>, vector<4x8x32xf32> -> vector<4x8x32xf32>
    "tpu.trace_stop"() : () -> ()
    %207 = vector.extract_strided_slice %134 {offsets = [0, 0, 96], sizes = [4, 8, 32], strides = [1, 1, 1]} : vector<4x8x128xf32> to vector<4x8x32xf32>
    %cst_71 = arith.constant 0.176776692 : f32
    %208 = vector.broadcast %cst_71 : f32 to vector<4x8x32xf32>
    %209 = arith.mulf %207, %208 : vector<4x8x32xf32>
    %210 = vector.extract_strided_slice %139 {offsets = [0, 0, 96], sizes = [4, 8, 32], strides = [1, 1, 1]} : vector<4x8x128xf32> to vector<4x8x32xf32>
    %211 = arith.truncf %209 : vector<4x8x32xf32> to vector<4x8x32xbf16>
    %212 = arith.truncf %210 : vector<4x8x32xf32> to vector<4x8x32xbf16>
    "tpu.trace_start"() <{level = 10 : i32, message = "bld,bmd->blm"}> : () -> ()
    %cst_72 = arith.constant dense<0.000000e+00> : vector<4x8x8xf32>
    %213 = tpu.matmul %211, %212, %cst_72 {dimension_numbers = #tpu.dot_dimension_numbers<[2], [2], [1], [1], [0, 0, 0, 1, 1, 1], [0], [0]>} : vector<4x8x32xbf16>, vector<4x8x32xbf16>, vector<4x8x8xf32> -> vector<4x8x8xf32>
    "tpu.trace_stop"() : () -> ()
    %cst_73 = arith.constant dense<0xFF800000> : vector<4x8xf32>
    %214 = vector.multi_reduction <maximumf>, %213, %cst_73 [2] : vector<4x8x8xf32> to vector<4x8xf32>
    %215 = vector.shape_cast %214 : vector<4x8xf32> to vector<4x8x1xf32>
    %216 = vector.broadcast %215 : vector<4x8x1xf32> to vector<4x8x8xf32>
    %217 = arith.subf %213, %216 : vector<4x8x8xf32>
    %218 = math.exp %217 : vector<4x8x8xf32>
    %cst_74 = arith.constant dense<0.000000e+00> : vector<4x8xf32>
    %219 = vector.multi_reduction <add>, %218, %cst_74 [2] : vector<4x8x8xf32> to vector<4x8xf32>
    %220 = vector.shape_cast %219 : vector<4x8xf32> to vector<4x8x1xf32>
    %221 = vector.broadcast %220 : vector<4x8x1xf32> to vector<4x8x8xf32>
    %222 = arith.divf %218, %221 : vector<4x8x8xf32>
    %223 = vector.extract_strided_slice %146 {offsets = [0, 0, 96], sizes = [4, 8, 32], strides = [1, 1, 1]} : vector<4x8x128xf32> to vector<4x8x32xf32>
    %224 = arith.truncf %222 : vector<4x8x8xf32> to vector<4x8x8xbf16>
    %225 = arith.truncf %223 : vector<4x8x32xf32> to vector<4x8x32xbf16>
    "tpu.trace_start"() <{level = 10 : i32, message = "blm,bmd->bld"}> : () -> ()
    %cst_75 = arith.constant dense<0.000000e+00> : vector<4x8x32xf32>
    %226 = tpu.matmul %224, %225, %cst_75 {dimension_numbers = #tpu.dot_dimension_numbers<[2], [1], [1], [2], [0, 0, 0, 1, 1, 2], [0], [0]>} : vector<4x8x8xbf16>, vector<4x8x32xbf16>, vector<4x8x32xf32> -> vector<4x8x32xf32>
    "tpu.trace_stop"() : () -> ()
    %227 = tpu.concatenate %166, %186, %206, %226 in 2 : vector<4x8x32xf32>, vector<4x8x32xf32>, vector<4x8x32xf32>, vector<4x8x32xf32> -> vector<4x8x128xf32>
    %228 = vector.shape_cast %227 : vector<4x8x128xf32> to vector<32x128xf32>
    %229 = arith.truncf %228 : vector<32x128xf32> to vector<32x128xbf16>
    %cst_76 = arith.constant dense<0.000000e+00> : vector<32x128xf32>
    %230 = tpu.matmul %229, %7, %cst_76 {dimension_numbers = #tpu.dot_dimension_numbers<[1], [0], [0], [1], [0, 0, 1, 1], [], []>} : vector<32x128xbf16>, vector<128x128xbf16>, vector<32x128xf32> -> vector<32x128xf32>
    %231 = vector.extract_strided_slice %12 {offsets = [5, 0], sizes = [1, 128], strides = [1, 1]} : vector<14x128xf32> to vector<1x128xf32>
    %232 = vector.broadcast %231 : vector<1x128xf32> to vector<32x128xf32>
    %233 = arith.addf %230, %232 : vector<32x128xf32>
    %234 = arith.addf %121, %233 : vector<32x128xf32>
    %235 = vector.extract_strided_slice %12 {offsets = [6, 0], sizes = [1, 128], strides = [1, 1]} : vector<14x128xf32> to vector<1x128xf32>
    %236 = vector.extract_strided_slice %12 {offsets = [7, 0], sizes = [1, 128], strides = [1, 1]} : vector<14x128xf32> to vector<1x128xf32>
    %cst_77 = arith.constant dense<0.000000e+00> : vector<32xf32>
    %237 = vector.multi_reduction <add>, %234, %cst_77 [1] : vector<32x128xf32> to vector<32xf32>
    %238 = vector.shape_cast %237 : vector<32xf32> to vector<32x1xf32>
    %cst_78 = arith.constant 1.280000e+02 : f32
    %239 = vector.broadcast %cst_78 : f32 to vector<32x1xf32>
    %240 = arith.divf %238, %239 : vector<32x1xf32>
    %241 = vector.broadcast %240 : vector<32x1xf32> to vector<32x128xf32>
    %242 = arith.subf %234, %241 : vector<32x128xf32>
    %243 = arith.mulf %242, %242 : vector<32x128xf32>
    %cst_79 = arith.constant dense<0.000000e+00> : vector<32xf32>
    %244 = vector.multi_reduction <add>, %243, %cst_79 [1] : vector<32x128xf32> to vector<32xf32>
    %245 = vector.shape_cast %244 : vector<32xf32> to vector<32x1xf32>
    %cst_80 = arith.constant 1.280000e+02 : f32
    %246 = vector.broadcast %cst_80 : f32 to vector<32x1xf32>
    %247 = arith.divf %245, %246 : vector<32x1xf32>
    %248 = vector.broadcast %240 : vector<32x1xf32> to vector<32x128xf32>
    %249 = arith.subf %234, %248 : vector<32x128xf32>
    %cst_81 = arith.constant 9.99999974E-6 : f32
    %250 = vector.broadcast %cst_81 : f32 to vector<32x1xf32>
    %251 = arith.addf %247, %250 : vector<32x1xf32>
    %252 = math.rsqrt %251 : vector<32x1xf32>
    %253 = vector.broadcast %252 : vector<32x1xf32> to vector<32x128xf32>
    %254 = arith.mulf %249, %253 : vector<32x128xf32>
    %255 = vector.broadcast %235 : vector<1x128xf32> to vector<32x128xf32>
    %256 = arith.mulf %254, %255 : vector<32x128xf32>
    %257 = vector.broadcast %236 : vector<1x128xf32> to vector<32x128xf32>
    %258 = arith.addf %256, %257 : vector<32x128xf32>
    %259 = arith.truncf %258 : vector<32x128xf32> to vector<32x128xbf16>
    %cst_82 = arith.constant dense<0.000000e+00> : vector<32x128xf32>
    %260 = tpu.matmul %259, %8, %cst_82 {dimension_numbers = #tpu.dot_dimension_numbers<[1], [0], [0], [1], [0, 0, 1, 1], [], []>} : vector<32x128xbf16>, vector<128x128xbf16>, vector<32x128xf32> -> vector<32x128xf32>
    %261 = vector.extract_strided_slice %12 {offsets = [8, 0], sizes = [1, 128], strides = [1, 1]} : vector<14x128xf32> to vector<1x128xf32>
    %262 = vector.broadcast %261 : vector<1x128xf32> to vector<32x128xf32>
    %263 = arith.addf %260, %262 : vector<32x128xf32>
    %cst_83 = arith.constant 0.000000e+00 : f32
    %264 = vector.broadcast %cst_83 : f32 to vector<32x128xf32>
    %265 = arith.maximumf %263, %264 : vector<32x128xf32>
    %266 = arith.truncf %265 : vector<32x128xf32> to vector<32x128xbf16>
    %cst_84 = arith.constant dense<0.000000e+00> : vector<32x128xf32>
    %267 = tpu.matmul %266, %9, %cst_84 {dimension_numbers = #tpu.dot_dimension_numbers<[1], [0], [0], [1], [0, 0, 1, 1], [], []>} : vector<32x128xbf16>, vector<128x128xbf16>, vector<32x128xf32> -> vector<32x128xf32>
    %268 = vector.extract_strided_slice %12 {offsets = [9, 0], sizes = [1, 128], strides = [1, 1]} : vector<14x128xf32> to vector<1x128xf32>
    %269 = vector.broadcast %268 : vector<1x128xf32> to vector<32x128xf32>
    %270 = arith.addf %267, %269 : vector<32x128xf32>
    %271 = arith.addf %258, %270 : vector<32x128xf32>
    %272 = vector.extract_strided_slice %12 {offsets = [10, 0], sizes = [1, 128], strides = [1, 1]} : vector<14x128xf32> to vector<1x128xf32>
    %273 = vector.extract_strided_slice %12 {offsets = [11, 0], sizes = [1, 128], strides = [1, 1]} : vector<14x128xf32> to vector<1x128xf32>
    %cst_85 = arith.constant dense<0.000000e+00> : vector<32xf32>
    %274 = vector.multi_reduction <add>, %271, %cst_85 [1] : vector<32x128xf32> to vector<32xf32>
    %275 = vector.shape_cast %274 : vector<32xf32> to vector<32x1xf32>
    %cst_86 = arith.constant 1.280000e+02 : f32
    %276 = vector.broadcast %cst_86 : f32 to vector<32x1xf32>
    %277 = arith.divf %275, %276 : vector<32x1xf32>
    %278 = vector.broadcast %277 : vector<32x1xf32> to vector<32x128xf32>
    %279 = arith.subf %271, %278 : vector<32x128xf32>
    %280 = arith.mulf %279, %279 : vector<32x128xf32>
    %cst_87 = arith.constant dense<0.000000e+00> : vector<32xf32>
    %281 = vector.multi_reduction <add>, %280, %cst_87 [1] : vector<32x128xf32> to vector<32xf32>
    %282 = vector.shape_cast %281 : vector<32xf32> to vector<32x1xf32>
    %cst_88 = arith.constant 1.280000e+02 : f32
    %283 = vector.broadcast %cst_88 : f32 to vector<32x1xf32>
    %284 = arith.divf %282, %283 : vector<32x1xf32>
    %285 = vector.broadcast %277 : vector<32x1xf32> to vector<32x128xf32>
    %286 = arith.subf %271, %285 : vector<32x128xf32>
    %cst_89 = arith.constant 9.99999974E-6 : f32
    %287 = vector.broadcast %cst_89 : f32 to vector<32x1xf32>
    %288 = arith.addf %284, %287 : vector<32x1xf32>
    %289 = math.rsqrt %288 : vector<32x1xf32>
    %290 = vector.broadcast %289 : vector<32x1xf32> to vector<32x128xf32>
    %291 = arith.mulf %286, %290 : vector<32x128xf32>
    %292 = vector.broadcast %272 : vector<1x128xf32> to vector<32x128xf32>
    %293 = arith.mulf %291, %292 : vector<32x128xf32>
    %294 = vector.broadcast %273 : vector<1x128xf32> to vector<32x128xf32>
    %295 = arith.addf %293, %294 : vector<32x128xf32>
    %296 = arith.truncf %295 : vector<32x128xf32> to vector<32x128xbf16>
    %cst_90 = arith.constant dense<0.000000e+00> : vector<32x128xf32>
    %297 = tpu.matmul %296, %10, %cst_90 {dimension_numbers = #tpu.dot_dimension_numbers<[1], [0], [0], [1], [0, 0, 1, 1], [], []>} : vector<32x128xbf16>, vector<128x128xbf16>, vector<32x128xf32> -> vector<32x128xf32>
    %298 = vector.extract_strided_slice %12 {offsets = [12, 0], sizes = [1, 128], strides = [1, 1]} : vector<14x128xf32> to vector<1x128xf32>
    %299 = vector.broadcast %298 : vector<1x128xf32> to vector<32x128xf32>
    %300 = arith.addf %297, %299 : vector<32x128xf32>
    %cst_91 = arith.constant 0.000000e+00 : f32
    %301 = vector.broadcast %cst_91 : f32 to vector<32x128xf32>
    %302 = arith.maximumf %300, %301 : vector<32x128xf32>
    %303 = arith.truncf %302 : vector<32x128xf32> to vector<32x128xbf16>
    %cst_92 = arith.constant dense<0.000000e+00> : vector<32x128xf32>
    %304 = tpu.matmul %303, %11, %cst_92 {dimension_numbers = #tpu.dot_dimension_numbers<[1], [0], [0], [1], [0, 0, 1, 1], [], []>} : vector<32x128xbf16>, vector<128x128xbf16>, vector<32x128xf32> -> vector<32x128xf32>
    %305 = vector.extract_strided_slice %12 {offsets = [13, 0], sizes = [1, 128], strides = [1, 1]} : vector<14x128xf32> to vector<1x128xf32>
    %306 = vector.broadcast %305 : vector<1x128xf32> to vector<32x128xf32>
    %307 = arith.addf %304, %306 : vector<32x128xf32>
    %308 = arith.negf %307 : vector<32x128xf32>
    %309 = math.exp %308 : vector<32x128xf32>
    %cst_93 = arith.constant 1.000000e+00 : f32
    %310 = vector.broadcast %cst_93 : f32 to vector<32x128xf32>
    %311 = arith.addf %310, %309 : vector<32x128xf32>
    %312 = arith.divf %310, %311 : vector<32x128xf32>
    %313 = vector.extract_strided_slice %312 {offsets = [0, 0], sizes = [32, 1], strides = [1, 1]} : vector<32x128xf32> to vector<32x1xf32>
    %314 = vector.broadcast %313 : vector<32x1xf32> to vector<32x128xf32>
    %315 = arith.mulf %295, %314 : vector<32x128xf32>
    %316 = vector.shape_cast %315 : vector<32x128xf32> to vector<4x8x128xf32>
    %317 = vector.extract_strided_slice %312 {offsets = [0, 1], sizes = [32, 1], strides = [1, 1]} : vector<32x128xf32> to vector<32x1xf32>
    %318 = vector.broadcast %317 : vector<32x1xf32> to vector<32x128xf32>
    %319 = arith.mulf %295, %318 : vector<32x128xf32>
    %320 = vector.shape_cast %319 : vector<32x128xf32> to vector<4x8x128xf32>
    %c0_94 = arith.constant 0 : index
    %c0_95 = arith.constant 0 : index
    %c0_96 = arith.constant 0 : index
    %321 = vector.load %arg16[%c0_94, %c0_95, %c0_96] : memref<4x8x128xf32, #tpu.memory_space<vmem>>, vector<4x8x128xf32>
    tpu.vector_store %arg16[%c0_94, %c0_95, %c0_96], %316 {strides = array<i32>} : memref<4x8x128xf32, #tpu.memory_space<vmem>>, vector<4x8x128xf32>,
    %c0_97 = arith.constant 0 : index
    %c0_98 = arith.constant 0 : index
    %c0_99 = arith.constant 0 : index
    %322 = vector.load %arg17[%c0_97, %c0_98, %c0_99] : memref<4x8x128xf32, #tpu.memory_space<vmem>>, vector<4x8x128xf32>
    tpu.vector_store %arg17[%c0_97, %c0_98, %c0_99], %320 {strides = array<i32>} : memref<4x8x128xf32, #tpu.memory_space<vmem>>, vector<4x8x128xf32>,
    return
  }
  func.func @transform_0(%arg0: i32) -> (i32, i32, i32) {
    %c0_i32 = arith.constant 0 : i32
    %c0_i32_0 = arith.constant 0 : i32
    %c0_i32_1 = arith.constant 0 : i32
    return %arg0, %c0_i32, %c0_i32_0 : i32, i32, i32
  }
  func.func @transform_1(%arg0: i32) -> (i32, i32) {
    %c0_i32 = arith.constant 0 : i32
    %c0_i32_0 = arith.constant 0 : i32
    %c0_i32_1 = arith.constant 0 : i32
    return %c0_i32, %c0_i32_0 : i32, i32
  }
  func.func @transform_2(%arg0: i32) -> (i32, i32) {
    %c0_i32 = arith.constant 0 : i32
    %c0_i32_0 = arith.constant 0 : i32
    %c0_i32_1 = arith.constant 0 : i32
    return %c0_i32, %c0_i32_0 : i32, i32
  }
  func.func @transform_3(%arg0: i32) -> (i32, i32) {
    %c0_i32 = arith.constant 0 : i32
    %c0_i32_0 = arith.constant 0 : i32
    %c0_i32_1 = arith.constant 0 : i32
    return %c0_i32, %c0_i32_0 : i32, i32
  }
  func.func @transform_4(%arg0: i32) -> (i32, i32) {
    %c0_i32 = arith.constant 0 : i32
    %c0_i32_0 = arith.constant 0 : i32
    %c0_i32_1 = arith.constant 0 : i32
    return %c0_i32, %c0_i32_0 : i32, i32
  }
  func.func @transform_5(%arg0: i32) -> (i32, i32) {
    %c0_i32 = arith.constant 0 : i32
    %c0_i32_0 = arith.constant 0 : i32
    %c0_i32_1 = arith.constant 0 : i32
    return %c0_i32, %c0_i32_0 : i32, i32
  }
  func.func @transform_6(%arg0: i32) -> (i32, i32) {
    %c0_i32 = arith.constant 0 : i32
    %c0_i32_0 = arith.constant 0 : i32
    %c0_i32_1 = arith.constant 0 : i32
    return %c0_i32, %c0_i32_0 : i32, i32
  }
  func.func @transform_7(%arg0: i32) -> (i32, i32) {
    %c0_i32 = arith.constant 0 : i32
    %c0_i32_0 = arith.constant 0 : i32
    %c0_i32_1 = arith.constant 0 : i32
    return %c0_i32, %c0_i32_0 : i32, i32
  }
  func.func @transform_8(%arg0: i32) -> (i32, i32) {
    %c0_i32 = arith.constant 0 : i32
    %c0_i32_0 = arith.constant 0 : i32
    %c0_i32_1 = arith.constant 0 : i32
    return %c0_i32, %c0_i32_0 : i32, i32
  }
  func.func @transform_9(%arg0: i32) -> (i32, i32) {
    %c0_i32 = arith.constant 0 : i32
    %c0_i32_0 = arith.constant 0 : i32
    %c0_i32_1 = arith.constant 0 : i32
    return %c0_i32, %c0_i32_0 : i32, i32
  }
  func.func @transform_10(%arg0: i32) -> (i32, i32) {
    %c0_i32 = arith.constant 0 : i32
    %c0_i32_0 = arith.constant 0 : i32
    %c0_i32_1 = arith.constant 0 : i32
    return %c0_i32, %c0_i32_0 : i32, i32
  }
  func.func @transform_11(%arg0: i32) -> (i32, i32) {
    %c0_i32 = arith.constant 0 : i32
    %c0_i32_0 = arith.constant 0 : i32
    %c0_i32_1 = arith.constant 0 : i32
    return %c0_i32, %c0_i32_0 : i32, i32
  }
  func.func @transform_12(%arg0: i32) -> (i32, i32) {
    %c0_i32 = arith.constant 0 : i32
    %c0_i32_0 = arith.constant 0 : i32
    %c0_i32_1 = arith.constant 0 : i32
    return %c0_i32, %c0_i32_0 : i32, i32
  }
  func.func @transform_13(%arg0: i32) -> (i32, i32) {
    %c0_i32 = arith.constant 0 : i32
    %c0_i32_0 = arith.constant 0 : i32
    %c0_i32_1 = arith.constant 0 : i32
    return %c0_i32, %c0_i32_0 : i32, i32
  }
  func.func @transform_14(%arg0: i32) -> (i32, i32) {
    %c0_i32 = arith.constant 0 : i32
    %c0_i32_0 = arith.constant 0 : i32
    %c0_i32_1 = arith.constant 0 : i32
    return %c0_i32, %c0_i32_0 : i32, i32
  }
  func.func @transform_15(%arg0: i32) -> (i32, i32, i32) {
    %c0_i32 = arith.constant 0 : i32
    %c0_i32_0 = arith.constant 0 : i32
    %c0_i32_1 = arith.constant 0 : i32
    return %arg0, %c0_i32, %c0_i32_0 : i32, i32, i32
  }
  func.func @transform_16(%arg0: i32) -> (i32, i32, i32) {
    %c0_i32 = arith.constant 0 : i32
    %c0_i32_0 = arith.constant 0 : i32
    %c0_i32_1 = arith.constant 0 : i32
    return %arg0, %c0_i32, %c0_i32_0 : i32, i32, i32
  }
}

</mosaic_0001>

<llo_original>
// kernel: tpu_custom_call.1
$region0: #{tpu_custom_call.1}
  #allocation0 [shape = 'u32[]', space=smem, size = 0x4, offset = 0x4, fixed_abs, tag = 'smem constant byte address 0x4 - core index']
  #allocation1 [shape = 'u32[72,128]{1,0:T(1,128)}', space=vmem, size = 0x9000, scoped, tag = 'internal scratch']
  %s0 = inlined_call_operand.vmem [shape: bf16[8,128,32], index: 0, kind: input, shape index: {}]
  %s1 = inlined_call_operand.hbm [shape: f32[8,128], index: 1, kind: input, shape index: {}]
  %s2 = inlined_call_operand.hbm [shape: f32[14,128], index: 2, kind: input, shape index: {}]
  %s3 = inlined_call_operand.hbm [shape: bf16[32,384], index: 3, kind: input, shape index: {}]
  %s4 = inlined_call_operand.vmem [shape: bf16[128,128], index: 4, kind: input, shape index: {}]
  %s5 = inlined_call_operand.vmem [shape: bf16[128,4], index: 5, kind: input, shape index: {}]
  %s6 = inlined_call_operand.vmem [shape: bf16[128,256], index: 6, kind: input, shape index: {}]
  %s7 = inlined_call_operand.vmem [shape: bf16[128,128], index: 7, kind: input, shape index: {}]
  %s8 = inlined_call_operand.vmem [shape: bf16[128,128], index: 8, kind: input, shape index: {}]
  %s9 = inlined_call_operand.vmem [shape: bf16[128,384], index: 9, kind: input, shape index: {}]
  %s10 = inlined_call_operand.vmem [shape: bf16[128,128], index: 10, kind: input, shape index: {}]
  %s11 = inlined_call_operand.vmem [shape: bf16[128,128], index: 11, kind: input, shape index: {}]
  %s12 = inlined_call_operand.vmem [shape: bf16[128,128], index: 12, kind: input, shape index: {}]
  %s13 = inlined_call_operand.hbm [shape: bf16[128,128], index: 13, kind: input, shape index: {}]
  %s14 = inlined_call_operand.hbm [shape: bf16[128,128], index: 14, kind: input, shape index: {}]
  %s15 = inlined_call_operand.hbm [shape: f32[8,8,128], index: 15, kind: output, shape index: {0}]
  %s16 = inlined_call_operand.hbm [shape: f32[8,8,128], index: 16, kind: output, shape index: {1}]
  %17 = xla_tuple %s15, %s16
  %s18 = sld [smem:[#allocation0]]
  $region121: #{tpu_custom_call.1} parent=0
    _
  %s20 = ssub.s32 1, %s18
  %s21 = scalar_select 0, %s20, %s18
  $region1: #{tpu_custom_call.1} parent=0
    #allocation2 [shape = 'u8[4096]{0}', space=vmem, size = 0x1000, scoped, tag = 'input window, operand 1, single buffered']
    #allocation3 [shape = 's32[2]{0}', space=sflag, size = 0x8, scoped, tag = 'scoped memory for tpu_custom_call.1']
    #allocation4 [shape = 's32[2]{0}', space=sflag, size = 0x8, scoped, tag = 'scoped memory for tpu_custom_call.1']
    #allocation5 [shape = 'u8[8192]{0}', space=vmem, size = 0x2000, scoped, tag = 'input window, operand 2, single buffered']
    #allocation6 [shape = 's32[1]{0}', space=sflag, size = 0x4, scoped, tag = 'scoped memory for tpu_custom_call.1']
    #allocation7 [shape = 'u8[24576]{0}', space=vmem, size = 0x6000, scoped, tag = 'input window, operand 3, single buffered']
    #allocation8 [shape = 'u8[32768]{0}', space=vmem, size = 0x8000, scoped, tag = 'input window, operand 13, single buffered']
    #allocation9 [shape = 's32[1]{0}', space=sflag, size = 0x4, scoped, tag = 'scoped memory for tpu_custom_call.1']
    #allocation10 [shape = 'u8[32768]{0}', space=vmem, size = 0x8000, scoped, tag = 'input window, operand 14, single buffered']
    #allocation11 [shape = 'u8[32768]{0}', space=vmem, size = 0x8000, scoped, tag = 'output window, operand 0']
    #allocation12 [shape = 'u8[32768]{0}', space=vmem, size = 0x8000, scoped, tag = 'output window, operand 1']
    #allocation13 [shape = 's32[2]{0}', space=sflag, size = 0x8, scoped, tag = 'scoped memory for tpu_custom_call.1']
    %22 = vsyncpa [#allocation3], 0
    %23 = vsyncpa [#allocation6], 0
    %24 = vsyncpa [#allocation9], 0
    %25 = vsyncpa [#allocation4], 0
    %s26 = scalar_lea.sflag [#allocation4], 1
    %27 = vsyncpa %s26, 0
    %28 = vsyncpa [#allocation13], 0
    %s29 = scalar_lea.sflag [#allocation13], 1
    %30 = vsyncpa %s29, 0
    loop: start=0, step=1, limit=4
    $region2: #{tpu_custom_call.1} parent=1 // loop_pre_header
      _
    $region3: #{tpu_custom_call.1} parent=1 // loop_header
      %s32 = sphi 0, %s36
      %p33 = scmp.ge.s32.totalorder %s32, 4
      %s42 = sphi 0, %s44
      %s45 = sphi 0, %s42
      %s46 = sphi 0, %s45
      %s62 = sphi 0, %s46
      %s66 = sphi 0, %s66
      %s68 = sphi 0, %s66
      %s69 = sphi 0, %s68
      %s83 = sphi 0, %s69
      %s87 = sphi 0, %s87
      %s89 = sphi 0, %s87
      %s90 = sphi 0, %s89
      %s104 = sphi 0, %s90
      %s108 = sphi 0, %s108
      %s110 = sphi 0, %s108
      %s111 = sphi 0, %s110
      %s125 = sphi 0, %s111
      %s129 = sphi 0, %s129
      %s131 = sphi 0, %s129
      %s132 = sphi 0, %s131
      %s146 = sphi 0, %s132
      %s150 = sphi 0, %s150
      %s152 = sphi 0, %s150
      %s153 = sphi 0, %s152
      %s167 = sphi 0, %s153
      %s171 = sphi 0, %s171
      %s173 = sphi 0, %s171
      %s174 = sphi 0, %s173
      %s188 = sphi 0, %s174
      %s192 = sphi 0, %s192
      %s194 = sphi 0, %s192
      %s195 = sphi 0, %s194
      %s209 = sphi 0, %s195
      %s213 = sphi 0, %s213
      %s215 = sphi 0, %s213
      %s216 = sphi 0, %s215
      %s230 = sphi 0, %s216
      %s234 = sphi 0, %s234
      %s236 = sphi 0, %s234
      %s237 = sphi 0, %s236
      %s251 = sphi 0, %s237
      %s255 = sphi 0, %s255
      %s257 = sphi 0, %s255
      %s258 = sphi 0, %s257
      %s272 = sphi 0, %s258
      %s276 = sphi 0, %s276
      %s278 = sphi 0, %s276
      %s279 = sphi 0, %s278
      %s293 = sphi 0, %s279
      %s297 = sphi 0, %s297
      %s299 = sphi 0, %s297
      %s300 = sphi 0, %s299
      %s314 = sphi 0, %s300
      %s318 = sphi 0, %s318
      %s320 = sphi 0, %s318
      %s321 = sphi 0, %s320
      %s335 = sphi 0, %s321
      %s339 = sphi 0, %s339
      %s341 = sphi 0, %s339
      %s342 = sphi 0, %s341
      %s356 = sphi 0, %s342
      %s362 = sphi 0, %s364
      %s365 = sphi 0, %s362
      %s366 = sphi 0, %s365
      %s382 = sphi 0, %s366
      %s388 = sphi 0, %s390
      %s391 = sphi 0, %s388
      %s392 = sphi 0, %s391
      %s408 = sphi 0, %s392
    $region4: #{tpu_custom_call.1} parent=1 // loop_header_branch
      %35 = sbr.rel (%p33) target = $region8
    $region5: #{tpu_custom_call.1} parent=1 // loop_body
      %s37 = ssub.s32 %s32, 1
      %s38 = ssub.s32 %s32, 2
      %s39 = sadd.s32 %s32, 1
      %s40 = ssub.s32 %s32, %s39
      %p41 = scmp.eq.s32.totalorder %s40, 0
      %s43 = sadd.s32 %s42, 1
      %s44 = scalar_select %p41, %s42, %s43
      %p47 = pneg %p41
      %p48 = scmp.eq.s32.totalorder %s32, 1
      %p49 = por %p47, %p48
      %p50 = scmp.ne.s32.totalorder %s42, %s45
      %p51 = scmp.eq.s32.totalorder %s32, 0
      %p52 = por %p50, %p51
      %p53 = scmp.ne.s32.totalorder %s42, %s45
      %p54 = scmp.eq.s32.totalorder %s37, 1
      %p55 = por %p53, %p54
      %p56 = scmp.ne.s32.totalorder %s45, %s46
      %p57 = scmp.eq.s32.totalorder %s37, 0
      %p58 = por %p56, %p57
      %p59 = scmp.ne.s32.totalorder %s45, %s46
      %p60 = scmp.eq.s32.totalorder %s38, 1
      %p61 = por %p59, %p60
      %p63 = scmp.ne.s32.totalorder %s46, %s62
      %p64 = scmp.eq.s32.totalorder %s38, 0
      %p65 = por %p63, %p64
      %s67 = sadd.s32 %s66, 1
      %p70 = scmp.eq.s32.totalorder %s32, 1
      %p71 = scmp.ne.s32.totalorder %s66, %s68
      %p72 = scmp.eq.s32.totalorder %s32, 0
      %p73 = por %p71, %p72
      %p74 = scmp.ne.s32.totalorder %s66, %s68
      %p75 = scmp.eq.s32.totalorder %s37, 1
      %p76 = por %p74, %p75
      %p77 = scmp.ne.s32.totalorder %s68, %s69
      %p78 = scmp.eq.s32.totalorder %s37, 0
      %p79 = por %p77, %p78
      %p80 = scmp.ne.s32.totalorder %s68, %s69
      %p81 = scmp.eq.s32.totalorder %s38, 1
      %p82 = por %p80, %p81
      %p84 = scmp.ne.s32.totalorder %s69, %s83
      %p85 = scmp.eq.s32.totalorder %s38, 0
      %p86 = por %p84, %p85
      %s88 = sadd.s32 %s87, 1
      %p91 = scmp.eq.s32.totalorder %s32, 1
      %p92 = scmp.ne.s32.totalorder %s87, %s89
      %p93 = scmp.eq.s32.totalorder %s32, 0
      %p94 = por %p92, %p93
      %p95 = scmp.ne.s32.totalorder %s87, %s89
      %p96 = scmp.eq.s32.totalorder %s37, 1
      %p97 = por %p95, %p96
      %p98 = scmp.ne.s32.totalorder %s89, %s90
      %p99 = scmp.eq.s32.totalorder %s37, 0
      %p100 = por %p98, %p99
      %p101 = scmp.ne.s32.totalorder %s89, %s90
      %p102 = scmp.eq.s32.totalorder %s38, 1
      %p103 = por %p101, %p102
      %p105 = scmp.ne.s32.totalorder %s90, %s104
      %p106 = scmp.eq.s32.totalorder %s38, 0
      %p107 = por %p105, %p106
      %s109 = sadd.s32 %s108, 1
      %p112 = scmp.eq.s32.totalorder %s32, 1
      %p113 = scmp.ne.s32.totalorder %s108, %s110
      %p114 = scmp.eq.s32.totalorder %s32, 0
      %p115 = por %p113, %p114
      %p116 = scmp.ne.s32.totalorder %s108, %s110
      %p117 = scmp.eq.s32.totalorder %s37, 1
      %p118 = por %p116, %p117
      %p119 = scmp.ne.s32.totalorder %s110, %s111
      %p120 = scmp.eq.s32.totalorder %s37, 0
      %p121 = por %p119, %p120
      %p122 = scmp.ne.s32.totalorder %s110, %s111
      %p123 = scmp.eq.s32.totalorder %s38, 1
      %p124 = por %p122, %p123
      %p126 = scmp.ne.s32.totalorder %s111, %s125
      %p127 = scmp.eq.s32.totalorder %s38, 0
      %p128 = por %p126, %p127
      %s130 = sadd.s32 %s129, 1
      %p133 = scmp.eq.s32.totalorder %s32, 1
      %p134 = scmp.ne.s32.totalorder %s129, %s131
      %p135 = scmp.eq.s32.totalorder %s32, 0
      %p136 = por %p134, %p135
      %p137 = scmp.ne.s32.totalorder %s129, %s131
      %p138 = scmp.eq.s32.totalorder %s37, 1
      %p139 = por %p137, %p138
      %p140 = scmp.ne.s32.totalorder %s131, %s132
      %p141 = scmp.eq.s32.totalorder %s37, 0
      %p142 = por %p140, %p141
      %p143 = scmp.ne.s32.totalorder %s131, %s132
      %p144 = scmp.eq.s32.totalorder %s38, 1
      %p145 = por %p143, %p144
      %p147 = scmp.ne.s32.totalorder %s132, %s146
      %p148 = scmp.eq.s32.totalorder %s38, 0
      %p149 = por %p147, %p148
      %s151 = sadd.s32 %s150, 1
      %p154 = scmp.eq.s32.totalorder %s32, 1
      %p155 = scmp.ne.s32.totalorder %s150, %s152
      %p156 = scmp.eq.s32.totalorder %s32, 0
      %p157 = por %p155, %p156
      %p158 = scmp.ne.s32.totalorder %s150, %s152
      %p159 = scmp.eq.s32.totalorder %s37, 1
      %p160 = por %p158, %p159
      %p161 = scmp.ne.s32.totalorder %s152, %s153
      %p162 = scmp.eq.s32.totalorder %s37, 0
      %p163 = por %p161, %p162
      %p164 = scmp.ne.s32.totalorder %s152, %s153
      %p165 = scmp.eq.s32.totalorder %s38, 1
      %p166 = por %p164, %p165
      %p168 = scmp.ne.s32.totalorder %s153, %s167
      %p169 = scmp.eq.s32.totalorder %s38, 0
      %p170 = por %p168, %p169
      %s172 = sadd.s32 %s171, 1
      %p175 = scmp.eq.s32.totalorder %s32, 1
      %p176 = scmp.ne.s32.totalorder %s171, %s173
      %p177 = scmp.eq.s32.totalorder %s32, 0
      %p178 = por %p176, %p177
      %p179 = scmp.ne.s32.totalorder %s171, %s173
      %p180 = scmp.eq.s32.totalorder %s37, 1
      %p181 = por %p179, %p180
      %p182 = scmp.ne.s32.totalorder %s173, %s174
      %p183 = scmp.eq.s32.totalorder %s37, 0
      %p184 = por %p182, %p183
      %p185 = scmp.ne.s32.totalorder %s173, %s174
      %p186 = scmp.eq.s32.totalorder %s38, 1
      %p187 = por %p185, %p186
      %p189 = scmp.ne.s32.totalorder %s174, %s188
      %p190 = scmp.eq.s32.totalorder %s38, 0
      %p191 = por %p189, %p190
      %s193 = sadd.s32 %s192, 1
      %p196 = scmp.eq.s32.totalorder %s32, 1
      %p197 = scmp.ne.s32.totalorder %s192, %s194
      %p198 = scmp.eq.s32.totalorder %s32, 0
      %p199 = por %p197, %p198
      %p200 = scmp.ne.s32.totalorder %s192, %s194
      %p201 = scmp.eq.s32.totalorder %s37, 1
      %p202 = por %p200, %p201
      %p203 = scmp.ne.s32.totalorder %s194, %s195
      %p204 = scmp.eq.s32.totalorder %s37, 0
      %p205 = por %p203, %p204
      %p206 = scmp.ne.s32.totalorder %s194, %s195
      %p207 = scmp.eq.s32.totalorder %s38, 1
      %p208 = por %p206, %p207
      %p210 = scmp.ne.s32.totalorder %s195, %s209
      %p211 = scmp.eq.s32.totalorder %s38, 0
      %p212 = por %p210, %p211
      %s214 = sadd.s32 %s213, 1
      %p217 = scmp.eq.s32.totalorder %s32, 1
      %p218 = scmp.ne.s32.totalorder %s213, %s215
      %p219 = scmp.eq.s32.totalorder %s32, 0
      %p220 = por %p218, %p219
      %p221 = scmp.ne.s32.totalorder %s213, %s215
      %p222 = scmp.eq.s32.totalorder %s37, 1
      %p223 = por %p221, %p222
      %p224 = scmp.ne.s32.totalorder %s215, %s216
      %p225 = scmp.eq.s32.totalorder %s37, 0
      %p226 = por %p224, %p225
      %p227 = scmp.ne.s32.totalorder %s215, %s216
      %p228 = scmp.eq.s32.totalorder %s38, 1
      %p229 = por %p227, %p228
      %p231 = scmp.ne.s32.totalorder %s216, %s230
      %p232 = scmp.eq.s32.totalorder %s38, 0
      %p233 = por %p231, %p232
      %s235 = sadd.s32 %s234, 1
      %p238 = scmp.eq.s32.totalorder %s32, 1
      %p239 = scmp.ne.s32.totalorder %s234, %s236
      %p240 = scmp.eq.s32.totalorder %s32, 0
      %p241 = por %p239, %p240
      %p242 = scmp.ne.s32.totalorder %s234, %s236
      %p243 = scmp.eq.s32.totalorder %s37, 1
      %p244 = por %p242, %p243
      %p245 = scmp.ne.s32.totalorder %s236, %s237
      %p246 = scmp.eq.s32.totalorder %s37, 0
      %p247 = por %p245, %p246
      %p248 = scmp.ne.s32.totalorder %s236, %s237
      %p249 = scmp.eq.s32.totalorder %s38, 1
      %p250 = por %p248, %p249
      %p252 = scmp.ne.s32.totalorder %s237, %s251
      %p253 = scmp.eq.s32.totalorder %s38, 0
      %p254 = por %p252, %p253
      %s256 = sadd.s32 %s255, 1
      %p259 = scmp.eq.s32.totalorder %s32, 1
      %p260 = scmp.ne.s32.totalorder %s255, %s257
      %p261 = scmp.eq.s32.totalorder %s32, 0
      %p262 = por %p260, %p261
      %p263 = scmp.ne.s32.totalorder %s255, %s257
      %p264 = scmp.eq.s32.totalorder %s37, 1
      %p265 = por %p263, %p264
      %p266 = scmp.ne.s32.totalorder %s257, %s258
      %p267 = scmp.eq.s32.totalorder %s37, 0
      %p268 = por %p266, %p267
      %p269 = scmp.ne.s32.totalorder %s257, %s258
      %p270 = scmp.eq.s32.totalorder %s38, 1
      %p271 = por %p269, %p270
      %p273 = scmp.ne.s32.totalorder %s258, %s272
      %p274 = scmp.eq.s32.totalorder %s38, 0
      %p275 = por %p273, %p274
      %s277 = sadd.s32 %s276, 1
      %p280 = scmp.eq.s32.totalorder %s32, 1
      %p281 = scmp.ne.s32.totalorder %s276, %s278
      %p282 = scmp.eq.s32.totalorder %s32, 0
      %p283 = por %p281, %p282
      %p284 = scmp.ne.s32.totalorder %s276, %s278
      %p285 = scmp.eq.s32.totalorder %s37, 1
      %p286 = por %p284, %p285
      %p287 = scmp.ne.s32.totalorder %s278, %s279
      %p288 = scmp.eq.s32.totalorder %s37, 0
      %p289 = por %p287, %p288
      %p290 = scmp.ne.s32.totalorder %s278, %s279
      %p291 = scmp.eq.s32.totalorder %s38, 1
      %p292 = por %p290, %p291
      %p294 = scmp.ne.s32.totalorder %s279, %s293
      %p295 = scmp.eq.s32.totalorder %s38, 0
      %p296 = por %p294, %p295
      %s298 = sadd.s32 %s297, 1
      %p301 = scmp.eq.s32.totalorder %s32, 1
      %p302 = scmp.ne.s32.totalorder %s297, %s299
      %p303 = scmp.eq.s32.totalorder %s32, 0
      %p304 = por %p302, %p303
      %p305 = scmp.ne.s32.totalorder %s297, %s299
      %p306 = scmp.eq.s32.totalorder %s37, 1
      %p307 = por %p305, %p306
      %p308 = scmp.ne.s32.totalorder %s299, %s300
      %p309 = scmp.eq.s32.totalorder %s37, 0
      %p310 = por %p308, %p309
      %p311 = scmp.ne.s32.totalorder %s299, %s300
      %p312 = scmp.eq.s32.totalorder %s38, 1
      %p313 = por %p311, %p312
      %p315 = scmp.ne.s32.totalorder %s300, %s314
      %p316 = scmp.eq.s32.totalorder %s38, 0
      %p317 = por %p315, %p316
      %s319 = sadd.s32 %s318, 1
      %p322 = scmp.eq.s32.totalorder %s32, 1
      %p323 = scmp.ne.s32.totalorder %s318, %s320
      %p324 = scmp.eq.s32.totalorder %s32, 0
      %p325 = por %p323, %p324
      %p326 = scmp.ne.s32.totalorder %s318, %s320
      %p327 = scmp.eq.s32.totalorder %s37, 1
      %p328 = por %p326, %p327
      %p329 = scmp.ne.s32.totalorder %s320, %s321
      %p330 = scmp.eq.s32.totalorder %s37, 0
      %p331 = por %p329, %p330
      %p332 = scmp.ne.s32.totalorder %s320, %s321
      %p333 = scmp.eq.s32.totalorder %s38, 1
      %p334 = por %p332, %p333
      %p336 = scmp.ne.s32.totalorder %s321, %s335
      %p337 = scmp.eq.s32.totalorder %s38, 0
      %p338 = por %p336, %p337
      %s340 = sadd.s32 %s339, 1
      %p343 = scmp.eq.s32.totalorder %s32, 1
      %p344 = scmp.ne.s32.totalorder %s339, %s341
      %p345 = scmp.eq.s32.totalorder %s32, 0
      %p346 = por %p344, %p345
      %p347 = scmp.ne.s32.totalorder %s339, %s341
      %p348 = scmp.eq.s32.totalorder %s37, 1
      %p349 = por %p347, %p348
      %p350 = scmp.ne.s32.totalorder %s341, %s342
      %p351 = scmp.eq.s32.totalorder %s37, 0
      %p352 = por %p350, %p351
      %p353 = scmp.ne.s32.totalorder %s341, %s342
      %p354 = scmp.eq.s32.totalorder %s38, 1
      %p355 = por %p353, %p354
      %p357 = scmp.ne.s32.totalorder %s342, %s356
      %p358 = scmp.eq.s32.totalorder %s38, 0
      %p359 = por %p357, %p358
      %s360 = ssub.s32 %s32, %s39
      %p361 = scmp.eq.s32.totalorder %s360, 0
      %s363 = sadd.s32 %s362, 1
      %s364 = scalar_select %p361, %s362, %s363
      %p367 = pneg %p361
      %p368 = scmp.eq.s32.totalorder %s32, 1
      %p369 = por %p367, %p368
      %p370 = scmp.ne.s32.totalorder %s362, %s365
      %p371 = scmp.eq.s32.totalorder %s32, 0
      %p372 = por %p370, %p371
      %p373 = scmp.ne.s32.totalorder %s362, %s365
      %p374 = scmp.eq.s32.totalorder %s37, 1
      %p375 = por %p373, %p374
      %p376 = scmp.ne.s32.totalorder %s365, %s366
      %p377 = scmp.eq.s32.totalorder %s37, 0
      %p378 = por %p376, %p377
      %p379 = scmp.ne.s32.totalorder %s365, %s366
      %p380 = scmp.eq.s32.totalorder %s38, 1
      %p381 = por %p379, %p380
      %p383 = scmp.ne.s32.totalorder %s366, %s382
      %p384 = scmp.eq.s32.totalorder %s38, 0
      %p385 = por %p383, %p384
      %s386 = ssub.s32 %s32, %s39
      %p387 = scmp.eq.s32.totalorder %s386, 0
      %s389 = sadd.s32 %s388, 1
      %s390 = scalar_select %p387, %s388, %s389
      %p393 = pneg %p387
      %p394 = scmp.eq.s32.totalorder %s32, 1
      %p395 = por %p393, %p394
      %p396 = scmp.ne.s32.totalorder %s388, %s391
      %p397 = scmp.eq.s32.totalorder %s32, 0
      %p398 = por %p396, %p397
      %p399 = scmp.ne.s32.totalorder %s388, %s391
      %p400 = scmp.eq.s32.totalorder %s37, 1
      %p401 = por %p399, %p400
      %p402 = scmp.ne.s32.totalorder %s391, %s392
      %p403 = scmp.eq.s32.totalorder %s37, 0
      %p404 = por %p402, %p403
      %p405 = scmp.ne.s32.totalorder %s391, %s392
      %p406 = scmp.eq.s32.totalorder %s38, 1
      %p407 = por %p405, %p406
      %p409 = scmp.ne.s32.totalorder %s392, %s408
      %p410 = scmp.eq.s32.totalorder %s38, 0
      %p411 = por %p409, %p410
      %p412 = scmp.le.s32.totalorder 1, %s32
      %p413 = scmp.lt.s32.totalorder %s32, 3
      %p414 = pnand %p412, %p413
      %p415 = pneg %p414
      // Predicated region
      $region9: #{tpu_custom_call.1} parent=5 // pred_check
        _
      $region10: #{tpu_custom_call.1} parent=5 // pred_check_branch
        %417 = sbr.rel (%p414) target = $region12
      $region11: #{tpu_custom_call.1} parent=5 // pred_region
        %s418 = ssub.s32 %s32, 1
        // Predicated region
        $region13: #{tpu_custom_call.1} parent=11 // pred_check
          %p419 = pneg %p79
        $region14: #{tpu_custom_call.1} parent=11 // pred_check_branch
          %421 = sbr.rel (%p419) target = $region16
        $region15: #{tpu_custom_call.1} parent=11 // pred_region
          %423 = vsyncadd [#allocation3], 0
          %s425 = sshll.u32 %s1, 4
          %s426 = int_to_ptr.hbm [resolvable:$true] %s425
          %s427 = sshll.u32 [#allocation2], 4
          %s428 = int_to_ptr.vmem [resolvable:$true] %s427
          %430 = dma.hbm_to_vmem [thread:$0]  %s426, 128, %s428, [#allocation3]
        $region16: #{tpu_custom_call.1} parent=11 // pred_fallthru
          _
        // Predicated region
        $region17: #{tpu_custom_call.1} parent=11 // pred_check
          %p431 = pneg %p100
        $region18: #{tpu_custom_call.1} parent=11 // pred_check_branch
          %433 = sbr.rel (%p431) target = $region20
        $region19: #{tpu_custom_call.1} parent=11 // pred_region
          %435 = vsyncadd [#allocation6], 0
          %s436 = sshll.u32 %s2, 4
          %s437 = int_to_ptr.hbm [resolvable:$true] %s436
          %s438 = sshll.u32 [#allocation5], 4
          %s439 = int_to_ptr.vmem [resolvable:$true] %s438
          %444 = dma.hbm_to_vmem [thread:$0]  %s437, 256, %s439, [#allocation6], 128, 128, 8
        $region20: #{tpu_custom_call.1} parent=11 // pred_fallthru
          _
        // Predicated region
        $region21: #{tpu_custom_call.1} parent=11 // pred_check
          %p445 = pneg %p121
        $region22: #{tpu_custom_call.1} parent=11 // pred_check_branch
          %447 = sbr.rel (%p445) target = $region24
        $region23: #{tpu_custom_call.1} parent=11 // pred_region
          %449 = vsyncadd [#allocation6], 0
          %s450 = sshll.u32 %s3, 4
          %s451 = int_to_ptr.hbm [resolvable:$true] %s450
          %s452 = sshll.u32 [#allocation7], 4
          %s453 = int_to_ptr.vmem [resolvable:$true] %s452
          %458 = dma.hbm_to_vmem [thread:$0]  %s451, 768, %s453, [#allocation6], 192, 192, 12
        $region24: #{tpu_custom_call.1} parent=11 // pred_fallthru
          _
        // Predicated region
        $region25: #{tpu_custom_call.1} parent=11 // pred_check
          %p459 = pneg %p142
        $region26: #{tpu_custom_call.1} parent=11 // pred_check_branch
          %461 = sbr.rel (%p459) target = $region28
        $region27: #{tpu_custom_call.1} parent=11 // pred_region
          _
        $region28: #{tpu_custom_call.1} parent=11 // pred_fallthru
          _
        // Predicated region
        $region29: #{tpu_custom_call.1} parent=11 // pred_check
          %p462 = pneg %p163
        $region30: #{tpu_custom_call.1} parent=11 // pred_check_branch
          %464 = sbr.rel (%p462) target = $region32
        $region31: #{tpu_custom_call.1} parent=11 // pred_region
          _
        $region32: #{tpu_custom_call.1} parent=11 // pred_fallthru
          _
        // Predicated region
        $region33: #{tpu_custom_call.1} parent=11 // pred_check
          %p465 = pneg %p184
        $region34: #{tpu_custom_call.1} parent=11 // pred_check_branch
          %467 = sbr.rel (%p465) target = $region36
        $region35: #{tpu_custom_call.1} parent=11 // pred_region
          _
        $region36: #{tpu_custom_call.1} parent=11 // pred_fallthru
          _
        // Predicated region
        $region37: #{tpu_custom_call.1} parent=11 // pred_check
          %p468 = pneg %p205
        $region38: #{tpu_custom_call.1} parent=11 // pred_check_branch
          %470 = sbr.rel (%p468) target = $region40
        $region39: #{tpu_custom_call.1} parent=11 // pred_region
          _
        $region40: #{tpu_custom_call.1} parent=11 // pred_fallthru
          _
        // Predicated region
        $region41: #{tpu_custom_call.1} parent=11 // pred_check
          %p471 = pneg %p226
        $region42: #{tpu_custom_call.1} parent=11 // pred_check_branch
          %473 = sbr.rel (%p471) target = $region44
        $region43: #{tpu_custom_call.1} parent=11 // pred_region
          _
        $region44: #{tpu_custom_call.1} parent=11 // pred_fallthru
          _
        // Predicated region
        $region45: #{tpu_custom_call.1} parent=11 // pred_check
          %p474 = pneg %p247
        $region46: #{tpu_custom_call.1} parent=11 // pred_check_branch
          %476 = sbr.rel (%p474) target = $region48
        $region47: #{tpu_custom_call.1} parent=11 // pred_region
          _
        $region48: #{tpu_custom_call.1} parent=11 // pred_fallthru
          _
        // Predicated region
        $region49: #{tpu_custom_call.1} parent=11 // pred_check
          %p477 = pneg %p268
        $region50: #{tpu_custom_call.1} parent=11 // pred_check_branch
          %479 = sbr.rel (%p477) target = $region52
        $region51: #{tpu_custom_call.1} parent=11 // pred_region
          _
        $region52: #{tpu_custom_call.1} parent=11 // pred_fallthru
          _
        // Predicated region
        $region53: #{tpu_custom_call.1} parent=11 // pred_check
          %p480 = pneg %p289
        $region54: #{tpu_custom_call.1} parent=11 // pred_check_branch
          %482 = sbr.rel (%p480) target = $region56
        $region55: #{tpu_custom_call.1} parent=11 // pred_region
          _
        $region56: #{tpu_custom_call.1} parent=11 // pred_fallthru
          _
        // Predicated region
        $region57: #{tpu_custom_call.1} parent=11 // pred_check
          %p483 = pneg %p310
        $region58: #{tpu_custom_call.1} parent=11 // pred_check_branch
          %485 = sbr.rel (%p483) target = $region60
        $region59: #{tpu_custom_call.1} parent=11 // pred_region
          _
        $region60: #{tpu_custom_call.1} parent=11 // pred_fallthru
          _
        // Predicated region
        $region61: #{tpu_custom_call.1} parent=11 // pred_check
          %p486 = pneg %p331
        $region62: #{tpu_custom_call.1} parent=11 // pred_check_branch
          %488 = sbr.rel (%p486) target = $region64
        $region63: #{tpu_custom_call.1} parent=11 // pred_region
          %490 = vsyncadd [#allocation9], 0
          %s491 = sshll.u32 %s13, 4
          %s492 = int_to_ptr.hbm [resolvable:$true] %s491
          %s493 = sshll.u32 [#allocation8], 4
          %s494 = int_to_ptr.vmem [resolvable:$true] %s493
          %499 = dma.hbm_to_vmem [thread:$0]  %s492, 1024, %s494, [#allocation9], 64, 64, 4
        $region64: #{tpu_custom_call.1} parent=11 // pred_fallthru
          _
        // Predicated region
        $region65: #{tpu_custom_call.1} parent=11 // pred_check
          %p500 = pneg %p352
        $region66: #{tpu_custom_call.1} parent=11 // pred_check_branch
          %502 = sbr.rel (%p500) target = $region68
        $region67: #{tpu_custom_call.1} parent=11 // pred_region
          %504 = vsyncadd [#allocation9], 0
          %s505 = sshll.u32 %s14, 4
          %s506 = int_to_ptr.hbm [resolvable:$true] %s505
          %s507 = sshll.u32 [#allocation10], 4
          %s508 = int_to_ptr.vmem [resolvable:$true] %s507
          %513 = dma.hbm_to_vmem [thread:$0]  %s506, 1024, %s508, [#allocation9], 64, 64, 4
        $region68: #{tpu_custom_call.1} parent=11 // pred_fallthru
          _
      $region12: #{tpu_custom_call.1} parent=5 // pred_fallthru
        _
      %p514 = scmp.lt.s32.totalorder %s32, 2
      // Predicated region
      $region69: #{tpu_custom_call.1} parent=5 // pred_check
        %p515 = pneg %p514
      $region70: #{tpu_custom_call.1} parent=5 // pred_check_branch
        %517 = sbr.rel (%p515) target = $region72
      $region71: #{tpu_custom_call.1} parent=5 // pred_region
        // Predicated region
        $region73: #{tpu_custom_call.1} parent=71 // pred_check
          %p518 = pneg %p52
        $region74: #{tpu_custom_call.1} parent=71 // pred_check_branch
          %520 = sbr.rel (%p518) target = $region76
        $region75: #{tpu_custom_call.1} parent=71 // pred_region
          %s521 = smul.u32 4, %s32
          %p522 = scmp.lt.s32.totalorder %s521, 7
          %s523 = scalar_select %p522, %s521, 7
          %s524 = smul.addr %s523, 16
          %s525 = smul.addr %s524, 4
          %s526 = scalar_lea.vmem %s0, %s525
          %s527 = smul.u32 4, %s32
        $region76: #{tpu_custom_call.1} parent=71 // pred_fallthru
          _
      $region72: #{tpu_custom_call.1} parent=5 // pred_fallthru
        _
      %p528 = scmp.le.s32.totalorder 1, %s32
      %p529 = scmp.lt.s32.totalorder %s32, 3
      %p530 = pnand %p528, %p529
      %p531 = pneg %p530
      // Predicated region
      $region77: #{tpu_custom_call.1} parent=5 // pred_check
        _
      $region78: #{tpu_custom_call.1} parent=5 // pred_check_branch
        %533 = sbr.rel (%p530) target = $region80
      $region79: #{tpu_custom_call.1} parent=5 // pred_region
        %s534 = ssub.s32 %s32, 1
        // Predicated region
        $region81: #{tpu_custom_call.1} parent=79 // pred_check
          %p535 = pneg %p79
        $region82: #{tpu_custom_call.1} parent=79 // pred_check_branch
          %537 = sbr.rel (%p535) target = $region84
        $region83: #{tpu_custom_call.1} parent=79 // pred_region
          %539 = dma.done [#allocation3], 128
        $region84: #{tpu_custom_call.1} parent=79 // pred_fallthru
          _
        // Predicated region
        $region85: #{tpu_custom_call.1} parent=79 // pred_check
          %p540 = pneg %p100
        $region86: #{tpu_custom_call.1} parent=79 // pred_check_branch
          %542 = sbr.rel (%p540) target = $region88
        $region87: #{tpu_custom_call.1} parent=79 // pred_region
          %544 = dma.done [#allocation6], 256
        $region88: #{tpu_custom_call.1} parent=79 // pred_fallthru
          _
        // Predicated region
        $region89: #{tpu_custom_call.1} parent=79 // pred_check
          %p545 = pneg %p121
        $region90: #{tpu_custom_call.1} parent=79 // pred_check_branch
          %547 = sbr.rel (%p545) target = $region92
        $region91: #{tpu_custom_call.1} parent=79 // pred_region
          %549 = dma.done [#allocation6], 768
        $region92: #{tpu_custom_call.1} parent=79 // pred_fallthru
          _
        // Predicated region
        $region93: #{tpu_custom_call.1} parent=79 // pred_check
          %p550 = pneg %p331
        $region94: #{tpu_custom_call.1} parent=79 // pred_check_branch
          %552 = sbr.rel (%p550) target = $region96
        $region95: #{tpu_custom_call.1} parent=79 // pred_region
          %554 = dma.done [#allocation9], 1024
        $region96: #{tpu_custom_call.1} parent=79 // pred_fallthru
          _
        // Predicated region
        $region97: #{tpu_custom_call.1} parent=79 // pred_check
          %p555 = pneg %p352
        $region98: #{tpu_custom_call.1} parent=79 // pred_check_branch
          %557 = sbr.rel (%p555) target = $region100
        $region99: #{tpu_custom_call.1} parent=79 // pred_region
          %559 = dma.done [#allocation9], 1024
        $region100: #{tpu_custom_call.1} parent=79 // pred_fallthru
          _
        %s560 = smul.u32 4, %s37
        %p561 = scmp.lt.s32.totalorder %s560, 7
        %s562 = scalar_select %p561, %s560, 7
        %s563 = smul.addr %s562, 16
        %s564 = smul.addr %s563, 4
        %s565 = scalar_lea.vmem %s0, %s564
        %p566 = pneg %p58
        %p567 = pneg %p55
        %p568 = pneg %p79
        %p569 = pneg %p76
        %p570 = pneg %p100
        %p571 = pneg %p97
        %p572 = pneg %p121
        %p573 = pneg %p118
        %p574 = pneg %p142
        %p575 = pneg %p139
        %p576 = pneg %p163
        %p577 = pneg %p160
        %p578 = pneg %p184
        %p579 = pneg %p181
        %p580 = pneg %p205
        %p581 = pneg %p202
        %p582 = pneg %p226
        %p583 = pneg %p223
        %p584 = pneg %p247
        %p585 = pneg %p244
        %p586 = pneg %p268
        %p587 = pneg %p265
        %p588 = pneg %p289
        %p589 = pneg %p286
        %p590 = pneg %p310
        %p591 = pneg %p307
        %p592 = pneg %p331
        %p593 = pneg %p328
        %p594 = pneg %p352
        %p595 = pneg %p349
        %p596 = pneg %p378
        %p597 = pneg %p375
        %s598 = sand.u32 %s365, 1
        %s599 = scalar_lea.sflag [#allocation4], %s598
        %s600 = sand.u32 %s365, 1
        %s601 = smul.addr %s600, 32
        %s602 = scalar_lea.vmem [#allocation11], %s601
        %p603 = pneg %p404
        %p604 = pneg %p401
        %s605 = sand.u32 %s391, 1
        %s606 = scalar_lea.sflag [#allocation13], %s605
        %s607 = sand.u32 %s391, 1
        %s608 = smul.addr %s607, 32
        %s609 = scalar_lea.vmem [#allocation12], %s608
        %s610 = smul.u32 4, %s37
        %p611 = scmp.lt.s32.totalorder %s610, 7
        %s612 = scalar_select %p611, %s610, 7
        %s613 = smul.addr %s612, 16
        %s614 = smul.addr %s613, 4
        %s615 = scalar_lea.vmem %s0, %s614
        %s616 = smul.u32 4, %s37
        %s617 = smul.u32 4, %s37
        %s618 = smul.u32 4, %s37
        %v620 = vld [vmem:[#allocation7] sm:$0xff]
        %v621 = vld [vmem:[#allocation7 + $0x8] sm:$0xf]
        %v622 = vld [vmem:[#allocation7 + $0xc] sm:$0xff]
        %v623 = vld [vmem:[#allocation7 + $0x14] sm:$0xf]
        %v624 = vld [vmem:[#allocation7 + $0x18] sm:$0xff]
        %v625 = vld [vmem:[#allocation7 + $0x20] sm:$0xf]
        %v626 = vld [vmem:[#allocation7 + $0x24] sm:$0xff]
        %v627 = vld [vmem:[#allocation7 + $0x2c] sm:$0xf]
        %v628 = vld [vmem:[%s4] sm:$0xf]
        %v629 = vld [vmem:[%s4 + $0x4] sm:$0xf]
        %v630 = vld [vmem:[%s4 + $0x8] sm:$0xf]
        %v631 = vld [vmem:[%s4 + $0xc] sm:$0xf]
        %v632 = vld [vmem:[%s4 + $0x10] sm:$0xf]
        %v633 = vld [vmem:[%s4 + $0x14] sm:$0xf]
        %v634 = vld [vmem:[%s4 + $0x18] sm:$0xf]
        %v635 = vld [vmem:[%s4 + $0x1c] sm:$0xf]
        %v636 = vld [vmem:[%s4 + $0x20] sm:$0xf]
        %v637 = vld [vmem:[%s4 + $0x24] sm:$0xf]
        %v638 = vld [vmem:[%s4 + $0x28] sm:$0xf]
        %v639 = vld [vmem:[%s4 + $0x2c] sm:$0xf]
        %v640 = vld [vmem:[%s4 + $0x30] sm:$0xf]
        %v641 = vld [vmem:[%s4 + $0x34] sm:$0xf]
        %v642 = vld [vmem:[%s4 + $0x38] sm:$0xf]
        %v643 = vld [vmem:[%s4 + $0x3c] sm:$0xf]
        %v644 = vld [vmem:[%s5] sm:$0xf]
        %v645 = vld [vmem:[%s5 + $0x4] sm:$0xf]
        %v646 = vld [vmem:[%s5 + $0x8] sm:$0xf]
        %v647 = vld [vmem:[%s5 + $0xc] sm:$0xf]
        %v648 = vld [vmem:[%s5 + $0x10] sm:$0xf]
        %v649 = vld [vmem:[%s5 + $0x14] sm:$0xf]
        %v650 = vld [vmem:[%s5 + $0x18] sm:$0xf]
        %v651 = vld [vmem:[%s5 + $0x1c] sm:$0xf]
        %v652 = vld [vmem:[%s5 + $0x20] sm:$0xf]
        %v653 = vld [vmem:[%s5 + $0x24] sm:$0xf]
        %v654 = vld [vmem:[%s5 + $0x28] sm:$0xf]
        %v655 = vld [vmem:[%s5 + $0x2c] sm:$0xf]
        %v656 = vld [vmem:[%s5 + $0x30] sm:$0xf]
        %v657 = vld [vmem:[%s5 + $0x34] sm:$0xf]
        %v658 = vld [vmem:[%s5 + $0x38] sm:$0xf]
        %v659 = vld [vmem:[%s5 + $0x3c] sm:$0xf]
        %v660 = vld [vmem:[%s6] sm:$0xff]
        %v661 = vld [vmem:[%s6 + $0x8] sm:$0xff]
        %v662 = vld [vmem:[%s6 + $0x10] sm:$0xff]
        %v663 = vld [vmem:[%s6 + $0x18] sm:$0xff]
        %v664 = vld [vmem:[%s6 + $0x20] sm:$0xff]
        %v665 = vld [vmem:[%s6 + $0x28] sm:$0xff]
        %v666 = vld [vmem:[%s6 + $0x30] sm:$0xff]
        %v667 = vld [vmem:[%s6 + $0x38] sm:$0xff]
        %v668 = vld [vmem:[%s6 + $0x40] sm:$0xff]
        %v669 = vld [vmem:[%s6 + $0x48] sm:$0xff]
        %v670 = vld [vmem:[%s6 + $0x50] sm:$0xff]
        %v671 = vld [vmem:[%s6 + $0x58] sm:$0xff]
        %v672 = vld [vmem:[%s6 + $0x60] sm:$0xff]
        %v673 = vld [vmem:[%s6 + $0x68] sm:$0xff]
        %v674 = vld [vmem:[%s6 + $0x70] sm:$0xff]
        %v675 = vld [vmem:[%s6 + $0x78] sm:$0xff]
        %v676 = vld [vmem:[%s7] sm:$0xf]
        %v677 = vld [vmem:[%s7 + $0x4] sm:$0xf]
        %v678 = vld [vmem:[%s7 + $0x8] sm:$0xf]
        %v679 = vld [vmem:[%s7 + $0xc] sm:$0xf]
        %v680 = vld [vmem:[%s7 + $0x10] sm:$0xf]
        %v681 = vld [vmem:[%s7 + $0x14] sm:$0xf]
        %v682 = vld [vmem:[%s7 + $0x18] sm:$0xf]
        %v683 = vld [vmem:[%s7 + $0x1c] sm:$0xf]
        %v684 = vld [vmem:[%s7 + $0x20] sm:$0xf]
        %v685 = vld [vmem:[%s7 + $0x24] sm:$0xf]
        %v686 = vld [vmem:[%s7 + $0x28] sm:$0xf]
        %v687 = vld [vmem:[%s7 + $0x2c] sm:$0xf]
        %v688 = vld [vmem:[%s7 + $0x30] sm:$0xf]
        %v689 = vld [vmem:[%s7 + $0x34] sm:$0xf]
        %v690 = vld [vmem:[%s7 + $0x38] sm:$0xf]
        %v691 = vld [vmem:[%s7 + $0x3c] sm:$0xf]
        %v692 = vld [vmem:[%s8] sm:$0xf]
        %v693 = vld [vmem:[%s8 + $0x4] sm:$0xf]
        %v694 = vld [vmem:[%s8 + $0x8] sm:$0xf]
        %v695 = vld [vmem:[%s8 + $0xc] sm:$0xf]
        %v696 = vld [vmem:[%s8 + $0x10] sm:$0xf]
        %v697 = vld [vmem:[%s8 + $0x14] sm:$0xf]
        %v698 = vld [vmem:[%s8 + $0x18] sm:$0xf]
        %v699 = vld [vmem:[%s8 + $0x1c] sm:$0xf]
        %v700 = vld [vmem:[%s8 + $0x20] sm:$0xf]
        %v701 = vld [vmem:[%s8 + $0x24] sm:$0xf]
        %v702 = vld [vmem:[%s8 + $0x28] sm:$0xf]
        %v703 = vld [vmem:[%s8 + $0x2c] sm:$0xf]
        %v704 = vld [vmem:[%s8 + $0x30] sm:$0xf]
        %v705 = vld [vmem:[%s8 + $0x34] sm:$0xf]
        %v706 = vld [vmem:[%s8 + $0x38] sm:$0xf]
        %v707 = vld [vmem:[%s8 + $0x3c] sm:$0xf]
        %v708 = vld [vmem:[%s9] sm:$0xff]
        %v709 = vld [vmem:[%s9 + $0x8] sm:$0xf]
        %v710 = vld [vmem:[%s9 + $0xc] sm:$0xff]
        %v711 = vld [vmem:[%s9 + $0x14] sm:$0xf]
        %v712 = vld [vmem:[%s9 + $0x18] sm:$0xff]
        %v713 = vld [vmem:[%s9 + $0x20] sm:$0xf]
        %v714 = vld [vmem:[%s9 + $0x24] sm:$0xff]
        %v715 = vld [vmem:[%s9 + $0x2c] sm:$0xf]
        %v716 = vld [vmem:[%s9 + $0x30] sm:$0xff]
        %v717 = vld [vmem:[%s9 + $0x38] sm:$0xf]
        %v718 = vld [vmem:[%s9 + $0x3c] sm:$0xff]
        %v719 = vld [vmem:[%s9 + $0x44] sm:$0xf]
        %v720 = vld [vmem:[%s9 + $0x48] sm:$0xff]
        %v721 = vld [vmem:[%s9 + $0x50] sm:$0xf]
        %v722 = vld [vmem:[%s9 + $0x54] sm:$0xff]
        %v723 = vld [vmem:[%s9 + $0x5c] sm:$0xf]
        %v724 = vld [vmem:[%s9 + $0x60] sm:$0xff]
        %v725 = vld [vmem:[%s9 + $0x68] sm:$0xf]
        %v726 = vld [vmem:[%s9 + $0x6c] sm:$0xff]
        %v727 = vld [vmem:[%s9 + $0x74] sm:$0xf]
        %v728 = vld [vmem:[%s9 + $0x78] sm:$0xff]
        %v729 = vld [vmem:[%s9 + $0x80] sm:$0xf]
        %v730 = vld [vmem:[%s9 + $0x84] sm:$0xff]
        %v731 = vld [vmem:[%s9 + $0x8c] sm:$0xf]
        %v732 = vld [vmem:[%s9 + $0x90] sm:$0xff]
        %v733 = vld [vmem:[%s9 + $0x98] sm:$0xf]
        %v734 = vld [vmem:[%s9 + $0x9c] sm:$0xff]
        %v735 = vld [vmem:[%s9 + $0xa4] sm:$0xf]
        %v736 = vld [vmem:[%s9 + $0xa8] sm:$0xff]
        %v737 = vld [vmem:[%s9 + $0xb0] sm:$0xf]
        %v738 = vld [vmem:[%s9 + $0xb4] sm:$0xff]
        %v739 = vld [vmem:[%s9 + $0xbc] sm:$0xf]
        %v740 = vld [vmem:[%s10] sm:$0xf]
        %v741 = vld [vmem:[%s10 + $0x4] sm:$0xf]
        %v742 = vld [vmem:[%s10 + $0x8] sm:$0xf]
        %v743 = vld [vmem:[%s10 + $0xc] sm:$0xf]
        %v744 = vld [vmem:[%s10 + $0x10] sm:$0xf]
        %v745 = vld [vmem:[%s10 + $0x14] sm:$0xf]
        %v746 = vld [vmem:[%s10 + $0x18] sm:$0xf]
        %v747 = vld [vmem:[%s10 + $0x1c] sm:$0xf]
        %v748 = vld [vmem:[%s10 + $0x20] sm:$0xf]
        %v749 = vld [vmem:[%s10 + $0x24] sm:$0xf]
        %v750 = vld [vmem:[%s10 + $0x28] sm:$0xf]
        %v751 = vld [vmem:[%s10 + $0x2c] sm:$0xf]
        %v752 = vld [vmem:[%s10 + $0x30] sm:$0xf]
        %v753 = vld [vmem:[%s10 + $0x34] sm:$0xf]
        %v754 = vld [vmem:[%s10 + $0x38] sm:$0xf]
        %v755 = vld [vmem:[%s10 + $0x3c] sm:$0xf]
        %v756 = vld [vmem:[%s11] sm:$0xf]
        %v757 = vld [vmem:[%s11 + $0x4] sm:$0xf]
        %v758 = vld [vmem:[%s11 + $0x8] sm:$0xf]
        %v759 = vld [vmem:[%s11 + $0xc] sm:$0xf]
        %v760 = vld [vmem:[%s11 + $0x10] sm:$0xf]
        %v761 = vld [vmem:[%s11 + $0x14] sm:$0xf]
        %v762 = vld [vmem:[%s11 + $0x18] sm:$0xf]
        %v763 = vld [vmem:[%s11 + $0x1c] sm:$0xf]
        %v764 = vld [vmem:[%s11 + $0x20] sm:$0xf]
        %v765 = vld [vmem:[%s11 + $0x24] sm:$0xf]
        %v766 = vld [vmem:[%s11 + $0x28] sm:$0xf]
        %v767 = vld [vmem:[%s11 + $0x2c] sm:$0xf]
        %v768 = vld [vmem:[%s11 + $0x30] sm:$0xf]
        %v769 = vld [vmem:[%s11 + $0x34] sm:$0xf]
        %v770 = vld [vmem:[%s11 + $0x38] sm:$0xf]
        %v771 = vld [vmem:[%s11 + $0x3c] sm:$0xf]
        %v772 = vld [vmem:[%s12] sm:$0xf]
        %v773 = vld [vmem:[%s12 + $0x4] sm:$0xf]
        %v774 = vld [vmem:[%s12 + $0x8] sm:$0xf]
        %v775 = vld [vmem:[%s12 + $0xc] sm:$0xf]
        %v776 = vld [vmem:[%s12 + $0x10] sm:$0xf]
        %v777 = vld [vmem:[%s12 + $0x14] sm:$0xf]
        %v778 = vld [vmem:[%s12 + $0x18] sm:$0xf]
        %v779 = vld [vmem:[%s12 + $0x1c] sm:$0xf]
        %v780 = vld [vmem:[%s12 + $0x20] sm:$0xf]
        %v781 = vld [vmem:[%s12 + $0x24] sm:$0xf]
        %v782 = vld [vmem:[%s12 + $0x28] sm:$0xf]
        %v783 = vld [vmem:[%s12 + $0x2c] sm:$0xf]
        %v784 = vld [vmem:[%s12 + $0x30] sm:$0xf]
        %v785 = vld [vmem:[%s12 + $0x34] sm:$0xf]
        %v786 = vld [vmem:[%s12 + $0x38] sm:$0xf]
        %v787 = vld [vmem:[%s12 + $0x3c] sm:$0xf]
        %v788 = vld [vmem:[#allocation8] sm:$0xf]
        %v789 = vld [vmem:[#allocation8 + $0x4] sm:$0xf]
        %v790 = vld [vmem:[#allocation8 + $0x8] sm:$0xf]
        %v791 = vld [vmem:[#allocation8 + $0xc] sm:$0xf]
        %v792 = vld [vmem:[#allocation8 + $0x10] sm:$0xf]
        %v793 = vld [vmem:[#allocation8 + $0x14] sm:$0xf]
        %v794 = vld [vmem:[#allocation8 + $0x18] sm:$0xf]
        %v795 = vld [vmem:[#allocation8 + $0x1c] sm:$0xf]
        %v796 = vld [vmem:[#allocation8 + $0x20] sm:$0xf]
        %v797 = vld [vmem:[#allocation8 + $0x24] sm:$0xf]
        %v798 = vld [vmem:[#allocation8 + $0x28] sm:$0xf]
        %v799 = vld [vmem:[#allocation8 + $0x2c] sm:$0xf]
        %v800 = vld [vmem:[#allocation8 + $0x30] sm:$0xf]
        %v801 = vld [vmem:[#allocation8 + $0x34] sm:$0xf]
        %v802 = vld [vmem:[#allocation8 + $0x38] sm:$0xf]
        %v803 = vld [vmem:[#allocation8 + $0x3c] sm:$0xf]
        %v804 = vld [vmem:[#allocation10] sm:$0xf]
        %v805 = vld [vmem:[#allocation10 + $0x4] sm:$0xf]
        %v806 = vld [vmem:[#allocation10 + $0x8] sm:$0xf]
        %v807 = vld [vmem:[#allocation10 + $0xc] sm:$0xf]
        %v808 = vld [vmem:[#allocation10 + $0x10] sm:$0xf]
        %v809 = vld [vmem:[#allocation10 + $0x14] sm:$0xf]
        %v810 = vld [vmem:[#allocation10 + $0x18] sm:$0xf]
        %v811 = vld [vmem:[#allocation10 + $0x1c] sm:$0xf]
        %v812 = vld [vmem:[#allocation10 + $0x20] sm:$0xf]
        %v813 = vld [vmem:[#allocation10 + $0x24] sm:$0xf]
        %v814 = vld [vmem:[#allocation10 + $0x28] sm:$0xf]
        %v815 = vld [vmem:[#allocation10 + $0x2c] sm:$0xf]
        %v816 = vld [vmem:[#allocation10 + $0x30] sm:$0xf]
        %v817 = vld [vmem:[#allocation10 + $0x34] sm:$0xf]
        %v818 = vld [vmem:[#allocation10 + $0x38] sm:$0xf]
        %v819 = vld [vmem:[#allocation10 + $0x3c] sm:$0xf]
        %v820 = vld [vmem:[#allocation5] sm:$0xff]
        %v821 = vld [vmem:[#allocation5 + $0x8] sm:$0x3f]
        %v822 = vld [vmem:[#allocation2] sm:$0xff]
        %v823 = vld [vmem:[%s615] sm:$0xf]
        %v824 = vld [vmem:[%s615 + $0x4] sm:$0xf]
        %v825 = vld [vmem:[%s615 + $0x8] sm:$0xf]
        %v826 = vld [vmem:[%s615 + $0xc] sm:$0xf]
        %v827 = vld [vmem:[%s615 + $0x10] sm:$0xf]
        %v828 = vld [vmem:[%s615 + $0x14] sm:$0xf]
        %v829 = vld [vmem:[%s615 + $0x18] sm:$0xf]
        %v830 = vld [vmem:[%s615 + $0x1c] sm:$0xf]
        %v831 = vld [vmem:[%s615 + $0x20] sm:$0xf]
        %v832 = vld [vmem:[%s615 + $0x24] sm:$0xf]
        %v833 = vld [vmem:[%s615 + $0x28] sm:$0xf]
        %v834 = vld [vmem:[%s615 + $0x2c] sm:$0xf]
        %v835 = vld [vmem:[%s615 + $0x30] sm:$0xf]
        %v836 = vld [vmem:[%s615 + $0x34] sm:$0xf]
        %v837 = vld [vmem:[%s615 + $0x38] sm:$0xf]
        %v838 = vld [vmem:[%s615 + $0x3c] sm:$0xf]
        %v839 = vld [vmem:[%s615 + $0x40] sm:$0xf]
        %v840 = vld [vmem:[%s615 + $0x44] sm:$0xf]
        %v841 = vld [vmem:[%s615 + $0x48] sm:$0xf]
        %v842 = vld [vmem:[%s615 + $0x4c] sm:$0xf]
        %v843 = vld [vmem:[%s615 + $0x50] sm:$0xf]
        %v844 = vld [vmem:[%s615 + $0x54] sm:$0xf]
        %v845 = vld [vmem:[%s615 + $0x58] sm:$0xf]
        %v846 = vld [vmem:[%s615 + $0x5c] sm:$0xf]
        %v847 = vld [vmem:[%s615 + $0x60] sm:$0xf]
        %v848 = vld [vmem:[%s615 + $0x64] sm:$0xf]
        %v849 = vld [vmem:[%s615 + $0x68] sm:$0xf]
        %v850 = vld [vmem:[%s615 + $0x6c] sm:$0xf]
        %v851 = vld [vmem:[%s615 + $0x70] sm:$0xf]
        %v852 = vld [vmem:[%s615 + $0x74] sm:$0xf]
        %v853 = vld [vmem:[%s615 + $0x78] sm:$0xf]
        %v854 = vld [vmem:[%s615 + $0x7c] sm:$0xf]
        %v855 = vld [vmem:[%s615 + $0x80] sm:$0xf]
        %v856 = vld [vmem:[%s615 + $0x84] sm:$0xf]
        %v857 = vld [vmem:[%s615 + $0x88] sm:$0xf]
        %v858 = vld [vmem:[%s615 + $0x8c] sm:$0xf]
        %v859 = vld [vmem:[%s615 + $0x90] sm:$0xf]
        %v860 = vld [vmem:[%s615 + $0x94] sm:$0xf]
        %v861 = vld [vmem:[%s615 + $0x98] sm:$0xf]
        %v862 = vld [vmem:[%s615 + $0x9c] sm:$0xf]
        %v863 = vld [vmem:[%s615 + $0xa0] sm:$0xf]
        %v864 = vld [vmem:[%s615 + $0xa4] sm:$0xf]
        %v865 = vld [vmem:[%s615 + $0xa8] sm:$0xf]
        %v866 = vld [vmem:[%s615 + $0xac] sm:$0xf]
        %v867 = vld [vmem:[%s615 + $0xb0] sm:$0xf]
        %v868 = vld [vmem:[%s615 + $0xb4] sm:$0xf]
        %v869 = vld [vmem:[%s615 + $0xb8] sm:$0xf]
        %v870 = vld [vmem:[%s615 + $0xbc] sm:$0xf]
        %v871 = vld [vmem:[%s615 + $0xc0] sm:$0xf]
        %v872 = vld [vmem:[%s615 + $0xc4] sm:$0xf]
        %v873 = vld [vmem:[%s615 + $0xc8] sm:$0xf]
        %v874 = vld [vmem:[%s615 + $0xcc] sm:$0xf]
        %v875 = vld [vmem:[%s615 + $0xd0] sm:$0xf]
        %v876 = vld [vmem:[%s615 + $0xd4] sm:$0xf]
        %v877 = vld [vmem:[%s615 + $0xd8] sm:$0xf]
        %v878 = vld [vmem:[%s615 + $0xdc] sm:$0xf]
        %v879 = vld [vmem:[%s615 + $0xe0] sm:$0xf]
        %v880 = vld [vmem:[%s615 + $0xe4] sm:$0xf]
        %v881 = vld [vmem:[%s615 + $0xe8] sm:$0xf]
        %v882 = vld [vmem:[%s615 + $0xec] sm:$0xf]
        %v883 = vld [vmem:[%s615 + $0xf0] sm:$0xf]
        %v884 = vld [vmem:[%s615 + $0xf4] sm:$0xf]
        %v885 = vld [vmem:[%s615 + $0xf8] sm:$0xf]
        %v886 = vld [vmem:[%s615 + $0xfc] sm:$0xf]
        %v951 = vunpack.c.l.b16 %v823
        %v952 = vunpack.c.l.b16 %v824
        %v953 = vunpack.c.l.b16 %v825
        %v954 = vunpack.c.l.b16 %v826
        %v955 = vunpack.c.l.b16 %v827
        %v956 = vunpack.c.l.b16 %v828
        %v957 = vunpack.c.l.b16 %v829
        %v958 = vunpack.c.l.b16 %v830
        %v959 = vunpack.c.l.b16 %v831
        %v960 = vunpack.c.l.b16 %v832
        %v961 = vunpack.c.l.b16 %v833
        %v962 = vunpack.c.l.b16 %v834
        %v963 = vunpack.c.l.b16 %v835
        %v964 = vunpack.c.l.b16 %v836
        %v965 = vunpack.c.l.b16 %v837
        %v966 = vunpack.c.l.b16 %v838
        %v967 = vunpack.c.l.b16 %v839
        %v968 = vunpack.c.l.b16 %v840
        %v969 = vunpack.c.l.b16 %v841
        %v970 = vunpack.c.l.b16 %v842
        %v971 = vunpack.c.l.b16 %v843
        %v972 = vunpack.c.l.b16 %v844
        %v973 = vunpack.c.l.b16 %v845
        %v974 = vunpack.c.l.b16 %v846
        %v975 = vunpack.c.l.b16 %v847
        %v976 = vunpack.c.l.b16 %v848
        %v977 = vunpack.c.l.b16 %v849
        %v978 = vunpack.c.l.b16 %v850
        %v979 = vunpack.c.l.b16 %v851
        %v980 = vunpack.c.l.b16 %v852
        %v981 = vunpack.c.l.b16 %v853
        %v982 = vunpack.c.l.b16 %v854
        %v983 = vunpack.c.l.b16 %v855
        %v984 = vunpack.c.l.b16 %v856
        %v985 = vunpack.c.l.b16 %v857
        %v986 = vunpack.c.l.b16 %v858
        %v987 = vunpack.c.l.b16 %v859
        %v988 = vunpack.c.l.b16 %v860
        %v989 = vunpack.c.l.b16 %v861
        %v990 = vunpack.c.l.b16 %v862
        %v991 = vunpack.c.l.b16 %v863
        %v992 = vunpack.c.l.b16 %v864
        %v993 = vunpack.c.l.b16 %v865
        %v994 = vunpack.c.l.b16 %v866
        %v995 = vunpack.c.l.b16 %v867
        %v996 = vunpack.c.l.b16 %v868
        %v997 = vunpack.c.l.b16 %v869
        %v998 = vunpack.c.l.b16 %v870
        %v999 = vunpack.c.l.b16 %v871
        %v1000 = vunpack.c.l.b16 %v872
        %v1001 = vunpack.c.l.b16 %v873
        %v1002 = vunpack.c.l.b16 %v874
        %v1003 = vunpack.c.l.b16 %v875
        %v1004 = vunpack.c.l.b16 %v876
        %v1005 = vunpack.c.l.b16 %v877
        %v1006 = vunpack.c.l.b16 %v878
        %v1007 = vunpack.c.l.b16 %v879
        %v1008 = vunpack.c.l.b16 %v880
        %v1009 = vunpack.c.l.b16 %v881
        %v1010 = vunpack.c.l.b16 %v882
        %v1011 = vunpack.c.l.b16 %v883
        %v1012 = vunpack.c.l.b16 %v884
        %v1013 = vunpack.c.l.b16 %v885
        %v1014 = vunpack.c.l.b16 %v886
        %v1015 = vpack.c.b16 %v952, %v951
        %v1016 = vpack.c.b16 %v954, %v953
        %v1017 = vpack.c.b16 %v956, %v955
        %v1018 = vpack.c.b16 %v958, %v957
        %v1019 = vpack.c.b16 %v960, %v959
        %v1020 = vpack.c.b16 %v962, %v961
        %v1021 = vpack.c.b16 %v964, %v963
        %v1022 = vpack.c.b16 %v966, %v965
        %v1023 = vpack.c.b16 %v968, %v967
        %v1024 = vpack.c.b16 %v970, %v969
        %v1025 = vpack.c.b16 %v972, %v971
        %v1026 = vpack.c.b16 %v974, %v973
        %v1027 = vpack.c.b16 %v976, %v975
        %v1028 = vpack.c.b16 %v978, %v977
        %v1029 = vpack.c.b16 %v980, %v979
        %v1030 = vpack.c.b16 %v982, %v981
        %v1031 = vpack.c.b16 %v984, %v983
        %v1032 = vpack.c.b16 %v986, %v985
        %v1033 = vpack.c.b16 %v988, %v987
        %v1034 = vpack.c.b16 %v990, %v989
        %v1035 = vpack.c.b16 %v992, %v991
        %v1036 = vpack.c.b16 %v994, %v993
        %v1037 = vpack.c.b16 %v996, %v995
        %v1038 = vpack.c.b16 %v998, %v997
        %v1039 = vpack.c.b16 %v1000, %v999
        %v1040 = vpack.c.b16 %v1002, %v1001
        %v1041 = vpack.c.b16 %v1004, %v1003
        %v1042 = vpack.c.b16 %v1006, %v1005
        %v1043 = vpack.c.b16 %v1008, %v1007
        %v1044 = vpack.c.b16 %v1010, %v1009
        %v1045 = vpack.c.b16 %v1012, %v1011
        %v1046 = vpack.c.b16 %v1014, %v1013
        %v1055 = vunpack.c.l.b16 %v620
        %v1056 = vunpack.c.h.b16 %v620
        %v1057 = vunpack.c.l.b16 %v621
        %v1058 = vunpack.c.l.b16 %v622
        %v1059 = vunpack.c.h.b16 %v622
        %v1060 = vunpack.c.l.b16 %v623
        %v1061 = vunpack.c.l.b16 %v624
        %v1062 = vunpack.c.h.b16 %v624
        %v1063 = vunpack.c.l.b16 %v625
        %v1064 = vunpack.c.l.b16 %v626
        %v1065 = vunpack.c.h.b16 %v626
        %v1066 = vunpack.c.l.b16 %v627
        %v1067 = vpack.c.b16 %v1058, %v1055
        %v1068 = vpack.c.b16 %v1059, %v1056
        %v1069 = vpack.c.b16 %v1060, %v1057
        %v1070 = vpack.c.b16 %v1064, %v1061
        %v1071 = vpack.c.b16 %v1065, %v1062
        %v1072 = vpack.c.b16 %v1066, %v1063
        %vm1079 = vcmask 261120
        %v1081 = vsel %vm1079, %v1015, 0
        %v1084 = vsel %vm1079, %v1016, 0
        %v1087 = vsel %vm1079, %v1017, 0
        %v1090 = vsel %vm1079, %v1018, 0
        %v1093 = vsel %vm1079, %v1019, 0
        %v1096 = vsel %vm1079, %v1020, 0
        %v1099 = vsel %vm1079, %v1021, 0
        %v1102 = vsel %vm1079, %v1022, 0
        %v1105 = vsel %vm1079, %v1023, 0
        %v1108 = vsel %vm1079, %v1024, 0
        %v1111 = vsel %vm1079, %v1025, 0
        %v1114 = vsel %vm1079, %v1026, 0
        %v1117 = vsel %vm1079, %v1027, 0
        %v1120 = vsel %vm1079, %v1028, 0
        %v1123 = vsel %vm1079, %v1029, 0
        %v1126 = vsel %vm1079, %v1030, 0
        %v1129 = vsel %vm1079, %v1031, 0
        %v1132 = vsel %vm1079, %v1032, 0
        %v1135 = vsel %vm1079, %v1033, 0
        %v1138 = vsel %vm1079, %v1034, 0
        %v1141 = vsel %vm1079, %v1035, 0
        %v1144 = vsel %vm1079, %v1036, 0
        %v1147 = vsel %vm1079, %v1037, 0
        %v1150 = vsel %vm1079, %v1038, 0
        %v1153 = vsel %vm1079, %v1039, 0
        %v1156 = vsel %vm1079, %v1040, 0
        %v1159 = vsel %vm1079, %v1041, 0
        %v1162 = vsel %vm1079, %v1042, 0
        %v1165 = vsel %vm1079, %v1043, 0
        %v1168 = vsel %vm1079, %v1044, 0
        %v1171 = vsel %vm1079, %v1045, 0
        %v1174 = vsel %vm1079, %v1046, 0
        %1176 = vmatpush.bf16.msra.mxu0 0
        %1177 = vmatpush.bf16.msra.mxu0 0
        %1178 = vmatpush.bf16.msra.mxu0 0
        %1179 = vmatpush.bf16.msra.mxu0 0
        %1180 = vmatpush.bf16.msra.mxu0 0
        %1181 = vmatpush.bf16.msra.mxu0 0
        %1182 = vmatpush.bf16.msra.mxu0 %v1070
        %1183 = vmatpush.bf16.msra.mxu0 %v1067
        %1184 = vmatmul.bf16.gmra.mxu0 %v1081
        %v1185 = vpop.f32.mrf.mxu0
        %v1186 = vadd.f32 0.0, %v1185
        %v1187 = vpop.f32.mrf.mxu0
        %v1188 = vadd.f32 0.0, %v1187
        %1189 = vmatmul.bf16.gmra.mxu0 %v1084
        %v1190 = vpop.f32.mrf.mxu0
        %v1191 = vadd.f32 0.0, %v1190
        %v1192 = vpop.f32.mrf.mxu0
        %v1193 = vadd.f32 0.0, %v1192
        %1194 = vmatmul.bf16.gmra.mxu0 %v1087
        %v1195 = vpop.f32.mrf.mxu0
        %v1196 = vadd.f32 0.0, %v1195
        %v1197 = vpop.f32.mrf.mxu0
        %v1198 = vadd.f32 0.0, %v1197
        %1199 = vmatmul.bf16.gmra.mxu0 %v1090
        %v1200 = vpop.f32.mrf.mxu0
        %v1201 = vadd.f32 0.0, %v1200
        %v1202 = vpop.f32.mrf.mxu0
        %v1203 = vadd.f32 0.0, %v1202
        %1204 = vmatmul.bf16.gmra.mxu0 %v1093
        %v1205 = vpop.f32.mrf.mxu0
        %v1206 = vadd.f32 0.0, %v1205
        %v1207 = vpop.f32.mrf.mxu0
        %v1208 = vadd.f32 0.0, %v1207
        %1209 = vmatmul.bf16.gmra.mxu0 %v1096
        %v1210 = vpop.f32.mrf.mxu0
        %v1211 = vadd.f32 0.0, %v1210
        %v1212 = vpop.f32.mrf.mxu0
        %v1213 = vadd.f32 0.0, %v1212
        %1214 = vmatmul.bf16.gmra.mxu0 %v1099
        %v1215 = vpop.f32.mrf.mxu0
        %v1216 = vadd.f32 0.0, %v1215
        %v1217 = vpop.f32.mrf.mxu0
        %v1218 = vadd.f32 0.0, %v1217
        %1219 = vmatmul.bf16.gmra.mxu0 %v1102
        %v1220 = vpop.f32.mrf.mxu0
        %v1221 = vadd.f32 0.0, %v1220
        %v1222 = vpop.f32.mrf.mxu0
        %v1223 = vadd.f32 0.0, %v1222
        %1224 = vmatmul.bf16.gmra.mxu0 %v1105
        %v1225 = vpop.f32.mrf.mxu0
        %v1226 = vadd.f32 0.0, %v1225
        %v1227 = vpop.f32.mrf.mxu0
        %v1228 = vadd.f32 0.0, %v1227
        %1229 = vmatmul.bf16.gmra.mxu0 %v1108
        %v1230 = vpop.f32.mrf.mxu0
        %v1231 = vadd.f32 0.0, %v1230
        %v1232 = vpop.f32.mrf.mxu0
        %v1233 = vadd.f32 0.0, %v1232
        %1234 = vmatmul.bf16.gmra.mxu0 %v1111
        %v1235 = vpop.f32.mrf.mxu0
        %v1236 = vadd.f32 0.0, %v1235
        %v1237 = vpop.f32.mrf.mxu0
        %v1238 = vadd.f32 0.0, %v1237
        %1239 = vmatmul.bf16.gmra.mxu0 %v1114
        %v1240 = vpop.f32.mrf.mxu0
        %v1241 = vadd.f32 0.0, %v1240
        %v1242 = vpop.f32.mrf.mxu0
        %v1243 = vadd.f32 0.0, %v1242
        %1244 = vmatmul.bf16.gmra.mxu0 %v1117
        %v1245 = vpop.f32.mrf.mxu0
        %v1246 = vadd.f32 0.0, %v1245
        %v1247 = vpop.f32.mrf.mxu0
        %v1248 = vadd.f32 0.0, %v1247
        %1249 = vmatmul.bf16.gmra.mxu0 %v1120
        %v1250 = vpop.f32.mrf.mxu0
        %v1251 = vadd.f32 0.0, %v1250
        %v1252 = vpop.f32.mrf.mxu0
        %v1253 = vadd.f32 0.0, %v1252
        %1254 = vmatmul.bf16.gmra.mxu0 %v1123
        %v1255 = vpop.f32.mrf.mxu0
        %v1256 = vadd.f32 0.0, %v1255
        %v1257 = vpop.f32.mrf.mxu0
        %v1258 = vadd.f32 0.0, %v1257
        %1259 = vmatmul.bf16.gmra.mxu0 %v1126
        %v1260 = vpop.f32.mrf.mxu0
        %v1261 = vadd.f32 0.0, %v1260
        %v1262 = vpop.f32.mrf.mxu0
        %v1263 = vadd.f32 0.0, %v1262
        %1264 = vmatmul.bf16.gmra.mxu0 %v1129
        %v1265 = vpop.f32.mrf.mxu0
        %v1266 = vadd.f32 0.0, %v1265
        %v1267 = vpop.f32.mrf.mxu0
        %v1268 = vadd.f32 0.0, %v1267
        %1269 = vmatmul.bf16.gmra.mxu0 %v1132
        %v1270 = vpop.f32.mrf.mxu0
        %v1271 = vadd.f32 0.0, %v1270
        %v1272 = vpop.f32.mrf.mxu0
        %v1273 = vadd.f32 0.0, %v1272
        %1274 = vmatmul.bf16.gmra.mxu0 %v1135
        %v1275 = vpop.f32.mrf.mxu0
        %v1276 = vadd.f32 0.0, %v1275
        %v1277 = vpop.f32.mrf.mxu0
        %v1278 = vadd.f32 0.0, %v1277
        %1279 = vmatmul.bf16.gmra.mxu0 %v1138
        %v1280 = vpop.f32.mrf.mxu0
        %v1281 = vadd.f32 0.0, %v1280
        %v1282 = vpop.f32.mrf.mxu0
        %v1283 = vadd.f32 0.0, %v1282
        %1284 = vmatmul.bf16.gmra.mxu0 %v1141
        %v1285 = vpop.f32.mrf.mxu0
        %v1286 = vadd.f32 0.0, %v1285
        %v1287 = vpop.f32.mrf.mxu0
        %v1288 = vadd.f32 0.0, %v1287
        %1289 = vmatmul.bf16.gmra.mxu0 %v1144
        %v1290 = vpop.f32.mrf.mxu0
        %v1291 = vadd.f32 0.0, %v1290
        %v1292 = vpop.f32.mrf.mxu0
        %v1293 = vadd.f32 0.0, %v1292
        %1294 = vmatmul.bf16.gmra.mxu0 %v1147
        %v1295 = vpop.f32.mrf.mxu0
        %v1296 = vadd.f32 0.0, %v1295
        %v1297 = vpop.f32.mrf.mxu0
        %v1298 = vadd.f32 0.0, %v1297
        %1299 = vmatmul.bf16.gmra.mxu0 %v1150
        %v1300 = vpop.f32.mrf.mxu0
        %v1301 = vadd.f32 0.0, %v1300
        %v1302 = vpop.f32.mrf.mxu0
        %v1303 = vadd.f32 0.0, %v1302
        %1304 = vmatmul.bf16.gmra.mxu0 %v1153
        %v1305 = vpop.f32.mrf.mxu0
        %v1306 = vadd.f32 0.0, %v1305
        %v1307 = vpop.f32.mrf.mxu0
        %v1308 = vadd.f32 0.0, %v1307
        %1309 = vmatmul.bf16.gmra.mxu0 %v1156
        %v1310 = vpop.f32.mrf.mxu0
        %v1311 = vadd.f32 0.0, %v1310
        %v1312 = vpop.f32.mrf.mxu0
        %v1313 = vadd.f32 0.0, %v1312
        %1314 = vmatmul.bf16.gmra.mxu0 %v1159
        %v1315 = vpop.f32.mrf.mxu0
        %v1316 = vadd.f32 0.0, %v1315
        %v1317 = vpop.f32.mrf.mxu0
        %v1318 = vadd.f32 0.0, %v1317
        %1319 = vmatmul.bf16.gmra.mxu0 %v1162
        %v1320 = vpop.f32.mrf.mxu0
        %v1321 = vadd.f32 0.0, %v1320
        %v1322 = vpop.f32.mrf.mxu0
        %v1323 = vadd.f32 0.0, %v1322
        %1324 = vmatmul.bf16.gmra.mxu0 %v1165
        %v1325 = vpop.f32.mrf.mxu0
        %v1326 = vadd.f32 0.0, %v1325
        %v1327 = vpop.f32.mrf.mxu0
        %v1328 = vadd.f32 0.0, %v1327
        %1329 = vmatmul.bf16.gmra.mxu0 %v1168
        %v1330 = vpop.f32.mrf.mxu0
        %v1331 = vadd.f32 0.0, %v1330
        %v1332 = vpop.f32.mrf.mxu0
        %v1333 = vadd.f32 0.0, %v1332
        %1334 = vmatmul.bf16.gmra.mxu0 %v1171
        %v1335 = vpop.f32.mrf.mxu0
        %v1336 = vadd.f32 0.0, %v1335
        %v1337 = vpop.f32.mrf.mxu0
        %v1338 = vadd.f32 0.0, %v1337
        %1339 = vmatmul.bf16.gmra.mxu0 %v1174
        %v1340 = vpop.f32.mrf.mxu0
        %v1341 = vadd.f32 0.0, %v1340
        %v1342 = vpop.f32.mrf.mxu0
        %v1343 = vadd.f32 0.0, %v1342
        %1344 = vdwg.mxu0
        %1345 = vmatpush.bf16.msra.mxu0 0
        %1346 = vmatpush.bf16.msra.mxu0 0
        %1347 = vmatpush.bf16.msra.mxu0 0
        %1348 = vmatpush.bf16.msra.mxu0 0
        %1349 = vmatpush.bf16.msra.mxu0 0
        %1350 = vmatpush.bf16.msra.mxu0 0
        %1351 = vmatpush.bf16.msra.mxu0 %v1071
        %1352 = vmatpush.bf16.msra.mxu0 %v1068
        %1353 = vmatmul.bf16.gmra.mxu0 %v1081
        %v1354 = vpop.f32.mrf.mxu0
        %v1355 = vadd.f32 0.0, %v1354
        %v1356 = vpop.f32.mrf.mxu0
        %v1357 = vadd.f32 0.0, %v1356
        %1358 = vmatmul.bf16.gmra.mxu0 %v1084
        %v1359 = vpop.f32.mrf.mxu0
        %v1360 = vadd.f32 0.0, %v1359
        %v1361 = vpop.f32.mrf.mxu0
        %v1362 = vadd.f32 0.0, %v1361
        %1363 = vmatmul.bf16.gmra.mxu0 %v1087
        %v1364 = vpop.f32.mrf.mxu0
        %v1365 = vadd.f32 0.0, %v1364
        %v1366 = vpop.f32.mrf.mxu0
        %v1367 = vadd.f32 0.0, %v1366
        %1368 = vmatmul.bf16.gmra.mxu0 %v1090
        %v1369 = vpop.f32.mrf.mxu0
        %v1370 = vadd.f32 0.0, %v1369
        %v1371 = vpop.f32.mrf.mxu0
        %v1372 = vadd.f32 0.0, %v1371
        %1373 = vmatmul.bf16.gmra.mxu0 %v1093
        %v1374 = vpop.f32.mrf.mxu0
        %v1375 = vadd.f32 0.0, %v1374
        %v1376 = vpop.f32.mrf.mxu0
        %v1377 = vadd.f32 0.0, %v1376
        %1378 = vmatmul.bf16.gmra.mxu0 %v1096
        %v1379 = vpop.f32.mrf.mxu0
        %v1380 = vadd.f32 0.0, %v1379
        %v1381 = vpop.f32.mrf.mxu0
        %v1382 = vadd.f32 0.0, %v1381
        %1383 = vmatmul.bf16.gmra.mxu0 %v1099
        %v1384 = vpop.f32.mrf.mxu0
        %v1385 = vadd.f32 0.0, %v1384
        %v1386 = vpop.f32.mrf.mxu0
        %v1387 = vadd.f32 0.0, %v1386
        %1388 = vmatmul.bf16.gmra.mxu0 %v1102
        %v1389 = vpop.f32.mrf.mxu0
        %v1390 = vadd.f32 0.0, %v1389
        %v1391 = vpop.f32.mrf.mxu0
        %v1392 = vadd.f32 0.0, %v1391
        %1393 = vmatmul.bf16.gmra.mxu0 %v1105
        %v1394 = vpop.f32.mrf.mxu0
        %v1395 = vadd.f32 0.0, %v1394
        %v1396 = vpop.f32.mrf.mxu0
        %v1397 = vadd.f32 0.0, %v1396
        %1398 = vmatmul.bf16.gmra.mxu0 %v1108
        %v1399 = vpop.f32.mrf.mxu0
        %v1400 = vadd.f32 0.0, %v1399
        %v1401 = vpop.f32.mrf.mxu0
        %v1402 = vadd.f32 0.0, %v1401
        %1403 = vmatmul.bf16.gmra.mxu0 %v1111
        %v1404 = vpop.f32.mrf.mxu0
        %v1405 = vadd.f32 0.0, %v1404
        %v1406 = vpop.f32.mrf.mxu0
        %v1407 = vadd.f32 0.0, %v1406
        %1408 = vmatmul.bf16.gmra.mxu0 %v1114
        %v1409 = vpop.f32.mrf.mxu0
        %v1410 = vadd.f32 0.0, %v1409
        %v1411 = vpop.f32.mrf.mxu0
        %v1412 = vadd.f32 0.0, %v1411
        %1413 = vmatmul.bf16.gmra.mxu0 %v1117
        %v1414 = vpop.f32.mrf.mxu0
        %v1415 = vadd.f32 0.0, %v1414
        %v1416 = vpop.f32.mrf.mxu0
        %v1417 = vadd.f32 0.0, %v1416
        %1418 = vmatmul.bf16.gmra.mxu0 %v1120
        %v1419 = vpop.f32.mrf.mxu0
        %v1420 = vadd.f32 0.0, %v1419
        %v1421 = vpop.f32.mrf.mxu0
        %v1422 = vadd.f32 0.0, %v1421
        %1423 = vmatmul.bf16.gmra.mxu0 %v1123
        %v1424 = vpop.f32.mrf.mxu0
        %v1425 = vadd.f32 0.0, %v1424
        %v1426 = vpop.f32.mrf.mxu0
        %v1427 = vadd.f32 0.0, %v1426
        %1428 = vmatmul.bf16.gmra.mxu0 %v1126
        %v1429 = vpop.f32.mrf.mxu0
        %v1430 = vadd.f32 0.0, %v1429
        %v1431 = vpop.f32.mrf.mxu0
        %v1432 = vadd.f32 0.0, %v1431
        %1433 = vmatmul.bf16.gmra.mxu0 %v1129
        %v1434 = vpop.f32.mrf.mxu0
        %v1435 = vadd.f32 0.0, %v1434
        %v1436 = vpop.f32.mrf.mxu0
        %v1437 = vadd.f32 0.0, %v1436
        %1438 = vmatmul.bf16.gmra.mxu0 %v1132
        %v1439 = vpop.f32.mrf.mxu0
        %v1440 = vadd.f32 0.0, %v1439
        %v1441 = vpop.f32.mrf.mxu0
        %v1442 = vadd.f32 0.0, %v1441
        %1443 = vmatmul.bf16.gmra.mxu0 %v1135
        %v1444 = vpop.f32.mrf.mxu0
        %v1445 = vadd.f32 0.0, %v1444
        %v1446 = vpop.f32.mrf.mxu0
        %v1447 = vadd.f32 0.0, %v1446
        %1448 = vmatmul.bf16.gmra.mxu0 %v1138
        %v1449 = vpop.f32.mrf.mxu0
        %v1450 = vadd.f32 0.0, %v1449
        %v1451 = vpop.f32.mrf.mxu0
        %v1452 = vadd.f32 0.0, %v1451
        %1453 = vmatmul.bf16.gmra.mxu0 %v1141
        %v1454 = vpop.f32.mrf.mxu0
        %v1455 = vadd.f32 0.0, %v1454
        %v1456 = vpop.f32.mrf.mxu0
        %v1457 = vadd.f32 0.0, %v1456
        %1458 = vmatmul.bf16.gmra.mxu0 %v1144
        %v1459 = vpop.f32.mrf.mxu0
        %v1460 = vadd.f32 0.0, %v1459
        %v1461 = vpop.f32.mrf.mxu0
        %v1462 = vadd.f32 0.0, %v1461
        %1463 = vmatmul.bf16.gmra.mxu0 %v1147
        %v1464 = vpop.f32.mrf.mxu0
        %v1465 = vadd.f32 0.0, %v1464
        %v1466 = vpop.f32.mrf.mxu0
        %v1467 = vadd.f32 0.0, %v1466
        %1468 = vmatmul.bf16.gmra.mxu0 %v1150
        %v1469 = vpop.f32.mrf.mxu0
        %v1470 = vadd.f32 0.0, %v1469
        %v1471 = vpop.f32.mrf.mxu0
        %v1472 = vadd.f32 0.0, %v1471
        %1473 = vmatmul.bf16.gmra.mxu0 %v1153
        %v1474 = vpop.f32.mrf.mxu0
        %v1475 = vadd.f32 0.0, %v1474
        %v1476 = vpop.f32.mrf.mxu0
        %v1477 = vadd.f32 0.0, %v1476
        %1478 = vmatmul.bf16.gmra.mxu0 %v1156
        %v1479 = vpop.f32.mrf.mxu0
        %v1480 = vadd.f32 0.0, %v1479
        %v1481 = vpop.f32.mrf.mxu0
        %v1482 = vadd.f32 0.0, %v1481
        %1483 = vmatmul.bf16.gmra.mxu0 %v1159
        %v1484 = vpop.f32.mrf.mxu0
        %v1485 = vadd.f32 0.0, %v1484
        %v1486 = vpop.f32.mrf.mxu0
        %v1487 = vadd.f32 0.0, %v1486
        %1488 = vmatmul.bf16.gmra.mxu0 %v1162
        %v1489 = vpop.f32.mrf.mxu0
        %v1490 = vadd.f32 0.0, %v1489
        %v1491 = vpop.f32.mrf.mxu0
        %v1492 = vadd.f32 0.0, %v1491
        %1493 = vmatmul.bf16.gmra.mxu0 %v1165
        %v1494 = vpop.f32.mrf.mxu0
        %v1495 = vadd.f32 0.0, %v1494
        %v1496 = vpop.f32.mrf.mxu0
        %v1497 = vadd.f32 0.0, %v1496
        %1498 = vmatmul.bf16.gmra.mxu0 %v1168
        %v1499 = vpop.f32.mrf.mxu0
        %v1500 = vadd.f32 0.0, %v1499
        %v1501 = vpop.f32.mrf.mxu0
        %v1502 = vadd.f32 0.0, %v1501
        %1503 = vmatmul.bf16.gmra.mxu0 %v1171
        %v1504 = vpop.f32.mrf.mxu0
        %v1505 = vadd.f32 0.0, %v1504
        %v1506 = vpop.f32.mrf.mxu0
        %v1507 = vadd.f32 0.0, %v1506
        %1508 = vmatmul.bf16.gmra.mxu0 %v1174
        %v1509 = vpop.f32.mrf.mxu0
        %v1510 = vadd.f32 0.0, %v1509
        %v1511 = vpop.f32.mrf.mxu0
        %v1512 = vadd.f32 0.0, %v1511
        %1513 = vdwg.mxu0
        %1514 = vmatpush.bf16.msra.mxu0 0
        %1515 = vmatpush.bf16.msra.mxu0 0
        %1516 = vmatpush.bf16.msra.mxu0 0
        %1517 = vmatpush.bf16.msra.mxu0 0
        %1518 = vmatpush.bf16.msra.mxu0 0
        %1519 = vmatpush.bf16.msra.mxu0 0
        %1520 = vmatpush.bf16.msra.mxu0 %v1072
        %1521 = vmatpush.bf16.msra.mxu0 %v1069
        %1522 = vmatmul.bf16.gmra.mxu0 %v1081
        %v1523 = vpop.f32.mrf.mxu0
        %v1524 = vadd.f32 0.0, %v1523
        %v1525 = vpop.f32.mrf.mxu0
        %v1526 = vadd.f32 0.0, %v1525
        %1527 = vmatmul.bf16.gmra.mxu0 %v1084
        %v1528 = vpop.f32.mrf.mxu0
        %v1529 = vadd.f32 0.0, %v1528
        %v1530 = vpop.f32.mrf.mxu0
        %v1531 = vadd.f32 0.0, %v1530
        %1532 = vmatmul.bf16.gmra.mxu0 %v1087
        %v1533 = vpop.f32.mrf.mxu0
        %v1534 = vadd.f32 0.0, %v1533
        %v1535 = vpop.f32.mrf.mxu0
        %v1536 = vadd.f32 0.0, %v1535
        %1537 = vmatmul.bf16.gmra.mxu0 %v1090
        %v1538 = vpop.f32.mrf.mxu0
        %v1539 = vadd.f32 0.0, %v1538
        %v1540 = vpop.f32.mrf.mxu0
        %v1541 = vadd.f32 0.0, %v1540
        %1542 = vmatmul.bf16.gmra.mxu0 %v1093
        %v1543 = vpop.f32.mrf.mxu0
        %v1544 = vadd.f32 0.0, %v1543
        %v1545 = vpop.f32.mrf.mxu0
        %v1546 = vadd.f32 0.0, %v1545
        %1547 = vmatmul.bf16.gmra.mxu0 %v1096
        %v1548 = vpop.f32.mrf.mxu0
        %v1549 = vadd.f32 0.0, %v1548
        %v1550 = vpop.f32.mrf.mxu0
        %v1551 = vadd.f32 0.0, %v1550
        %1552 = vmatmul.bf16.gmra.mxu0 %v1099
        %v1553 = vpop.f32.mrf.mxu0
        %v1554 = vadd.f32 0.0, %v1553
        %v1555 = vpop.f32.mrf.mxu0
        %v1556 = vadd.f32 0.0, %v1555
        %1557 = vmatmul.bf16.gmra.mxu0 %v1102
        %v1558 = vpop.f32.mrf.mxu0
        %v1559 = vadd.f32 0.0, %v1558
        %v1560 = vpop.f32.mrf.mxu0
        %v1561 = vadd.f32 0.0, %v1560
        %1562 = vmatmul.bf16.gmra.mxu0 %v1105
        %v1563 = vpop.f32.mrf.mxu0
        %v1564 = vadd.f32 0.0, %v1563
        %v1565 = vpop.f32.mrf.mxu0
        %v1566 = vadd.f32 0.0, %v1565
        %1567 = vmatmul.bf16.gmra.mxu0 %v1108
        %v1568 = vpop.f32.mrf.mxu0
        %v1569 = vadd.f32 0.0, %v1568
        %v1570 = vpop.f32.mrf.mxu0
        %v1571 = vadd.f32 0.0, %v1570
        %1572 = vmatmul.bf16.gmra.mxu0 %v1111
        %v1573 = vpop.f32.mrf.mxu0
        %v1574 = vadd.f32 0.0, %v1573
        %v1575 = vpop.f32.mrf.mxu0
        %v1576 = vadd.f32 0.0, %v1575
        %1577 = vmatmul.bf16.gmra.mxu0 %v1114
        %v1578 = vpop.f32.mrf.mxu0
        %v1579 = vadd.f32 0.0, %v1578
        %v1580 = vpop.f32.mrf.mxu0
        %v1581 = vadd.f32 0.0, %v1580
        %1582 = vmatmul.bf16.gmra.mxu0 %v1117
        %v1583 = vpop.f32.mrf.mxu0
        %v1584 = vadd.f32 0.0, %v1583
        %v1585 = vpop.f32.mrf.mxu0
        %v1586 = vadd.f32 0.0, %v1585
        %1587 = vmatmul.bf16.gmra.mxu0 %v1120
        %v1588 = vpop.f32.mrf.mxu0
        %v1589 = vadd.f32 0.0, %v1588
        %v1590 = vpop.f32.mrf.mxu0
        %v1591 = vadd.f32 0.0, %v1590
        %1592 = vmatmul.bf16.gmra.mxu0 %v1123
        %v1593 = vpop.f32.mrf.mxu0
        %v1594 = vadd.f32 0.0, %v1593
        %v1595 = vpop.f32.mrf.mxu0
        %v1596 = vadd.f32 0.0, %v1595
        %1597 = vmatmul.bf16.gmra.mxu0 %v1126
        %v1598 = vpop.f32.mrf.mxu0
        %v1599 = vadd.f32 0.0, %v1598
        %v1600 = vpop.f32.mrf.mxu0
        %v1601 = vadd.f32 0.0, %v1600
        %1602 = vmatmul.bf16.gmra.mxu0 %v1129
        %v1603 = vpop.f32.mrf.mxu0
        %v1604 = vadd.f32 0.0, %v1603
        %v1605 = vpop.f32.mrf.mxu0
        %v1606 = vadd.f32 0.0, %v1605
        %1607 = vmatmul.bf16.gmra.mxu0 %v1132
        %v1608 = vpop.f32.mrf.mxu0
        %v1609 = vadd.f32 0.0, %v1608
        %v1610 = vpop.f32.mrf.mxu0
        %v1611 = vadd.f32 0.0, %v1610
        %1612 = vmatmul.bf16.gmra.mxu0 %v1135
        %v1613 = vpop.f32.mrf.mxu0
        %v1614 = vadd.f32 0.0, %v1613
        %v1615 = vpop.f32.mrf.mxu0
        %v1616 = vadd.f32 0.0, %v1615
        %1617 = vmatmul.bf16.gmra.mxu0 %v1138
        %v1618 = vpop.f32.mrf.mxu0
        %v1619 = vadd.f32 0.0, %v1618
        %v1620 = vpop.f32.mrf.mxu0
        %v1621 = vadd.f32 0.0, %v1620
        %1622 = vmatmul.bf16.gmra.mxu0 %v1141
        %v1623 = vpop.f32.mrf.mxu0
        %v1624 = vadd.f32 0.0, %v1623
        %v1625 = vpop.f32.mrf.mxu0
        %v1626 = vadd.f32 0.0, %v1625
        %1627 = vmatmul.bf16.gmra.mxu0 %v1144
        %v1628 = vpop.f32.mrf.mxu0
        %v1629 = vadd.f32 0.0, %v1628
        %v1630 = vpop.f32.mrf.mxu0
        %v1631 = vadd.f32 0.0, %v1630
        %1632 = vmatmul.bf16.gmra.mxu0 %v1147
        %v1633 = vpop.f32.mrf.mxu0
        %v1634 = vadd.f32 0.0, %v1633
        %v1635 = vpop.f32.mrf.mxu0
        %v1636 = vadd.f32 0.0, %v1635
        %1637 = vmatmul.bf16.gmra.mxu0 %v1150
        %v1638 = vpop.f32.mrf.mxu0
        %v1639 = vadd.f32 0.0, %v1638
        %v1640 = vpop.f32.mrf.mxu0
        %v1641 = vadd.f32 0.0, %v1640
        %1642 = vmatmul.bf16.gmra.mxu0 %v1153
        %v1643 = vpop.f32.mrf.mxu0
        %v1644 = vadd.f32 0.0, %v1643
        %v1645 = vpop.f32.mrf.mxu0
        %v1646 = vadd.f32 0.0, %v1645
        %1647 = vmatmul.bf16.gmra.mxu0 %v1156
        %v1648 = vpop.f32.mrf.mxu0
        %v1649 = vadd.f32 0.0, %v1648
        %v1650 = vpop.f32.mrf.mxu0
        %v1651 = vadd.f32 0.0, %v1650
        %1652 = vmatmul.bf16.gmra.mxu0 %v1159
        %v1653 = vpop.f32.mrf.mxu0
        %v1654 = vadd.f32 0.0, %v1653
        %v1655 = vpop.f32.mrf.mxu0
        %v1656 = vadd.f32 0.0, %v1655
        %1657 = vmatmul.bf16.gmra.mxu0 %v1162
        %v1658 = vpop.f32.mrf.mxu0
        %v1659 = vadd.f32 0.0, %v1658
        %v1660 = vpop.f32.mrf.mxu0
        %v1661 = vadd.f32 0.0, %v1660
        %1662 = vmatmul.bf16.gmra.mxu0 %v1165
        %v1663 = vpop.f32.mrf.mxu0
        %v1664 = vadd.f32 0.0, %v1663
        %v1665 = vpop.f32.mrf.mxu0
        %v1666 = vadd.f32 0.0, %v1665
        %1667 = vmatmul.bf16.gmra.mxu0 %v1168
        %v1668 = vpop.f32.mrf.mxu0
        %v1669 = vadd.f32 0.0, %v1668
        %v1670 = vpop.f32.mrf.mxu0
        %v1671 = vadd.f32 0.0, %v1670
        %1672 = vmatmul.bf16.gmra.mxu0 %v1171
        %v1673 = vpop.f32.mrf.mxu0
        %v1674 = vadd.f32 0.0, %v1673
        %v1675 = vpop.f32.mrf.mxu0
        %v1676 = vadd.f32 0.0, %v1675
        %1677 = vmatmul.bf16.gmra.mxu0 %v1174
        %v1678 = vpop.f32.mrf.mxu0
        %v1679 = vadd.f32 0.0, %v1678
        %v1680 = vpop.f32.mrf.mxu0
        %v1681 = vadd.f32 0.0, %v1680
        %1682 = vdwg.mxu0
        %v1683 = vmax.f32 %v1186, 0.0
        %v1684 = vmax.f32 %v1188, 0.0
        %v1685 = vmax.f32 %v1191, 0.0
        %v1686 = vmax.f32 %v1193, 0.0
        %v1687 = vmax.f32 %v1196, 0.0
        %v1688 = vmax.f32 %v1198, 0.0
        %v1689 = vmax.f32 %v1201, 0.0
        %v1690 = vmax.f32 %v1203, 0.0
        %v1691 = vmax.f32 %v1206, 0.0
        %v1692 = vmax.f32 %v1208, 0.0
        %v1693 = vmax.f32 %v1211, 0.0
        %v1694 = vmax.f32 %v1213, 0.0
        %v1695 = vmax.f32 %v1216, 0.0
        %v1696 = vmax.f32 %v1218, 0.0
        %v1697 = vmax.f32 %v1221, 0.0
        %v1698 = vmax.f32 %v1223, 0.0
        %v1699 = vmax.f32 %v1226, 0.0
        %v1700 = vmax.f32 %v1228, 0.0
        %v1701 = vmax.f32 %v1231, 0.0
        %v1702 = vmax.f32 %v1233, 0.0
        %v1703 = vmax.f32 %v1236, 0.0
        %v1704 = vmax.f32 %v1238, 0.0
        %v1705 = vmax.f32 %v1241, 0.0
        %v1706 = vmax.f32 %v1243, 0.0
        %v1707 = vmax.f32 %v1246, 0.0
        %v1708 = vmax.f32 %v1248, 0.0
        %v1709 = vmax.f32 %v1251, 0.0
        %v1710 = vmax.f32 %v1253, 0.0
        %v1711 = vmax.f32 %v1256, 0.0
        %v1712 = vmax.f32 %v1258, 0.0
        %v1713 = vmax.f32 %v1261, 0.0
        %v1714 = vmax.f32 %v1263, 0.0
        %v1715 = vmax.f32 %v1266, 0.0
        %v1716 = vmax.f32 %v1268, 0.0
        %v1717 = vmax.f32 %v1271, 0.0
        %v1718 = vmax.f32 %v1273, 0.0
        %v1719 = vmax.f32 %v1276, 0.0
        %v1720 = vmax.f32 %v1278, 0.0
        %v1721 = vmax.f32 %v1281, 0.0
        %v1722 = vmax.f32 %v1283, 0.0
        %v1723 = vmax.f32 %v1286, 0.0
        %v1724 = vmax.f32 %v1288, 0.0
        %v1725 = vmax.f32 %v1291, 0.0
        %v1726 = vmax.f32 %v1293, 0.0
        %v1727 = vmax.f32 %v1296, 0.0
        %v1728 = vmax.f32 %v1298, 0.0
        %v1729 = vmax.f32 %v1301, 0.0
        %v1730 = vmax.f32 %v1303, 0.0
        %v1731 = vmax.f32 %v1306, 0.0
        %v1732 = vmax.f32 %v1308, 0.0
        %v1733 = vmax.f32 %v1311, 0.0
        %v1734 = vmax.f32 %v1313, 0.0
        %v1735 = vmax.f32 %v1316, 0.0
        %v1736 = vmax.f32 %v1318, 0.0
        %v1737 = vmax.f32 %v1321, 0.0
        %v1738 = vmax.f32 %v1323, 0.0
        %v1739 = vmax.f32 %v1326, 0.0
        %v1740 = vmax.f32 %v1328, 0.0
        %v1741 = vmax.f32 %v1331, 0.0
        %v1742 = vmax.f32 %v1333, 0.0
        %v1743 = vmax.f32 %v1336, 0.0
        %v1744 = vmax.f32 %v1338, 0.0
        %v1745 = vmax.f32 %v1341, 0.0
        %v1746 = vmax.f32 %v1343, 0.0
        %v1747 = vmax.f32 %v1355, 0.0
        %v1748 = vmax.f32 %v1357, 0.0
        %v1749 = vmax.f32 %v1360, 0.0
        %v1750 = vmax.f32 %v1362, 0.0
        %v1751 = vmax.f32 %v1365, 0.0
        %v1752 = vmax.f32 %v1367, 0.0
        %v1753 = vmax.f32 %v1370, 0.0
        %v1754 = vmax.f32 %v1372, 0.0
        %v1755 = vmax.f32 %v1375, 0.0
        %v1756 = vmax.f32 %v1377, 0.0
        %v1757 = vmax.f32 %v1380, 0.0
        %v1758 = vmax.f32 %v1382, 0.0
        %v1759 = vmax.f32 %v1385, 0.0
        %v1760 = vmax.f32 %v1387, 0.0
        %v1761 = vmax.f32 %v1390, 0.0
        %v1762 = vmax.f32 %v1392, 0.0
        %v1763 = vmax.f32 %v1395, 0.0
        %v1764 = vmax.f32 %v1397, 0.0
        %v1765 = vmax.f32 %v1400, 0.0
        %v1766 = vmax.f32 %v1402, 0.0
        %v1767 = vmax.f32 %v1405, 0.0
        %v1768 = vmax.f32 %v1407, 0.0
        %v1769 = vmax.f32 %v1410, 0.0
        %v1770 = vmax.f32 %v1412, 0.0
        %v1771 = vmax.f32 %v1415, 0.0
        %v1772 = vmax.f32 %v1417, 0.0
        %v1773 = vmax.f32 %v1420, 0.0
        %v1774 = vmax.f32 %v1422, 0.0
        %v1775 = vmax.f32 %v1425, 0.0
        %v1776 = vmax.f32 %v1427, 0.0
        %v1777 = vmax.f32 %v1430, 0.0
        %v1778 = vmax.f32 %v1432, 0.0
        %v1779 = vmax.f32 %v1435, 0.0
        %v1780 = vmax.f32 %v1437, 0.0
        %v1781 = vmax.f32 %v1440, 0.0
        %v1782 = vmax.f32 %v1442, 0.0
        %v1783 = vmax.f32 %v1445, 0.0
        %v1784 = vmax.f32 %v1447, 0.0
        %v1785 = vmax.f32 %v1450, 0.0
        %v1786 = vmax.f32 %v1452, 0.0
        %v1787 = vmax.f32 %v1455, 0.0
        %v1788 = vmax.f32 %v1457, 0.0
        %v1789 = vmax.f32 %v1460, 0.0
        %v1790 = vmax.f32 %v1462, 0.0
        %v1791 = vmax.f32 %v1465, 0.0
        %v1792 = vmax.f32 %v1467, 0.0
        %v1793 = vmax.f32 %v1470, 0.0
        %v1794 = vmax.f32 %v1472, 0.0
        %v1795 = vmax.f32 %v1475, 0.0
        %v1796 = vmax.f32 %v1477, 0.0
        %v1797 = vmax.f32 %v1480, 0.0
        %v1798 = vmax.f32 %v1482, 0.0
        %v1799 = vmax.f32 %v1485, 0.0
        %v1800 = vmax.f32 %v1487, 0.0
        %v1801 = vmax.f32 %v1490, 0.0
        %v1802 = vmax.f32 %v1492, 0.0
        %v1803 = vmax.f32 %v1495, 0.0
        %v1804 = vmax.f32 %v1497, 0.0
        %v1805 = vmax.f32 %v1500, 0.0
        %v1806 = vmax.f32 %v1502, 0.0
        %v1807 = vmax.f32 %v1505, 0.0
        %v1808 = vmax.f32 %v1507, 0.0
        %v1809 = vmax.f32 %v1510, 0.0
        %v1810 = vmax.f32 %v1512, 0.0
        %v1811 = vperm.slane %v820, 0
        %v1812 = vadd.f32 %v1524, %v1811
        %v1813 = vadd.f32 %v1526, %v1811
        %v1814 = vadd.f32 %v1529, %v1811
        %v1815 = vadd.f32 %v1531, %v1811
        %v1816 = vadd.f32 %v1534, %v1811
        %v1817 = vadd.f32 %v1536, %v1811
        %v1818 = vadd.f32 %v1539, %v1811
        %v1819 = vadd.f32 %v1541, %v1811
        %v1820 = vadd.f32 %v1544, %v1811
        %v1821 = vadd.f32 %v1546, %v1811
        %v1822 = vadd.f32 %v1549, %v1811
        %v1823 = vadd.f32 %v1551, %v1811
        %v1824 = vadd.f32 %v1554, %v1811
        %v1825 = vadd.f32 %v1556, %v1811
        %v1826 = vadd.f32 %v1559, %v1811
        %v1827 = vadd.f32 %v1561, %v1811
        %v1828 = vadd.f32 %v1564, %v1811
        %v1829 = vadd.f32 %v1566, %v1811
        %v1830 = vadd.f32 %v1569, %v1811
        %v1831 = vadd.f32 %v1571, %v1811
        %v1832 = vadd.f32 %v1574, %v1811
        %v1833 = vadd.f32 %v1576, %v1811
        %v1834 = vadd.f32 %v1579, %v1811
        %v1835 = vadd.f32 %v1581, %v1811
        %v1836 = vadd.f32 %v1584, %v1811
        %v1837 = vadd.f32 %v1586, %v1811
        %v1838 = vadd.f32 %v1589, %v1811
        %v1839 = vadd.f32 %v1591, %v1811
        %v1840 = vadd.f32 %v1594, %v1811
        %v1841 = vadd.f32 %v1596, %v1811
        %v1842 = vadd.f32 %v1599, %v1811
        %v1843 = vadd.f32 %v1601, %v1811
        %v1844 = vadd.f32 %v1604, %v1811
        %v1845 = vadd.f32 %v1606, %v1811
        %v1846 = vadd.f32 %v1609, %v1811
        %v1847 = vadd.f32 %v1611, %v1811
        %v1848 = vadd.f32 %v1614, %v1811
        %v1849 = vadd.f32 %v1616, %v1811
        %v1850 = vadd.f32 %v1619, %v1811
        %v1851 = vadd.f32 %v1621, %v1811
        %v1852 = vadd.f32 %v1624, %v1811
        %v1853 = vadd.f32 %v1626, %v1811
        %v1854 = vadd.f32 %v1629, %v1811
        %v1855 = vadd.f32 %v1631, %v1811
        %v1856 = vadd.f32 %v1634, %v1811
        %v1857 = vadd.f32 %v1636, %v1811
        %v1858 = vadd.f32 %v1639, %v1811
        %v1859 = vadd.f32 %v1641, %v1811
        %v1860 = vadd.f32 %v1644, %v1811
        %v1861 = vadd.f32 %v1646, %v1811
        %v1862 = vadd.f32 %v1649, %v1811
        %v1863 = vadd.f32 %v1651, %v1811
        %v1864 = vadd.f32 %v1654, %v1811
        %v1865 = vadd.f32 %v1656, %v1811
        %v1866 = vadd.f32 %v1659, %v1811
        %v1867 = vadd.f32 %v1661, %v1811
        %v1868 = vadd.f32 %v1664, %v1811
        %v1869 = vadd.f32 %v1666, %v1811
        %v1870 = vadd.f32 %v1669, %v1811
        %v1871 = vadd.f32 %v1671, %v1811
        %v1872 = vadd.f32 %v1674, %v1811
        %v1873 = vadd.f32 %v1676, %v1811
        %v1874 = vadd.f32 %v1679, %v1811
        %v1875 = vadd.f32 %v1681, %v1811
        %v1876 = vmax.f32 %v1812, 0.0
        %v1877 = vmax.f32 %v1813, 0.0
        %v1878 = vmax.f32 %v1814, 0.0
        %v1879 = vmax.f32 %v1815, 0.0
        %v1880 = vmax.f32 %v1816, 0.0
        %v1881 = vmax.f32 %v1817, 0.0
        %v1882 = vmax.f32 %v1818, 0.0
        %v1883 = vmax.f32 %v1819, 0.0
        %v1884 = vmax.f32 %v1820, 0.0
        %v1885 = vmax.f32 %v1821, 0.0
        %v1886 = vmax.f32 %v1822, 0.0
        %v1887 = vmax.f32 %v1823, 0.0
        %v1888 = vmax.f32 %v1824, 0.0
        %v1889 = vmax.f32 %v1825, 0.0
        %v1890 = vmax.f32 %v1826, 0.0
        %v1891 = vmax.f32 %v1827, 0.0
        %v1892 = vmax.f32 %v1828, 0.0
        %v1893 = vmax.f32 %v1829, 0.0
        %v1894 = vmax.f32 %v1830, 0.0
        %v1895 = vmax.f32 %v1831, 0.0
        %v1896 = vmax.f32 %v1832, 0.0
        %v1897 = vmax.f32 %v1833, 0.0
        %v1898 = vmax.f32 %v1834, 0.0
        %v1899 = vmax.f32 %v1835, 0.0
        %v1900 = vmax.f32 %v1836, 0.0
        %v1901 = vmax.f32 %v1837, 0.0
        %v1902 = vmax.f32 %v1838, 0.0
        %v1903 = vmax.f32 %v1839, 0.0
        %v1904 = vmax.f32 %v1840, 0.0
        %v1905 = vmax.f32 %v1841, 0.0
        %v1906 = vmax.f32 %v1842, 0.0
        %v1907 = vmax.f32 %v1843, 0.0
        %v1908 = vmax.f32 %v1844, 0.0
        %v1909 = vmax.f32 %v1845, 0.0
        %v1910 = vmax.f32 %v1846, 0.0
        %v1911 = vmax.f32 %v1847, 0.0
        %v1912 = vmax.f32 %v1848, 0.0
        %v1913 = vmax.f32 %v1849, 0.0
        %v1914 = vmax.f32 %v1850, 0.0
        %v1915 = vmax.f32 %v1851, 0.0
        %v1916 = vmax.f32 %v1852, 0.0
        %v1917 = vmax.f32 %v1853, 0.0
        %v1918 = vmax.f32 %v1854, 0.0
        %v1919 = vmax.f32 %v1855, 0.0
        %v1920 = vmax.f32 %v1856, 0.0
        %v1921 = vmax.f32 %v1857, 0.0
        %v1922 = vmax.f32 %v1858, 0.0
        %v1923 = vmax.f32 %v1859, 0.0
        %v1924 = vmax.f32 %v1860, 0.0
        %v1925 = vmax.f32 %v1861, 0.0
        %v1926 = vmax.f32 %v1862, 0.0
        %v1927 = vmax.f32 %v1863, 0.0
        %v1928 = vmax.f32 %v1864, 0.0
        %v1929 = vmax.f32 %v1865, 0.0
        %v1930 = vmax.f32 %v1866, 0.0
        %v1931 = vmax.f32 %v1867, 0.0
        %v1932 = vmax.f32 %v1868, 0.0
        %v1933 = vmax.f32 %v1869, 0.0
        %v1934 = vmax.f32 %v1870, 0.0
        %v1935 = vmax.f32 %v1871, 0.0
        %v1936 = vmax.f32 %v1872, 0.0
        %v1937 = vmax.f32 %v1873, 0.0
        %v1938 = vmax.f32 %v1874, 0.0
        %v1939 = vmax.f32 %v1875, 0.0
        %v1940 = vpack.c.bf16 %v1877, %v1876
        %v1941 = vpack.c.bf16 %v1879, %v1878
        %v1942 = vpack.c.bf16 %v1881, %v1880
        %v1943 = vpack.c.bf16 %v1883, %v1882
        %v1944 = vpack.c.bf16 %v1885, %v1884
        %v1945 = vpack.c.bf16 %v1887, %v1886
        %v1946 = vpack.c.bf16 %v1889, %v1888
        %v1947 = vpack.c.bf16 %v1891, %v1890
        %v1948 = vpack.c.bf16 %v1893, %v1892
        %v1949 = vpack.c.bf16 %v1895, %v1894
        %v1950 = vpack.c.bf16 %v1897, %v1896
        %v1951 = vpack.c.bf16 %v1899, %v1898
        %v1952 = vpack.c.bf16 %v1901, %v1900
        %v1953 = vpack.c.bf16 %v1903, %v1902
        %v1954 = vpack.c.bf16 %v1905, %v1904
        %v1955 = vpack.c.bf16 %v1907, %v1906
        %v1956 = vpack.c.bf16 %v1909, %v1908
        %v1957 = vpack.c.bf16 %v1911, %v1910
        %v1958 = vpack.c.bf16 %v1913, %v1912
        %v1959 = vpack.c.bf16 %v1915, %v1914
        %v1960 = vpack.c.bf16 %v1917, %v1916
        %v1961 = vpack.c.bf16 %v1919, %v1918
        %v1962 = vpack.c.bf16 %v1921, %v1920
        %v1963 = vpack.c.bf16 %v1923, %v1922
        %v1964 = vpack.c.bf16 %v1925, %v1924
        %v1965 = vpack.c.bf16 %v1927, %v1926
        %v1966 = vpack.c.bf16 %v1929, %v1928
        %v1967 = vpack.c.bf16 %v1931, %v1930
        %v1968 = vpack.c.bf16 %v1933, %v1932
        %v1969 = vpack.c.bf16 %v1935, %v1934
        %v1970 = vpack.c.bf16 %v1937, %v1936
        %v1971 = vpack.c.bf16 %v1939, %v1938
        %v1972 = vperm.slane %v820, 1
        %v1989 = vunpack.c.l.b16 %v628
        %v1990 = vunpack.c.l.b16 %v629
        %v1991 = vunpack.c.l.b16 %v630
        %v1992 = vunpack.c.l.b16 %v631
        %v1993 = vunpack.c.l.b16 %v632
        %v1994 = vunpack.c.l.b16 %v633
        %v1995 = vunpack.c.l.b16 %v634
        %v1996 = vunpack.c.l.b16 %v635
        %v1997 = vunpack.c.l.b16 %v636
        %v1998 = vunpack.c.l.b16 %v637
        %v1999 = vunpack.c.l.b16 %v638
        %v2000 = vunpack.c.l.b16 %v639
        %v2001 = vunpack.c.l.b16 %v640
        %v2002 = vunpack.c.l.b16 %v641
        %v2003 = vunpack.c.l.b16 %v642
        %v2004 = vunpack.c.l.b16 %v643
        %v2005 = vpack.c.b16 %v1990, %v1989
        %v2006 = vpack.c.b16 %v1992, %v1991
        %v2007 = vpack.c.b16 %v1994, %v1993
        %v2008 = vpack.c.b16 %v1996, %v1995
        %v2009 = vpack.c.b16 %v1998, %v1997
        %v2010 = vpack.c.b16 %v2000, %v1999
        %v2011 = vpack.c.b16 %v2002, %v2001
        %v2012 = vpack.c.b16 %v2004, %v2003
        %2021 = vmatpush.bf16.msra.mxu0 %v2012
        %2022 = vmatpush.bf16.msra.mxu0 %v2011
        %2023 = vmatpush.bf16.msra.mxu0 %v2010
        %2024 = vmatpush.bf16.msra.mxu0 %v2009
        %2025 = vmatpush.bf16.msra.mxu0 %v2008
        %2026 = vmatpush.bf16.msra.mxu0 %v2007
        %2027 = vmatpush.bf16.msra.mxu0 %v2006
        %2028 = vmatpush.bf16.msra.mxu0 %v2005
        %2029 = vmatmul.bf16.gmra.mxu0 %v1940
        %v2030 = vpop.f32.mrf.mxu0
        %v2031 = vadd.f32 %v1972, %v2030
        %v2032 = vpop.f32.mrf.mxu0
        %v2033 = vadd.f32 %v1972, %v2032
        %2034 = vmatmul.bf16.gmra.mxu0 %v1941
        %v2035 = vpop.f32.mrf.mxu0
        %v2036 = vadd.f32 %v1972, %v2035
        %v2037 = vpop.f32.mrf.mxu0
        %v2038 = vadd.f32 %v1972, %v2037
        %2039 = vmatmul.bf16.gmra.mxu0 %v1942
        %v2040 = vpop.f32.mrf.mxu0
        %v2041 = vadd.f32 %v1972, %v2040
        %v2042 = vpop.f32.mrf.mxu0
        %v2043 = vadd.f32 %v1972, %v2042
        %2044 = vmatmul.bf16.gmra.mxu0 %v1943
        %v2045 = vpop.f32.mrf.mxu0
        %v2046 = vadd.f32 %v1972, %v2045
        %v2047 = vpop.f32.mrf.mxu0
        %v2048 = vadd.f32 %v1972, %v2047
        %2049 = vmatmul.bf16.gmra.mxu0 %v1944
        %v2050 = vpop.f32.mrf.mxu0
        %v2051 = vadd.f32 %v1972, %v2050
        %v2052 = vpop.f32.mrf.mxu0
        %v2053 = vadd.f32 %v1972, %v2052
        %2054 = vmatmul.bf16.gmra.mxu0 %v1945
        %v2055 = vpop.f32.mrf.mxu0
        %v2056 = vadd.f32 %v1972, %v2055
        %v2057 = vpop.f32.mrf.mxu0
        %v2058 = vadd.f32 %v1972, %v2057
        %2059 = vmatmul.bf16.gmra.mxu0 %v1946
        %v2060 = vpop.f32.mrf.mxu0
        %v2061 = vadd.f32 %v1972, %v2060
        %v2062 = vpop.f32.mrf.mxu0
        %v2063 = vadd.f32 %v1972, %v2062
        %2064 = vmatmul.bf16.gmra.mxu0 %v1947
        %v2065 = vpop.f32.mrf.mxu0
        %v2066 = vadd.f32 %v1972, %v2065
        %v2067 = vpop.f32.mrf.mxu0
        %v2068 = vadd.f32 %v1972, %v2067
        %2069 = vmatmul.bf16.gmra.mxu0 %v1948
        %v2070 = vpop.f32.mrf.mxu0
        %v2071 = vadd.f32 %v1972, %v2070
        %v2072 = vpop.f32.mrf.mxu0
        %v2073 = vadd.f32 %v1972, %v2072
        %2074 = vmatmul.bf16.gmra.mxu0 %v1949
        %v2075 = vpop.f32.mrf.mxu0
        %v2076 = vadd.f32 %v1972, %v2075
        %v2077 = vpop.f32.mrf.mxu0
        %v2078 = vadd.f32 %v1972, %v2077
        %2079 = vmatmul.bf16.gmra.mxu0 %v1950
        %v2080 = vpop.f32.mrf.mxu0
        %v2081 = vadd.f32 %v1972, %v2080
        %v2082 = vpop.f32.mrf.mxu0
        %v2083 = vadd.f32 %v1972, %v2082
        %2084 = vmatmul.bf16.gmra.mxu0 %v1951
        %v2085 = vpop.f32.mrf.mxu0
        %v2086 = vadd.f32 %v1972, %v2085
        %v2087 = vpop.f32.mrf.mxu0
        %v2088 = vadd.f32 %v1972, %v2087
        %2089 = vmatmul.bf16.gmra.mxu0 %v1952
        %v2090 = vpop.f32.mrf.mxu0
        %v2091 = vadd.f32 %v1972, %v2090
        %v2092 = vpop.f32.mrf.mxu0
        %v2093 = vadd.f32 %v1972, %v2092
        %2094 = vmatmul.bf16.gmra.mxu0 %v1953
        %v2095 = vpop.f32.mrf.mxu0
        %v2096 = vadd.f32 %v1972, %v2095
        %v2097 = vpop.f32.mrf.mxu0
        %v2098 = vadd.f32 %v1972, %v2097
        %2099 = vmatmul.bf16.gmra.mxu0 %v1954
        %v2100 = vpop.f32.mrf.mxu0
        %v2101 = vadd.f32 %v1972, %v2100
        %v2102 = vpop.f32.mrf.mxu0
        %v2103 = vadd.f32 %v1972, %v2102
        %2104 = vmatmul.bf16.gmra.mxu0 %v1955
        %v2105 = vpop.f32.mrf.mxu0
        %v2106 = vadd.f32 %v1972, %v2105
        %v2107 = vpop.f32.mrf.mxu0
        %v2108 = vadd.f32 %v1972, %v2107
        %2109 = vmatmul.bf16.gmra.mxu0 %v1956
        %v2110 = vpop.f32.mrf.mxu0
        %v2111 = vadd.f32 %v1972, %v2110
        %v2112 = vpop.f32.mrf.mxu0
        %v2113 = vadd.f32 %v1972, %v2112
        %2114 = vmatmul.bf16.gmra.mxu0 %v1957
        %v2115 = vpop.f32.mrf.mxu0
        %v2116 = vadd.f32 %v1972, %v2115
        %v2117 = vpop.f32.mrf.mxu0
        %v2118 = vadd.f32 %v1972, %v2117
        %2119 = vmatmul.bf16.gmra.mxu0 %v1958
        %v2120 = vpop.f32.mrf.mxu0
        %v2121 = vadd.f32 %v1972, %v2120
        %v2122 = vpop.f32.mrf.mxu0
        %v2123 = vadd.f32 %v1972, %v2122
        %2124 = vmatmul.bf16.gmra.mxu0 %v1959
        %v2125 = vpop.f32.mrf.mxu0
        %v2126 = vadd.f32 %v1972, %v2125
        %v2127 = vpop.f32.mrf.mxu0
        %v2128 = vadd.f32 %v1972, %v2127
        %2129 = vmatmul.bf16.gmra.mxu0 %v1960
        %v2130 = vpop.f32.mrf.mxu0
        %v2131 = vadd.f32 %v1972, %v2130
        %v2132 = vpop.f32.mrf.mxu0
        %v2133 = vadd.f32 %v1972, %v2132
        %2134 = vmatmul.bf16.gmra.mxu0 %v1961
        %v2135 = vpop.f32.mrf.mxu0
        %v2136 = vadd.f32 %v1972, %v2135
        %v2137 = vpop.f32.mrf.mxu0
        %v2138 = vadd.f32 %v1972, %v2137
        %2139 = vmatmul.bf16.gmra.mxu0 %v1962
        %v2140 = vpop.f32.mrf.mxu0
        %v2141 = vadd.f32 %v1972, %v2140
        %v2142 = vpop.f32.mrf.mxu0
        %v2143 = vadd.f32 %v1972, %v2142
        %2144 = vmatmul.bf16.gmra.mxu0 %v1963
        %v2145 = vpop.f32.mrf.mxu0
        %v2146 = vadd.f32 %v1972, %v2145
        %v2147 = vpop.f32.mrf.mxu0
        %v2148 = vadd.f32 %v1972, %v2147
        %2149 = vmatmul.bf16.gmra.mxu0 %v1964
        %v2150 = vpop.f32.mrf.mxu0
        %v2151 = vadd.f32 %v1972, %v2150
        %v2152 = vpop.f32.mrf.mxu0
        %v2153 = vadd.f32 %v1972, %v2152
        %2154 = vmatmul.bf16.gmra.mxu0 %v1965
        %v2155 = vpop.f32.mrf.mxu0
        %v2156 = vadd.f32 %v1972, %v2155
        %v2157 = vpop.f32.mrf.mxu0
        %v2158 = vadd.f32 %v1972, %v2157
        %2159 = vmatmul.bf16.gmra.mxu0 %v1966
        %v2160 = vpop.f32.mrf.mxu0
        %v2161 = vadd.f32 %v1972, %v2160
        %v2162 = vpop.f32.mrf.mxu0
        %v2163 = vadd.f32 %v1972, %v2162
        %2164 = vmatmul.bf16.gmra.mxu0 %v1967
        %v2165 = vpop.f32.mrf.mxu0
        %v2166 = vadd.f32 %v1972, %v2165
        %v2167 = vpop.f32.mrf.mxu0
        %v2168 = vadd.f32 %v1972, %v2167
        %2169 = vmatmul.bf16.gmra.mxu0 %v1968
        %v2170 = vpop.f32.mrf.mxu0
        %v2171 = vadd.f32 %v1972, %v2170
        %v2172 = vpop.f32.mrf.mxu0
        %v2173 = vadd.f32 %v1972, %v2172
        %2174 = vmatmul.bf16.gmra.mxu0 %v1969
        %v2175 = vpop.f32.mrf.mxu0
        %v2176 = vadd.f32 %v1972, %v2175
        %v2177 = vpop.f32.mrf.mxu0
        %v2178 = vadd.f32 %v1972, %v2177
        %2179 = vmatmul.bf16.gmra.mxu0 %v1970
        %v2180 = vpop.f32.mrf.mxu0
        %v2181 = vadd.f32 %v1972, %v2180
        %v2182 = vpop.f32.mrf.mxu0
        %v2183 = vadd.f32 %v1972, %v2182
        %2184 = vmatmul.bf16.gmra.mxu0 %v1971
        %v2185 = vpop.f32.mrf.mxu0
        %v2186 = vadd.f32 %v1972, %v2185
        %v2187 = vpop.f32.mrf.mxu0
        %v2188 = vadd.f32 %v1972, %v2187
        %2189 = vdwg.mxu0
        %v2190 = vmax.f32 %v2031, 0.0
        %v2191 = vmax.f32 %v2033, 0.0
        %v2192 = vmax.f32 %v2036, 0.0
        %v2193 = vmax.f32 %v2038, 0.0
        %v2194 = vmax.f32 %v2041, 0.0
        %v2195 = vmax.f32 %v2043, 0.0
        %v2196 = vmax.f32 %v2046, 0.0
        %v2197 = vmax.f32 %v2048, 0.0
        %v2198 = vmax.f32 %v2051, 0.0
        %v2199 = vmax.f32 %v2053, 0.0
        %v2200 = vmax.f32 %v2056, 0.0
        %v2201 = vmax.f32 %v2058, 0.0
        %v2202 = vmax.f32 %v2061, 0.0
        %v2203 = vmax.f32 %v2063, 0.0
        %v2204 = vmax.f32 %v2066, 0.0
        %v2205 = vmax.f32 %v2068, 0.0
        %v2206 = vmax.f32 %v2071, 0.0
        %v2207 = vmax.f32 %v2073, 0.0
        %v2208 = vmax.f32 %v2076, 0.0
        %v2209 = vmax.f32 %v2078, 0.0
        %v2210 = vmax.f32 %v2081, 0.0
        %v2211 = vmax.f32 %v2083, 0.0
        %v2212 = vmax.f32 %v2086, 0.0
        %v2213 = vmax.f32 %v2088, 0.0
        %v2214 = vmax.f32 %v2091, 0.0
        %v2215 = vmax.f32 %v2093, 0.0
        %v2216 = vmax.f32 %v2096, 0.0
        %v2217 = vmax.f32 %v2098, 0.0
        %v2218 = vmax.f32 %v2101, 0.0
        %v2219 = vmax.f32 %v2103, 0.0
        %v2220 = vmax.f32 %v2106, 0.0
        %v2221 = vmax.f32 %v2108, 0.0
        %v2222 = vmax.f32 %v2111, 0.0
        %v2223 = vmax.f32 %v2113, 0.0
        %v2224 = vmax.f32 %v2116, 0.0
        %v2225 = vmax.f32 %v2118, 0.0
        %v2226 = vmax.f32 %v2121, 0.0
        %v2227 = vmax.f32 %v2123, 0.0
        %v2228 = vmax.f32 %v2126, 0.0
        %v2229 = vmax.f32 %v2128, 0.0
        %v2230 = vmax.f32 %v2131, 0.0
        %v2231 = vmax.f32 %v2133, 0.0
        %v2232 = vmax.f32 %v2136, 0.0
        %v2233 = vmax.f32 %v2138, 0.0
        %v2234 = vmax.f32 %v2141, 0.0
        %v2235 = vmax.f32 %v2143, 0.0
        %v2236 = vmax.f32 %v2146, 0.0
        %v2237 = vmax.f32 %v2148, 0.0
        %v2238 = vmax.f32 %v2151, 0.0
        %v2239 = vmax.f32 %v2153, 0.0
        %v2240 = vmax.f32 %v2156, 0.0
        %v2241 = vmax.f32 %v2158, 0.0
        %v2242 = vmax.f32 %v2161, 0.0
        %v2243 = vmax.f32 %v2163, 0.0
        %v2244 = vmax.f32 %v2166, 0.0
        %v2245 = vmax.f32 %v2168, 0.0
        %v2246 = vmax.f32 %v2171, 0.0
        %v2247 = vmax.f32 %v2173, 0.0
        %v2248 = vmax.f32 %v2176, 0.0
        %v2249 = vmax.f32 %v2178, 0.0
        %v2250 = vmax.f32 %v2181, 0.0
        %v2251 = vmax.f32 %v2183, 0.0
        %v2252 = vmax.f32 %v2186, 0.0
        %v2253 = vmax.f32 %v2188, 0.0
        %v2254 = vmul.f32 %v1683, %v1747
        %v2255 = vmul.f32 %v1684, %v1748
        %v2256 = vmul.f32 %v1685, %v1749
        %v2257 = vmul.f32 %v1686, %v1750
        %v2258 = vmul.f32 %v1687, %v1751
        %v2259 = vmul.f32 %v1688, %v1752
        %v2260 = vmul.f32 %v1689, %v1753
        %v2261 = vmul.f32 %v1690, %v1754
        %v2262 = vmul.f32 %v1691, %v1755
        %v2263 = vmul.f32 %v1692, %v1756
        %v2264 = vmul.f32 %v1693, %v1757
        %v2265 = vmul.f32 %v1694, %v1758
        %v2266 = vmul.f32 %v1695, %v1759
        %v2267 = vmul.f32 %v1696, %v1760
        %v2268 = vmul.f32 %v1697, %v1761
        %v2269 = vmul.f32 %v1698, %v1762
        %v2270 = vmul.f32 %v1699, %v1763
        %v2271 = vmul.f32 %v1700, %v1764
        %v2272 = vmul.f32 %v1701, %v1765
        %v2273 = vmul.f32 %v1702, %v1766
        %v2274 = vmul.f32 %v1703, %v1767
        %v2275 = vmul.f32 %v1704, %v1768
        %v2276 = vmul.f32 %v1705, %v1769
        %v2277 = vmul.f32 %v1706, %v1770
        %v2278 = vmul.f32 %v1707, %v1771
        %v2279 = vmul.f32 %v1708, %v1772
        %v2280 = vmul.f32 %v1709, %v1773
        %v2281 = vmul.f32 %v1710, %v1774
        %v2282 = vmul.f32 %v1711, %v1775
        %v2283 = vmul.f32 %v1712, %v1776
        %v2284 = vmul.f32 %v1713, %v1777
        %v2285 = vmul.f32 %v1714, %v1778
        %v2286 = vmul.f32 %v1715, %v1779
        %v2287 = vmul.f32 %v1716, %v1780
        %v2288 = vmul.f32 %v1717, %v1781
        %v2289 = vmul.f32 %v1718, %v1782
        %v2290 = vmul.f32 %v1719, %v1783
        %v2291 = vmul.f32 %v1720, %v1784
        %v2292 = vmul.f32 %v1721, %v1785
        %v2293 = vmul.f32 %v1722, %v1786
        %v2294 = vmul.f32 %v1723, %v1787
        %v2295 = vmul.f32 %v1724, %v1788
        %v2296 = vmul.f32 %v1725, %v1789
        %v2297 = vmul.f32 %v1726, %v1790
        %v2298 = vmul.f32 %v1727, %v1791
        %v2299 = vmul.f32 %v1728, %v1792
        %v2300 = vmul.f32 %v1729, %v1793
        %v2301 = vmul.f32 %v1730, %v1794
        %v2302 = vmul.f32 %v1731, %v1795
        %v2303 = vmul.f32 %v1732, %v1796
        %v2304 = vmul.f32 %v1733, %v1797
        %v2305 = vmul.f32 %v1734, %v1798
        %v2306 = vmul.f32 %v1735, %v1799
        %v2307 = vmul.f32 %v1736, %v1800
        %v2308 = vmul.f32 %v1737, %v1801
        %v2309 = vmul.f32 %v1738, %v1802
        %v2310 = vmul.f32 %v1739, %v1803
        %v2311 = vmul.f32 %v1740, %v1804
        %v2312 = vmul.f32 %v1741, %v1805
        %v2313 = vmul.f32 %v1742, %v1806
        %v2314 = vmul.f32 %v1743, %v1807
        %v2315 = vmul.f32 %v1744, %v1808
        %v2316 = vmul.f32 %v1745, %v1809
        %v2317 = vmul.f32 %v1746, %v1810
        %v2318 = vadd.f32 %v1683, %v1684
        %v2319 = vrot.slane %v2318, 4
        %v2320 = vadd.f32 %v2318, %v2319
        %v2321 = vrot.slane %v2320, 2
        %v2322 = vadd.f32 %v2320, %v2321
        %v2323 = vrot.slane %v2322, 1
        %v2324 = vadd.f32 %v2322, %v2323
        %v2325 = vadd.f32 %v1685, %v1686
        %v2326 = vrot.slane %v2325, 4
        %v2327 = vadd.f32 %v2325, %v2326
        %v2328 = vrot.slane %v2327, 2
        %v2329 = vadd.f32 %v2327, %v2328
        %v2330 = vrot.slane %v2329, 1
        %v2331 = vadd.f32 %v2329, %v2330
        %v2332 = vadd.f32 %v1687, %v1688
        %v2333 = vrot.slane %v2332, 4
        %v2334 = vadd.f32 %v2332, %v2333
        %v2335 = vrot.slane %v2334, 2
        %v2336 = vadd.f32 %v2334, %v2335
        %v2337 = vrot.slane %v2336, 1
        %v2338 = vadd.f32 %v2336, %v2337
        %v2339 = vadd.f32 %v1689, %v1690
        %v2340 = vrot.slane %v2339, 4
        %v2341 = vadd.f32 %v2339, %v2340
        %v2342 = vrot.slane %v2341, 2
        %v2343 = vadd.f32 %v2341, %v2342
        %v2344 = vrot.slane %v2343, 1
        %v2345 = vadd.f32 %v2343, %v2344
        %v2346 = vadd.f32 %v1691, %v1692
        %v2347 = vrot.slane %v2346, 4
        %v2348 = vadd.f32 %v2346, %v2347
        %v2349 = vrot.slane %v2348, 2
        %v2350 = vadd.f32 %v2348, %v2349
        %v2351 = vrot.slane %v2350, 1
        %v2352 = vadd.f32 %v2350, %v2351
        %v2353 = vadd.f32 %v1693, %v1694
        %v2354 = vrot.slane %v2353, 4
        %v2355 = vadd.f32 %v2353, %v2354
        %v2356 = vrot.slane %v2355, 2
        %v2357 = vadd.f32 %v2355, %v2356
        %v2358 = vrot.slane %v2357, 1
        %v2359 = vadd.f32 %v2357, %v2358
        %v2360 = vadd.f32 %v1695, %v1696
        %v2361 = vrot.slane %v2360, 4
        %v2362 = vadd.f32 %v2360, %v2361
        %v2363 = vrot.slane %v2362, 2
        %v2364 = vadd.f32 %v2362, %v2363
        %v2365 = vrot.slane %v2364, 1
        %v2366 = vadd.f32 %v2364, %v2365
        %v2367 = vadd.f32 %v1697, %v1698
        %v2368 = vrot.slane %v2367, 4
        %v2369 = vadd.f32 %v2367, %v2368
        %v2370 = vrot.slane %v2369, 2
        %v2371 = vadd.f32 %v2369, %v2370
        %v2372 = vrot.slane %v2371, 1
        %v2373 = vadd.f32 %v2371, %v2372
        %v2374 = vadd.f32 %v1699, %v1700
        %v2375 = vrot.slane %v2374, 4
        %v2376 = vadd.f32 %v2374, %v2375
        %v2377 = vrot.slane %v2376, 2
        %v2378 = vadd.f32 %v2376, %v2377
        %v2379 = vrot.slane %v2378, 1
        %v2380 = vadd.f32 %v2378, %v2379
        %v2381 = vadd.f32 %v1701, %v1702
        %v2382 = vrot.slane %v2381, 4
        %v2383 = vadd.f32 %v2381, %v2382
        %v2384 = vrot.slane %v2383, 2
        %v2385 = vadd.f32 %v2383, %v2384
        %v2386 = vrot.slane %v2385, 1
        %v2387 = vadd.f32 %v2385, %v2386
        %v2388 = vadd.f32 %v1703, %v1704
        %v2389 = vrot.slane %v2388, 4
        %v2390 = vadd.f32 %v2388, %v2389
        %v2391 = vrot.slane %v2390, 2
        %v2392 = vadd.f32 %v2390, %v2391
        %v2393 = vrot.slane %v2392, 1
        %v2394 = vadd.f32 %v2392, %v2393
        %v2395 = vadd.f32 %v1705, %v1706
        %v2396 = vrot.slane %v2395, 4
        %v2397 = vadd.f32 %v2395, %v2396
        %v2398 = vrot.slane %v2397, 2
        %v2399 = vadd.f32 %v2397, %v2398
        %v2400 = vrot.slane %v2399, 1
        %v2401 = vadd.f32 %v2399, %v2400
        %v2402 = vadd.f32 %v1707, %v1708
        %v2403 = vrot.slane %v2402, 4
        %v2404 = vadd.f32 %v2402, %v2403
        %v2405 = vrot.slane %v2404, 2
        %v2406 = vadd.f32 %v2404, %v2405
        %v2407 = vrot.slane %v2406, 1
        %v2408 = vadd.f32 %v2406, %v2407
        %v2409 = vadd.f32 %v1709, %v1710
        %v2410 = vrot.slane %v2409, 4
        %v2411 = vadd.f32 %v2409, %v2410
        %v2412 = vrot.slane %v2411, 2
        %v2413 = vadd.f32 %v2411, %v2412
        %v2414 = vrot.slane %v2413, 1
        %v2415 = vadd.f32 %v2413, %v2414
        %v2416 = vadd.f32 %v1711, %v1712
        %v2417 = vrot.slane %v2416, 4
        %v2418 = vadd.f32 %v2416, %v2417
        %v2419 = vrot.slane %v2418, 2
        %v2420 = vadd.f32 %v2418, %v2419
        %v2421 = vrot.slane %v2420, 1
        %v2422 = vadd.f32 %v2420, %v2421
        %v2423 = vadd.f32 %v1713, %v1714
        %v2424 = vrot.slane %v2423, 4
        %v2425 = vadd.f32 %v2423, %v2424
        %v2426 = vrot.slane %v2425, 2
        %v2427 = vadd.f32 %v2425, %v2426
        %v2428 = vrot.slane %v2427, 1
        %v2429 = vadd.f32 %v2427, %v2428
        %v2430 = vadd.f32 %v1715, %v1716
        %v2431 = vrot.slane %v2430, 4
        %v2432 = vadd.f32 %v2430, %v2431
        %v2433 = vrot.slane %v2432, 2
        %v2434 = vadd.f32 %v2432, %v2433
        %v2435 = vrot.slane %v2434, 1
        %v2436 = vadd.f32 %v2434, %v2435
        %v2437 = vadd.f32 %v1717, %v1718
        %v2438 = vrot.slane %v2437, 4
        %v2439 = vadd.f32 %v2437, %v2438
        %v2440 = vrot.slane %v2439, 2
        %v2441 = vadd.f32 %v2439, %v2440
        %v2442 = vrot.slane %v2441, 1
        %v2443 = vadd.f32 %v2441, %v2442
        %v2444 = vadd.f32 %v1719, %v1720
        %v2445 = vrot.slane %v2444, 4
        %v2446 = vadd.f32 %v2444, %v2445
        %v2447 = vrot.slane %v2446, 2
        %v2448 = vadd.f32 %v2446, %v2447
        %v2449 = vrot.slane %v2448, 1
        %v2450 = vadd.f32 %v2448, %v2449
        %v2451 = vadd.f32 %v1721, %v1722
        %v2452 = vrot.slane %v2451, 4
        %v2453 = vadd.f32 %v2451, %v2452
        %v2454 = vrot.slane %v2453, 2
        %v2455 = vadd.f32 %v2453, %v2454
        %v2456 = vrot.slane %v2455, 1
        %v2457 = vadd.f32 %v2455, %v2456
        %v2458 = vadd.f32 %v1723, %v1724
        %v2459 = vrot.slane %v2458, 4
        %v2460 = vadd.f32 %v2458, %v2459
        %v2461 = vrot.slane %v2460, 2
        %v2462 = vadd.f32 %v2460, %v2461
        %v2463 = vrot.slane %v2462, 1
        %v2464 = vadd.f32 %v2462, %v2463
        %v2465 = vadd.f32 %v1725, %v1726
        %v2466 = vrot.slane %v2465, 4
        %v2467 = vadd.f32 %v2465, %v2466
        %v2468 = vrot.slane %v2467, 2
        %v2469 = vadd.f32 %v2467, %v2468
        %v2470 = vrot.slane %v2469, 1
        %v2471 = vadd.f32 %v2469, %v2470
        %v2472 = vadd.f32 %v1727, %v1728
        %v2473 = vrot.slane %v2472, 4
        %v2474 = vadd.f32 %v2472, %v2473
        %v2475 = vrot.slane %v2474, 2
        %v2476 = vadd.f32 %v2474, %v2475
        %v2477 = vrot.slane %v2476, 1
        %v2478 = vadd.f32 %v2476, %v2477
        %v2479 = vadd.f32 %v1729, %v1730
        %v2480 = vrot.slane %v2479, 4
        %v2481 = vadd.f32 %v2479, %v2480
        %v2482 = vrot.slane %v2481, 2
        %v2483 = vadd.f32 %v2481, %v2482
        %v2484 = vrot.slane %v2483, 1
        %v2485 = vadd.f32 %v2483, %v2484
        %v2486 = vadd.f32 %v1731, %v1732
        %v2487 = vrot.slane %v2486, 4
        %v2488 = vadd.f32 %v2486, %v2487
        %v2489 = vrot.slane %v2488, 2
        %v2490 = vadd.f32 %v2488, %v2489
        %v2491 = vrot.slane %v2490, 1
        %v2492 = vadd.f32 %v2490, %v2491
        %v2493 = vadd.f32 %v1733, %v1734
        %v2494 = vrot.slane %v2493, 4
        %v2495 = vadd.f32 %v2493, %v2494
        %v2496 = vrot.slane %v2495, 2
        %v2497 = vadd.f32 %v2495, %v2496
        %v2498 = vrot.slane %v2497, 1
        %v2499 = vadd.f32 %v2497, %v2498
        %v2500 = vadd.f32 %v1735, %v1736
        %v2501 = vrot.slane %v2500, 4
        %v2502 = vadd.f32 %v2500, %v2501
        %v2503 = vrot.slane %v2502, 2
        %v2504 = vadd.f32 %v2502, %v2503
        %v2505 = vrot.slane %v2504, 1
        %v2506 = vadd.f32 %v2504, %v2505
        %v2507 = vadd.f32 %v1737, %v1738
        %v2508 = vrot.slane %v2507, 4
        %v2509 = vadd.f32 %v2507, %v2508
        %v2510 = vrot.slane %v2509, 2
        %v2511 = vadd.f32 %v2509, %v2510
        %v2512 = vrot.slane %v2511, 1
        %v2513 = vadd.f32 %v2511, %v2512
        %v2514 = vadd.f32 %v1739, %v1740
        %v2515 = vrot.slane %v2514, 4
        %v2516 = vadd.f32 %v2514, %v2515
        %v2517 = vrot.slane %v2516, 2
        %v2518 = vadd.f32 %v2516, %v2517
        %v2519 = vrot.slane %v2518, 1
        %v2520 = vadd.f32 %v2518, %v2519
        %v2521 = vadd.f32 %v1741, %v1742
        %v2522 = vrot.slane %v2521, 4
        %v2523 = vadd.f32 %v2521, %v2522
        %v2524 = vrot.slane %v2523, 2
        %v2525 = vadd.f32 %v2523, %v2524
        %v2526 = vrot.slane %v2525, 1
        %v2527 = vadd.f32 %v2525, %v2526
        %v2528 = vadd.f32 %v1743, %v1744
        %v2529 = vrot.slane %v2528, 4
        %v2530 = vadd.f32 %v2528, %v2529
        %v2531 = vrot.slane %v2530, 2
        %v2532 = vadd.f32 %v2530, %v2531
        %v2533 = vrot.slane %v2532, 1
        %v2534 = vadd.f32 %v2532, %v2533
        %v2535 = vadd.f32 %v1745, %v1746
        %v2536 = vrot.slane %v2535, 4
        %v2537 = vadd.f32 %v2535, %v2536
        %v2538 = vrot.slane %v2537, 2
        %v2539 = vadd.f32 %v2537, %v2538
        %v2540 = vrot.slane %v2539, 1
        %v2541 = vadd.f32 %v2539, %v2540
        %v2542 = vmul.f32 %v2324, 0.0625
        %v2543 = vmul.f32 %v2331, 0.0625
        %v2544 = vmul.f32 %v2338, 0.0625
        %v2545 = vmul.f32 %v2345, 0.0625
        %v2546 = vmul.f32 %v2352, 0.0625
        %v2547 = vmul.f32 %v2359, 0.0625
        %v2548 = vmul.f32 %v2366, 0.0625
        %v2549 = vmul.f32 %v2373, 0.0625
        %v2550 = vmul.f32 %v2380, 0.0625
        %v2551 = vmul.f32 %v2387, 0.0625
        %v2552 = vmul.f32 %v2394, 0.0625
        %v2553 = vmul.f32 %v2401, 0.0625
        %v2554 = vmul.f32 %v2408, 0.0625
        %v2555 = vmul.f32 %v2415, 0.0625
        %v2556 = vmul.f32 %v2422, 0.0625
        %v2557 = vmul.f32 %v2429, 0.0625
        %v2558 = vmul.f32 %v2436, 0.0625
        %v2559 = vmul.f32 %v2443, 0.0625
        %v2560 = vmul.f32 %v2450, 0.0625
        %v2561 = vmul.f32 %v2457, 0.0625
        %v2562 = vmul.f32 %v2464, 0.0625
        %v2563 = vmul.f32 %v2471, 0.0625
        %v2564 = vmul.f32 %v2478, 0.0625
        %v2565 = vmul.f32 %v2485, 0.0625
        %v2566 = vmul.f32 %v2492, 0.0625
        %v2567 = vmul.f32 %v2499, 0.0625
        %v2568 = vmul.f32 %v2506, 0.0625
        %v2569 = vmul.f32 %v2513, 0.0625
        %v2570 = vmul.f32 %v2520, 0.0625
        %v2571 = vmul.f32 %v2527, 0.0625
        %v2572 = vmul.f32 %v2534, 0.0625
        %v2573 = vmul.f32 %v2541, 0.0625
        %v2574 = vadd.f32 %v1747, %v1748
        %v2575 = vrot.slane %v2574, 4
        %v2576 = vadd.f32 %v2574, %v2575
        %v2577 = vrot.slane %v2576, 2
        %v2578 = vadd.f32 %v2576, %v2577
        %v2579 = vrot.slane %v2578, 1
        %v2580 = vadd.f32 %v2578, %v2579
        %v2581 = vadd.f32 %v1749, %v1750
        %v2582 = vrot.slane %v2581, 4
        %v2583 = vadd.f32 %v2581, %v2582
        %v2584 = vrot.slane %v2583, 2
        %v2585 = vadd.f32 %v2583, %v2584
        %v2586 = vrot.slane %v2585, 1
        %v2587 = vadd.f32 %v2585, %v2586
        %v2588 = vadd.f32 %v1751, %v1752
        %v2589 = vrot.slane %v2588, 4
        %v2590 = vadd.f32 %v2588, %v2589
        %v2591 = vrot.slane %v2590, 2
        %v2592 = vadd.f32 %v2590, %v2591
        %v2593 = vrot.slane %v2592, 1
        %v2594 = vadd.f32 %v2592, %v2593
        %v2595 = vadd.f32 %v1753, %v1754
        %v2596 = vrot.slane %v2595, 4
        %v2597 = vadd.f32 %v2595, %v2596
        %v2598 = vrot.slane %v2597, 2
        %v2599 = vadd.f32 %v2597, %v2598
        %v2600 = vrot.slane %v2599, 1
        %v2601 = vadd.f32 %v2599, %v2600
        %v2602 = vadd.f32 %v1755, %v1756
        %v2603 = vrot.slane %v2602, 4
        %v2604 = vadd.f32 %v2602, %v2603
        %v2605 = vrot.slane %v2604, 2
        %v2606 = vadd.f32 %v2604, %v2605
        %v2607 = vrot.slane %v2606, 1
        %v2608 = vadd.f32 %v2606, %v2607
        %v2609 = vadd.f32 %v1757, %v1758
        %v2610 = vrot.slane %v2609, 4
        %v2611 = vadd.f32 %v2609, %v2610
        %v2612 = vrot.slane %v2611, 2
        %v2613 = vadd.f32 %v2611, %v2612
        %v2614 = vrot.slane %v2613, 1
        %v2615 = vadd.f32 %v2613, %v2614
        %v2616 = vadd.f32 %v1759, %v1760
        %v2617 = vrot.slane %v2616, 4
        %v2618 = vadd.f32 %v2616, %v2617
        %v2619 = vrot.slane %v2618, 2
        %v2620 = vadd.f32 %v2618, %v2619
        %v2621 = vrot.slane %v2620, 1
        %v2622 = vadd.f32 %v2620, %v2621
        %v2623 = vadd.f32 %v1761, %v1762
        %v2624 = vrot.slane %v2623, 4
        %v2625 = vadd.f32 %v2623, %v2624
        %v2626 = vrot.slane %v2625, 2
        %v2627 = vadd.f32 %v2625, %v2626
        %v2628 = vrot.slane %v2627, 1
        %v2629 = vadd.f32 %v2627, %v2628
        %v2630 = vadd.f32 %v1763, %v1764
        %v2631 = vrot.slane %v2630, 4
        %v2632 = vadd.f32 %v2630, %v2631
        %v2633 = vrot.slane %v2632, 2
        %v2634 = vadd.f32 %v2632, %v2633
        %v2635 = vrot.slane %v2634, 1
        %v2636 = vadd.f32 %v2634, %v2635
        %v2637 = vadd.f32 %v1765, %v1766
        %v2638 = vrot.slane %v2637, 4
        %v2639 = vadd.f32 %v2637, %v2638
        %v2640 = vrot.slane %v2639, 2
        %v2641 = vadd.f32 %v2639, %v2640
        %v2642 = vrot.slane %v2641, 1
        %v2643 = vadd.f32 %v2641, %v2642
        %v2644 = vadd.f32 %v1767, %v1768
        %v2645 = vrot.slane %v2644, 4
        %v2646 = vadd.f32 %v2644, %v2645
        %v2647 = vrot.slane %v2646, 2
        %v2648 = vadd.f32 %v2646, %v2647
        %v2649 = vrot.slane %v2648, 1
        %v2650 = vadd.f32 %v2648, %v2649
        %v2651 = vadd.f32 %v1769, %v1770
        %v2652 = vrot.slane %v2651, 4
        %v2653 = vadd.f32 %v2651, %v2652
        %v2654 = vrot.slane %v2653, 2
        %v2655 = vadd.f32 %v2653, %v2654
        %v2656 = vrot.slane %v2655, 1
        %v2657 = vadd.f32 %v2655, %v2656
        %v2658 = vadd.f32 %v1771, %v1772
        %v2659 = vrot.slane %v2658, 4
        %v2660 = vadd.f32 %v2658, %v2659
        %v2661 = vrot.slane %v2660, 2
        %v2662 = vadd.f32 %v2660, %v2661
        %v2663 = vrot.slane %v2662, 1
        %v2664 = vadd.f32 %v2662, %v2663
        %v2665 = vadd.f32 %v1773, %v1774
        %v2666 = vrot.slane %v2665, 4
        %v2667 = vadd.f32 %v2665, %v2666
        %v2668 = vrot.slane %v2667, 2
        %v2669 = vadd.f32 %v2667, %v2668
        %v2670 = vrot.slane %v2669, 1
        %v2671 = vadd.f32 %v2669, %v2670
        %v2672 = vadd.f32 %v1775, %v1776
        %v2673 = vrot.slane %v2672, 4
        %v2674 = vadd.f32 %v2672, %v2673
        %v2675 = vrot.slane %v2674, 2
        %v2676 = vadd.f32 %v2674, %v2675
        %v2677 = vrot.slane %v2676, 1
        %v2678 = vadd.f32 %v2676, %v2677
        %v2679 = vadd.f32 %v1777, %v1778
        %v2680 = vrot.slane %v2679, 4
        %v2681 = vadd.f32 %v2679, %v2680
        %v2682 = vrot.slane %v2681, 2
        %v2683 = vadd.f32 %v2681, %v2682
        %v2684 = vrot.slane %v2683, 1
        %v2685 = vadd.f32 %v2683, %v2684
        %v2686 = vadd.f32 %v1779, %v1780
        %v2687 = vrot.slane %v2686, 4
        %v2688 = vadd.f32 %v2686, %v2687
        %v2689 = vrot.slane %v2688, 2
        %v2690 = vadd.f32 %v2688, %v2689
        %v2691 = vrot.slane %v2690, 1
        %v2692 = vadd.f32 %v2690, %v2691
        %v2693 = vadd.f32 %v1781, %v1782
        %v2694 = vrot.slane %v2693, 4
        %v2695 = vadd.f32 %v2693, %v2694
        %v2696 = vrot.slane %v2695, 2
        %v2697 = vadd.f32 %v2695, %v2696
        %v2698 = vrot.slane %v2697, 1
        %v2699 = vadd.f32 %v2697, %v2698
        %v2700 = vadd.f32 %v1783, %v1784
        %v2701 = vrot.slane %v2700, 4
        %v2702 = vadd.f32 %v2700, %v2701
        %v2703 = vrot.slane %v2702, 2
        %v2704 = vadd.f32 %v2702, %v2703
        %v2705 = vrot.slane %v2704, 1
        %v2706 = vadd.f32 %v2704, %v2705
        %v2707 = vadd.f32 %v1785, %v1786
        %v2708 = vrot.slane %v2707, 4
        %v2709 = vadd.f32 %v2707, %v2708
        %v2710 = vrot.slane %v2709, 2
        %v2711 = vadd.f32 %v2709, %v2710
        %v2712 = vrot.slane %v2711, 1
        %v2713 = vadd.f32 %v2711, %v2712
        %v2714 = vadd.f32 %v1787, %v1788
        %v2715 = vrot.slane %v2714, 4
        %v2716 = vadd.f32 %v2714, %v2715
        %v2717 = vrot.slane %v2716, 2
        %v2718 = vadd.f32 %v2716, %v2717
        %v2719 = vrot.slane %v2718, 1
        %v2720 = vadd.f32 %v2718, %v2719
        %v2721 = vadd.f32 %v1789, %v1790
        %v2722 = vrot.slane %v2721, 4
        %v2723 = vadd.f32 %v2721, %v2722
        %v2724 = vrot.slane %v2723, 2
        %v2725 = vadd.f32 %v2723, %v2724
        %v2726 = vrot.slane %v2725, 1
        %v2727 = vadd.f32 %v2725, %v2726
        %v2728 = vadd.f32 %v1791, %v1792
        %v2729 = vrot.slane %v2728, 4
        %v2730 = vadd.f32 %v2728, %v2729
        %v2731 = vrot.slane %v2730, 2
        %v2732 = vadd.f32 %v2730, %v2731
        %v2733 = vrot.slane %v2732, 1
        %v2734 = vadd.f32 %v2732, %v2733
        %v2735 = vadd.f32 %v1793, %v1794
        %v2736 = vrot.slane %v2735, 4
        %v2737 = vadd.f32 %v2735, %v2736
        %v2738 = vrot.slane %v2737, 2
        %v2739 = vadd.f32 %v2737, %v2738
        %v2740 = vrot.slane %v2739, 1
        %v2741 = vadd.f32 %v2739, %v2740
        %v2742 = vadd.f32 %v1795, %v1796
        %v2743 = vrot.slane %v2742, 4
        %v2744 = vadd.f32 %v2742, %v2743
        %v2745 = vrot.slane %v2744, 2
        %v2746 = vadd.f32 %v2744, %v2745
        %v2747 = vrot.slane %v2746, 1
        %v2748 = vadd.f32 %v2746, %v2747
        %v2749 = vadd.f32 %v1797, %v1798
        %v2750 = vrot.slane %v2749, 4
        %v2751 = vadd.f32 %v2749, %v2750
        %v2752 = vrot.slane %v2751, 2
        %v2753 = vadd.f32 %v2751, %v2752
        %v2754 = vrot.slane %v2753, 1
        %v2755 = vadd.f32 %v2753, %v2754
        %v2756 = vadd.f32 %v1799, %v1800
        %v2757 = vrot.slane %v2756, 4
        %v2758 = vadd.f32 %v2756, %v2757
        %v2759 = vrot.slane %v2758, 2
        %v2760 = vadd.f32 %v2758, %v2759
        %v2761 = vrot.slane %v2760, 1
        %v2762 = vadd.f32 %v2760, %v2761
        %v2763 = vadd.f32 %v1801, %v1802
        %v2764 = vrot.slane %v2763, 4
        %v2765 = vadd.f32 %v2763, %v2764
        %v2766 = vrot.slane %v2765, 2
        %v2767 = vadd.f32 %v2765, %v2766
        %v2768 = vrot.slane %v2767, 1
        %v2769 = vadd.f32 %v2767, %v2768
        %v2770 = vadd.f32 %v1803, %v1804
        %v2771 = vrot.slane %v2770, 4
        %v2772 = vadd.f32 %v2770, %v2771
        %v2773 = vrot.slane %v2772, 2
        %v2774 = vadd.f32 %v2772, %v2773
        %v2775 = vrot.slane %v2774, 1
        %v2776 = vadd.f32 %v2774, %v2775
        %v2777 = vadd.f32 %v1805, %v1806
        %v2778 = vrot.slane %v2777, 4
        %v2779 = vadd.f32 %v2777, %v2778
        %v2780 = vrot.slane %v2779, 2
        %v2781 = vadd.f32 %v2779, %v2780
        %v2782 = vrot.slane %v2781, 1
        %v2783 = vadd.f32 %v2781, %v2782
        %v2784 = vadd.f32 %v1807, %v1808
        %v2785 = vrot.slane %v2784, 4
        %v2786 = vadd.f32 %v2784, %v2785
        %v2787 = vrot.slane %v2786, 2
        %v2788 = vadd.f32 %v2786, %v2787
        %v2789 = vrot.slane %v2788, 1
        %v2790 = vadd.f32 %v2788, %v2789
        %v2791 = vadd.f32 %v1809, %v1810
        %v2792 = vrot.slane %v2791, 4
        %v2793 = vadd.f32 %v2791, %v2792
        %v2794 = vrot.slane %v2793, 2
        %v2795 = vadd.f32 %v2793, %v2794
        %v2796 = vrot.slane %v2795, 1
        %v2797 = vadd.f32 %v2795, %v2796
        %v2798 = vmul.f32 %v2580, 0.0625
        %v2799 = vmul.f32 %v2587, 0.0625
        %v2800 = vmul.f32 %v2594, 0.0625
        %v2801 = vmul.f32 %v2601, 0.0625
        %v2802 = vmul.f32 %v2608, 0.0625
        %v2803 = vmul.f32 %v2615, 0.0625
        %v2804 = vmul.f32 %v2622, 0.0625
        %v2805 = vmul.f32 %v2629, 0.0625
        %v2806 = vmul.f32 %v2636, 0.0625
        %v2807 = vmul.f32 %v2643, 0.0625
        %v2808 = vmul.f32 %v2650, 0.0625
        %v2809 = vmul.f32 %v2657, 0.0625
        %v2810 = vmul.f32 %v2664, 0.0625
        %v2811 = vmul.f32 %v2671, 0.0625
        %v2812 = vmul.f32 %v2678, 0.0625
        %v2813 = vmul.f32 %v2685, 0.0625
        %v2814 = vmul.f32 %v2692, 0.0625
        %v2815 = vmul.f32 %v2699, 0.0625
        %v2816 = vmul.f32 %v2706, 0.0625
        %v2817 = vmul.f32 %v2713, 0.0625
        %v2818 = vmul.f32 %v2720, 0.0625
        %v2819 = vmul.f32 %v2727, 0.0625
        %v2820 = vmul.f32 %v2734, 0.0625
        %v2821 = vmul.f32 %v2741, 0.0625
        %v2822 = vmul.f32 %v2748, 0.0625
        %v2823 = vmul.f32 %v2755, 0.0625
        %v2824 = vmul.f32 %v2762, 0.0625
        %v2825 = vmul.f32 %v2769, 0.0625
        %v2826 = vmul.f32 %v2776, 0.0625
        %v2827 = vmul.f32 %v2783, 0.0625
        %v2828 = vmul.f32 %v2790, 0.0625
        %v2829 = vmul.f32 %v2797, 0.0625
        %v2830 = vadd.f32 %v2254, %v2255
        %v2831 = vrot.slane %v2830, 4
        %v2832 = vadd.f32 %v2830, %v2831
        %v2833 = vrot.slane %v2832, 2
        %v2834 = vadd.f32 %v2832, %v2833
        %v2835 = vrot.slane %v2834, 1
        %v2836 = vadd.f32 %v2834, %v2835
        %v2837 = vadd.f32 %v2256, %v2257
        %v2838 = vrot.slane %v2837, 4
        %v2839 = vadd.f32 %v2837, %v2838
        %v2840 = vrot.slane %v2839, 2
        %v2841 = vadd.f32 %v2839, %v2840
        %v2842 = vrot.slane %v2841, 1
        %v2843 = vadd.f32 %v2841, %v2842
        %v2844 = vadd.f32 %v2258, %v2259
        %v2845 = vrot.slane %v2844, 4
        %v2846 = vadd.f32 %v2844, %v2845
        %v2847 = vrot.slane %v2846, 2
        %v2848 = vadd.f32 %v2846, %v2847
        %v2849 = vrot.slane %v2848, 1
        %v2850 = vadd.f32 %v2848, %v2849
        %v2851 = vadd.f32 %v2260, %v2261
        %v2852 = vrot.slane %v2851, 4
        %v2853 = vadd.f32 %v2851, %v2852
        %v2854 = vrot.slane %v2853, 2
        %v2855 = vadd.f32 %v2853, %v2854
        %v2856 = vrot.slane %v2855, 1
        %v2857 = vadd.f32 %v2855, %v2856
        %v2858 = vadd.f32 %v2262, %v2263
        %v2859 = vrot.slane %v2858, 4
        %v2860 = vadd.f32 %v2858, %v2859
        %v2861 = vrot.slane %v2860, 2
        %v2862 = vadd.f32 %v2860, %v2861
        %v2863 = vrot.slane %v2862, 1
        %v2864 = vadd.f32 %v2862, %v2863
        %v2865 = vadd.f32 %v2264, %v2265
        %v2866 = vrot.slane %v2865, 4
        %v2867 = vadd.f32 %v2865, %v2866
        %v2868 = vrot.slane %v2867, 2
        %v2869 = vadd.f32 %v2867, %v2868
        %v2870 = vrot.slane %v2869, 1
        %v2871 = vadd.f32 %v2869, %v2870
        %v2872 = vadd.f32 %v2266, %v2267
        %v2873 = vrot.slane %v2872, 4
        %v2874 = vadd.f32 %v2872, %v2873
        %v2875 = vrot.slane %v2874, 2
        %v2876 = vadd.f32 %v2874, %v2875
        %v2877 = vrot.slane %v2876, 1
        %v2878 = vadd.f32 %v2876, %v2877
        %v2879 = vadd.f32 %v2268, %v2269
        %v2880 = vrot.slane %v2879, 4
        %v2881 = vadd.f32 %v2879, %v2880
        %v2882 = vrot.slane %v2881, 2
        %v2883 = vadd.f32 %v2881, %v2882
        %v2884 = vrot.slane %v2883, 1
        %v2885 = vadd.f32 %v2883, %v2884
        %v2886 = vadd.f32 %v2270, %v2271
        %v2887 = vrot.slane %v2886, 4
        %v2888 = vadd.f32 %v2886, %v2887
        %v2889 = vrot.slane %v2888, 2
        %v2890 = vadd.f32 %v2888, %v2889
        %v2891 = vrot.slane %v2890, 1
        %v2892 = vadd.f32 %v2890, %v2891
        %v2893 = vadd.f32 %v2272, %v2273
        %v2894 = vrot.slane %v2893, 4
        %v2895 = vadd.f32 %v2893, %v2894
        %v2896 = vrot.slane %v2895, 2
        %v2897 = vadd.f32 %v2895, %v2896
        %v2898 = vrot.slane %v2897, 1
        %v2899 = vadd.f32 %v2897, %v2898
        %v2900 = vadd.f32 %v2274, %v2275
        %v2901 = vrot.slane %v2900, 4
        %v2902 = vadd.f32 %v2900, %v2901
        %v2903 = vrot.slane %v2902, 2
        %v2904 = vadd.f32 %v2902, %v2903
        %v2905 = vrot.slane %v2904, 1
        %v2906 = vadd.f32 %v2904, %v2905
        %v2907 = vadd.f32 %v2276, %v2277
        %v2908 = vrot.slane %v2907, 4
        %v2909 = vadd.f32 %v2907, %v2908
        %v2910 = vrot.slane %v2909, 2
        %v2911 = vadd.f32 %v2909, %v2910
        %v2912 = vrot.slane %v2911, 1
        %v2913 = vadd.f32 %v2911, %v2912
        %v2914 = vadd.f32 %v2278, %v2279
        %v2915 = vrot.slane %v2914, 4
        %v2916 = vadd.f32 %v2914, %v2915
        %v2917 = vrot.slane %v2916, 2
        %v2918 = vadd.f32 %v2916, %v2917
        %v2919 = vrot.slane %v2918, 1
        %v2920 = vadd.f32 %v2918, %v2919
        %v2921 = vadd.f32 %v2280, %v2281
        %v2922 = vrot.slane %v2921, 4
        %v2923 = vadd.f32 %v2921, %v2922
        %v2924 = vrot.slane %v2923, 2
        %v2925 = vadd.f32 %v2923, %v2924
        %v2926 = vrot.slane %v2925, 1
        %v2927 = vadd.f32 %v2925, %v2926
        %v2928 = vadd.f32 %v2282, %v2283
        %v2929 = vrot.slane %v2928, 4
        %v2930 = vadd.f32 %v2928, %v2929
        %v2931 = vrot.slane %v2930, 2
        %v2932 = vadd.f32 %v2930, %v2931
        %v2933 = vrot.slane %v2932, 1
        %v2934 = vadd.f32 %v2932, %v2933
        %v2935 = vadd.f32 %v2284, %v2285
        %v2936 = vrot.slane %v2935, 4
        %v2937 = vadd.f32 %v2935, %v2936
        %v2938 = vrot.slane %v2937, 2
        %v2939 = vadd.f32 %v2937, %v2938
        %v2940 = vrot.slane %v2939, 1
        %v2941 = vadd.f32 %v2939, %v2940
        %v2942 = vadd.f32 %v2286, %v2287
        %v2943 = vrot.slane %v2942, 4
        %v2944 = vadd.f32 %v2942, %v2943
        %v2945 = vrot.slane %v2944, 2
        %v2946 = vadd.f32 %v2944, %v2945
        %v2947 = vrot.slane %v2946, 1
        %v2948 = vadd.f32 %v2946, %v2947
        %v2949 = vadd.f32 %v2288, %v2289
        %v2950 = vrot.slane %v2949, 4
        %v2951 = vadd.f32 %v2949, %v2950
        %v2952 = vrot.slane %v2951, 2
        %v2953 = vadd.f32 %v2951, %v2952
        %v2954 = vrot.slane %v2953, 1
        %v2955 = vadd.f32 %v2953, %v2954
        %v2956 = vadd.f32 %v2290, %v2291
        %v2957 = vrot.slane %v2956, 4
        %v2958 = vadd.f32 %v2956, %v2957
        %v2959 = vrot.slane %v2958, 2
        %v2960 = vadd.f32 %v2958, %v2959
        %v2961 = vrot.slane %v2960, 1
        %v2962 = vadd.f32 %v2960, %v2961
        %v2963 = vadd.f32 %v2292, %v2293
        %v2964 = vrot.slane %v2963, 4
        %v2965 = vadd.f32 %v2963, %v2964
        %v2966 = vrot.slane %v2965, 2
        %v2967 = vadd.f32 %v2965, %v2966
        %v2968 = vrot.slane %v2967, 1
        %v2969 = vadd.f32 %v2967, %v2968
        %v2970 = vadd.f32 %v2294, %v2295
        %v2971 = vrot.slane %v2970, 4
        %v2972 = vadd.f32 %v2970, %v2971
        %v2973 = vrot.slane %v2972, 2
        %v2974 = vadd.f32 %v2972, %v2973
        %v2975 = vrot.slane %v2974, 1
        %v2976 = vadd.f32 %v2974, %v2975
        %v2977 = vadd.f32 %v2296, %v2297
        %v2978 = vrot.slane %v2977, 4
        %v2979 = vadd.f32 %v2977, %v2978
        %v2980 = vrot.slane %v2979, 2
        %v2981 = vadd.f32 %v2979, %v2980
        %v2982 = vrot.slane %v2981, 1
        %v2983 = vadd.f32 %v2981, %v2982
        %v2984 = vadd.f32 %v2298, %v2299
        %v2985 = vrot.slane %v2984, 4
        %v2986 = vadd.f32 %v2984, %v2985
        %v2987 = vrot.slane %v2986, 2
        %v2988 = vadd.f32 %v2986, %v2987
        %v2989 = vrot.slane %v2988, 1
        %v2990 = vadd.f32 %v2988, %v2989
        %v2991 = vadd.f32 %v2300, %v2301
        %v2992 = vrot.slane %v2991, 4
        %v2993 = vadd.f32 %v2991, %v2992
        %v2994 = vrot.slane %v2993, 2
        %v2995 = vadd.f32 %v2993, %v2994
        %v2996 = vrot.slane %v2995, 1
        %v2997 = vadd.f32 %v2995, %v2996
        %v2998 = vadd.f32 %v2302, %v2303
        %v2999 = vrot.slane %v2998, 4
        %v3000 = vadd.f32 %v2998, %v2999
        %v3001 = vrot.slane %v3000, 2
        %v3002 = vadd.f32 %v3000, %v3001
        %v3003 = vrot.slane %v3002, 1
        %v3004 = vadd.f32 %v3002, %v3003
        %v3005 = vadd.f32 %v2304, %v2305
        %v3006 = vrot.slane %v3005, 4
        %v3007 = vadd.f32 %v3005, %v3006
        %v3008 = vrot.slane %v3007, 2
        %v3009 = vadd.f32 %v3007, %v3008
        %v3010 = vrot.slane %v3009, 1
        %v3011 = vadd.f32 %v3009, %v3010
        %v3012 = vadd.f32 %v2306, %v2307
        %v3013 = vrot.slane %v3012, 4
        %v3014 = vadd.f32 %v3012, %v3013
        %v3015 = vrot.slane %v3014, 2
        %v3016 = vadd.f32 %v3014, %v3015
        %v3017 = vrot.slane %v3016, 1
        %v3018 = vadd.f32 %v3016, %v3017
        %v3019 = vadd.f32 %v2308, %v2309
        %v3020 = vrot.slane %v3019, 4
        %v3021 = vadd.f32 %v3019, %v3020
        %v3022 = vrot.slane %v3021, 2
        %v3023 = vadd.f32 %v3021, %v3022
        %v3024 = vrot.slane %v3023, 1
        %v3025 = vadd.f32 %v3023, %v3024
        %v3026 = vadd.f32 %v2310, %v2311
        %v3027 = vrot.slane %v3026, 4
        %v3028 = vadd.f32 %v3026, %v3027
        %v3029 = vrot.slane %v3028, 2
        %v3030 = vadd.f32 %v3028, %v3029
        %v3031 = vrot.slane %v3030, 1
        %v3032 = vadd.f32 %v3030, %v3031
        %v3033 = vadd.f32 %v2312, %v2313
        %v3034 = vrot.slane %v3033, 4
        %v3035 = vadd.f32 %v3033, %v3034
        %v3036 = vrot.slane %v3035, 2
        %v3037 = vadd.f32 %v3035, %v3036
        %v3038 = vrot.slane %v3037, 1
        %v3039 = vadd.f32 %v3037, %v3038
        %v3040 = vadd.f32 %v2314, %v2315
        %v3041 = vrot.slane %v3040, 4
        %v3042 = vadd.f32 %v3040, %v3041
        %v3043 = vrot.slane %v3042, 2
        %v3044 = vadd.f32 %v3042, %v3043
        %v3045 = vrot.slane %v3044, 1
        %v3046 = vadd.f32 %v3044, %v3045
        %v3047 = vadd.f32 %v2316, %v2317
        %v3048 = vrot.slane %v3047, 4
        %v3049 = vadd.f32 %v3047, %v3048
        %v3050 = vrot.slane %v3049, 2
        %v3051 = vadd.f32 %v3049, %v3050
        %v3052 = vrot.slane %v3051, 1
        %v3053 = vadd.f32 %v3051, %v3052
        %v3054 = vmul.f32 %v2836, 0.0625
        %v3055 = vmul.f32 %v2843, 0.0625
        %v3056 = vmul.f32 %v2850, 0.0625
        %v3057 = vmul.f32 %v2857, 0.0625
        %v3058 = vmul.f32 %v2864, 0.0625
        %v3059 = vmul.f32 %v2871, 0.0625
        %v3060 = vmul.f32 %v2878, 0.0625
        %v3061 = vmul.f32 %v2885, 0.0625
        %v3062 = vmul.f32 %v2892, 0.0625
        %v3063 = vmul.f32 %v2899, 0.0625
        %v3064 = vmul.f32 %v2906, 0.0625
        %v3065 = vmul.f32 %v2913, 0.0625
        %v3066 = vmul.f32 %v2920, 0.0625
        %v3067 = vmul.f32 %v2927, 0.0625
        %v3068 = vmul.f32 %v2934, 0.0625
        %v3069 = vmul.f32 %v2941, 0.0625
        %v3070 = vmul.f32 %v2948, 0.0625
        %v3071 = vmul.f32 %v2955, 0.0625
        %v3072 = vmul.f32 %v2962, 0.0625
        %v3073 = vmul.f32 %v2969, 0.0625
        %v3074 = vmul.f32 %v2976, 0.0625
        %v3075 = vmul.f32 %v2983, 0.0625
        %v3076 = vmul.f32 %v2990, 0.0625
        %v3077 = vmul.f32 %v2997, 0.0625
        %v3078 = vmul.f32 %v3004, 0.0625
        %v3079 = vmul.f32 %v3011, 0.0625
        %v3080 = vmul.f32 %v3018, 0.0625
        %v3081 = vmul.f32 %v3025, 0.0625
        %v3082 = vmul.f32 %v3032, 0.0625
        %v3083 = vmul.f32 %v3039, 0.0625
        %v3084 = vmul.f32 %v3046, 0.0625
        %v3085 = vmul.f32 %v3053, 0.0625
        %v3086 = vpack.c.bf16 %v2542, %v2542
        %v3087 = vpack.c.bf16 %v2543, %v2543
        %v3088 = vpack.c.bf16 %v2544, %v2544
        %v3089 = vpack.c.bf16 %v2545, %v2545
        %v3090 = vpack.c.bf16 %v2546, %v2546
        %v3091 = vpack.c.bf16 %v2547, %v2547
        %v3092 = vpack.c.bf16 %v2548, %v2548
        %v3093 = vpack.c.bf16 %v2549, %v2549
        %v3094 = vpack.c.bf16 %v2550, %v2550
        %v3095 = vpack.c.bf16 %v2551, %v2551
        %v3096 = vpack.c.bf16 %v2552, %v2552
        %v3097 = vpack.c.bf16 %v2553, %v2553
        %v3098 = vpack.c.bf16 %v2554, %v2554
        %v3099 = vpack.c.bf16 %v2555, %v2555
        %v3100 = vpack.c.bf16 %v2556, %v2556
        %v3101 = vpack.c.bf16 %v2557, %v2557
        %v3102 = vpack.c.bf16 %v2558, %v2558
        %v3103 = vpack.c.bf16 %v2559, %v2559
        %v3104 = vpack.c.bf16 %v2560, %v2560
        %v3105 = vpack.c.bf16 %v2561, %v2561
        %v3106 = vpack.c.bf16 %v2562, %v2562
        %v3107 = vpack.c.bf16 %v2563, %v2563
        %v3108 = vpack.c.bf16 %v2564, %v2564
        %v3109 = vpack.c.bf16 %v2565, %v2565
        %v3110 = vpack.c.bf16 %v2566, %v2566
        %v3111 = vpack.c.bf16 %v2567, %v2567
        %v3112 = vpack.c.bf16 %v2568, %v2568
        %v3113 = vpack.c.bf16 %v2569, %v2569
        %v3114 = vpack.c.bf16 %v2570, %v2570
        %v3115 = vpack.c.bf16 %v2571, %v2571
        %v3116 = vpack.c.bf16 %v2572, %v2572
        %v3117 = vpack.c.bf16 %v2573, %v2573
        %v3150 = vunpack.c.l.b16 %v3086
        %v3151 = vunpack.c.l.b16 %v3087
        %v3152 = vunpack.c.l.b16 %v3088
        %v3153 = vunpack.c.l.b16 %v3089
        %v3154 = vunpack.c.l.b16 %v3090
        %v3155 = vunpack.c.l.b16 %v3091
        %v3156 = vunpack.c.l.b16 %v3092
        %v3157 = vunpack.c.l.b16 %v3093
        %v3158 = vunpack.c.l.b16 %v3094
        %v3159 = vunpack.c.l.b16 %v3095
        %v3160 = vunpack.c.l.b16 %v3096
        %v3161 = vunpack.c.l.b16 %v3097
        %v3162 = vunpack.c.l.b16 %v3098
        %v3163 = vunpack.c.l.b16 %v3099
        %v3164 = vunpack.c.l.b16 %v3100
        %v3165 = vunpack.c.l.b16 %v3101
        %v3166 = vunpack.c.l.b16 %v3102
        %v3167 = vunpack.c.l.b16 %v3103
        %v3168 = vunpack.c.l.b16 %v3104
        %v3169 = vunpack.c.l.b16 %v3105
        %v3170 = vunpack.c.l.b16 %v3106
        %v3171 = vunpack.c.l.b16 %v3107
        %v3172 = vunpack.c.l.b16 %v3108
        %v3173 = vunpack.c.l.b16 %v3109
        %v3174 = vunpack.c.l.b16 %v3110
        %v3175 = vunpack.c.l.b16 %v3111
        %v3176 = vunpack.c.l.b16 %v3112
        %v3177 = vunpack.c.l.b16 %v3113
        %v3178 = vunpack.c.l.b16 %v3114
        %v3179 = vunpack.c.l.b16 %v3115
        %v3180 = vunpack.c.l.b16 %v3116
        %v3181 = vunpack.c.l.b16 %v3117
        %vm3182 = vcmask 1041409
        %v3183 = vsel %vm3182, %v3151, %v3150
        %vm3184 = vcmask 1042434
        %v3185 = vsel %vm3184, %v3152, %v3183
        %vm3186 = vcmask 1043459
        %v3187 = vsel %vm3186, %v3153, %v3185
        %vm3188 = vcmask 1044484
        %v3189 = vsel %vm3188, %v3154, %v3187
        %vm3190 = vcmask 1045509
        %v3191 = vsel %vm3190, %v3155, %v3189
        %vm3192 = vcmask 1046534
        %v3193 = vsel %vm3192, %v3156, %v3191
        %vm3194 = vcmask 1047559
        %v3195 = vsel %vm3194, %v3157, %v3193
        %v3196 = vsel %vm3182, %v3159, %v3158
        %v3197 = vsel %vm3184, %v3160, %v3196
        %v3198 = vsel %vm3186, %v3161, %v3197
        %v3199 = vsel %vm3188, %v3162, %v3198
        %v3200 = vsel %vm3190, %v3163, %v3199
        %v3201 = vsel %vm3192, %v3164, %v3200
        %v3202 = vsel %vm3194, %v3165, %v3201
        %v3203 = vsel %vm3182, %v3167, %v3166
        %v3204 = vsel %vm3184, %v3168, %v3203
        %v3205 = vsel %vm3186, %v3169, %v3204
        %v3206 = vsel %vm3188, %v3170, %v3205
        %v3207 = vsel %vm3190, %v3171, %v3206
        %v3208 = vsel %vm3192, %v3172, %v3207
        %v3209 = vsel %vm3194, %v3173, %v3208
        %v3210 = vsel %vm3182, %v3175, %v3174
        %v3211 = vsel %vm3184, %v3176, %v3210
        %v3212 = vsel %vm3186, %v3177, %v3211
        %v3213 = vsel %vm3188, %v3178, %v3212
        %v3214 = vsel %vm3190, %v3179, %v3213
        %v3215 = vsel %vm3192, %v3180, %v3214
        %v3216 = vsel %vm3194, %v3181, %v3215
        %v3217 = vpack.c.b16 %v3202, %v3195
        %v3218 = vpack.c.b16 %v3216, %v3209
        %v3237 = vunpack.c.l.b16 %v660
        %v3238 = vunpack.c.h.b16 %v660
        %v3239 = vunpack.c.l.b16 %v661
        %v3240 = vunpack.c.h.b16 %v661
        %v3241 = vunpack.c.l.b16 %v662
        %v3242 = vunpack.c.h.b16 %v662
        %v3243 = vunpack.c.l.b16 %v663
        %v3244 = vunpack.c.h.b16 %v663
        %v3245 = vunpack.c.l.b16 %v664
        %v3246 = vunpack.c.h.b16 %v664
        %v3247 = vunpack.c.l.b16 %v665
        %v3248 = vunpack.c.h.b16 %v665
        %v3249 = vunpack.c.l.b16 %v666
        %v3250 = vunpack.c.h.b16 %v666
        %v3251 = vunpack.c.l.b16 %v667
        %v3252 = vunpack.c.h.b16 %v667
        %v3253 = vunpack.c.l.b16 %v668
        %v3254 = vunpack.c.h.b16 %v668
        %v3255 = vunpack.c.l.b16 %v669
        %v3256 = vunpack.c.h.b16 %v669
        %v3257 = vunpack.c.l.b16 %v670
        %v3258 = vunpack.c.h.b16 %v670
        %v3259 = vunpack.c.l.b16 %v671
        %v3260 = vunpack.c.h.b16 %v671
        %v3261 = vunpack.c.l.b16 %v672
        %v3262 = vunpack.c.h.b16 %v672
        %v3263 = vunpack.c.l.b16 %v673
        %v3264 = vunpack.c.h.b16 %v673
        %v3265 = vunpack.c.l.b16 %v674
        %v3266 = vunpack.c.h.b16 %v674
        %v3267 = vunpack.c.l.b16 %v675
        %v3268 = vunpack.c.h.b16 %v675
        %v3269 = vpack.c.b16 %v3239, %v3237
        %v3270 = vpack.c.b16 %v3240, %v3238
        %v3271 = vpack.c.b16 %v3243, %v3241
        %v3272 = vpack.c.b16 %v3244, %v3242
        %v3273 = vpack.c.b16 %v3247, %v3245
        %v3274 = vpack.c.b16 %v3248, %v3246
        %v3275 = vpack.c.b16 %v3251, %v3249
        %v3276 = vpack.c.b16 %v3252, %v3250
        %v3277 = vpack.c.b16 %v3255, %v3253
        %v3278 = vpack.c.b16 %v3256, %v3254
        %v3279 = vpack.c.b16 %v3259, %v3257
        %v3280 = vpack.c.b16 %v3260, %v3258
        %v3281 = vpack.c.b16 %v3263, %v3261
        %v3282 = vpack.c.b16 %v3264, %v3262
        %v3283 = vpack.c.b16 %v3267, %v3265
        %v3284 = vpack.c.b16 %v3268, %v3266
        %3301 = vmatpush.bf16.msra.mxu0 %v3283
        %3302 = vmatpush.bf16.msra.mxu0 %v3281
        %3303 = vmatpush.bf16.msra.mxu0 %v3279
        %3304 = vmatpush.bf16.msra.mxu0 %v3277
        %3305 = vmatpush.bf16.msra.mxu0 %v3275
        %3306 = vmatpush.bf16.msra.mxu0 %v3273
        %3307 = vmatpush.bf16.msra.mxu0 %v3271
        %3308 = vmatpush.bf16.msra.mxu0 %v3269
        %3309 = vmatmul.bf16.gmra.mxu0 %v3217
        %v3310 = vpop.f32.mrf.mxu0
        %v3311 = vadd.f32 0.0, %v3310
        %v3312 = vpop.f32.mrf.mxu0
        %v3313 = vadd.f32 0.0, %v3312
        %3314 = vmatmul.bf16.gmra.mxu0 %v3218
        %v3315 = vpop.f32.mrf.mxu0
        %v3316 = vadd.f32 0.0, %v3315
        %v3317 = vpop.f32.mrf.mxu0
        %v3318 = vadd.f32 0.0, %v3317
        %3319 = vdwg.mxu0
        %3320 = vmatpush.bf16.msra.mxu0 %v3284
        %3321 = vmatpush.bf16.msra.mxu0 %v3282
        %3322 = vmatpush.bf16.msra.mxu0 %v3280
        %3323 = vmatpush.bf16.msra.mxu0 %v3278
        %3324 = vmatpush.bf16.msra.mxu0 %v3276
        %3325 = vmatpush.bf16.msra.mxu0 %v3274
        %3326 = vmatpush.bf16.msra.mxu0 %v3272
        %3327 = vmatpush.bf16.msra.mxu0 %v3270
        %3328 = vmatmul.bf16.gmra.mxu0 %v3217
        %v3329 = vpop.f32.mrf.mxu0
        %v3330 = vadd.f32 0.0, %v3329
        %v3331 = vpop.f32.mrf.mxu0
        %v3332 = vadd.f32 0.0, %v3331
        %3333 = vmatmul.bf16.gmra.mxu0 %v3218
        %v3334 = vpop.f32.mrf.mxu0
        %v3335 = vadd.f32 0.0, %v3334
        %v3336 = vpop.f32.mrf.mxu0
        %v3337 = vadd.f32 0.0, %v3336
        %3338 = vdwg.mxu0
        %v3339 = vxor.u32 %v3311, 2147483648
        %v3340 = vxor.u32 %v3330, 2147483648
        %v3341 = vxor.u32 %v3313, 2147483648
        %v3342 = vxor.u32 %v3332, 2147483648
        %v3343 = vxor.u32 %v3316, 2147483648
        %v3344 = vxor.u32 %v3335, 2147483648
        %v3345 = vxor.u32 %v3318, 2147483648
        %v3346 = vxor.u32 %v3337, 2147483648
        %v3347 = vmul.f32 %v3339, 1.442695
        %v3348 = vpow.pop %v3347
        %v3349 = vmul.f32 %v3340, 1.442695
        %v3350 = vpow.pop %v3349
        %v3351 = vmul.f32 %v3341, 1.442695
        %v3352 = vpow.pop %v3351
        %v3353 = vmul.f32 %v3342, 1.442695
        %v3354 = vpow.pop %v3353
        %v3355 = vmul.f32 %v3343, 1.442695
        %v3356 = vpow.pop %v3355
        %v3357 = vmul.f32 %v3344, 1.442695
        %v3358 = vpow.pop %v3357
        %v3359 = vmul.f32 %v3345, 1.442695
        %v3360 = vpow.pop %v3359
        %v3361 = vmul.f32 %v3346, 1.442695
        %v3362 = vpow.pop %v3361
        %v3363 = vadd.f32 %v3348, 1.0
        %v3364 = vadd.f32 %v3350, 1.0
        %v3365 = vadd.f32 %v3352, 1.0
        %v3366 = vadd.f32 %v3354, 1.0
        %v3367 = vadd.f32 %v3356, 1.0
        %v3368 = vadd.f32 %v3358, 1.0
        %v3369 = vadd.f32 %v3360, 1.0
        %v3370 = vadd.f32 %v3362, 1.0
        %v3371 = vrcp.pop %v3363
        %v3372 = vmul.f32 %v3363, %v3371
        %v3373 = vsub.f32 1.0, %v3372
        %v3374 = vmul.f32 %v3371, %v3373
        %v3375 = vadd.f32 %v3371, %v3374
        %vm3376 = vweird.f32 %v3363
        %vm3377 = vweird.f32 %v3371
        %vm3378 = vmor %vm3376, %vm3377
        %v3379 = vsel %vm3378, %v3371, %v3375
        %v3380 = vand.u32 2147483647, %v3363
        %vm3381 = vcmp.eq.f32.partialorder %v3380, 8.507059e+37
        %v3382 = vand.u32 %v3363, 2147483648
        %v3383 = vor.u32 1.1754944e-38, %v3382
        %v3384 = vsel %vm3381, %v3383, %v3379
        %v3385 = vmul.f32 1.0, %v3384
        %v3386 = vrcp.pop %v3364
        %v3387 = vmul.f32 %v3364, %v3386
        %v3388 = vsub.f32 1.0, %v3387
        %v3389 = vmul.f32 %v3386, %v3388
        %v3390 = vadd.f32 %v3386, %v3389
        %vm3391 = vweird.f32 %v3364
        %vm3392 = vweird.f32 %v3386
        %vm3393 = vmor %vm3391, %vm3392
        %v3394 = vsel %vm3393, %v3386, %v3390
        %v3395 = vand.u32 2147483647, %v3364
        %vm3396 = vcmp.eq.f32.partialorder %v3395, 8.507059e+37
        %v3397 = vand.u32 %v3364, 2147483648
        %v3398 = vor.u32 1.1754944e-38, %v3397
        %v3399 = vsel %vm3396, %v3398, %v3394
        %v3400 = vmul.f32 1.0, %v3399
        %v3401 = vrcp.pop %v3365
        %v3402 = vmul.f32 %v3365, %v3401
        %v3403 = vsub.f32 1.0, %v3402
        %v3404 = vmul.f32 %v3401, %v3403
        %v3405 = vadd.f32 %v3401, %v3404
        %vm3406 = vweird.f32 %v3365
        %vm3407 = vweird.f32 %v3401
        %vm3408 = vmor %vm3406, %vm3407
        %v3409 = vsel %vm3408, %v3401, %v3405
        %v3410 = vand.u32 2147483647, %v3365
        %vm3411 = vcmp.eq.f32.partialorder %v3410, 8.507059e+37
        %v3412 = vand.u32 %v3365, 2147483648
        %v3413 = vor.u32 1.1754944e-38, %v3412
        %v3414 = vsel %vm3411, %v3413, %v3409
        %v3415 = vmul.f32 1.0, %v3414
        %v3416 = vrcp.pop %v3366
        %v3417 = vmul.f32 %v3366, %v3416
        %v3418 = vsub.f32 1.0, %v3417
        %v3419 = vmul.f32 %v3416, %v3418
        %v3420 = vadd.f32 %v3416, %v3419
        %vm3421 = vweird.f32 %v3366
        %vm3422 = vweird.f32 %v3416
        %vm3423 = vmor %vm3421, %vm3422
        %v3424 = vsel %vm3423, %v3416, %v3420
        %v3425 = vand.u32 2147483647, %v3366
        %vm3426 = vcmp.eq.f32.partialorder %v3425, 8.507059e+37
        %v3427 = vand.u32 %v3366, 2147483648
        %v3428 = vor.u32 1.1754944e-38, %v3427
        %v3429 = vsel %vm3426, %v3428, %v3424
        %v3430 = vmul.f32 1.0, %v3429
        %v3431 = vrcp.pop %v3367
        %v3432 = vmul.f32 %v3367, %v3431
        %v3433 = vsub.f32 1.0, %v3432
        %v3434 = vmul.f32 %v3431, %v3433
        %v3435 = vadd.f32 %v3431, %v3434
        %vm3436 = vweird.f32 %v3367
        %vm3437 = vweird.f32 %v3431
        %vm3438 = vmor %vm3436, %vm3437
        %v3439 = vsel %vm3438, %v3431, %v3435
        %v3440 = vand.u32 2147483647, %v3367
        %vm3441 = vcmp.eq.f32.partialorder %v3440, 8.507059e+37
        %v3442 = vand.u32 %v3367, 2147483648
        %v3443 = vor.u32 1.1754944e-38, %v3442
        %v3444 = vsel %vm3441, %v3443, %v3439
        %v3445 = vmul.f32 1.0, %v3444
        %v3446 = vrcp.pop %v3368
        %v3447 = vmul.f32 %v3368, %v3446
        %v3448 = vsub.f32 1.0, %v3447
        %v3449 = vmul.f32 %v3446, %v3448
        %v3450 = vadd.f32 %v3446, %v3449
        %vm3451 = vweird.f32 %v3368
        %vm3452 = vweird.f32 %v3446
        %vm3453 = vmor %vm3451, %vm3452
        %v3454 = vsel %vm3453, %v3446, %v3450
        %v3455 = vand.u32 2147483647, %v3368
        %vm3456 = vcmp.eq.f32.partialorder %v3455, 8.507059e+37
        %v3457 = vand.u32 %v3368, 2147483648
        %v3458 = vor.u32 1.1754944e-38, %v3457
        %v3459 = vsel %vm3456, %v3458, %v3454
        %v3460 = vmul.f32 1.0, %v3459
        %v3461 = vrcp.pop %v3369
        %v3462 = vmul.f32 %v3369, %v3461
        %v3463 = vsub.f32 1.0, %v3462
        %v3464 = vmul.f32 %v3461, %v3463
        %v3465 = vadd.f32 %v3461, %v3464
        %vm3466 = vweird.f32 %v3369
        %vm3467 = vweird.f32 %v3461
        %vm3468 = vmor %vm3466, %vm3467
        %v3469 = vsel %vm3468, %v3461, %v3465
        %v3470 = vand.u32 2147483647, %v3369
        %vm3471 = vcmp.eq.f32.partialorder %v3470, 8.507059e+37
        %v3472 = vand.u32 %v3369, 2147483648
        %v3473 = vor.u32 1.1754944e-38, %v3472
        %v3474 = vsel %vm3471, %v3473, %v3469
        %v3475 = vmul.f32 1.0, %v3474
        %v3476 = vrcp.pop %v3370
        %v3477 = vmul.f32 %v3370, %v3476
        %v3478 = vsub.f32 1.0, %v3477
        %v3479 = vmul.f32 %v3476, %v3478
        %v3480 = vadd.f32 %v3476, %v3479
        %vm3481 = vweird.f32 %v3370
        %vm3482 = vweird.f32 %v3476
        %vm3483 = vmor %vm3481, %vm3482
        %v3484 = vsel %vm3483, %v3476, %v3480
        %v3485 = vand.u32 2147483647, %v3370
        %vm3486 = vcmp.eq.f32.partialorder %v3485, 8.507059e+37
        %v3487 = vand.u32 %v3370, 2147483648
        %v3488 = vor.u32 1.1754944e-38, %v3487
        %v3489 = vsel %vm3486, %v3488, %v3484
        %v3490 = vmul.f32 1.0, %v3489
        %v3491 = vpack.c.bf16 %v2798, %v2798
        %v3492 = vpack.c.bf16 %v2799, %v2799
        %v3493 = vpack.c.bf16 %v2800, %v2800
        %v3494 = vpack.c.bf16 %v2801, %v2801
        %v3495 = vpack.c.bf16 %v2802, %v2802
        %v3496 = vpack.c.bf16 %v2803, %v2803
        %v3497 = vpack.c.bf16 %v2804, %v2804
        %v3498 = vpack.c.bf16 %v2805, %v2805
        %v3499 = vpack.c.bf16 %v2806, %v2806
        %v3500 = vpack.c.bf16 %v2807, %v2807
        %v3501 = vpack.c.bf16 %v2808, %v2808
        %v3502 = vpack.c.bf16 %v2809, %v2809
        %v3503 = vpack.c.bf16 %v2810, %v2810
        %v3504 = vpack.c.bf16 %v2811, %v2811
        %v3505 = vpack.c.bf16 %v2812, %v2812
        %v3506 = vpack.c.bf16 %v2813, %v2813
        %v3507 = vpack.c.bf16 %v2814, %v2814
        %v3508 = vpack.c.bf16 %v2815, %v2815
        %v3509 = vpack.c.bf16 %v2816, %v2816
        %v3510 = vpack.c.bf16 %v2817, %v2817
        %v3511 = vpack.c.bf16 %v2818, %v2818
        %v3512 = vpack.c.bf16 %v2819, %v2819
        %v3513 = vpack.c.bf16 %v2820, %v2820
        %v3514 = vpack.c.bf16 %v2821, %v2821
        %v3515 = vpack.c.bf16 %v2822, %v2822
        %v3516 = vpack.c.bf16 %v2823, %v2823
        %v3517 = vpack.c.bf16 %v2824, %v2824
        %v3518 = vpack.c.bf16 %v2825, %v2825
        %v3519 = vpack.c.bf16 %v2826, %v2826
        %v3520 = vpack.c.bf16 %v2827, %v2827
        %v3521 = vpack.c.bf16 %v2828, %v2828
        %v3522 = vpack.c.bf16 %v2829, %v2829
        %v3555 = vunpack.c.l.b16 %v3491
        %v3556 = vunpack.c.l.b16 %v3492
        %v3557 = vunpack.c.l.b16 %v3493
        %v3558 = vunpack.c.l.b16 %v3494
        %v3559 = vunpack.c.l.b16 %v3495
        %v3560 = vunpack.c.l.b16 %v3496
        %v3561 = vunpack.c.l.b16 %v3497
        %v3562 = vunpack.c.l.b16 %v3498
        %v3563 = vunpack.c.l.b16 %v3499
        %v3564 = vunpack.c.l.b16 %v3500
        %v3565 = vunpack.c.l.b16 %v3501
        %v3566 = vunpack.c.l.b16 %v3502
        %v3567 = vunpack.c.l.b16 %v3503
        %v3568 = vunpack.c.l.b16 %v3504
        %v3569 = vunpack.c.l.b16 %v3505
        %v3570 = vunpack.c.l.b16 %v3506
        %v3571 = vunpack.c.l.b16 %v3507
        %v3572 = vunpack.c.l.b16 %v3508
        %v3573 = vunpack.c.l.b16 %v3509
        %v3574 = vunpack.c.l.b16 %v3510
        %v3575 = vunpack.c.l.b16 %v3511
        %v3576 = vunpack.c.l.b16 %v3512
        %v3577 = vunpack.c.l.b16 %v3513
        %v3578 = vunpack.c.l.b16 %v3514
        %v3579 = vunpack.c.l.b16 %v3515
        %v3580 = vunpack.c.l.b16 %v3516
        %v3581 = vunpack.c.l.b16 %v3517
        %v3582 = vunpack.c.l.b16 %v3518
        %v3583 = vunpack.c.l.b16 %v3519
        %v3584 = vunpack.c.l.b16 %v3520
        %v3585 = vunpack.c.l.b16 %v3521
        %v3586 = vunpack.c.l.b16 %v3522
        %v3587 = vsel %vm3182, %v3556, %v3555
        %v3588 = vsel %vm3184, %v3557, %v3587
        %v3589 = vsel %vm3186, %v3558, %v3588
        %v3590 = vsel %vm3188, %v3559, %v3589
        %v3591 = vsel %vm3190, %v3560, %v3590
        %v3592 = vsel %vm3192, %v3561, %v3591
        %v3593 = vsel %vm3194, %v3562, %v3592
        %v3594 = vsel %vm3182, %v3564, %v3563
        %v3595 = vsel %vm3184, %v3565, %v3594
        %v3596 = vsel %vm3186, %v3566, %v3595
        %v3597 = vsel %vm3188, %v3567, %v3596
        %v3598 = vsel %vm3190, %v3568, %v3597
        %v3599 = vsel %vm3192, %v3569, %v3598
        %v3600 = vsel %vm3194, %v3570, %v3599
        %v3601 = vsel %vm3182, %v3572, %v3571
        %v3602 = vsel %vm3184, %v3573, %v3601
        %v3603 = vsel %vm3186, %v3574, %v3602
        %v3604 = vsel %vm3188, %v3575, %v3603
        %v3605 = vsel %vm3190, %v3576, %v3604
        %v3606 = vsel %vm3192, %v3577, %v3605
        %v3607 = vsel %vm3194, %v3578, %v3606
        %v3608 = vsel %vm3182, %v3580, %v3579
        %v3609 = vsel %vm3184, %v3581, %v3608
        %v3610 = vsel %vm3186, %v3582, %v3609
        %v3611 = vsel %vm3188, %v3583, %v3610
        %v3612 = vsel %vm3190, %v3584, %v3611
        %v3613 = vsel %vm3192, %v3585, %v3612
        %v3614 = vsel %vm3194, %v3586, %v3613
        %v3615 = vpack.c.b16 %v3600, %v3593
        %v3616 = vpack.c.b16 %v3614, %v3607
        %v3635 = vunpack.c.l.b16 %v676
        %v3636 = vunpack.c.l.b16 %v677
        %v3637 = vunpack.c.l.b16 %v678
        %v3638 = vunpack.c.l.b16 %v679
        %v3639 = vunpack.c.l.b16 %v680
        %v3640 = vunpack.c.l.b16 %v681
        %v3641 = vunpack.c.l.b16 %v682
        %v3642 = vunpack.c.l.b16 %v683
        %v3643 = vunpack.c.l.b16 %v684
        %v3644 = vunpack.c.l.b16 %v685
        %v3645 = vunpack.c.l.b16 %v686
        %v3646 = vunpack.c.l.b16 %v687
        %v3647 = vunpack.c.l.b16 %v688
        %v3648 = vunpack.c.l.b16 %v689
        %v3649 = vunpack.c.l.b16 %v690
        %v3650 = vunpack.c.l.b16 %v691
        %v3651 = vpack.c.b16 %v3636, %v3635
        %v3652 = vpack.c.b16 %v3638, %v3637
        %v3653 = vpack.c.b16 %v3640, %v3639
        %v3654 = vpack.c.b16 %v3642, %v3641
        %v3655 = vpack.c.b16 %v3644, %v3643
        %v3656 = vpack.c.b16 %v3646, %v3645
        %v3657 = vpack.c.b16 %v3648, %v3647
        %v3658 = vpack.c.b16 %v3650, %v3649
        %3667 = vmatpush.bf16.msra.mxu0 %v3658
        %3668 = vmatpush.bf16.msra.mxu0 %v3657
        %3669 = vmatpush.bf16.msra.mxu0 %v3656
        %3670 = vmatpush.bf16.msra.mxu0 %v3655
        %3671 = vmatpush.bf16.msra.mxu0 %v3654
        %3672 = vmatpush.bf16.msra.mxu0 %v3653
        %3673 = vmatpush.bf16.msra.mxu0 %v3652
        %3674 = vmatpush.bf16.msra.mxu0 %v3651
        %3675 = vmatmul.bf16.gmra.mxu0 %v3615
        %v3676 = vpop.f32.mrf.mxu0
        %v3677 = vadd.f32 0.0, %v3676
        %v3678 = vpop.f32.mrf.mxu0
        %v3679 = vadd.f32 0.0, %v3678
        %3680 = vmatmul.bf16.gmra.mxu0 %v3616
        %v3681 = vpop.f32.mrf.mxu0
        %v3682 = vadd.f32 0.0, %v3681
        %v3683 = vpop.f32.mrf.mxu0
        %v3684 = vadd.f32 0.0, %v3683
        %3685 = vdwg.mxu0
        %v3686 = vxor.u32 %v3677, 2147483648
        %v3687 = vxor.u32 %v3679, 2147483648
        %v3688 = vxor.u32 %v3682, 2147483648
        %v3689 = vxor.u32 %v3684, 2147483648
        %v3690 = vmul.f32 %v3686, 1.442695
        %v3691 = vpow.pop %v3690
        %v3692 = vmul.f32 %v3687, 1.442695
        %v3693 = vpow.pop %v3692
        %v3694 = vmul.f32 %v3688, 1.442695
        %v3695 = vpow.pop %v3694
        %v3696 = vmul.f32 %v3689, 1.442695
        %v3697 = vpow.pop %v3696
        %v3698 = vadd.f32 %v3691, 1.0
        %v3699 = vadd.f32 %v3693, 1.0
        %v3700 = vadd.f32 %v3695, 1.0
        %v3701 = vadd.f32 %v3697, 1.0
        %v3702 = vrcp.pop %v3698
        %v3703 = vmul.f32 %v3698, %v3702
        %v3704 = vsub.f32 1.0, %v3703
        %v3705 = vmul.f32 %v3702, %v3704
        %v3706 = vadd.f32 %v3702, %v3705
        %vm3707 = vweird.f32 %v3698
        %vm3708 = vweird.f32 %v3702
        %vm3709 = vmor %vm3707, %vm3708
        %v3710 = vsel %vm3709, %v3702, %v3706
        %v3711 = vand.u32 2147483647, %v3698
        %vm3712 = vcmp.eq.f32.partialorder %v3711, 8.507059e+37
        %v3713 = vand.u32 %v3698, 2147483648
        %v3714 = vor.u32 1.1754944e-38, %v3713
        %v3715 = vsel %vm3712, %v3714, %v3710
        %v3716 = vmul.f32 1.0, %v3715
        %v3717 = vrcp.pop %v3699
        %v3718 = vmul.f32 %v3699, %v3717
        %v3719 = vsub.f32 1.0, %v3718
        %v3720 = vmul.f32 %v3717, %v3719
        %v3721 = vadd.f32 %v3717, %v3720
        %vm3722 = vweird.f32 %v3699
        %vm3723 = vweird.f32 %v3717
        %vm3724 = vmor %vm3722, %vm3723
        %v3725 = vsel %vm3724, %v3717, %v3721
        %v3726 = vand.u32 2147483647, %v3699
        %vm3727 = vcmp.eq.f32.partialorder %v3726, 8.507059e+37
        %v3728 = vand.u32 %v3699, 2147483648
        %v3729 = vor.u32 1.1754944e-38, %v3728
        %v3730 = vsel %vm3727, %v3729, %v3725
        %v3731 = vmul.f32 1.0, %v3730
        %v3732 = vrcp.pop %v3700
        %v3733 = vmul.f32 %v3700, %v3732
        %v3734 = vsub.f32 1.0, %v3733
        %v3735 = vmul.f32 %v3732, %v3734
        %v3736 = vadd.f32 %v3732, %v3735
        %vm3737 = vweird.f32 %v3700
        %vm3738 = vweird.f32 %v3732
        %vm3739 = vmor %vm3737, %vm3738
        %v3740 = vsel %vm3739, %v3732, %v3736
        %v3741 = vand.u32 2147483647, %v3700
        %vm3742 = vcmp.eq.f32.partialorder %v3741, 8.507059e+37
        %v3743 = vand.u32 %v3700, 2147483648
        %v3744 = vor.u32 1.1754944e-38, %v3743
        %v3745 = vsel %vm3742, %v3744, %v3740
        %v3746 = vmul.f32 1.0, %v3745
        %v3747 = vrcp.pop %v3701
        %v3748 = vmul.f32 %v3701, %v3747
        %v3749 = vsub.f32 1.0, %v3748
        %v3750 = vmul.f32 %v3747, %v3749
        %v3751 = vadd.f32 %v3747, %v3750
        %vm3752 = vweird.f32 %v3701
        %vm3753 = vweird.f32 %v3747
        %vm3754 = vmor %vm3752, %vm3753
        %v3755 = vsel %vm3754, %v3747, %v3751
        %v3756 = vand.u32 2147483647, %v3701
        %vm3757 = vcmp.eq.f32.partialorder %v3756, 8.507059e+37
        %v3758 = vand.u32 %v3701, 2147483648
        %v3759 = vor.u32 1.1754944e-38, %v3758
        %v3760 = vsel %vm3757, %v3759, %v3755
        %v3761 = vmul.f32 1.0, %v3760
        %v3762 = vpack.c.bf16 %v3054, %v3054
        %v3763 = vpack.c.bf16 %v3055, %v3055
        %v3764 = vpack.c.bf16 %v3056, %v3056
        %v3765 = vpack.c.bf16 %v3057, %v3057
        %v3766 = vpack.c.bf16 %v3058, %v3058
        %v3767 = vpack.c.bf16 %v3059, %v3059
        %v3768 = vpack.c.bf16 %v3060, %v3060
        %v3769 = vpack.c.bf16 %v3061, %v3061
        %v3770 = vpack.c.bf16 %v3062, %v3062
        %v3771 = vpack.c.bf16 %v3063, %v3063
        %v3772 = vpack.c.bf16 %v3064, %v3064
        %v3773 = vpack.c.bf16 %v3065, %v3065
        %v3774 = vpack.c.bf16 %v3066, %v3066
        %v3775 = vpack.c.bf16 %v3067, %v3067
        %v3776 = vpack.c.bf16 %v3068, %v3068
        %v3777 = vpack.c.bf16 %v3069, %v3069
        %v3778 = vpack.c.bf16 %v3070, %v3070
        %v3779 = vpack.c.bf16 %v3071, %v3071
        %v3780 = vpack.c.bf16 %v3072, %v3072
        %v3781 = vpack.c.bf16 %v3073, %v3073
        %v3782 = vpack.c.bf16 %v3074, %v3074
        %v3783 = vpack.c.bf16 %v3075, %v3075
        %v3784 = vpack.c.bf16 %v3076, %v3076
        %v3785 = vpack.c.bf16 %v3077, %v3077
        %v3786 = vpack.c.bf16 %v3078, %v3078
        %v3787 = vpack.c.bf16 %v3079, %v3079
        %v3788 = vpack.c.bf16 %v3080, %v3080
        %v3789 = vpack.c.bf16 %v3081, %v3081
        %v3790 = vpack.c.bf16 %v3082, %v3082
        %v3791 = vpack.c.bf16 %v3083, %v3083
        %v3792 = vpack.c.bf16 %v3084, %v3084
        %v3793 = vpack.c.bf16 %v3085, %v3085
        %v3826 = vunpack.c.l.b16 %v3762
        %v3827 = vunpack.c.l.b16 %v3763
        %v3828 = vunpack.c.l.b16 %v3764
        %v3829 = vunpack.c.l.b16 %v3765
        %v3830 = vunpack.c.l.b16 %v3766
        %v3831 = vunpack.c.l.b16 %v3767
        %v3832 = vunpack.c.l.b16 %v3768
        %v3833 = vunpack.c.l.b16 %v3769
        %v3834 = vunpack.c.l.b16 %v3770
        %v3835 = vunpack.c.l.b16 %v3771
        %v3836 = vunpack.c.l.b16 %v3772
        %v3837 = vunpack.c.l.b16 %v3773
        %v3838 = vunpack.c.l.b16 %v3774
        %v3839 = vunpack.c.l.b16 %v3775
        %v3840 = vunpack.c.l.b16 %v3776
        %v3841 = vunpack.c.l.b16 %v3777
        %v3842 = vunpack.c.l.b16 %v3778
        %v3843 = vunpack.c.l.b16 %v3779
        %v3844 = vunpack.c.l.b16 %v3780
        %v3845 = vunpack.c.l.b16 %v3781
        %v3846 = vunpack.c.l.b16 %v3782
        %v3847 = vunpack.c.l.b16 %v3783
        %v3848 = vunpack.c.l.b16 %v3784
        %v3849 = vunpack.c.l.b16 %v3785
        %v3850 = vunpack.c.l.b16 %v3786
        %v3851 = vunpack.c.l.b16 %v3787
        %v3852 = vunpack.c.l.b16 %v3788
        %v3853 = vunpack.c.l.b16 %v3789
        %v3854 = vunpack.c.l.b16 %v3790
        %v3855 = vunpack.c.l.b16 %v3791
        %v3856 = vunpack.c.l.b16 %v3792
        %v3857 = vunpack.c.l.b16 %v3793
        %v3858 = vsel %vm3182, %v3827, %v3826
        %v3859 = vsel %vm3184, %v3828, %v3858
        %v3860 = vsel %vm3186, %v3829, %v3859
        %v3861 = vsel %vm3188, %v3830, %v3860
        %v3862 = vsel %vm3190, %v3831, %v3861
        %v3863 = vsel %vm3192, %v3832, %v3862
        %v3864 = vsel %vm3194, %v3833, %v3863
        %v3865 = vsel %vm3182, %v3835, %v3834
        %v3866 = vsel %vm3184, %v3836, %v3865
        %v3867 = vsel %vm3186, %v3837, %v3866
        %v3868 = vsel %vm3188, %v3838, %v3867
        %v3869 = vsel %vm3190, %v3839, %v3868
        %v3870 = vsel %vm3192, %v3840, %v3869
        %v3871 = vsel %vm3194, %v3841, %v3870
        %v3872 = vsel %vm3182, %v3843, %v3842
        %v3873 = vsel %vm3184, %v3844, %v3872
        %v3874 = vsel %vm3186, %v3845, %v3873
        %v3875 = vsel %vm3188, %v3846, %v3874
        %v3876 = vsel %vm3190, %v3847, %v3875
        %v3877 = vsel %vm3192, %v3848, %v3876
        %v3878 = vsel %vm3194, %v3849, %v3877
        %v3879 = vsel %vm3182, %v3851, %v3850
        %v3880 = vsel %vm3184, %v3852, %v3879
        %v3881 = vsel %vm3186, %v3853, %v3880
        %v3882 = vsel %vm3188, %v3854, %v3881
        %v3883 = vsel %vm3190, %v3855, %v3882
        %v3884 = vsel %vm3192, %v3856, %v3883
        %v3885 = vsel %vm3194, %v3857, %v3884
        %v3886 = vpack.c.b16 %v3871, %v3864
        %v3887 = vpack.c.b16 %v3885, %v3878
        %v3906 = vunpack.c.l.b16 %v692
        %v3907 = vunpack.c.l.b16 %v693
        %v3908 = vunpack.c.l.b16 %v694
        %v3909 = vunpack.c.l.b16 %v695
        %v3910 = vunpack.c.l.b16 %v696
        %v3911 = vunpack.c.l.b16 %v697
        %v3912 = vunpack.c.l.b16 %v698
        %v3913 = vunpack.c.l.b16 %v699
        %v3914 = vunpack.c.l.b16 %v700
        %v3915 = vunpack.c.l.b16 %v701
        %v3916 = vunpack.c.l.b16 %v702
        %v3917 = vunpack.c.l.b16 %v703
        %v3918 = vunpack.c.l.b16 %v704
        %v3919 = vunpack.c.l.b16 %v705
        %v3920 = vunpack.c.l.b16 %v706
        %v3921 = vunpack.c.l.b16 %v707
        %v3922 = vpack.c.b16 %v3907, %v3906
        %v3923 = vpack.c.b16 %v3909, %v3908
        %v3924 = vpack.c.b16 %v3911, %v3910
        %v3925 = vpack.c.b16 %v3913, %v3912
        %v3926 = vpack.c.b16 %v3915, %v3914
        %v3927 = vpack.c.b16 %v3917, %v3916
        %v3928 = vpack.c.b16 %v3919, %v3918
        %v3929 = vpack.c.b16 %v3921, %v3920
        %3938 = vmatpush.bf16.msra.mxu0 %v3929
        %3939 = vmatpush.bf16.msra.mxu0 %v3928
        %3940 = vmatpush.bf16.msra.mxu0 %v3927
        %3941 = vmatpush.bf16.msra.mxu0 %v3926
        %3942 = vmatpush.bf16.msra.mxu0 %v3925
        %3943 = vmatpush.bf16.msra.mxu0 %v3924
        %3944 = vmatpush.bf16.msra.mxu0 %v3923
        %3945 = vmatpush.bf16.msra.mxu0 %v3922
        %3946 = vmatmul.bf16.gmra.mxu0 %v3886
        %v3947 = vpop.f32.mrf.mxu0
        %v3948 = vadd.f32 0.0, %v3947
        %v3949 = vpop.f32.mrf.mxu0
        %v3950 = vadd.f32 0.0, %v3949
        %3951 = vmatmul.bf16.gmra.mxu0 %v3887
        %v3952 = vpop.f32.mrf.mxu0
        %v3953 = vadd.f32 0.0, %v3952
        %v3954 = vpop.f32.mrf.mxu0
        %v3955 = vadd.f32 0.0, %v3954
        %3956 = vdwg.mxu0
        %v3957 = vxor.u32 %v3948, 2147483648
        %v3958 = vxor.u32 %v3950, 2147483648
        %v3959 = vxor.u32 %v3953, 2147483648
        %v3960 = vxor.u32 %v3955, 2147483648
        %v3961 = vmul.f32 %v3957, 1.442695
        %v3962 = vpow.pop %v3961
        %v3963 = vmul.f32 %v3958, 1.442695
        %v3964 = vpow.pop %v3963
        %v3965 = vmul.f32 %v3959, 1.442695
        %v3966 = vpow.pop %v3965
        %v3967 = vmul.f32 %v3960, 1.442695
        %v3968 = vpow.pop %v3967
        %v3969 = vadd.f32 %v3962, 1.0
        %v3970 = vadd.f32 %v3964, 1.0
        %v3971 = vadd.f32 %v3966, 1.0
        %v3972 = vadd.f32 %v3968, 1.0
        %v3973 = vrcp.pop %v3969
        %v3974 = vmul.f32 %v3969, %v3973
        %v3975 = vsub.f32 1.0, %v3974
        %v3976 = vmul.f32 %v3973, %v3975
        %v3977 = vadd.f32 %v3973, %v3976
        %vm3978 = vweird.f32 %v3969
        %vm3979 = vweird.f32 %v3973
        %vm3980 = vmor %vm3978, %vm3979
        %v3981 = vsel %vm3980, %v3973, %v3977
        %v3982 = vand.u32 2147483647, %v3969
        %vm3983 = vcmp.eq.f32.partialorder %v3982, 8.507059e+37
        %v3984 = vand.u32 %v3969, 2147483648
        %v3985 = vor.u32 1.1754944e-38, %v3984
        %v3986 = vsel %vm3983, %v3985, %v3981
        %v3987 = vmul.f32 1.0, %v3986
        %v3988 = vrcp.pop %v3970
        %v3989 = vmul.f32 %v3970, %v3988
        %v3990 = vsub.f32 1.0, %v3989
        %v3991 = vmul.f32 %v3988, %v3990
        %v3992 = vadd.f32 %v3988, %v3991
        %vm3993 = vweird.f32 %v3970
        %vm3994 = vweird.f32 %v3988
        %vm3995 = vmor %vm3993, %vm3994
        %v3996 = vsel %vm3995, %v3988, %v3992
        %v3997 = vand.u32 2147483647, %v3970
        %vm3998 = vcmp.eq.f32.partialorder %v3997, 8.507059e+37
        %v3999 = vand.u32 %v3970, 2147483648
        %v4000 = vor.u32 1.1754944e-38, %v3999
        %v4001 = vsel %vm3998, %v4000, %v3996
        %v4002 = vmul.f32 1.0, %v4001
        %v4003 = vrcp.pop %v3971
        %v4004 = vmul.f32 %v3971, %v4003
        %v4005 = vsub.f32 1.0, %v4004
        %v4006 = vmul.f32 %v4003, %v4005
        %v4007 = vadd.f32 %v4003, %v4006
        %vm4008 = vweird.f32 %v3971
        %vm4009 = vweird.f32 %v4003
        %vm4010 = vmor %vm4008, %vm4009
        %v4011 = vsel %vm4010, %v4003, %v4007
        %v4012 = vand.u32 2147483647, %v3971
        %vm4013 = vcmp.eq.f32.partialorder %v4012, 8.507059e+37
        %v4014 = vand.u32 %v3971, 2147483648
        %v4015 = vor.u32 1.1754944e-38, %v4014
        %v4016 = vsel %vm4013, %v4015, %v4011
        %v4017 = vmul.f32 1.0, %v4016
        %v4018 = vrcp.pop %v3972
        %v4019 = vmul.f32 %v3972, %v4018
        %v4020 = vsub.f32 1.0, %v4019
        %v4021 = vmul.f32 %v4018, %v4020
        %v4022 = vadd.f32 %v4018, %v4021
        %vm4023 = vweird.f32 %v3972
        %vm4024 = vweird.f32 %v4018
        %vm4025 = vmor %vm4023, %vm4024
        %v4026 = vsel %vm4025, %v4018, %v4022
        %v4027 = vand.u32 2147483647, %v3972
        %vm4028 = vcmp.eq.f32.partialorder %v4027, 8.507059e+37
        %v4029 = vand.u32 %v3972, 2147483648
        %v4030 = vor.u32 1.1754944e-38, %v4029
        %v4031 = vsel %vm4028, %v4030, %v4026
        %v4032 = vmul.f32 1.0, %v4031
        %v4037 = vrot.slane %v3400, 1
        %v4038 = vrot.slane %v3400, 2
        %v4039 = vrot.slane %v3400, 3
        %v4040 = vrot.slane %v3400, 4
        %v4041 = vrot.slane %v3400, 5
        %v4042 = vrot.slane %v3400, 6
        %v4043 = vrot.slane %v3400, 7
        %v4044 = vrot.slane %v3430, 1
        %v4045 = vrot.slane %v3430, 2
        %v4046 = vrot.slane %v3430, 3
        %v4047 = vrot.slane %v3430, 4
        %v4048 = vrot.slane %v3430, 5
        %v4049 = vrot.slane %v3430, 6
        %v4050 = vrot.slane %v3430, 7
        %v4051 = vrot.slane %v3460, 1
        %v4052 = vrot.slane %v3460, 2
        %v4053 = vrot.slane %v3460, 3
        %v4054 = vrot.slane %v3460, 4
        %v4055 = vrot.slane %v3460, 5
        %v4056 = vrot.slane %v3460, 6
        %v4057 = vrot.slane %v3460, 7
        %v4058 = vrot.slane %v3490, 1
        %v4059 = vrot.slane %v3490, 2
        %v4060 = vrot.slane %v3490, 3
        %v4061 = vrot.slane %v3490, 4
        %v4062 = vrot.slane %v3490, 5
        %v4063 = vrot.slane %v3490, 6
        %v4064 = vrot.slane %v3490, 7
        %v4065 = vperm.slane %v3400, 0
        %v4066 = vperm.slane %v4037, 0
        %v4067 = vperm.slane %v4038, 0
        %v4068 = vperm.slane %v4039, 0
        %v4069 = vperm.slane %v4040, 0
        %v4070 = vperm.slane %v4041, 0
        %v4071 = vperm.slane %v4042, 0
        %v4072 = vperm.slane %v4043, 0
        %v4073 = vperm.slane %v3430, 0
        %v4074 = vperm.slane %v4044, 0
        %v4075 = vperm.slane %v4045, 0
        %v4076 = vperm.slane %v4046, 0
        %v4077 = vperm.slane %v4047, 0
        %v4078 = vperm.slane %v4048, 0
        %v4079 = vperm.slane %v4049, 0
        %v4080 = vperm.slane %v4050, 0
        %v4081 = vperm.slane %v3460, 0
        %v4082 = vperm.slane %v4051, 0
        %v4083 = vperm.slane %v4052, 0
        %v4084 = vperm.slane %v4053, 0
        %v4085 = vperm.slane %v4054, 0
        %v4086 = vperm.slane %v4055, 0
        %v4087 = vperm.slane %v4056, 0
        %v4088 = vperm.slane %v4057, 0
        %v4089 = vperm.slane %v3490, 0
        %v4090 = vperm.slane %v4058, 0
        %v4091 = vperm.slane %v4059, 0
        %v4092 = vperm.slane %v4060, 0
        %v4093 = vperm.slane %v4061, 0
        %v4094 = vperm.slane %v4062, 0
        %v4095 = vperm.slane %v4063, 0
        %v4096 = vperm.slane %v4064, 0
        %v4129 = vmul.f32 %v1683, %v4065
        %v4130 = vmul.f32 %v1684, %v4065
        %v4131 = vmul.f32 %v1685, %v4066
        %v4132 = vmul.f32 %v1686, %v4066
        %v4133 = vmul.f32 %v1687, %v4067
        %v4134 = vmul.f32 %v1688, %v4067
        %v4135 = vmul.f32 %v1689, %v4068
        %v4136 = vmul.f32 %v1690, %v4068
        %v4137 = vmul.f32 %v1691, %v4069
        %v4138 = vmul.f32 %v1692, %v4069
        %v4139 = vmul.f32 %v1693, %v4070
        %v4140 = vmul.f32 %v1694, %v4070
        %v4141 = vmul.f32 %v1695, %v4071
        %v4142 = vmul.f32 %v1696, %v4071
        %v4143 = vmul.f32 %v1697, %v4072
        %v4144 = vmul.f32 %v1698, %v4072
        %v4145 = vmul.f32 %v1699, %v4073
        %v4146 = vmul.f32 %v1700, %v4073
        %v4147 = vmul.f32 %v1701, %v4074
        %v4148 = vmul.f32 %v1702, %v4074
        %v4149 = vmul.f32 %v1703, %v4075
        %v4150 = vmul.f32 %v1704, %v4075
        %v4151 = vmul.f32 %v1705, %v4076
        %v4152 = vmul.f32 %v1706, %v4076
        %v4153 = vmul.f32 %v1707, %v4077
        %v4154 = vmul.f32 %v1708, %v4077
        %v4155 = vmul.f32 %v1709, %v4078
        %v4156 = vmul.f32 %v1710, %v4078
        %v4157 = vmul.f32 %v1711, %v4079
        %v4158 = vmul.f32 %v1712, %v4079
        %v4159 = vmul.f32 %v1713, %v4080
        %v4160 = vmul.f32 %v1714, %v4080
        %v4161 = vmul.f32 %v1715, %v4081
        %v4162 = vmul.f32 %v1716, %v4081
        %v4163 = vmul.f32 %v1717, %v4082
        %v4164 = vmul.f32 %v1718, %v4082
        %v4165 = vmul.f32 %v1719, %v4083
        %v4166 = vmul.f32 %v1720, %v4083
        %v4167 = vmul.f32 %v1721, %v4084
        %v4168 = vmul.f32 %v1722, %v4084
        %v4169 = vmul.f32 %v1723, %v4085
        %v4170 = vmul.f32 %v1724, %v4085
        %v4171 = vmul.f32 %v1725, %v4086
        %v4172 = vmul.f32 %v1726, %v4086
        %v4173 = vmul.f32 %v1727, %v4087
        %v4174 = vmul.f32 %v1728, %v4087
        %v4175 = vmul.f32 %v1729, %v4088
        %v4176 = vmul.f32 %v1730, %v4088
        %v4177 = vmul.f32 %v1731, %v4089
        %v4178 = vmul.f32 %v1732, %v4089
        %v4179 = vmul.f32 %v1733, %v4090
        %v4180 = vmul.f32 %v1734, %v4090
        %v4181 = vmul.f32 %v1735, %v4091
        %v4182 = vmul.f32 %v1736, %v4091
        %v4183 = vmul.f32 %v1737, %v4092
        %v4184 = vmul.f32 %v1738, %v4092
        %v4185 = vmul.f32 %v1739, %v4093
        %v4186 = vmul.f32 %v1740, %v4093
        %v4187 = vmul.f32 %v1741, %v4094
        %v4188 = vmul.f32 %v1742, %v4094
        %v4189 = vmul.f32 %v1743, %v4095
        %v4190 = vmul.f32 %v1744, %v4095
        %v4191 = vmul.f32 %v1745, %v4096
        %v4192 = vmul.f32 %v1746, %v4096
        %v4193 = vadd.f32 %v2190, %v4129
        %v4194 = vadd.f32 %v2191, %v4130
        %v4195 = vadd.f32 %v2192, %v4131
        %v4196 = vadd.f32 %v2193, %v4132
        %v4197 = vadd.f32 %v2194, %v4133
        %v4198 = vadd.f32 %v2195, %v4134
        %v4199 = vadd.f32 %v2196, %v4135
        %v4200 = vadd.f32 %v2197, %v4136
        %v4201 = vadd.f32 %v2198, %v4137
        %v4202 = vadd.f32 %v2199, %v4138
        %v4203 = vadd.f32 %v2200, %v4139
        %v4204 = vadd.f32 %v2201, %v4140
        %v4205 = vadd.f32 %v2202, %v4141
        %v4206 = vadd.f32 %v2203, %v4142
        %v4207 = vadd.f32 %v2204, %v4143
        %v4208 = vadd.f32 %v2205, %v4144
        %v4209 = vadd.f32 %v2206, %v4145
        %v4210 = vadd.f32 %v2207, %v4146
        %v4211 = vadd.f32 %v2208, %v4147
        %v4212 = vadd.f32 %v2209, %v4148
        %v4213 = vadd.f32 %v2210, %v4149
        %v4214 = vadd.f32 %v2211, %v4150
        %v4215 = vadd.f32 %v2212, %v4151
        %v4216 = vadd.f32 %v2213, %v4152
        %v4217 = vadd.f32 %v2214, %v4153
        %v4218 = vadd.f32 %v2215, %v4154
        %v4219 = vadd.f32 %v2216, %v4155
        %v4220 = vadd.f32 %v2217, %v4156
        %v4221 = vadd.f32 %v2218, %v4157
        %v4222 = vadd.f32 %v2219, %v4158
        %v4223 = vadd.f32 %v2220, %v4159
        %v4224 = vadd.f32 %v2221, %v4160
        %v4225 = vadd.f32 %v2222, %v4161
        %v4226 = vadd.f32 %v2223, %v4162
        %v4227 = vadd.f32 %v2224, %v4163
        %v4228 = vadd.f32 %v2225, %v4164
        %v4229 = vadd.f32 %v2226, %v4165
        %v4230 = vadd.f32 %v2227, %v4166
        %v4231 = vadd.f32 %v2228, %v4167
        %v4232 = vadd.f32 %v2229, %v4168
        %v4233 = vadd.f32 %v2230, %v4169
        %v4234 = vadd.f32 %v2231, %v4170
        %v4235 = vadd.f32 %v2232, %v4171
        %v4236 = vadd.f32 %v2233, %v4172
        %v4237 = vadd.f32 %v2234, %v4173
        %v4238 = vadd.f32 %v2235, %v4174
        %v4239 = vadd.f32 %v2236, %v4175
        %v4240 = vadd.f32 %v2237, %v4176
        %v4241 = vadd.f32 %v2238, %v4177
        %v4242 = vadd.f32 %v2239, %v4178
        %v4243 = vadd.f32 %v2240, %v4179
        %v4244 = vadd.f32 %v2241, %v4180
        %v4245 = vadd.f32 %v2242, %v4181
        %v4246 = vadd.f32 %v2243, %v4182
        %v4247 = vadd.f32 %v2244, %v4183
        %v4248 = vadd.f32 %v2245, %v4184
        %v4249 = vadd.f32 %v2246, %v4185
        %v4250 = vadd.f32 %v2247, %v4186
        %v4251 = vadd.f32 %v2248, %v4187
        %v4252 = vadd.f32 %v2249, %v4188
        %v4253 = vadd.f32 %v2250, %v4189
        %v4254 = vadd.f32 %v2251, %v4190
        %v4255 = vadd.f32 %v2252, %v4191
        %v4256 = vadd.f32 %v2253, %v4192
        %v4261 = vrot.slane %v3385, 1
        %v4262 = vrot.slane %v3385, 2
        %v4263 = vrot.slane %v3385, 3
        %v4264 = vrot.slane %v3385, 4
        %v4265 = vrot.slane %v3385, 5
        %v4266 = vrot.slane %v3385, 6
        %v4267 = vrot.slane %v3385, 7
        %v4268 = vrot.slane %v3415, 1
        %v4269 = vrot.slane %v3415, 2
        %v4270 = vrot.slane %v3415, 3
        %v4271 = vrot.slane %v3415, 4
        %v4272 = vrot.slane %v3415, 5
        %v4273 = vrot.slane %v3415, 6
        %v4274 = vrot.slane %v3415, 7
        %v4275 = vrot.slane %v3445, 1
        %v4276 = vrot.slane %v3445, 2
        %v4277 = vrot.slane %v3445, 3
        %v4278 = vrot.slane %v3445, 4
        %v4279 = vrot.slane %v3445, 5
        %v4280 = vrot.slane %v3445, 6
        %v4281 = vrot.slane %v3445, 7
        %v4282 = vrot.slane %v3475, 1
        %v4283 = vrot.slane %v3475, 2
        %v4284 = vrot.slane %v3475, 3
        %v4285 = vrot.slane %v3475, 4
        %v4286 = vrot.slane %v3475, 5
        %v4287 = vrot.slane %v3475, 6
        %v4288 = vrot.slane %v3475, 7
        %v4289 = vperm.slane %v3385, 0
        %v4290 = vperm.slane %v4261, 0
        %v4291 = vperm.slane %v4262, 0
        %v4292 = vperm.slane %v4263, 0
        %v4293 = vperm.slane %v4264, 0
        %v4294 = vperm.slane %v4265, 0
        %v4295 = vperm.slane %v4266, 0
        %v4296 = vperm.slane %v4267, 0
        %v4297 = vperm.slane %v3415, 0
        %v4298 = vperm.slane %v4268, 0
        %v4299 = vperm.slane %v4269, 0
        %v4300 = vperm.slane %v4270, 0
        %v4301 = vperm.slane %v4271, 0
        %v4302 = vperm.slane %v4272, 0
        %v4303 = vperm.slane %v4273, 0
        %v4304 = vperm.slane %v4274, 0
        %v4305 = vperm.slane %v3445, 0
        %v4306 = vperm.slane %v4275, 0
        %v4307 = vperm.slane %v4276, 0
        %v4308 = vperm.slane %v4277, 0
        %v4309 = vperm.slane %v4278, 0
        %v4310 = vperm.slane %v4279, 0
        %v4311 = vperm.slane %v4280, 0
        %v4312 = vperm.slane %v4281, 0
        %v4313 = vperm.slane %v3475, 0
        %v4314 = vperm.slane %v4282, 0
        %v4315 = vperm.slane %v4283, 0
        %v4316 = vperm.slane %v4284, 0
        %v4317 = vperm.slane %v4285, 0
        %v4318 = vperm.slane %v4286, 0
        %v4319 = vperm.slane %v4287, 0
        %v4320 = vperm.slane %v4288, 0
        %v4353 = vmul.f32 %v1683, %v4289
        %v4354 = vmul.f32 %v1684, %v4289
        %v4355 = vmul.f32 %v1685, %v4290
        %v4356 = vmul.f32 %v1686, %v4290
        %v4357 = vmul.f32 %v1687, %v4291
        %v4358 = vmul.f32 %v1688, %v4291
        %v4359 = vmul.f32 %v1689, %v4292
        %v4360 = vmul.f32 %v1690, %v4292
        %v4361 = vmul.f32 %v1691, %v4293
        %v4362 = vmul.f32 %v1692, %v4293
        %v4363 = vmul.f32 %v1693, %v4294
        %v4364 = vmul.f32 %v1694, %v4294
        %v4365 = vmul.f32 %v1695, %v4295
        %v4366 = vmul.f32 %v1696, %v4295
        %v4367 = vmul.f32 %v1697, %v4296
        %v4368 = vmul.f32 %v1698, %v4296
        %v4369 = vmul.f32 %v1699, %v4297
        %v4370 = vmul.f32 %v1700, %v4297
        %v4371 = vmul.f32 %v1701, %v4298
        %v4372 = vmul.f32 %v1702, %v4298
        %v4373 = vmul.f32 %v1703, %v4299
        %v4374 = vmul.f32 %v1704, %v4299
        %v4375 = vmul.f32 %v1705, %v4300
        %v4376 = vmul.f32 %v1706, %v4300
        %v4377 = vmul.f32 %v1707, %v4301
        %v4378 = vmul.f32 %v1708, %v4301
        %v4379 = vmul.f32 %v1709, %v4302
        %v4380 = vmul.f32 %v1710, %v4302
        %v4381 = vmul.f32 %v1711, %v4303
        %v4382 = vmul.f32 %v1712, %v4303
        %v4383 = vmul.f32 %v1713, %v4304
        %v4384 = vmul.f32 %v1714, %v4304
        %v4385 = vmul.f32 %v1715, %v4305
        %v4386 = vmul.f32 %v1716, %v4305
        %v4387 = vmul.f32 %v1717, %v4306
        %v4388 = vmul.f32 %v1718, %v4306
        %v4389 = vmul.f32 %v1719, %v4307
        %v4390 = vmul.f32 %v1720, %v4307
        %v4391 = vmul.f32 %v1721, %v4308
        %v4392 = vmul.f32 %v1722, %v4308
        %v4393 = vmul.f32 %v1723, %v4309
        %v4394 = vmul.f32 %v1724, %v4309
        %v4395 = vmul.f32 %v1725, %v4310
        %v4396 = vmul.f32 %v1726, %v4310
        %v4397 = vmul.f32 %v1727, %v4311
        %v4398 = vmul.f32 %v1728, %v4311
        %v4399 = vmul.f32 %v1729, %v4312
        %v4400 = vmul.f32 %v1730, %v4312
        %v4401 = vmul.f32 %v1731, %v4313
        %v4402 = vmul.f32 %v1732, %v4313
        %v4403 = vmul.f32 %v1733, %v4314
        %v4404 = vmul.f32 %v1734, %v4314
        %v4405 = vmul.f32 %v1735, %v4315
        %v4406 = vmul.f32 %v1736, %v4315
        %v4407 = vmul.f32 %v1737, %v4316
        %v4408 = vmul.f32 %v1738, %v4316
        %v4409 = vmul.f32 %v1739, %v4317
        %v4410 = vmul.f32 %v1740, %v4317
        %v4411 = vmul.f32 %v1741, %v4318
        %v4412 = vmul.f32 %v1742, %v4318
        %v4413 = vmul.f32 %v1743, %v4319
        %v4414 = vmul.f32 %v1744, %v4319
        %v4415 = vmul.f32 %v1745, %v4320
        %v4416 = vmul.f32 %v1746, %v4320
        %v4421 = vrot.slane %v3716, 1
        %v4422 = vrot.slane %v3716, 2
        %v4423 = vrot.slane %v3716, 3
        %v4424 = vrot.slane %v3716, 4
        %v4425 = vrot.slane %v3716, 5
        %v4426 = vrot.slane %v3716, 6
        %v4427 = vrot.slane %v3716, 7
        %v4428 = vrot.slane %v3731, 1
        %v4429 = vrot.slane %v3731, 2
        %v4430 = vrot.slane %v3731, 3
        %v4431 = vrot.slane %v3731, 4
        %v4432 = vrot.slane %v3731, 5
        %v4433 = vrot.slane %v3731, 6
        %v4434 = vrot.slane %v3731, 7
        %v4435 = vrot.slane %v3746, 1
        %v4436 = vrot.slane %v3746, 2
        %v4437 = vrot.slane %v3746, 3
        %v4438 = vrot.slane %v3746, 4
        %v4439 = vrot.slane %v3746, 5
        %v4440 = vrot.slane %v3746, 6
        %v4441 = vrot.slane %v3746, 7
        %v4442 = vrot.slane %v3761, 1
        %v4443 = vrot.slane %v3761, 2
        %v4444 = vrot.slane %v3761, 3
        %v4445 = vrot.slane %v3761, 4
        %v4446 = vrot.slane %v3761, 5
        %v4447 = vrot.slane %v3761, 6
        %v4448 = vrot.slane %v3761, 7
        %v4449 = vperm.slane %v3716, 0
        %v4450 = vperm.slane %v4421, 0
        %v4451 = vperm.slane %v4422, 0
        %v4452 = vperm.slane %v4423, 0
        %v4453 = vperm.slane %v4424, 0
        %v4454 = vperm.slane %v4425, 0
        %v4455 = vperm.slane %v4426, 0
        %v4456 = vperm.slane %v4427, 0
        %v4457 = vperm.slane %v3731, 0
        %v4458 = vperm.slane %v4428, 0
        %v4459 = vperm.slane %v4429, 0
        %v4460 = vperm.slane %v4430, 0
        %v4461 = vperm.slane %v4431, 0
        %v4462 = vperm.slane %v4432, 0
        %v4463 = vperm.slane %v4433, 0
        %v4464 = vperm.slane %v4434, 0
        %v4465 = vperm.slane %v3746, 0
        %v4466 = vperm.slane %v4435, 0
        %v4467 = vperm.slane %v4436, 0
        %v4468 = vperm.slane %v4437, 0
        %v4469 = vperm.slane %v4438, 0
        %v4470 = vperm.slane %v4439, 0
        %v4471 = vperm.slane %v4440, 0
        %v4472 = vperm.slane %v4441, 0
        %v4473 = vperm.slane %v3761, 0
        %v4474 = vperm.slane %v4442, 0
        %v4475 = vperm.slane %v4443, 0
        %v4476 = vperm.slane %v4444, 0
        %v4477 = vperm.slane %v4445, 0
        %v4478 = vperm.slane %v4446, 0
        %v4479 = vperm.slane %v4447, 0
        %v4480 = vperm.slane %v4448, 0
        %v4513 = vmul.f32 %v1747, %v4449
        %v4514 = vmul.f32 %v1748, %v4449
        %v4515 = vmul.f32 %v1749, %v4450
        %v4516 = vmul.f32 %v1750, %v4450
        %v4517 = vmul.f32 %v1751, %v4451
        %v4518 = vmul.f32 %v1752, %v4451
        %v4519 = vmul.f32 %v1753, %v4452
        %v4520 = vmul.f32 %v1754, %v4452
        %v4521 = vmul.f32 %v1755, %v4453
        %v4522 = vmul.f32 %v1756, %v4453
        %v4523 = vmul.f32 %v1757, %v4454
        %v4524 = vmul.f32 %v1758, %v4454
        %v4525 = vmul.f32 %v1759, %v4455
        %v4526 = vmul.f32 %v1760, %v4455
        %v4527 = vmul.f32 %v1761, %v4456
        %v4528 = vmul.f32 %v1762, %v4456
        %v4529 = vmul.f32 %v1763, %v4457
        %v4530 = vmul.f32 %v1764, %v4457
        %v4531 = vmul.f32 %v1765, %v4458
        %v4532 = vmul.f32 %v1766, %v4458
        %v4533 = vmul.f32 %v1767, %v4459
        %v4534 = vmul.f32 %v1768, %v4459
        %v4535 = vmul.f32 %v1769, %v4460
        %v4536 = vmul.f32 %v1770, %v4460
        %v4537 = vmul.f32 %v1771, %v4461
        %v4538 = vmul.f32 %v1772, %v4461
        %v4539 = vmul.f32 %v1773, %v4462
        %v4540 = vmul.f32 %v1774, %v4462
        %v4541 = vmul.f32 %v1775, %v4463
        %v4542 = vmul.f32 %v1776, %v4463
        %v4543 = vmul.f32 %v1777, %v4464
        %v4544 = vmul.f32 %v1778, %v4464
        %v4545 = vmul.f32 %v1779, %v4465
        %v4546 = vmul.f32 %v1780, %v4465
        %v4547 = vmul.f32 %v1781, %v4466
        %v4548 = vmul.f32 %v1782, %v4466
        %v4549 = vmul.f32 %v1783, %v4467
        %v4550 = vmul.f32 %v1784, %v4467
        %v4551 = vmul.f32 %v1785, %v4468
        %v4552 = vmul.f32 %v1786, %v4468
        %v4553 = vmul.f32 %v1787, %v4469
        %v4554 = vmul.f32 %v1788, %v4469
        %v4555 = vmul.f32 %v1789, %v4470
        %v4556 = vmul.f32 %v1790, %v4470
        %v4557 = vmul.f32 %v1791, %v4471
        %v4558 = vmul.f32 %v1792, %v4471
        %v4559 = vmul.f32 %v1793, %v4472
        %v4560 = vmul.f32 %v1794, %v4472
        %v4561 = vmul.f32 %v1795, %v4473
        %v4562 = vmul.f32 %v1796, %v4473
        %v4563 = vmul.f32 %v1797, %v4474
        %v4564 = vmul.f32 %v1798, %v4474
        %v4565 = vmul.f32 %v1799, %v4475
        %v4566 = vmul.f32 %v1800, %v4475
        %v4567 = vmul.f32 %v1801, %v4476
        %v4568 = vmul.f32 %v1802, %v4476
        %v4569 = vmul.f32 %v1803, %v4477
        %v4570 = vmul.f32 %v1804, %v4477
        %v4571 = vmul.f32 %v1805, %v4478
        %v4572 = vmul.f32 %v1806, %v4478
        %v4573 = vmul.f32 %v1807, %v4479
        %v4574 = vmul.f32 %v1808, %v4479
        %v4575 = vmul.f32 %v1809, %v4480
        %v4576 = vmul.f32 %v1810, %v4480
        %v4577 = vadd.f32 %v4353, %v4513
        %v4578 = vadd.f32 %v4354, %v4514
        %v4579 = vadd.f32 %v4355, %v4515
        %v4580 = vadd.f32 %v4356, %v4516
        %v4581 = vadd.f32 %v4357, %v4517
        %v4582 = vadd.f32 %v4358, %v4518
        %v4583 = vadd.f32 %v4359, %v4519
        %v4584 = vadd.f32 %v4360, %v4520
        %v4585 = vadd.f32 %v4361, %v4521
        %v4586 = vadd.f32 %v4362, %v4522
        %v4587 = vadd.f32 %v4363, %v4523
        %v4588 = vadd.f32 %v4364, %v4524
        %v4589 = vadd.f32 %v4365, %v4525
        %v4590 = vadd.f32 %v4366, %v4526
        %v4591 = vadd.f32 %v4367, %v4527
        %v4592 = vadd.f32 %v4368, %v4528
        %v4593 = vadd.f32 %v4369, %v4529
        %v4594 = vadd.f32 %v4370, %v4530
        %v4595 = vadd.f32 %v4371, %v4531
        %v4596 = vadd.f32 %v4372, %v4532
        %v4597 = vadd.f32 %v4373, %v4533
        %v4598 = vadd.f32 %v4374, %v4534
        %v4599 = vadd.f32 %v4375, %v4535
        %v4600 = vadd.f32 %v4376, %v4536
        %v4601 = vadd.f32 %v4377, %v4537
        %v4602 = vadd.f32 %v4378, %v4538
        %v4603 = vadd.f32 %v4379, %v4539
        %v4604 = vadd.f32 %v4380, %v4540
        %v4605 = vadd.f32 %v4381, %v4541
        %v4606 = vadd.f32 %v4382, %v4542
        %v4607 = vadd.f32 %v4383, %v4543
        %v4608 = vadd.f32 %v4384, %v4544
        %v4609 = vadd.f32 %v4385, %v4545
        %v4610 = vadd.f32 %v4386, %v4546
        %v4611 = vadd.f32 %v4387, %v4547
        %v4612 = vadd.f32 %v4388, %v4548
        %v4613 = vadd.f32 %v4389, %v4549
        %v4614 = vadd.f32 %v4390, %v4550
        %v4615 = vadd.f32 %v4391, %v4551
        %v4616 = vadd.f32 %v4392, %v4552
        %v4617 = vadd.f32 %v4393, %v4553
        %v4618 = vadd.f32 %v4394, %v4554
        %v4619 = vadd.f32 %v4395, %v4555
        %v4620 = vadd.f32 %v4396, %v4556
        %v4621 = vadd.f32 %v4397, %v4557
        %v4622 = vadd.f32 %v4398, %v4558
        %v4623 = vadd.f32 %v4399, %v4559
        %v4624 = vadd.f32 %v4400, %v4560
        %v4625 = vadd.f32 %v4401, %v4561
        %v4626 = vadd.f32 %v4402, %v4562
        %v4627 = vadd.f32 %v4403, %v4563
        %v4628 = vadd.f32 %v4404, %v4564
        %v4629 = vadd.f32 %v4405, %v4565
        %v4630 = vadd.f32 %v4406, %v4566
        %v4631 = vadd.f32 %v4407, %v4567
        %v4632 = vadd.f32 %v4408, %v4568
        %v4633 = vadd.f32 %v4409, %v4569
        %v4634 = vadd.f32 %v4410, %v4570
        %v4635 = vadd.f32 %v4411, %v4571
        %v4636 = vadd.f32 %v4412, %v4572
        %v4637 = vadd.f32 %v4413, %v4573
        %v4638 = vadd.f32 %v4414, %v4574
        %v4639 = vadd.f32 %v4415, %v4575
        %v4640 = vadd.f32 %v4416, %v4576
        %v4645 = vrot.slane %v3987, 1
        %v4646 = vrot.slane %v3987, 2
        %v4647 = vrot.slane %v3987, 3
        %v4648 = vrot.slane %v3987, 4
        %v4649 = vrot.slane %v3987, 5
        %v4650 = vrot.slane %v3987, 6
        %v4651 = vrot.slane %v3987, 7
        %v4652 = vrot.slane %v4002, 1
        %v4653 = vrot.slane %v4002, 2
        %v4654 = vrot.slane %v4002, 3
        %v4655 = vrot.slane %v4002, 4
        %v4656 = vrot.slane %v4002, 5
        %v4657 = vrot.slane %v4002, 6
        %v4658 = vrot.slane %v4002, 7
        %v4659 = vrot.slane %v4017, 1
        %v4660 = vrot.slane %v4017, 2
        %v4661 = vrot.slane %v4017, 3
        %v4662 = vrot.slane %v4017, 4
        %v4663 = vrot.slane %v4017, 5
        %v4664 = vrot.slane %v4017, 6
        %v4665 = vrot.slane %v4017, 7
        %v4666 = vrot.slane %v4032, 1
        %v4667 = vrot.slane %v4032, 2
        %v4668 = vrot.slane %v4032, 3
        %v4669 = vrot.slane %v4032, 4
        %v4670 = vrot.slane %v4032, 5
        %v4671 = vrot.slane %v4032, 6
        %v4672 = vrot.slane %v4032, 7
        %v4673 = vperm.slane %v3987, 0
        %v4674 = vperm.slane %v4645, 0
        %v4675 = vperm.slane %v4646, 0
        %v4676 = vperm.slane %v4647, 0
        %v4677 = vperm.slane %v4648, 0
        %v4678 = vperm.slane %v4649, 0
        %v4679 = vperm.slane %v4650, 0
        %v4680 = vperm.slane %v4651, 0
        %v4681 = vperm.slane %v4002, 0
        %v4682 = vperm.slane %v4652, 0
        %v4683 = vperm.slane %v4653, 0
        %v4684 = vperm.slane %v4654, 0
        %v4685 = vperm.slane %v4655, 0
        %v4686 = vperm.slane %v4656, 0
        %v4687 = vperm.slane %v4657, 0
        %v4688 = vperm.slane %v4658, 0
        %v4689 = vperm.slane %v4017, 0
        %v4690 = vperm.slane %v4659, 0
        %v4691 = vperm.slane %v4660, 0
        %v4692 = vperm.slane %v4661, 0
        %v4693 = vperm.slane %v4662, 0
        %v4694 = vperm.slane %v4663, 0
        %v4695 = vperm.slane %v4664, 0
        %v4696 = vperm.slane %v4665, 0
        %v4697 = vperm.slane %v4032, 0
        %v4698 = vperm.slane %v4666, 0
        %v4699 = vperm.slane %v4667, 0
        %v4700 = vperm.slane %v4668, 0
        %v4701 = vperm.slane %v4669, 0
        %v4702 = vperm.slane %v4670, 0
        %v4703 = vperm.slane %v4671, 0
        %v4704 = vperm.slane %v4672, 0
        %v4737 = vmul.f32 %v2254, %v4673
        %v4738 = vmul.f32 %v2255, %v4673
        %v4739 = vmul.f32 %v2256, %v4674
        %v4740 = vmul.f32 %v2257, %v4674
        %v4741 = vmul.f32 %v2258, %v4675
        %v4742 = vmul.f32 %v2259, %v4675
        %v4743 = vmul.f32 %v2260, %v4676
        %v4744 = vmul.f32 %v2261, %v4676
        %v4745 = vmul.f32 %v2262, %v4677
        %v4746 = vmul.f32 %v2263, %v4677
        %v4747 = vmul.f32 %v2264, %v4678
        %v4748 = vmul.f32 %v2265, %v4678
        %v4749 = vmul.f32 %v2266, %v4679
        %v4750 = vmul.f32 %v2267, %v4679
        %v4751 = vmul.f32 %v2268, %v4680
        %v4752 = vmul.f32 %v2269, %v4680
        %v4753 = vmul.f32 %v2270, %v4681
        %v4754 = vmul.f32 %v2271, %v4681
        %v4755 = vmul.f32 %v2272, %v4682
        %v4756 = vmul.f32 %v2273, %v4682
        %v4757 = vmul.f32 %v2274, %v4683
        %v4758 = vmul.f32 %v2275, %v4683
        %v4759 = vmul.f32 %v2276, %v4684
        %v4760 = vmul.f32 %v2277, %v4684
        %v4761 = vmul.f32 %v2278, %v4685
        %v4762 = vmul.f32 %v2279, %v4685
        %v4763 = vmul.f32 %v2280, %v4686
        %v4764 = vmul.f32 %v2281, %v4686
        %v4765 = vmul.f32 %v2282, %v4687
        %v4766 = vmul.f32 %v2283, %v4687
        %v4767 = vmul.f32 %v2284, %v4688
        %v4768 = vmul.f32 %v2285, %v4688
        %v4769 = vmul.f32 %v2286, %v4689
        %v4770 = vmul.f32 %v2287, %v4689
        %v4771 = vmul.f32 %v2288, %v4690
        %v4772 = vmul.f32 %v2289, %v4690
        %v4773 = vmul.f32 %v2290, %v4691
        %v4774 = vmul.f32 %v2291, %v4691
        %v4775 = vmul.f32 %v2292, %v4692
        %v4776 = vmul.f32 %v2293, %v4692
        %v4777 = vmul.f32 %v2294, %v4693
        %v4778 = vmul.f32 %v2295, %v4693
        %v4779 = vmul.f32 %v2296, %v4694
        %v4780 = vmul.f32 %v2297, %v4694
        %v4781 = vmul.f32 %v2298, %v4695
        %v4782 = vmul.f32 %v2299, %v4695
        %v4783 = vmul.f32 %v2300, %v4696
        %v4784 = vmul.f32 %v2301, %v4696
        %v4785 = vmul.f32 %v2302, %v4697
        %v4786 = vmul.f32 %v2303, %v4697
        %v4787 = vmul.f32 %v2304, %v4698
        %v4788 = vmul.f32 %v2305, %v4698
        %v4789 = vmul.f32 %v2306, %v4699
        %v4790 = vmul.f32 %v2307, %v4699
        %v4791 = vmul.f32 %v2308, %v4700
        %v4792 = vmul.f32 %v2309, %v4700
        %v4793 = vmul.f32 %v2310, %v4701
        %v4794 = vmul.f32 %v2311, %v4701
        %v4795 = vmul.f32 %v2312, %v4702
        %v4796 = vmul.f32 %v2313, %v4702
        %v4797 = vmul.f32 %v2314, %v4703
        %v4798 = vmul.f32 %v2315, %v4703
        %v4799 = vmul.f32 %v2316, %v4704
        %v4800 = vmul.f32 %v2317, %v4704
        %v4801 = vadd.f32 %v4577, %v4737
        %v4802 = vadd.f32 %v4578, %v4738
        %v4803 = vadd.f32 %v4579, %v4739
        %v4804 = vadd.f32 %v4580, %v4740
        %v4805 = vadd.f32 %v4581, %v4741
        %v4806 = vadd.f32 %v4582, %v4742
        %v4807 = vadd.f32 %v4583, %v4743
        %v4808 = vadd.f32 %v4584, %v4744
        %v4809 = vadd.f32 %v4585, %v4745
        %v4810 = vadd.f32 %v4586, %v4746
        %v4811 = vadd.f32 %v4587, %v4747
        %v4812 = vadd.f32 %v4588, %v4748
        %v4813 = vadd.f32 %v4589, %v4749
        %v4814 = vadd.f32 %v4590, %v4750
        %v4815 = vadd.f32 %v4591, %v4751
        %v4816 = vadd.f32 %v4592, %v4752
        %v4817 = vadd.f32 %v4593, %v4753
        %v4818 = vadd.f32 %v4594, %v4754
        %v4819 = vadd.f32 %v4595, %v4755
        %v4820 = vadd.f32 %v4596, %v4756
        %v4821 = vadd.f32 %v4597, %v4757
        %v4822 = vadd.f32 %v4598, %v4758
        %v4823 = vadd.f32 %v4599, %v4759
        %v4824 = vadd.f32 %v4600, %v4760
        %v4825 = vadd.f32 %v4601, %v4761
        %v4826 = vadd.f32 %v4602, %v4762
        %v4827 = vadd.f32 %v4603, %v4763
        %v4828 = vadd.f32 %v4604, %v4764
        %v4829 = vadd.f32 %v4605, %v4765
        %v4830 = vadd.f32 %v4606, %v4766
        %v4831 = vadd.f32 %v4607, %v4767
        %v4832 = vadd.f32 %v4608, %v4768
        %v4833 = vadd.f32 %v4609, %v4769
        %v4834 = vadd.f32 %v4610, %v4770
        %v4835 = vadd.f32 %v4611, %v4771
        %v4836 = vadd.f32 %v4612, %v4772
        %v4837 = vadd.f32 %v4613, %v4773
        %v4838 = vadd.f32 %v4614, %v4774
        %v4839 = vadd.f32 %v4615, %v4775
        %v4840 = vadd.f32 %v4616, %v4776
        %v4841 = vadd.f32 %v4617, %v4777
        %v4842 = vadd.f32 %v4618, %v4778
        %v4843 = vadd.f32 %v4619, %v4779
        %v4844 = vadd.f32 %v4620, %v4780
        %v4845 = vadd.f32 %v4621, %v4781
        %v4846 = vadd.f32 %v4622, %v4782
        %v4847 = vadd.f32 %v4623, %v4783
        %v4848 = vadd.f32 %v4624, %v4784
        %v4849 = vadd.f32 %v4625, %v4785
        %v4850 = vadd.f32 %v4626, %v4786
        %v4851 = vadd.f32 %v4627, %v4787
        %v4852 = vadd.f32 %v4628, %v4788
        %v4853 = vadd.f32 %v4629, %v4789
        %v4854 = vadd.f32 %v4630, %v4790
        %v4855 = vadd.f32 %v4631, %v4791
        %v4856 = vadd.f32 %v4632, %v4792
        %v4857 = vadd.f32 %v4633, %v4793
        %v4858 = vadd.f32 %v4634, %v4794
        %v4859 = vadd.f32 %v4635, %v4795
        %v4860 = vadd.f32 %v4636, %v4796
        %v4861 = vadd.f32 %v4637, %v4797
        %v4862 = vadd.f32 %v4638, %v4798
        %v4863 = vadd.f32 %v4639, %v4799
        %v4864 = vadd.f32 %v4640, %v4800
        %v4865 = vpack.c.bf16 %v4802, %v4801
        %v4866 = vpack.c.bf16 %v4804, %v4803
        %v4867 = vpack.c.bf16 %v4806, %v4805
        %v4868 = vpack.c.bf16 %v4808, %v4807
        %v4869 = vpack.c.bf16 %v4810, %v4809
        %v4870 = vpack.c.bf16 %v4812, %v4811
        %v4871 = vpack.c.bf16 %v4814, %v4813
        %v4872 = vpack.c.bf16 %v4816, %v4815
        %v4873 = vpack.c.bf16 %v4818, %v4817
        %v4874 = vpack.c.bf16 %v4820, %v4819
        %v4875 = vpack.c.bf16 %v4822, %v4821
        %v4876 = vpack.c.bf16 %v4824, %v4823
        %v4877 = vpack.c.bf16 %v4826, %v4825
        %v4878 = vpack.c.bf16 %v4828, %v4827
        %v4879 = vpack.c.bf16 %v4830, %v4829
        %v4880 = vpack.c.bf16 %v4832, %v4831
        %v4881 = vpack.c.bf16 %v4834, %v4833
        %v4882 = vpack.c.bf16 %v4836, %v4835
        %v4883 = vpack.c.bf16 %v4838, %v4837
        %v4884 = vpack.c.bf16 %v4840, %v4839
        %v4885 = vpack.c.bf16 %v4842, %v4841
        %v4886 = vpack.c.bf16 %v4844, %v4843
        %v4887 = vpack.c.bf16 %v4846, %v4845
        %v4888 = vpack.c.bf16 %v4848, %v4847
        %v4889 = vpack.c.bf16 %v4850, %v4849
        %v4890 = vpack.c.bf16 %v4852, %v4851
        %v4891 = vpack.c.bf16 %v4854, %v4853
        %v4892 = vpack.c.bf16 %v4856, %v4855
        %v4893 = vpack.c.bf16 %v4858, %v4857
        %v4894 = vpack.c.bf16 %v4860, %v4859
        %v4895 = vpack.c.bf16 %v4862, %v4861
        %v4896 = vpack.c.bf16 %v4864, %v4863
        %v4913 = vunpack.c.l.b16 %v644
        %v4914 = vunpack.c.l.b16 %v645
        %v4915 = vunpack.c.l.b16 %v646
        %v4916 = vunpack.c.l.b16 %v647
        %v4917 = vunpack.c.l.b16 %v648
        %v4918 = vunpack.c.l.b16 %v649
        %v4919 = vunpack.c.l.b16 %v650
        %v4920 = vunpack.c.l.b16 %v651
        %v4921 = vunpack.c.l.b16 %v652
        %v4922 = vunpack.c.l.b16 %v653
        %v4923 = vunpack.c.l.b16 %v654
        %v4924 = vunpack.c.l.b16 %v655
        %v4925 = vunpack.c.l.b16 %v656
        %v4926 = vunpack.c.l.b16 %v657
        %v4927 = vunpack.c.l.b16 %v658
        %v4928 = vunpack.c.l.b16 %v659
        %v4929 = vpack.c.b16 %v4914, %v4913
        %v4930 = vpack.c.b16 %v4916, %v4915
        %v4931 = vpack.c.b16 %v4918, %v4917
        %v4932 = vpack.c.b16 %v4920, %v4919
        %v4933 = vpack.c.b16 %v4922, %v4921
        %v4934 = vpack.c.b16 %v4924, %v4923
        %v4935 = vpack.c.b16 %v4926, %v4925
        %v4936 = vpack.c.b16 %v4928, %v4927
        %4945 = vmatpush.bf16.msra.mxu0 %v4936
        %4946 = vmatpush.bf16.msra.mxu0 %v4935
        %4947 = vmatpush.bf16.msra.mxu0 %v4934
        %4948 = vmatpush.bf16.msra.mxu0 %v4933
        %4949 = vmatpush.bf16.msra.mxu0 %v4932
        %4950 = vmatpush.bf16.msra.mxu0 %v4931
        %4951 = vmatpush.bf16.msra.mxu0 %v4930
        %4952 = vmatpush.bf16.msra.mxu0 %v4929
        %4953 = vmatmul.bf16.gmra.mxu0 %v4865
        %v4954 = vpop.f32.mrf.mxu0
        %v4955 = vadd.f32 0.0, %v4954
        %v4956 = vpop.f32.mrf.mxu0
        %v4957 = vadd.f32 0.0, %v4956
        %4958 = vmatmul.bf16.gmra.mxu0 %v4866
        %v4959 = vpop.f32.mrf.mxu0
        %v4960 = vadd.f32 0.0, %v4959
        %v4961 = vpop.f32.mrf.mxu0
        %v4962 = vadd.f32 0.0, %v4961
        %4963 = vmatmul.bf16.gmra.mxu0 %v4867
        %v4964 = vpop.f32.mrf.mxu0
        %v4965 = vadd.f32 0.0, %v4964
        %v4966 = vpop.f32.mrf.mxu0
        %v4967 = vadd.f32 0.0, %v4966
        %4968 = vmatmul.bf16.gmra.mxu0 %v4868
        %v4969 = vpop.f32.mrf.mxu0
        %v4970 = vadd.f32 0.0, %v4969
        %v4971 = vpop.f32.mrf.mxu0
        %v4972 = vadd.f32 0.0, %v4971
        %4973 = vmatmul.bf16.gmra.mxu0 %v4869
        %v4974 = vpop.f32.mrf.mxu0
        %v4975 = vadd.f32 0.0, %v4974
        %v4976 = vpop.f32.mrf.mxu0
        %v4977 = vadd.f32 0.0, %v4976
        %4978 = vmatmul.bf16.gmra.mxu0 %v4870
        %v4979 = vpop.f32.mrf.mxu0
        %v4980 = vadd.f32 0.0, %v4979
        %v4981 = vpop.f32.mrf.mxu0
        %v4982 = vadd.f32 0.0, %v4981
        %4983 = vmatmul.bf16.gmra.mxu0 %v4871
        %v4984 = vpop.f32.mrf.mxu0
        %v4985 = vadd.f32 0.0, %v4984
        %v4986 = vpop.f32.mrf.mxu0
        %v4987 = vadd.f32 0.0, %v4986
        %4988 = vmatmul.bf16.gmra.mxu0 %v4872
        %v4989 = vpop.f32.mrf.mxu0
        %v4990 = vadd.f32 0.0, %v4989
        %v4991 = vpop.f32.mrf.mxu0
        %v4992 = vadd.f32 0.0, %v4991
        %4993 = vmatmul.bf16.gmra.mxu0 %v4873
        %v4994 = vpop.f32.mrf.mxu0
        %v4995 = vadd.f32 0.0, %v4994
        %v4996 = vpop.f32.mrf.mxu0
        %v4997 = vadd.f32 0.0, %v4996
        %4998 = vmatmul.bf16.gmra.mxu0 %v4874
        %v4999 = vpop.f32.mrf.mxu0
        %v5000 = vadd.f32 0.0, %v4999
        %v5001 = vpop.f32.mrf.mxu0
        %v5002 = vadd.f32 0.0, %v5001
        %5003 = vmatmul.bf16.gmra.mxu0 %v4875
        %v5004 = vpop.f32.mrf.mxu0
        %v5005 = vadd.f32 0.0, %v5004
        %v5006 = vpop.f32.mrf.mxu0
        %v5007 = vadd.f32 0.0, %v5006
        %5008 = vmatmul.bf16.gmra.mxu0 %v4876
        %v5009 = vpop.f32.mrf.mxu0
        %v5010 = vadd.f32 0.0, %v5009
        %v5011 = vpop.f32.mrf.mxu0
        %v5012 = vadd.f32 0.0, %v5011
        %5013 = vmatmul.bf16.gmra.mxu0 %v4877
        %v5014 = vpop.f32.mrf.mxu0
        %v5015 = vadd.f32 0.0, %v5014
        %v5016 = vpop.f32.mrf.mxu0
        %v5017 = vadd.f32 0.0, %v5016
        %5018 = vmatmul.bf16.gmra.mxu0 %v4878
        %v5019 = vpop.f32.mrf.mxu0
        %v5020 = vadd.f32 0.0, %v5019
        %v5021 = vpop.f32.mrf.mxu0
        %v5022 = vadd.f32 0.0, %v5021
        %5023 = vmatmul.bf16.gmra.mxu0 %v4879
        %v5024 = vpop.f32.mrf.mxu0
        %v5025 = vadd.f32 0.0, %v5024
        %v5026 = vpop.f32.mrf.mxu0
        %v5027 = vadd.f32 0.0, %v5026
        %5028 = vmatmul.bf16.gmra.mxu0 %v4880
        %v5029 = vpop.f32.mrf.mxu0
        %v5030 = vadd.f32 0.0, %v5029
        %v5031 = vpop.f32.mrf.mxu0
        %v5032 = vadd.f32 0.0, %v5031
        %5033 = vmatmul.bf16.gmra.mxu0 %v4881
        %v5034 = vpop.f32.mrf.mxu0
        %v5035 = vadd.f32 0.0, %v5034
        %v5036 = vpop.f32.mrf.mxu0
        %v5037 = vadd.f32 0.0, %v5036
        %5038 = vmatmul.bf16.gmra.mxu0 %v4882
        %v5039 = vpop.f32.mrf.mxu0
        %v5040 = vadd.f32 0.0, %v5039
        %v5041 = vpop.f32.mrf.mxu0
        %v5042 = vadd.f32 0.0, %v5041
        %5043 = vmatmul.bf16.gmra.mxu0 %v4883
        %v5044 = vpop.f32.mrf.mxu0
        %v5045 = vadd.f32 0.0, %v5044
        %v5046 = vpop.f32.mrf.mxu0
        %v5047 = vadd.f32 0.0, %v5046
        %5048 = vmatmul.bf16.gmra.mxu0 %v4884
        %v5049 = vpop.f32.mrf.mxu0
        %v5050 = vadd.f32 0.0, %v5049
        %v5051 = vpop.f32.mrf.mxu0
        %v5052 = vadd.f32 0.0, %v5051
        %5053 = vmatmul.bf16.gmra.mxu0 %v4885
        %v5054 = vpop.f32.mrf.mxu0
        %v5055 = vadd.f32 0.0, %v5054
        %v5056 = vpop.f32.mrf.mxu0
        %v5057 = vadd.f32 0.0, %v5056
        %5058 = vmatmul.bf16.gmra.mxu0 %v4886
        %v5059 = vpop.f32.mrf.mxu0
        %v5060 = vadd.f32 0.0, %v5059
        %v5061 = vpop.f32.mrf.mxu0
        %v5062 = vadd.f32 0.0, %v5061
        %5063 = vmatmul.bf16.gmra.mxu0 %v4887
        %v5064 = vpop.f32.mrf.mxu0
        %v5065 = vadd.f32 0.0, %v5064
        %v5066 = vpop.f32.mrf.mxu0
        %v5067 = vadd.f32 0.0, %v5066
        %5068 = vmatmul.bf16.gmra.mxu0 %v4888
        %v5069 = vpop.f32.mrf.mxu0
        %v5070 = vadd.f32 0.0, %v5069
        %v5071 = vpop.f32.mrf.mxu0
        %v5072 = vadd.f32 0.0, %v5071
        %5073 = vmatmul.bf16.gmra.mxu0 %v4889
        %v5074 = vpop.f32.mrf.mxu0
        %v5075 = vadd.f32 0.0, %v5074
        %v5076 = vpop.f32.mrf.mxu0
        %v5077 = vadd.f32 0.0, %v5076
        %5078 = vmatmul.bf16.gmra.mxu0 %v4890
        %v5079 = vpop.f32.mrf.mxu0
        %v5080 = vadd.f32 0.0, %v5079
        %v5081 = vpop.f32.mrf.mxu0
        %v5082 = vadd.f32 0.0, %v5081
        %5083 = vmatmul.bf16.gmra.mxu0 %v4891
        %v5084 = vpop.f32.mrf.mxu0
        %v5085 = vadd.f32 0.0, %v5084
        %v5086 = vpop.f32.mrf.mxu0
        %v5087 = vadd.f32 0.0, %v5086
        %5088 = vmatmul.bf16.gmra.mxu0 %v4892
        %v5089 = vpop.f32.mrf.mxu0
        %v5090 = vadd.f32 0.0, %v5089
        %v5091 = vpop.f32.mrf.mxu0
        %v5092 = vadd.f32 0.0, %v5091
        %5093 = vmatmul.bf16.gmra.mxu0 %v4893
        %v5094 = vpop.f32.mrf.mxu0
        %v5095 = vadd.f32 0.0, %v5094
        %v5096 = vpop.f32.mrf.mxu0
        %v5097 = vadd.f32 0.0, %v5096
        %5098 = vmatmul.bf16.gmra.mxu0 %v4894
        %v5099 = vpop.f32.mrf.mxu0
        %v5100 = vadd.f32 0.0, %v5099
        %v5101 = vpop.f32.mrf.mxu0
        %v5102 = vadd.f32 0.0, %v5101
        %5103 = vmatmul.bf16.gmra.mxu0 %v4895
        %v5104 = vpop.f32.mrf.mxu0
        %v5105 = vadd.f32 0.0, %v5104
        %v5106 = vpop.f32.mrf.mxu0
        %v5107 = vadd.f32 0.0, %v5106
        %5108 = vmatmul.bf16.gmra.mxu0 %v4896
        %v5109 = vpop.f32.mrf.mxu0
        %v5110 = vadd.f32 0.0, %v5109
        %v5111 = vpop.f32.mrf.mxu0
        %v5112 = vadd.f32 0.0, %v5111
        %5113 = vdwg.mxu0
        %vm5114 = vcmask 31744
        %v5115 = vsel %vm5114, %v4955, -inf
        %v5116 = vsel %vm5114, %v4957, -inf
        %v5117 = vmax.f32 %v5115, %v5116
        %v5118 = vrot.slane %v5117, 4
        %v5119 = vmax.f32 %v5117, %v5118
        %v5120 = vrot.slane %v5119, 2
        %v5121 = vmax.f32 %v5119, %v5120
        %v5122 = vrot.slane %v5121, 1
        %v5123 = vmax.f32 %v5121, %v5122
        %v5124 = vsel %vm5114, %v4960, -inf
        %v5125 = vsel %vm5114, %v4962, -inf
        %v5126 = vmax.f32 %v5124, %v5125
        %v5127 = vrot.slane %v5126, 4
        %v5128 = vmax.f32 %v5126, %v5127
        %v5129 = vrot.slane %v5128, 2
        %v5130 = vmax.f32 %v5128, %v5129
        %v5131 = vrot.slane %v5130, 1
        %v5132 = vmax.f32 %v5130, %v5131
        %v5133 = vsel %vm5114, %v4965, -inf
        %v5134 = vsel %vm5114, %v4967, -inf
        %v5135 = vmax.f32 %v5133, %v5134
        %v5136 = vrot.slane %v5135, 4
        %v5137 = vmax.f32 %v5135, %v5136
        %v5138 = vrot.slane %v5137, 2
        %v5139 = vmax.f32 %v5137, %v5138
        %v5140 = vrot.slane %v5139, 1
        %v5141 = vmax.f32 %v5139, %v5140
        %v5142 = vsel %vm5114, %v4970, -inf
        %v5143 = vsel %vm5114, %v4972, -inf
        %v5144 = vmax.f32 %v5142, %v5143
        %v5145 = vrot.slane %v5144, 4
        %v5146 = vmax.f32 %v5144, %v5145
        %v5147 = vrot.slane %v5146, 2
        %v5148 = vmax.f32 %v5146, %v5147
        %v5149 = vrot.slane %v5148, 1
        %v5150 = vmax.f32 %v5148, %v5149
        %v5151 = vsel %vm5114, %v4975, -inf
        %v5152 = vsel %vm5114, %v4977, -inf
        %v5153 = vmax.f32 %v5151, %v5152
        %v5154 = vrot.slane %v5153, 4
        %v5155 = vmax.f32 %v5153, %v5154
        %v5156 = vrot.slane %v5155, 2
        %v5157 = vmax.f32 %v5155, %v5156
        %v5158 = vrot.slane %v5157, 1
        %v5159 = vmax.f32 %v5157, %v5158
        %v5160 = vsel %vm5114, %v4980, -inf
        %v5161 = vsel %vm5114, %v4982, -inf
        %v5162 = vmax.f32 %v5160, %v5161
        %v5163 = vrot.slane %v5162, 4
        %v5164 = vmax.f32 %v5162, %v5163
        %v5165 = vrot.slane %v5164, 2
        %v5166 = vmax.f32 %v5164, %v5165
        %v5167 = vrot.slane %v5166, 1
        %v5168 = vmax.f32 %v5166, %v5167
        %v5169 = vsel %vm5114, %v4985, -inf
        %v5170 = vsel %vm5114, %v4987, -inf
        %v5171 = vmax.f32 %v5169, %v5170
        %v5172 = vrot.slane %v5171, 4
        %v5173 = vmax.f32 %v5171, %v5172
        %v5174 = vrot.slane %v5173, 2
        %v5175 = vmax.f32 %v5173, %v5174
        %v5176 = vrot.slane %v5175, 1
        %v5177 = vmax.f32 %v5175, %v5176
        %v5178 = vsel %vm5114, %v4990, -inf
        %v5179 = vsel %vm5114, %v4992, -inf
        %v5180 = vmax.f32 %v5178, %v5179
        %v5181 = vrot.slane %v5180, 4
        %v5182 = vmax.f32 %v5180, %v5181
        %v5183 = vrot.slane %v5182, 2
        %v5184 = vmax.f32 %v5182, %v5183
        %v5185 = vrot.slane %v5184, 1
        %v5186 = vmax.f32 %v5184, %v5185
        %v5187 = vsel %vm5114, %v4995, -inf
        %v5188 = vsel %vm5114, %v4997, -inf
        %v5189 = vmax.f32 %v5187, %v5188
        %v5190 = vrot.slane %v5189, 4
        %v5191 = vmax.f32 %v5189, %v5190
        %v5192 = vrot.slane %v5191, 2
        %v5193 = vmax.f32 %v5191, %v5192
        %v5194 = vrot.slane %v5193, 1
        %v5195 = vmax.f32 %v5193, %v5194
        %v5196 = vsel %vm5114, %v5000, -inf
        %v5197 = vsel %vm5114, %v5002, -inf
        %v5198 = vmax.f32 %v5196, %v5197
        %v5199 = vrot.slane %v5198, 4
        %v5200 = vmax.f32 %v5198, %v5199
        %v5201 = vrot.slane %v5200, 2
        %v5202 = vmax.f32 %v5200, %v5201
        %v5203 = vrot.slane %v5202, 1
        %v5204 = vmax.f32 %v5202, %v5203
        %v5205 = vsel %vm5114, %v5005, -inf
        %v5206 = vsel %vm5114, %v5007, -inf
        %v5207 = vmax.f32 %v5205, %v5206
        %v5208 = vrot.slane %v5207, 4
        %v5209 = vmax.f32 %v5207, %v5208
        %v5210 = vrot.slane %v5209, 2
        %v5211 = vmax.f32 %v5209, %v5210
        %v5212 = vrot.slane %v5211, 1
        %v5213 = vmax.f32 %v5211, %v5212
        %v5214 = vsel %vm5114, %v5010, -inf
        %v5215 = vsel %vm5114, %v5012, -inf
        %v5216 = vmax.f32 %v5214, %v5215
        %v5217 = vrot.slane %v5216, 4
        %v5218 = vmax.f32 %v5216, %v5217
        %v5219 = vrot.slane %v5218, 2
        %v5220 = vmax.f32 %v5218, %v5219
        %v5221 = vrot.slane %v5220, 1
        %v5222 = vmax.f32 %v5220, %v5221
        %v5223 = vsel %vm5114, %v5015, -inf
        %v5224 = vsel %vm5114, %v5017, -inf
        %v5225 = vmax.f32 %v5223, %v5224
        %v5226 = vrot.slane %v5225, 4
        %v5227 = vmax.f32 %v5225, %v5226
        %v5228 = vrot.slane %v5227, 2
        %v5229 = vmax.f32 %v5227, %v5228
        %v5230 = vrot.slane %v5229, 1
        %v5231 = vmax.f32 %v5229, %v5230
        %v5232 = vsel %vm5114, %v5020, -inf
        %v5233 = vsel %vm5114, %v5022, -inf
        %v5234 = vmax.f32 %v5232, %v5233
        %v5235 = vrot.slane %v5234, 4
        %v5236 = vmax.f32 %v5234, %v5235
        %v5237 = vrot.slane %v5236, 2
        %v5238 = vmax.f32 %v5236, %v5237
        %v5239 = vrot.slane %v5238, 1
        %v5240 = vmax.f32 %v5238, %v5239
        %v5241 = vsel %vm5114, %v5025, -inf
        %v5242 = vsel %vm5114, %v5027, -inf
        %v5243 = vmax.f32 %v5241, %v5242
        %v5244 = vrot.slane %v5243, 4
        %v5245 = vmax.f32 %v5243, %v5244
        %v5246 = vrot.slane %v5245, 2
        %v5247 = vmax.f32 %v5245, %v5246
        %v5248 = vrot.slane %v5247, 1
        %v5249 = vmax.f32 %v5247, %v5248
        %v5250 = vsel %vm5114, %v5030, -inf
        %v5251 = vsel %vm5114, %v5032, -inf
        %v5252 = vmax.f32 %v5250, %v5251
        %v5253 = vrot.slane %v5252, 4
        %v5254 = vmax.f32 %v5252, %v5253
        %v5255 = vrot.slane %v5254, 2
        %v5256 = vmax.f32 %v5254, %v5255
        %v5257 = vrot.slane %v5256, 1
        %v5258 = vmax.f32 %v5256, %v5257
        %v5259 = vsel %vm5114, %v5035, -inf
        %v5260 = vsel %vm5114, %v5037, -inf
        %v5261 = vmax.f32 %v5259, %v5260
        %v5262 = vrot.slane %v5261, 4
        %v5263 = vmax.f32 %v5261, %v5262
        %v5264 = vrot.slane %v5263, 2
        %v5265 = vmax.f32 %v5263, %v5264
        %v5266 = vrot.slane %v5265, 1
        %v5267 = vmax.f32 %v5265, %v5266
        %v5268 = vsel %vm5114, %v5040, -inf
        %v5269 = vsel %vm5114, %v5042, -inf
        %v5270 = vmax.f32 %v5268, %v5269
        %v5271 = vrot.slane %v5270, 4
        %v5272 = vmax.f32 %v5270, %v5271
        %v5273 = vrot.slane %v5272, 2
        %v5274 = vmax.f32 %v5272, %v5273
        %v5275 = vrot.slane %v5274, 1
        %v5276 = vmax.f32 %v5274, %v5275
        %v5277 = vsel %vm5114, %v5045, -inf
        %v5278 = vsel %vm5114, %v5047, -inf
        %v5279 = vmax.f32 %v5277, %v5278
        %v5280 = vrot.slane %v5279, 4
        %v5281 = vmax.f32 %v5279, %v5280
        %v5282 = vrot.slane %v5281, 2
        %v5283 = vmax.f32 %v5281, %v5282
        %v5284 = vrot.slane %v5283, 1
        %v5285 = vmax.f32 %v5283, %v5284
        %v5286 = vsel %vm5114, %v5050, -inf
        %v5287 = vsel %vm5114, %v5052, -inf
        %v5288 = vmax.f32 %v5286, %v5287
        %v5289 = vrot.slane %v5288, 4
        %v5290 = vmax.f32 %v5288, %v5289
        %v5291 = vrot.slane %v5290, 2
        %v5292 = vmax.f32 %v5290, %v5291
        %v5293 = vrot.slane %v5292, 1
        %v5294 = vmax.f32 %v5292, %v5293
        %v5295 = vsel %vm5114, %v5055, -inf
        %v5296 = vsel %vm5114, %v5057, -inf
        %v5297 = vmax.f32 %v5295, %v5296
        %v5298 = vrot.slane %v5297, 4
        %v5299 = vmax.f32 %v5297, %v5298
        %v5300 = vrot.slane %v5299, 2
        %v5301 = vmax.f32 %v5299, %v5300
        %v5302 = vrot.slane %v5301, 1
        %v5303 = vmax.f32 %v5301, %v5302
        %v5304 = vsel %vm5114, %v5060, -inf
        %v5305 = vsel %vm5114, %v5062, -inf
        %v5306 = vmax.f32 %v5304, %v5305
        %v5307 = vrot.slane %v5306, 4
        %v5308 = vmax.f32 %v5306, %v5307
        %v5309 = vrot.slane %v5308, 2
        %v5310 = vmax.f32 %v5308, %v5309
        %v5311 = vrot.slane %v5310, 1
        %v5312 = vmax.f32 %v5310, %v5311
        %v5313 = vsel %vm5114, %v5065, -inf
        %v5314 = vsel %vm5114, %v5067, -inf
        %v5315 = vmax.f32 %v5313, %v5314
        %v5316 = vrot.slane %v5315, 4
        %v5317 = vmax.f32 %v5315, %v5316
        %v5318 = vrot.slane %v5317, 2
        %v5319 = vmax.f32 %v5317, %v5318
        %v5320 = vrot.slane %v5319, 1
        %v5321 = vmax.f32 %v5319, %v5320
        %v5322 = vsel %vm5114, %v5070, -inf
        %v5323 = vsel %vm5114, %v5072, -inf
        %v5324 = vmax.f32 %v5322, %v5323
        %v5325 = vrot.slane %v5324, 4
        %v5326 = vmax.f32 %v5324, %v5325
        %v5327 = vrot.slane %v5326, 2
        %v5328 = vmax.f32 %v5326, %v5327
        %v5329 = vrot.slane %v5328, 1
        %v5330 = vmax.f32 %v5328, %v5329
        %v5331 = vsel %vm5114, %v5075, -inf
        %v5332 = vsel %vm5114, %v5077, -inf
        %v5333 = vmax.f32 %v5331, %v5332
        %v5334 = vrot.slane %v5333, 4
        %v5335 = vmax.f32 %v5333, %v5334
        %v5336 = vrot.slane %v5335, 2
        %v5337 = vmax.f32 %v5335, %v5336
        %v5338 = vrot.slane %v5337, 1
        %v5339 = vmax.f32 %v5337, %v5338
        %v5340 = vsel %vm5114, %v5080, -inf
        %v5341 = vsel %vm5114, %v5082, -inf
        %v5342 = vmax.f32 %v5340, %v5341
        %v5343 = vrot.slane %v5342, 4
        %v5344 = vmax.f32 %v5342, %v5343
        %v5345 = vrot.slane %v5344, 2
        %v5346 = vmax.f32 %v5344, %v5345
        %v5347 = vrot.slane %v5346, 1
        %v5348 = vmax.f32 %v5346, %v5347
        %v5349 = vsel %vm5114, %v5085, -inf
        %v5350 = vsel %vm5114, %v5087, -inf
        %v5351 = vmax.f32 %v5349, %v5350
        %v5352 = vrot.slane %v5351, 4
        %v5353 = vmax.f32 %v5351, %v5352
        %v5354 = vrot.slane %v5353, 2
        %v5355 = vmax.f32 %v5353, %v5354
        %v5356 = vrot.slane %v5355, 1
        %v5357 = vmax.f32 %v5355, %v5356
        %v5358 = vsel %vm5114, %v5090, -inf
        %v5359 = vsel %vm5114, %v5092, -inf
        %v5360 = vmax.f32 %v5358, %v5359
        %v5361 = vrot.slane %v5360, 4
        %v5362 = vmax.f32 %v5360, %v5361
        %v5363 = vrot.slane %v5362, 2
        %v5364 = vmax.f32 %v5362, %v5363
        %v5365 = vrot.slane %v5364, 1
        %v5366 = vmax.f32 %v5364, %v5365
        %v5367 = vsel %vm5114, %v5095, -inf
        %v5368 = vsel %vm5114, %v5097, -inf
        %v5369 = vmax.f32 %v5367, %v5368
        %v5370 = vrot.slane %v5369, 4
        %v5371 = vmax.f32 %v5369, %v5370
        %v5372 = vrot.slane %v5371, 2
        %v5373 = vmax.f32 %v5371, %v5372
        %v5374 = vrot.slane %v5373, 1
        %v5375 = vmax.f32 %v5373, %v5374
        %v5376 = vsel %vm5114, %v5100, -inf
        %v5377 = vsel %vm5114, %v5102, -inf
        %v5378 = vmax.f32 %v5376, %v5377
        %v5379 = vrot.slane %v5378, 4
        %v5380 = vmax.f32 %v5378, %v5379
        %v5381 = vrot.slane %v5380, 2
        %v5382 = vmax.f32 %v5380, %v5381
        %v5383 = vrot.slane %v5382, 1
        %v5384 = vmax.f32 %v5382, %v5383
        %v5385 = vsel %vm5114, %v5105, -inf
        %v5386 = vsel %vm5114, %v5107, -inf
        %v5387 = vmax.f32 %v5385, %v5386
        %v5388 = vrot.slane %v5387, 4
        %v5389 = vmax.f32 %v5387, %v5388
        %v5390 = vrot.slane %v5389, 2
        %v5391 = vmax.f32 %v5389, %v5390
        %v5392 = vrot.slane %v5391, 1
        %v5393 = vmax.f32 %v5391, %v5392
        %v5394 = vsel %vm5114, %v5110, -inf
        %v5395 = vsel %vm5114, %v5112, -inf
        %v5396 = vmax.f32 %v5394, %v5395
        %v5397 = vrot.slane %v5396, 4
        %v5398 = vmax.f32 %v5396, %v5397
        %v5399 = vrot.slane %v5398, 2
        %v5400 = vmax.f32 %v5398, %v5399
        %v5401 = vrot.slane %v5400, 1
        %v5402 = vmax.f32 %v5400, %v5401
        %v5403 = vsub.f32 %v4955, %v5123
        %v5404 = vsub.f32 %v4957, %v5123
        %v5405 = vsub.f32 %v4960, %v5132
        %v5406 = vsub.f32 %v4962, %v5132
        %v5407 = vsub.f32 %v4965, %v5141
        %v5408 = vsub.f32 %v4967, %v5141
        %v5409 = vsub.f32 %v4970, %v5150
        %v5410 = vsub.f32 %v4972, %v5150
        %v5411 = vsub.f32 %v4975, %v5159
        %v5412 = vsub.f32 %v4977, %v5159
        %v5413 = vsub.f32 %v4980, %v5168
        %v5414 = vsub.f32 %v4982, %v5168
        %v5415 = vsub.f32 %v4985, %v5177
        %v5416 = vsub.f32 %v4987, %v5177
        %v5417 = vsub.f32 %v4990, %v5186
        %v5418 = vsub.f32 %v4992, %v5186
        %v5419 = vsub.f32 %v4995, %v5195
        %v5420 = vsub.f32 %v4997, %v5195
        %v5421 = vsub.f32 %v5000, %v5204
        %v5422 = vsub.f32 %v5002, %v5204
        %v5423 = vsub.f32 %v5005, %v5213
        %v5424 = vsub.f32 %v5007, %v5213
        %v5425 = vsub.f32 %v5010, %v5222
        %v5426 = vsub.f32 %v5012, %v5222
        %v5427 = vsub.f32 %v5015, %v5231
        %v5428 = vsub.f32 %v5017, %v5231
        %v5429 = vsub.f32 %v5020, %v5240
        %v5430 = vsub.f32 %v5022, %v5240
        %v5431 = vsub.f32 %v5025, %v5249
        %v5432 = vsub.f32 %v5027, %v5249
        %v5433 = vsub.f32 %v5030, %v5258
        %v5434 = vsub.f32 %v5032, %v5258
        %v5435 = vsub.f32 %v5035, %v5267
        %v5436 = vsub.f32 %v5037, %v5267
        %v5437 = vsub.f32 %v5040, %v5276
        %v5438 = vsub.f32 %v5042, %v5276
        %v5439 = vsub.f32 %v5045, %v5285
        %v5440 = vsub.f32 %v5047, %v5285
        %v5441 = vsub.f32 %v5050, %v5294
        %v5442 = vsub.f32 %v5052, %v5294
        %v5443 = vsub.f32 %v5055, %v5303
        %v5444 = vsub.f32 %v5057, %v5303
        %v5445 = vsub.f32 %v5060, %v5312
        %v5446 = vsub.f32 %v5062, %v5312
        %v5447 = vsub.f32 %v5065, %v5321
        %v5448 = vsub.f32 %v5067, %v5321
        %v5449 = vsub.f32 %v5070, %v5330
        %v5450 = vsub.f32 %v5072, %v5330
        %v5451 = vsub.f32 %v5075, %v5339
        %v5452 = vsub.f32 %v5077, %v5339
        %v5453 = vsub.f32 %v5080, %v5348
        %v5454 = vsub.f32 %v5082, %v5348
        %v5455 = vsub.f32 %v5085, %v5357
        %v5456 = vsub.f32 %v5087, %v5357
        %v5457 = vsub.f32 %v5090, %v5366
        %v5458 = vsub.f32 %v5092, %v5366
        %v5459 = vsub.f32 %v5095, %v5375
        %v5460 = vsub.f32 %v5097, %v5375
        %v5461 = vsub.f32 %v5100, %v5384
        %v5462 = vsub.f32 %v5102, %v5384
        %v5463 = vsub.f32 %v5105, %v5393
        %v5464 = vsub.f32 %v5107, %v5393
        %v5465 = vsub.f32 %v5110, %v5402
        %v5466 = vsub.f32 %v5112, %v5402
        %v5467 = vmul.f32 %v5403, 1.442695
        %v5468 = vpow.pop %v5467
        %v5469 = vmul.f32 %v5404, 1.442695
        %v5470 = vpow.pop %v5469
        %v5471 = vmul.f32 %v5405, 1.442695
        %v5472 = vpow.pop %v5471
        %v5473 = vmul.f32 %v5406, 1.442695
        %v5474 = vpow.pop %v5473
        %v5475 = vmul.f32 %v5407, 1.442695
        %v5476 = vpow.pop %v5475
        %v5477 = vmul.f32 %v5408, 1.442695
        %v5478 = vpow.pop %v5477
        %v5479 = vmul.f32 %v5409, 1.442695
        %v5480 = vpow.pop %v5479
        %v5481 = vmul.f32 %v5410, 1.442695
        %v5482 = vpow.pop %v5481
        %v5483 = vmul.f32 %v5411, 1.442695
        %v5484 = vpow.pop %v5483
        %v5485 = vmul.f32 %v5412, 1.442695
        %v5486 = vpow.pop %v5485
        %v5487 = vmul.f32 %v5413, 1.442695
        %v5488 = vpow.pop %v5487
        %v5489 = vmul.f32 %v5414, 1.442695
        %v5490 = vpow.pop %v5489
        %v5491 = vmul.f32 %v5415, 1.442695
        %v5492 = vpow.pop %v5491
        %v5493 = vmul.f32 %v5416, 1.442695
        %v5494 = vpow.pop %v5493
        %v5495 = vmul.f32 %v5417, 1.442695
        %v5496 = vpow.pop %v5495
        %v5497 = vmul.f32 %v5418, 1.442695
        %v5498 = vpow.pop %v5497
        %v5499 = vmul.f32 %v5419, 1.442695
        %v5500 = vpow.pop %v5499
        %v5501 = vmul.f32 %v5420, 1.442695
        %v5502 = vpow.pop %v5501
        %v5503 = vmul.f32 %v5421, 1.442695
        %v5504 = vpow.pop %v5503
        %v5505 = vmul.f32 %v5422, 1.442695
        %v5506 = vpow.pop %v5505
        %v5507 = vmul.f32 %v5423, 1.442695
        %v5508 = vpow.pop %v5507
        %v5509 = vmul.f32 %v5424, 1.442695
        %v5510 = vpow.pop %v5509
        %v5511 = vmul.f32 %v5425, 1.442695
        %v5512 = vpow.pop %v5511
        %v5513 = vmul.f32 %v5426, 1.442695
        %v5514 = vpow.pop %v5513
        %v5515 = vmul.f32 %v5427, 1.442695
        %v5516 = vpow.pop %v5515
        %v5517 = vmul.f32 %v5428, 1.442695
        %v5518 = vpow.pop %v5517
        %v5519 = vmul.f32 %v5429, 1.442695
        %v5520 = vpow.pop %v5519
        %v5521 = vmul.f32 %v5430, 1.442695
        %v5522 = vpow.pop %v5521
        %v5523 = vmul.f32 %v5431, 1.442695
        %v5524 = vpow.pop %v5523
        %v5525 = vmul.f32 %v5432, 1.442695
        %v5526 = vpow.pop %v5525
        %v5527 = vmul.f32 %v5433, 1.442695
        %v5528 = vpow.pop %v5527
        %v5529 = vmul.f32 %v5434, 1.442695
        %v5530 = vpow.pop %v5529
        %v5531 = vmul.f32 %v5435, 1.442695
        %v5532 = vpow.pop %v5531
        %v5533 = vmul.f32 %v5436, 1.442695
        %v5534 = vpow.pop %v5533
        %v5535 = vmul.f32 %v5437, 1.442695
        %v5536 = vpow.pop %v5535
        %v5537 = vmul.f32 %v5438, 1.442695
        %v5538 = vpow.pop %v5537
        %v5539 = vmul.f32 %v5439, 1.442695
        %v5540 = vpow.pop %v5539
        %v5541 = vmul.f32 %v5440, 1.442695
        %v5542 = vpow.pop %v5541
        %v5543 = vmul.f32 %v5441, 1.442695
        %v5544 = vpow.pop %v5543
        %v5545 = vmul.f32 %v5442, 1.442695
        %v5546 = vpow.pop %v5545
        %v5547 = vmul.f32 %v5443, 1.442695
        %v5548 = vpow.pop %v5547
        %v5549 = vmul.f32 %v5444, 1.442695
        %v5550 = vpow.pop %v5549
        %v5551 = vmul.f32 %v5445, 1.442695
        %v5552 = vpow.pop %v5551
        %v5553 = vmul.f32 %v5446, 1.442695
        %v5554 = vpow.pop %v5553
        %v5555 = vmul.f32 %v5447, 1.442695
        %v5556 = vpow.pop %v5555
        %v5557 = vmul.f32 %v5448, 1.442695
        %v5558 = vpow.pop %v5557
        %v5559 = vmul.f32 %v5449, 1.442695
        %v5560 = vpow.pop %v5559
        %v5561 = vmul.f32 %v5450, 1.442695
        %v5562 = vpow.pop %v5561
        %v5563 = vmul.f32 %v5451, 1.442695
        %v5564 = vpow.pop %v5563
        %v5565 = vmul.f32 %v5452, 1.442695
        %v5566 = vpow.pop %v5565
        %v5567 = vmul.f32 %v5453, 1.442695
        %v5568 = vpow.pop %v5567
        %v5569 = vmul.f32 %v5454, 1.442695
        %v5570 = vpow.pop %v5569
        %v5571 = vmul.f32 %v5455, 1.442695
        %v5572 = vpow.pop %v5571
        %v5573 = vmul.f32 %v5456, 1.442695
        %v5574 = vpow.pop %v5573
        %v5575 = vmul.f32 %v5457, 1.442695
        %v5576 = vpow.pop %v5575
        %v5577 = vmul.f32 %v5458, 1.442695
        %v5578 = vpow.pop %v5577
        %v5579 = vmul.f32 %v5459, 1.442695
        %v5580 = vpow.pop %v5579
        %v5581 = vmul.f32 %v5460, 1.442695
        %v5582 = vpow.pop %v5581
        %v5583 = vmul.f32 %v5461, 1.442695
        %v5584 = vpow.pop %v5583
        %v5585 = vmul.f32 %v5462, 1.442695
        %v5586 = vpow.pop %v5585
        %v5587 = vmul.f32 %v5463, 1.442695
        %v5588 = vpow.pop %v5587
        %v5589 = vmul.f32 %v5464, 1.442695
        %v5590 = vpow.pop %v5589
        %v5591 = vmul.f32 %v5465, 1.442695
        %v5592 = vpow.pop %v5591
        %v5593 = vmul.f32 %v5466, 1.442695
        %v5594 = vpow.pop %v5593
        %v5595 = vsel %vm5114, %v5468, 0.0
        %v5596 = vsel %vm5114, %v5470, 0.0
        %v5597 = vadd.f32 %v5595, %v5596
        %v5598 = vrot.slane %v5597, 4
        %v5599 = vadd.f32 %v5597, %v5598
        %v5600 = vrot.slane %v5599, 2
        %v5601 = vadd.f32 %v5599, %v5600
        %v5602 = vrot.slane %v5601, 1
        %v5603 = vadd.f32 %v5601, %v5602
        %v5604 = vsel %vm5114, %v5472, 0.0
        %v5605 = vsel %vm5114, %v5474, 0.0
        %v5606 = vadd.f32 %v5604, %v5605
        %v5607 = vrot.slane %v5606, 4
        %v5608 = vadd.f32 %v5606, %v5607
        %v5609 = vrot.slane %v5608, 2
        %v5610 = vadd.f32 %v5608, %v5609
        %v5611 = vrot.slane %v5610, 1
        %v5612 = vadd.f32 %v5610, %v5611
        %v5613 = vsel %vm5114, %v5476, 0.0
        %v5614 = vsel %vm5114, %v5478, 0.0
        %v5615 = vadd.f32 %v5613, %v5614
        %v5616 = vrot.slane %v5615, 4
        %v5617 = vadd.f32 %v5615, %v5616
        %v5618 = vrot.slane %v5617, 2
        %v5619 = vadd.f32 %v5617, %v5618
        %v5620 = vrot.slane %v5619, 1
        %v5621 = vadd.f32 %v5619, %v5620
        %v5622 = vsel %vm5114, %v5480, 0.0
        %v5623 = vsel %vm5114, %v5482, 0.0
        %v5624 = vadd.f32 %v5622, %v5623
        %v5625 = vrot.slane %v5624, 4
        %v5626 = vadd.f32 %v5624, %v5625
        %v5627 = vrot.slane %v5626, 2
        %v5628 = vadd.f32 %v5626, %v5627
        %v5629 = vrot.slane %v5628, 1
        %v5630 = vadd.f32 %v5628, %v5629
        %v5631 = vsel %vm5114, %v5484, 0.0
        %v5632 = vsel %vm5114, %v5486, 0.0
        %v5633 = vadd.f32 %v5631, %v5632
        %v5634 = vrot.slane %v5633, 4
        %v5635 = vadd.f32 %v5633, %v5634
        %v5636 = vrot.slane %v5635, 2
        %v5637 = vadd.f32 %v5635, %v5636
        %v5638 = vrot.slane %v5637, 1
        %v5639 = vadd.f32 %v5637, %v5638
        %v5640 = vsel %vm5114, %v5488, 0.0
        %v5641 = vsel %vm5114, %v5490, 0.0
        %v5642 = vadd.f32 %v5640, %v5641
        %v5643 = vrot.slane %v5642, 4
        %v5644 = vadd.f32 %v5642, %v5643
        %v5645 = vrot.slane %v5644, 2
        %v5646 = vadd.f32 %v5644, %v5645
        %v5647 = vrot.slane %v5646, 1
        %v5648 = vadd.f32 %v5646, %v5647
        %v5649 = vsel %vm5114, %v5492, 0.0
        %v5650 = vsel %vm5114, %v5494, 0.0
        %v5651 = vadd.f32 %v5649, %v5650
        %v5652 = vrot.slane %v5651, 4
        %v5653 = vadd.f32 %v5651, %v5652
        %v5654 = vrot.slane %v5653, 2
        %v5655 = vadd.f32 %v5653, %v5654
        %v5656 = vrot.slane %v5655, 1
        %v5657 = vadd.f32 %v5655, %v5656
        %v5658 = vsel %vm5114, %v5496, 0.0
        %v5659 = vsel %vm5114, %v5498, 0.0
        %v5660 = vadd.f32 %v5658, %v5659
        %v5661 = vrot.slane %v5660, 4
        %v5662 = vadd.f32 %v5660, %v5661
        %v5663 = vrot.slane %v5662, 2
        %v5664 = vadd.f32 %v5662, %v5663
        %v5665 = vrot.slane %v5664, 1
        %v5666 = vadd.f32 %v5664, %v5665
        %v5667 = vsel %vm5114, %v5500, 0.0
        %v5668 = vsel %vm5114, %v5502, 0.0
        %v5669 = vadd.f32 %v5667, %v5668
        %v5670 = vrot.slane %v5669, 4
        %v5671 = vadd.f32 %v5669, %v5670
        %v5672 = vrot.slane %v5671, 2
        %v5673 = vadd.f32 %v5671, %v5672
        %v5674 = vrot.slane %v5673, 1
        %v5675 = vadd.f32 %v5673, %v5674
        %v5676 = vsel %vm5114, %v5504, 0.0
        %v5677 = vsel %vm5114, %v5506, 0.0
        %v5678 = vadd.f32 %v5676, %v5677
        %v5679 = vrot.slane %v5678, 4
        %v5680 = vadd.f32 %v5678, %v5679
        %v5681 = vrot.slane %v5680, 2
        %v5682 = vadd.f32 %v5680, %v5681
        %v5683 = vrot.slane %v5682, 1
        %v5684 = vadd.f32 %v5682, %v5683
        %v5685 = vsel %vm5114, %v5508, 0.0
        %v5686 = vsel %vm5114, %v5510, 0.0
        %v5687 = vadd.f32 %v5685, %v5686
        %v5688 = vrot.slane %v5687, 4
        %v5689 = vadd.f32 %v5687, %v5688
        %v5690 = vrot.slane %v5689, 2
        %v5691 = vadd.f32 %v5689, %v5690
        %v5692 = vrot.slane %v5691, 1
        %v5693 = vadd.f32 %v5691, %v5692
        %v5694 = vsel %vm5114, %v5512, 0.0
        %v5695 = vsel %vm5114, %v5514, 0.0
        %v5696 = vadd.f32 %v5694, %v5695
        %v5697 = vrot.slane %v5696, 4
        %v5698 = vadd.f32 %v5696, %v5697
        %v5699 = vrot.slane %v5698, 2
        %v5700 = vadd.f32 %v5698, %v5699
        %v5701 = vrot.slane %v5700, 1
        %v5702 = vadd.f32 %v5700, %v5701
        %v5703 = vsel %vm5114, %v5516, 0.0
        %v5704 = vsel %vm5114, %v5518, 0.0
        %v5705 = vadd.f32 %v5703, %v5704
        %v5706 = vrot.slane %v5705, 4
        %v5707 = vadd.f32 %v5705, %v5706
        %v5708 = vrot.slane %v5707, 2
        %v5709 = vadd.f32 %v5707, %v5708
        %v5710 = vrot.slane %v5709, 1
        %v5711 = vadd.f32 %v5709, %v5710
        %v5712 = vsel %vm5114, %v5520, 0.0
        %v5713 = vsel %vm5114, %v5522, 0.0
        %v5714 = vadd.f32 %v5712, %v5713
        %v5715 = vrot.slane %v5714, 4
        %v5716 = vadd.f32 %v5714, %v5715
        %v5717 = vrot.slane %v5716, 2
        %v5718 = vadd.f32 %v5716, %v5717
        %v5719 = vrot.slane %v5718, 1
        %v5720 = vadd.f32 %v5718, %v5719
        %v5721 = vsel %vm5114, %v5524, 0.0
        %v5722 = vsel %vm5114, %v5526, 0.0
        %v5723 = vadd.f32 %v5721, %v5722
        %v5724 = vrot.slane %v5723, 4
        %v5725 = vadd.f32 %v5723, %v5724
        %v5726 = vrot.slane %v5725, 2
        %v5727 = vadd.f32 %v5725, %v5726
        %v5728 = vrot.slane %v5727, 1
        %v5729 = vadd.f32 %v5727, %v5728
        %v5730 = vsel %vm5114, %v5528, 0.0
        %v5731 = vsel %vm5114, %v5530, 0.0
        %v5732 = vadd.f32 %v5730, %v5731
        %v5733 = vrot.slane %v5732, 4
        %v5734 = vadd.f32 %v5732, %v5733
        %v5735 = vrot.slane %v5734, 2
        %v5736 = vadd.f32 %v5734, %v5735
        %v5737 = vrot.slane %v5736, 1
        %v5738 = vadd.f32 %v5736, %v5737
        %v5739 = vsel %vm5114, %v5532, 0.0
        %v5740 = vsel %vm5114, %v5534, 0.0
        %v5741 = vadd.f32 %v5739, %v5740
        %v5742 = vrot.slane %v5741, 4
        %v5743 = vadd.f32 %v5741, %v5742
        %v5744 = vrot.slane %v5743, 2
        %v5745 = vadd.f32 %v5743, %v5744
        %v5746 = vrot.slane %v5745, 1
        %v5747 = vadd.f32 %v5745, %v5746
        %v5748 = vsel %vm5114, %v5536, 0.0
        %v5749 = vsel %vm5114, %v5538, 0.0
        %v5750 = vadd.f32 %v5748, %v5749
        %v5751 = vrot.slane %v5750, 4
        %v5752 = vadd.f32 %v5750, %v5751
        %v5753 = vrot.slane %v5752, 2
        %v5754 = vadd.f32 %v5752, %v5753
        %v5755 = vrot.slane %v5754, 1
        %v5756 = vadd.f32 %v5754, %v5755
        %v5757 = vsel %vm5114, %v5540, 0.0
        %v5758 = vsel %vm5114, %v5542, 0.0
        %v5759 = vadd.f32 %v5757, %v5758
        %v5760 = vrot.slane %v5759, 4
        %v5761 = vadd.f32 %v5759, %v5760
        %v5762 = vrot.slane %v5761, 2
        %v5763 = vadd.f32 %v5761, %v5762
        %v5764 = vrot.slane %v5763, 1
        %v5765 = vadd.f32 %v5763, %v5764
        %v5766 = vsel %vm5114, %v5544, 0.0
        %v5767 = vsel %vm5114, %v5546, 0.0
        %v5768 = vadd.f32 %v5766, %v5767
        %v5769 = vrot.slane %v5768, 4
        %v5770 = vadd.f32 %v5768, %v5769
        %v5771 = vrot.slane %v5770, 2
        %v5772 = vadd.f32 %v5770, %v5771
        %v5773 = vrot.slane %v5772, 1
        %v5774 = vadd.f32 %v5772, %v5773
        %v5775 = vsel %vm5114, %v5548, 0.0
        %v5776 = vsel %vm5114, %v5550, 0.0
        %v5777 = vadd.f32 %v5775, %v5776
        %v5778 = vrot.slane %v5777, 4
        %v5779 = vadd.f32 %v5777, %v5778
        %v5780 = vrot.slane %v5779, 2
        %v5781 = vadd.f32 %v5779, %v5780
        %v5782 = vrot.slane %v5781, 1
        %v5783 = vadd.f32 %v5781, %v5782
        %v5784 = vsel %vm5114, %v5552, 0.0
        %v5785 = vsel %vm5114, %v5554, 0.0
        %v5786 = vadd.f32 %v5784, %v5785
        %v5787 = vrot.slane %v5786, 4
        %v5788 = vadd.f32 %v5786, %v5787
        %v5789 = vrot.slane %v5788, 2
        %v5790 = vadd.f32 %v5788, %v5789
        %v5791 = vrot.slane %v5790, 1
        %v5792 = vadd.f32 %v5790, %v5791
        %v5793 = vsel %vm5114, %v5556, 0.0
        %v5794 = vsel %vm5114, %v5558, 0.0
        %v5795 = vadd.f32 %v5793, %v5794
        %v5796 = vrot.slane %v5795, 4
        %v5797 = vadd.f32 %v5795, %v5796
        %v5798 = vrot.slane %v5797, 2
        %v5799 = vadd.f32 %v5797, %v5798
        %v5800 = vrot.slane %v5799, 1
        %v5801 = vadd.f32 %v5799, %v5800
        %v5802 = vsel %vm5114, %v5560, 0.0
        %v5803 = vsel %vm5114, %v5562, 0.0
        %v5804 = vadd.f32 %v5802, %v5803
        %v5805 = vrot.slane %v5804, 4
        %v5806 = vadd.f32 %v5804, %v5805
        %v5807 = vrot.slane %v5806, 2
        %v5808 = vadd.f32 %v5806, %v5807
        %v5809 = vrot.slane %v5808, 1
        %v5810 = vadd.f32 %v5808, %v5809
        %v5811 = vsel %vm5114, %v5564, 0.0
        %v5812 = vsel %vm5114, %v5566, 0.0
        %v5813 = vadd.f32 %v5811, %v5812
        %v5814 = vrot.slane %v5813, 4
        %v5815 = vadd.f32 %v5813, %v5814
        %v5816 = vrot.slane %v5815, 2
        %v5817 = vadd.f32 %v5815, %v5816
        %v5818 = vrot.slane %v5817, 1
        %v5819 = vadd.f32 %v5817, %v5818
        %v5820 = vsel %vm5114, %v5568, 0.0
        %v5821 = vsel %vm5114, %v5570, 0.0
        %v5822 = vadd.f32 %v5820, %v5821
        %v5823 = vrot.slane %v5822, 4
        %v5824 = vadd.f32 %v5822, %v5823
        %v5825 = vrot.slane %v5824, 2
        %v5826 = vadd.f32 %v5824, %v5825
        %v5827 = vrot.slane %v5826, 1
        %v5828 = vadd.f32 %v5826, %v5827
        %v5829 = vsel %vm5114, %v5572, 0.0
        %v5830 = vsel %vm5114, %v5574, 0.0
        %v5831 = vadd.f32 %v5829, %v5830
        %v5832 = vrot.slane %v5831, 4
        %v5833 = vadd.f32 %v5831, %v5832
        %v5834 = vrot.slane %v5833, 2
        %v5835 = vadd.f32 %v5833, %v5834
        %v5836 = vrot.slane %v5835, 1
        %v5837 = vadd.f32 %v5835, %v5836
        %v5838 = vsel %vm5114, %v5576, 0.0
        %v5839 = vsel %vm5114, %v5578, 0.0
        %v5840 = vadd.f32 %v5838, %v5839
        %v5841 = vrot.slane %v5840, 4
        %v5842 = vadd.f32 %v5840, %v5841
        %v5843 = vrot.slane %v5842, 2
        %v5844 = vadd.f32 %v5842, %v5843
        %v5845 = vrot.slane %v5844, 1
        %v5846 = vadd.f32 %v5844, %v5845
        %v5847 = vsel %vm5114, %v5580, 0.0
        %v5848 = vsel %vm5114, %v5582, 0.0
        %v5849 = vadd.f32 %v5847, %v5848
        %v5850 = vrot.slane %v5849, 4
        %v5851 = vadd.f32 %v5849, %v5850
        %v5852 = vrot.slane %v5851, 2
        %v5853 = vadd.f32 %v5851, %v5852
        %v5854 = vrot.slane %v5853, 1
        %v5855 = vadd.f32 %v5853, %v5854
        %v5856 = vsel %vm5114, %v5584, 0.0
        %v5857 = vsel %vm5114, %v5586, 0.0
        %v5858 = vadd.f32 %v5856, %v5857
        %v5859 = vrot.slane %v5858, 4
        %v5860 = vadd.f32 %v5858, %v5859
        %v5861 = vrot.slane %v5860, 2
        %v5862 = vadd.f32 %v5860, %v5861
        %v5863 = vrot.slane %v5862, 1
        %v5864 = vadd.f32 %v5862, %v5863
        %v5865 = vsel %vm5114, %v5588, 0.0
        %v5866 = vsel %vm5114, %v5590, 0.0
        %v5867 = vadd.f32 %v5865, %v5866
        %v5868 = vrot.slane %v5867, 4
        %v5869 = vadd.f32 %v5867, %v5868
        %v5870 = vrot.slane %v5869, 2
        %v5871 = vadd.f32 %v5869, %v5870
        %v5872 = vrot.slane %v5871, 1
        %v5873 = vadd.f32 %v5871, %v5872
        %v5874 = vsel %vm5114, %v5592, 0.0
        %v5875 = vsel %vm5114, %v5594, 0.0
        %v5876 = vadd.f32 %v5874, %v5875
        %v5877 = vrot.slane %v5876, 4
        %v5878 = vadd.f32 %v5876, %v5877
        %v5879 = vrot.slane %v5878, 2
        %v5880 = vadd.f32 %v5878, %v5879
        %v5881 = vrot.slane %v5880, 1
        %v5882 = vadd.f32 %v5880, %v5881
        %v5883 = vrcp.pop %v5603
        %v5884 = vmul.f32 %v5603, %v5883
        %v5885 = vsub.f32 1.0, %v5884
        %v5886 = vmul.f32 %v5883, %v5885
        %v5887 = vadd.f32 %v5883, %v5886
        %vm5888 = vweird.f32 %v5603
        %vm5889 = vweird.f32 %v5883
        %vm5890 = vmor %vm5888, %vm5889
        %v5891 = vsel %vm5890, %v5883, %v5887
        %v5892 = vand.u32 2147483647, %v5603
        %vm5893 = vcmp.eq.f32.partialorder %v5892, 8.507059e+37
        %v5894 = vand.u32 %v5603, 2147483648
        %v5895 = vor.u32 1.1754944e-38, %v5894
        %v5896 = vsel %vm5893, %v5895, %v5891
        %v5897 = vmul.f32 %v5468, %v5896
        %v5898 = vmul.f32 %v5470, %v5896
        %v5899 = vrcp.pop %v5612
        %v5900 = vmul.f32 %v5612, %v5899
        %v5901 = vsub.f32 1.0, %v5900
        %v5902 = vmul.f32 %v5899, %v5901
        %v5903 = vadd.f32 %v5899, %v5902
        %vm5904 = vweird.f32 %v5612
        %vm5905 = vweird.f32 %v5899
        %vm5906 = vmor %vm5904, %vm5905
        %v5907 = vsel %vm5906, %v5899, %v5903
        %v5908 = vand.u32 2147483647, %v5612
        %vm5909 = vcmp.eq.f32.partialorder %v5908, 8.507059e+37
        %v5910 = vand.u32 %v5612, 2147483648
        %v5911 = vor.u32 1.1754944e-38, %v5910
        %v5912 = vsel %vm5909, %v5911, %v5907
        %v5913 = vmul.f32 %v5472, %v5912
        %v5914 = vmul.f32 %v5474, %v5912
        %v5915 = vrcp.pop %v5621
        %v5916 = vmul.f32 %v5621, %v5915
        %v5917 = vsub.f32 1.0, %v5916
        %v5918 = vmul.f32 %v5915, %v5917
        %v5919 = vadd.f32 %v5915, %v5918
        %vm5920 = vweird.f32 %v5621
        %vm5921 = vweird.f32 %v5915
        %vm5922 = vmor %vm5920, %vm5921
        %v5923 = vsel %vm5922, %v5915, %v5919
        %v5924 = vand.u32 2147483647, %v5621
        %vm5925 = vcmp.eq.f32.partialorder %v5924, 8.507059e+37
        %v5926 = vand.u32 %v5621, 2147483648
        %v5927 = vor.u32 1.1754944e-38, %v5926
        %v5928 = vsel %vm5925, %v5927, %v5923
        %v5929 = vmul.f32 %v5476, %v5928
        %v5930 = vmul.f32 %v5478, %v5928
        %v5931 = vrcp.pop %v5630
        %v5932 = vmul.f32 %v5630, %v5931
        %v5933 = vsub.f32 1.0, %v5932
        %v5934 = vmul.f32 %v5931, %v5933
        %v5935 = vadd.f32 %v5931, %v5934
        %vm5936 = vweird.f32 %v5630
        %vm5937 = vweird.f32 %v5931
        %vm5938 = vmor %vm5936, %vm5937
        %v5939 = vsel %vm5938, %v5931, %v5935
        %v5940 = vand.u32 2147483647, %v5630
        %vm5941 = vcmp.eq.f32.partialorder %v5940, 8.507059e+37
        %v5942 = vand.u32 %v5630, 2147483648
        %v5943 = vor.u32 1.1754944e-38, %v5942
        %v5944 = vsel %vm5941, %v5943, %v5939
        %v5945 = vmul.f32 %v5480, %v5944
        %v5946 = vmul.f32 %v5482, %v5944
        %v5947 = vrcp.pop %v5639
        %v5948 = vmul.f32 %v5639, %v5947
        %v5949 = vsub.f32 1.0, %v5948
        %v5950 = vmul.f32 %v5947, %v5949
        %v5951 = vadd.f32 %v5947, %v5950
        %vm5952 = vweird.f32 %v5639
        %vm5953 = vweird.f32 %v5947
        %vm5954 = vmor %vm5952, %vm5953
        %v5955 = vsel %vm5954, %v5947, %v5951
        %v5956 = vand.u32 2147483647, %v5639
        %vm5957 = vcmp.eq.f32.partialorder %v5956, 8.507059e+37
        %v5958 = vand.u32 %v5639, 2147483648
        %v5959 = vor.u32 1.1754944e-38, %v5958
        %v5960 = vsel %vm5957, %v5959, %v5955
        %v5961 = vmul.f32 %v5484, %v5960
        %v5962 = vmul.f32 %v5486, %v5960
        %v5963 = vrcp.pop %v5648
        %v5964 = vmul.f32 %v5648, %v5963
        %v5965 = vsub.f32 1.0, %v5964
        %v5966 = vmul.f32 %v5963, %v5965
        %v5967 = vadd.f32 %v5963, %v5966
        %vm5968 = vweird.f32 %v5648
        %vm5969 = vweird.f32 %v5963
        %vm5970 = vmor %vm5968, %vm5969
        %v5971 = vsel %vm5970, %v5963, %v5967
        %v5972 = vand.u32 2147483647, %v5648
        %vm5973 = vcmp.eq.f32.partialorder %v5972, 8.507059e+37
        %v5974 = vand.u32 %v5648, 2147483648
        %v5975 = vor.u32 1.1754944e-38, %v5974
        %v5976 = vsel %vm5973, %v5975, %v5971
        %v5977 = vmul.f32 %v5488, %v5976
        %v5978 = vmul.f32 %v5490, %v5976
        %v5979 = vrcp.pop %v5657
        %v5980 = vmul.f32 %v5657, %v5979
        %v5981 = vsub.f32 1.0, %v5980
        %v5982 = vmul.f32 %v5979, %v5981
        %v5983 = vadd.f32 %v5979, %v5982
        %vm5984 = vweird.f32 %v5657
        %vm5985 = vweird.f32 %v5979
        %vm5986 = vmor %vm5984, %vm5985
        %v5987 = vsel %vm5986, %v5979, %v5983
        %v5988 = vand.u32 2147483647, %v5657
        %vm5989 = vcmp.eq.f32.partialorder %v5988, 8.507059e+37
        %v5990 = vand.u32 %v5657, 2147483648
        %v5991 = vor.u32 1.1754944e-38, %v5990
        %v5992 = vsel %vm5989, %v5991, %v5987
        %v5993 = vmul.f32 %v5492, %v5992
        %v5994 = vmul.f32 %v5494, %v5992
        %v5995 = vrcp.pop %v5666
        %v5996 = vmul.f32 %v5666, %v5995
        %v5997 = vsub.f32 1.0, %v5996
        %v5998 = vmul.f32 %v5995, %v5997
        %v5999 = vadd.f32 %v5995, %v5998
        %vm6000 = vweird.f32 %v5666
        %vm6001 = vweird.f32 %v5995
        %vm6002 = vmor %vm6000, %vm6001
        %v6003 = vsel %vm6002, %v5995, %v5999
        %v6004 = vand.u32 2147483647, %v5666
        %vm6005 = vcmp.eq.f32.partialorder %v6004, 8.507059e+37
        %v6006 = vand.u32 %v5666, 2147483648
        %v6007 = vor.u32 1.1754944e-38, %v6006
        %v6008 = vsel %vm6005, %v6007, %v6003
        %v6009 = vmul.f32 %v5496, %v6008
        %v6010 = vmul.f32 %v5498, %v6008
        %v6011 = vrcp.pop %v5675
        %v6012 = vmul.f32 %v5675, %v6011
        %v6013 = vsub.f32 1.0, %v6012
        %v6014 = vmul.f32 %v6011, %v6013
        %v6015 = vadd.f32 %v6011, %v6014
        %vm6016 = vweird.f32 %v5675
        %vm6017 = vweird.f32 %v6011
        %vm6018 = vmor %vm6016, %vm6017
        %v6019 = vsel %vm6018, %v6011, %v6015
        %v6020 = vand.u32 2147483647, %v5675
        %vm6021 = vcmp.eq.f32.partialorder %v6020, 8.507059e+37
        %v6022 = vand.u32 %v5675, 2147483648
        %v6023 = vor.u32 1.1754944e-38, %v6022
        %v6024 = vsel %vm6021, %v6023, %v6019
        %v6025 = vmul.f32 %v5500, %v6024
        %v6026 = vmul.f32 %v5502, %v6024
        %v6027 = vrcp.pop %v5684
        %v6028 = vmul.f32 %v5684, %v6027
        %v6029 = vsub.f32 1.0, %v6028
        %v6030 = vmul.f32 %v6027, %v6029
        %v6031 = vadd.f32 %v6027, %v6030
        %vm6032 = vweird.f32 %v5684
        %vm6033 = vweird.f32 %v6027
        %vm6034 = vmor %vm6032, %vm6033
        %v6035 = vsel %vm6034, %v6027, %v6031
        %v6036 = vand.u32 2147483647, %v5684
        %vm6037 = vcmp.eq.f32.partialorder %v6036, 8.507059e+37
        %v6038 = vand.u32 %v5684, 2147483648
        %v6039 = vor.u32 1.1754944e-38, %v6038
        %v6040 = vsel %vm6037, %v6039, %v6035
        %v6041 = vmul.f32 %v5504, %v6040
        %v6042 = vmul.f32 %v5506, %v6040
        %v6043 = vrcp.pop %v5693
        %v6044 = vmul.f32 %v5693, %v6043
        %v6045 = vsub.f32 1.0, %v6044
        %v6046 = vmul.f32 %v6043, %v6045
        %v6047 = vadd.f32 %v6043, %v6046
        %vm6048 = vweird.f32 %v5693
        %vm6049 = vweird.f32 %v6043
        %vm6050 = vmor %vm6048, %vm6049
        %v6051 = vsel %vm6050, %v6043, %v6047
        %v6052 = vand.u32 2147483647, %v5693
        %vm6053 = vcmp.eq.f32.partialorder %v6052, 8.507059e+37
        %v6054 = vand.u32 %v5693, 2147483648
        %v6055 = vor.u32 1.1754944e-38, %v6054
        %v6056 = vsel %vm6053, %v6055, %v6051
        %v6057 = vmul.f32 %v5508, %v6056
        %v6058 = vmul.f32 %v5510, %v6056
        %v6059 = vrcp.pop %v5702
        %v6060 = vmul.f32 %v5702, %v6059
        %v6061 = vsub.f32 1.0, %v6060
        %v6062 = vmul.f32 %v6059, %v6061
        %v6063 = vadd.f32 %v6059, %v6062
        %vm6064 = vweird.f32 %v5702
        %vm6065 = vweird.f32 %v6059
        %vm6066 = vmor %vm6064, %vm6065
        %v6067 = vsel %vm6066, %v6059, %v6063
        %v6068 = vand.u32 2147483647, %v5702
        %vm6069 = vcmp.eq.f32.partialorder %v6068, 8.507059e+37
        %v6070 = vand.u32 %v5702, 2147483648
        %v6071 = vor.u32 1.1754944e-38, %v6070
        %v6072 = vsel %vm6069, %v6071, %v6067
        %v6073 = vmul.f32 %v5512, %v6072
        %v6074 = vmul.f32 %v5514, %v6072
        %v6075 = vrcp.pop %v5711
        %v6076 = vmul.f32 %v5711, %v6075
        %v6077 = vsub.f32 1.0, %v6076
        %v6078 = vmul.f32 %v6075, %v6077
        %v6079 = vadd.f32 %v6075, %v6078
        %vm6080 = vweird.f32 %v5711
        %vm6081 = vweird.f32 %v6075
        %vm6082 = vmor %vm6080, %vm6081
        %v6083 = vsel %vm6082, %v6075, %v6079
        %v6084 = vand.u32 2147483647, %v5711
        %vm6085 = vcmp.eq.f32.partialorder %v6084, 8.507059e+37
        %v6086 = vand.u32 %v5711, 2147483648
        %v6087 = vor.u32 1.1754944e-38, %v6086
        %v6088 = vsel %vm6085, %v6087, %v6083
        %v6089 = vmul.f32 %v5516, %v6088
        %v6090 = vmul.f32 %v5518, %v6088
        %v6091 = vrcp.pop %v5720
        %v6092 = vmul.f32 %v5720, %v6091
        %v6093 = vsub.f32 1.0, %v6092
        %v6094 = vmul.f32 %v6091, %v6093
        %v6095 = vadd.f32 %v6091, %v6094
        %vm6096 = vweird.f32 %v5720
        %vm6097 = vweird.f32 %v6091
        %vm6098 = vmor %vm6096, %vm6097
        %v6099 = vsel %vm6098, %v6091, %v6095
        %v6100 = vand.u32 2147483647, %v5720
        %vm6101 = vcmp.eq.f32.partialorder %v6100, 8.507059e+37
        %v6102 = vand.u32 %v5720, 2147483648
        %v6103 = vor.u32 1.1754944e-38, %v6102
        %v6104 = vsel %vm6101, %v6103, %v6099
        %v6105 = vmul.f32 %v5520, %v6104
        %v6106 = vmul.f32 %v5522, %v6104
        %v6107 = vrcp.pop %v5729
        %v6108 = vmul.f32 %v5729, %v6107
        %v6109 = vsub.f32 1.0, %v6108
        %v6110 = vmul.f32 %v6107, %v6109
        %v6111 = vadd.f32 %v6107, %v6110
        %vm6112 = vweird.f32 %v5729
        %vm6113 = vweird.f32 %v6107
        %vm6114 = vmor %vm6112, %vm6113
        %v6115 = vsel %vm6114, %v6107, %v6111
        %v6116 = vand.u32 2147483647, %v5729
        %vm6117 = vcmp.eq.f32.partialorder %v6116, 8.507059e+37
        %v6118 = vand.u32 %v5729, 2147483648
        %v6119 = vor.u32 1.1754944e-38, %v6118
        %v6120 = vsel %vm6117, %v6119, %v6115
        %v6121 = vmul.f32 %v5524, %v6120
        %v6122 = vmul.f32 %v5526, %v6120
        %v6123 = vrcp.pop %v5738
        %v6124 = vmul.f32 %v5738, %v6123
        %v6125 = vsub.f32 1.0, %v6124
        %v6126 = vmul.f32 %v6123, %v6125
        %v6127 = vadd.f32 %v6123, %v6126
        %vm6128 = vweird.f32 %v5738
        %vm6129 = vweird.f32 %v6123
        %vm6130 = vmor %vm6128, %vm6129
        %v6131 = vsel %vm6130, %v6123, %v6127
        %v6132 = vand.u32 2147483647, %v5738
        %vm6133 = vcmp.eq.f32.partialorder %v6132, 8.507059e+37
        %v6134 = vand.u32 %v5738, 2147483648
        %v6135 = vor.u32 1.1754944e-38, %v6134
        %v6136 = vsel %vm6133, %v6135, %v6131
        %v6137 = vmul.f32 %v5528, %v6136
        %v6138 = vmul.f32 %v5530, %v6136
        %v6139 = vrcp.pop %v5747
        %v6140 = vmul.f32 %v5747, %v6139
        %v6141 = vsub.f32 1.0, %v6140
        %v6142 = vmul.f32 %v6139, %v6141
        %v6143 = vadd.f32 %v6139, %v6142
        %vm6144 = vweird.f32 %v5747
        %vm6145 = vweird.f32 %v6139
        %vm6146 = vmor %vm6144, %vm6145
        %v6147 = vsel %vm6146, %v6139, %v6143
        %v6148 = vand.u32 2147483647, %v5747
        %vm6149 = vcmp.eq.f32.partialorder %v6148, 8.507059e+37
        %v6150 = vand.u32 %v5747, 2147483648
        %v6151 = vor.u32 1.1754944e-38, %v6150
        %v6152 = vsel %vm6149, %v6151, %v6147
        %v6153 = vmul.f32 %v5532, %v6152
        %v6154 = vmul.f32 %v5534, %v6152
        %v6155 = vrcp.pop %v5756
        %v6156 = vmul.f32 %v5756, %v6155
        %v6157 = vsub.f32 1.0, %v6156
        %v6158 = vmul.f32 %v6155, %v6157
        %v6159 = vadd.f32 %v6155, %v6158
        %vm6160 = vweird.f32 %v5756
        %vm6161 = vweird.f32 %v6155
        %vm6162 = vmor %vm6160, %vm6161
        %v6163 = vsel %vm6162, %v6155, %v6159
        %v6164 = vand.u32 2147483647, %v5756
        %vm6165 = vcmp.eq.f32.partialorder %v6164, 8.507059e+37
        %v6166 = vand.u32 %v5756, 2147483648
        %v6167 = vor.u32 1.1754944e-38, %v6166
        %v6168 = vsel %vm6165, %v6167, %v6163
        %v6169 = vmul.f32 %v5536, %v6168
        %v6170 = vmul.f32 %v5538, %v6168
        %v6171 = vrcp.pop %v5765
        %v6172 = vmul.f32 %v5765, %v6171
        %v6173 = vsub.f32 1.0, %v6172
        %v6174 = vmul.f32 %v6171, %v6173
        %v6175 = vadd.f32 %v6171, %v6174
        %vm6176 = vweird.f32 %v5765
        %vm6177 = vweird.f32 %v6171
        %vm6178 = vmor %vm6176, %vm6177
        %v6179 = vsel %vm6178, %v6171, %v6175
        %v6180 = vand.u32 2147483647, %v5765
        %vm6181 = vcmp.eq.f32.partialorder %v6180, 8.507059e+37
        %v6182 = vand.u32 %v5765, 2147483648
        %v6183 = vor.u32 1.1754944e-38, %v6182
        %v6184 = vsel %vm6181, %v6183, %v6179
        %v6185 = vmul.f32 %v5540, %v6184
        %v6186 = vmul.f32 %v5542, %v6184
        %v6187 = vrcp.pop %v5774
        %v6188 = vmul.f32 %v5774, %v6187
        %v6189 = vsub.f32 1.0, %v6188
        %v6190 = vmul.f32 %v6187, %v6189
        %v6191 = vadd.f32 %v6187, %v6190
        %vm6192 = vweird.f32 %v5774
        %vm6193 = vweird.f32 %v6187
        %vm6194 = vmor %vm6192, %vm6193
        %v6195 = vsel %vm6194, %v6187, %v6191
        %v6196 = vand.u32 2147483647, %v5774
        %vm6197 = vcmp.eq.f32.partialorder %v6196, 8.507059e+37
        %v6198 = vand.u32 %v5774, 2147483648
        %v6199 = vor.u32 1.1754944e-38, %v6198
        %v6200 = vsel %vm6197, %v6199, %v6195
        %v6201 = vmul.f32 %v5544, %v6200
        %v6202 = vmul.f32 %v5546, %v6200
        %v6203 = vrcp.pop %v5783
        %v6204 = vmul.f32 %v5783, %v6203
        %v6205 = vsub.f32 1.0, %v6204
        %v6206 = vmul.f32 %v6203, %v6205
        %v6207 = vadd.f32 %v6203, %v6206
        %vm6208 = vweird.f32 %v5783
        %vm6209 = vweird.f32 %v6203
        %vm6210 = vmor %vm6208, %vm6209
        %v6211 = vsel %vm6210, %v6203, %v6207
        %v6212 = vand.u32 2147483647, %v5783
        %vm6213 = vcmp.eq.f32.partialorder %v6212, 8.507059e+37
        %v6214 = vand.u32 %v5783, 2147483648
        %v6215 = vor.u32 1.1754944e-38, %v6214
        %v6216 = vsel %vm6213, %v6215, %v6211
        %v6217 = vmul.f32 %v5548, %v6216
        %v6218 = vmul.f32 %v5550, %v6216
        %v6219 = vrcp.pop %v5792
        %v6220 = vmul.f32 %v5792, %v6219
        %v6221 = vsub.f32 1.0, %v6220
        %v6222 = vmul.f32 %v6219, %v6221
        %v6223 = vadd.f32 %v6219, %v6222
        %vm6224 = vweird.f32 %v5792
        %vm6225 = vweird.f32 %v6219
        %vm6226 = vmor %vm6224, %vm6225
        %v6227 = vsel %vm6226, %v6219, %v6223
        %v6228 = vand.u32 2147483647, %v5792
        %vm6229 = vcmp.eq.f32.partialorder %v6228, 8.507059e+37
        %v6230 = vand.u32 %v5792, 2147483648
        %v6231 = vor.u32 1.1754944e-38, %v6230
        %v6232 = vsel %vm6229, %v6231, %v6227
        %v6233 = vmul.f32 %v5552, %v6232
        %v6234 = vmul.f32 %v5554, %v6232
        %v6235 = vrcp.pop %v5801
        %v6236 = vmul.f32 %v5801, %v6235
        %v6237 = vsub.f32 1.0, %v6236
        %v6238 = vmul.f32 %v6235, %v6237
        %v6239 = vadd.f32 %v6235, %v6238
        %vm6240 = vweird.f32 %v5801
        %vm6241 = vweird.f32 %v6235
        %vm6242 = vmor %vm6240, %vm6241
        %v6243 = vsel %vm6242, %v6235, %v6239
        %v6244 = vand.u32 2147483647, %v5801
        %vm6245 = vcmp.eq.f32.partialorder %v6244, 8.507059e+37
        %v6246 = vand.u32 %v5801, 2147483648
        %v6247 = vor.u32 1.1754944e-38, %v6246
        %v6248 = vsel %vm6245, %v6247, %v6243
        %v6249 = vmul.f32 %v5556, %v6248
        %v6250 = vmul.f32 %v5558, %v6248
        %v6251 = vrcp.pop %v5810
        %v6252 = vmul.f32 %v5810, %v6251
        %v6253 = vsub.f32 1.0, %v6252
        %v6254 = vmul.f32 %v6251, %v6253
        %v6255 = vadd.f32 %v6251, %v6254
        %vm6256 = vweird.f32 %v5810
        %vm6257 = vweird.f32 %v6251
        %vm6258 = vmor %vm6256, %vm6257
        %v6259 = vsel %vm6258, %v6251, %v6255
        %v6260 = vand.u32 2147483647, %v5810
        %vm6261 = vcmp.eq.f32.partialorder %v6260, 8.507059e+37
        %v6262 = vand.u32 %v5810, 2147483648
        %v6263 = vor.u32 1.1754944e-38, %v6262
        %v6264 = vsel %vm6261, %v6263, %v6259
        %v6265 = vmul.f32 %v5560, %v6264
        %v6266 = vmul.f32 %v5562, %v6264
        %v6267 = vrcp.pop %v5819
        %v6268 = vmul.f32 %v5819, %v6267
        %v6269 = vsub.f32 1.0, %v6268
        %v6270 = vmul.f32 %v6267, %v6269
        %v6271 = vadd.f32 %v6267, %v6270
        %vm6272 = vweird.f32 %v5819
        %vm6273 = vweird.f32 %v6267
        %vm6274 = vmor %vm6272, %vm6273
        %v6275 = vsel %vm6274, %v6267, %v6271
        %v6276 = vand.u32 2147483647, %v5819
        %vm6277 = vcmp.eq.f32.partialorder %v6276, 8.507059e+37
        %v6278 = vand.u32 %v5819, 2147483648
        %v6279 = vor.u32 1.1754944e-38, %v6278
        %v6280 = vsel %vm6277, %v6279, %v6275
        %v6281 = vmul.f32 %v5564, %v6280
        %v6282 = vmul.f32 %v5566, %v6280
        %v6283 = vrcp.pop %v5828
        %v6284 = vmul.f32 %v5828, %v6283
        %v6285 = vsub.f32 1.0, %v6284
        %v6286 = vmul.f32 %v6283, %v6285
        %v6287 = vadd.f32 %v6283, %v6286
        %vm6288 = vweird.f32 %v5828
        %vm6289 = vweird.f32 %v6283
        %vm6290 = vmor %vm6288, %vm6289
        %v6291 = vsel %vm6290, %v6283, %v6287
        %v6292 = vand.u32 2147483647, %v5828
        %vm6293 = vcmp.eq.f32.partialorder %v6292, 8.507059e+37
        %v6294 = vand.u32 %v5828, 2147483648
        %v6295 = vor.u32 1.1754944e-38, %v6294
        %v6296 = vsel %vm6293, %v6295, %v6291
        %v6297 = vmul.f32 %v5568, %v6296
        %v6298 = vmul.f32 %v5570, %v6296
        %v6299 = vrcp.pop %v5837
        %v6300 = vmul.f32 %v5837, %v6299
        %v6301 = vsub.f32 1.0, %v6300
        %v6302 = vmul.f32 %v6299, %v6301
        %v6303 = vadd.f32 %v6299, %v6302
        %vm6304 = vweird.f32 %v5837
        %vm6305 = vweird.f32 %v6299
        %vm6306 = vmor %vm6304, %vm6305
        %v6307 = vsel %vm6306, %v6299, %v6303
        %v6308 = vand.u32 2147483647, %v5837
        %vm6309 = vcmp.eq.f32.partialorder %v6308, 8.507059e+37
        %v6310 = vand.u32 %v5837, 2147483648
        %v6311 = vor.u32 1.1754944e-38, %v6310
        %v6312 = vsel %vm6309, %v6311, %v6307
        %v6313 = vmul.f32 %v5572, %v6312
        %v6314 = vmul.f32 %v5574, %v6312
        %v6315 = vrcp.pop %v5846
        %v6316 = vmul.f32 %v5846, %v6315
        %v6317 = vsub.f32 1.0, %v6316
        %v6318 = vmul.f32 %v6315, %v6317
        %v6319 = vadd.f32 %v6315, %v6318
        %vm6320 = vweird.f32 %v5846
        %vm6321 = vweird.f32 %v6315
        %vm6322 = vmor %vm6320, %vm6321
        %v6323 = vsel %vm6322, %v6315, %v6319
        %v6324 = vand.u32 2147483647, %v5846
        %vm6325 = vcmp.eq.f32.partialorder %v6324, 8.507059e+37
        %v6326 = vand.u32 %v5846, 2147483648
        %v6327 = vor.u32 1.1754944e-38, %v6326
        %v6328 = vsel %vm6325, %v6327, %v6323
        %v6329 = vmul.f32 %v5576, %v6328
        %v6330 = vmul.f32 %v5578, %v6328
        %v6331 = vrcp.pop %v5855
        %v6332 = vmul.f32 %v5855, %v6331
        %v6333 = vsub.f32 1.0, %v6332
        %v6334 = vmul.f32 %v6331, %v6333
        %v6335 = vadd.f32 %v6331, %v6334
        %vm6336 = vweird.f32 %v5855
        %vm6337 = vweird.f32 %v6331
        %vm6338 = vmor %vm6336, %vm6337
        %v6339 = vsel %vm6338, %v6331, %v6335
        %v6340 = vand.u32 2147483647, %v5855
        %vm6341 = vcmp.eq.f32.partialorder %v6340, 8.507059e+37
        %v6342 = vand.u32 %v5855, 2147483648
        %v6343 = vor.u32 1.1754944e-38, %v6342
        %v6344 = vsel %vm6341, %v6343, %v6339
        %v6345 = vmul.f32 %v5580, %v6344
        %v6346 = vmul.f32 %v5582, %v6344
        %v6347 = vrcp.pop %v5864
        %v6348 = vmul.f32 %v5864, %v6347
        %v6349 = vsub.f32 1.0, %v6348
        %v6350 = vmul.f32 %v6347, %v6349
        %v6351 = vadd.f32 %v6347, %v6350
        %vm6352 = vweird.f32 %v5864
        %vm6353 = vweird.f32 %v6347
        %vm6354 = vmor %vm6352, %vm6353
        %v6355 = vsel %vm6354, %v6347, %v6351
        %v6356 = vand.u32 2147483647, %v5864
        %vm6357 = vcmp.eq.f32.partialorder %v6356, 8.507059e+37
        %v6358 = vand.u32 %v5864, 2147483648
        %v6359 = vor.u32 1.1754944e-38, %v6358
        %v6360 = vsel %vm6357, %v6359, %v6355
        %v6361 = vmul.f32 %v5584, %v6360
        %v6362 = vmul.f32 %v5586, %v6360
        %v6363 = vrcp.pop %v5873
        %v6364 = vmul.f32 %v5873, %v6363
        %v6365 = vsub.f32 1.0, %v6364
        %v6366 = vmul.f32 %v6363, %v6365
        %v6367 = vadd.f32 %v6363, %v6366
        %vm6368 = vweird.f32 %v5873
        %vm6369 = vweird.f32 %v6363
        %vm6370 = vmor %vm6368, %vm6369
        %v6371 = vsel %vm6370, %v6363, %v6367
        %v6372 = vand.u32 2147483647, %v5873
        %vm6373 = vcmp.eq.f32.partialorder %v6372, 8.507059e+37
        %v6374 = vand.u32 %v5873, 2147483648
        %v6375 = vor.u32 1.1754944e-38, %v6374
        %v6376 = vsel %vm6373, %v6375, %v6371
        %v6377 = vmul.f32 %v5588, %v6376
        %v6378 = vmul.f32 %v5590, %v6376
        %v6379 = vrcp.pop %v5882
        %v6380 = vmul.f32 %v5882, %v6379
        %v6381 = vsub.f32 1.0, %v6380
        %v6382 = vmul.f32 %v6379, %v6381
        %v6383 = vadd.f32 %v6379, %v6382
        %vm6384 = vweird.f32 %v5882
        %vm6385 = vweird.f32 %v6379
        %vm6386 = vmor %vm6384, %vm6385
        %v6387 = vsel %vm6386, %v6379, %v6383
        %v6388 = vand.u32 2147483647, %v5882
        %vm6389 = vcmp.eq.f32.partialorder %v6388, 8.507059e+37
        %v6390 = vand.u32 %v5882, 2147483648
        %v6391 = vor.u32 1.1754944e-38, %v6390
        %v6392 = vsel %vm6389, %v6391, %v6387
        %v6393 = vmul.f32 %v5592, %v6392
        %v6394 = vmul.f32 %v5594, %v6392
        %6396 = vset.pattern.permute.xlu0 0
        %6397 = vperm.xlu0 %6396, %v5897
        %v6398 = vpop.permute.xlu0 %6397
        %6401 = vset.pattern.permute.xlu0 0
        %6402 = vperm.xlu0 %6401, %v5898
        %v6403 = vpop.permute.xlu0 %6402
        %6406 = vset.pattern.permute.xlu0 0
        %6407 = vperm.xlu0 %6406, %v5913
        %v6408 = vpop.permute.xlu0 %6407
        %6411 = vset.pattern.permute.xlu0 0
        %6412 = vperm.xlu0 %6411, %v5914
        %v6413 = vpop.permute.xlu0 %6412
        %6416 = vset.pattern.permute.xlu0 0
        %6417 = vperm.xlu0 %6416, %v5929
        %v6418 = vpop.permute.xlu0 %6417
        %6421 = vset.pattern.permute.xlu0 0
        %6422 = vperm.xlu0 %6421, %v5930
        %v6423 = vpop.permute.xlu0 %6422
        %6426 = vset.pattern.permute.xlu0 0
        %6427 = vperm.xlu0 %6426, %v5945
        %v6428 = vpop.permute.xlu0 %6427
        %6431 = vset.pattern.permute.xlu0 0
        %6432 = vperm.xlu0 %6431, %v5946
        %v6433 = vpop.permute.xlu0 %6432
        %6436 = vset.pattern.permute.xlu0 0
        %6437 = vperm.xlu0 %6436, %v5961
        %v6438 = vpop.permute.xlu0 %6437
        %6441 = vset.pattern.permute.xlu0 0
        %6442 = vperm.xlu0 %6441, %v5962
        %v6443 = vpop.permute.xlu0 %6442
        %6446 = vset.pattern.permute.xlu0 0
        %6447 = vperm.xlu0 %6446, %v5977
        %v6448 = vpop.permute.xlu0 %6447
        %6451 = vset.pattern.permute.xlu0 0
        %6452 = vperm.xlu0 %6451, %v5978
        %v6453 = vpop.permute.xlu0 %6452
        %6456 = vset.pattern.permute.xlu0 0
        %6457 = vperm.xlu0 %6456, %v5993
        %v6458 = vpop.permute.xlu0 %6457
        %6461 = vset.pattern.permute.xlu0 0
        %6462 = vperm.xlu0 %6461, %v5994
        %v6463 = vpop.permute.xlu0 %6462
        %6466 = vset.pattern.permute.xlu0 0
        %6467 = vperm.xlu0 %6466, %v6009
        %v6468 = vpop.permute.xlu0 %6467
        %6471 = vset.pattern.permute.xlu0 0
        %6472 = vperm.xlu0 %6471, %v6010
        %v6473 = vpop.permute.xlu0 %6472
        %6476 = vset.pattern.permute.xlu0 0
        %6477 = vperm.xlu0 %6476, %v6025
        %v6478 = vpop.permute.xlu0 %6477
        %6481 = vset.pattern.permute.xlu0 0
        %6482 = vperm.xlu0 %6481, %v6026
        %v6483 = vpop.permute.xlu0 %6482
        %6486 = vset.pattern.permute.xlu0 0
        %6487 = vperm.xlu0 %6486, %v6041
        %v6488 = vpop.permute.xlu0 %6487
        %6491 = vset.pattern.permute.xlu0 0
        %6492 = vperm.xlu0 %6491, %v6042
        %v6493 = vpop.permute.xlu0 %6492
        %6496 = vset.pattern.permute.xlu0 0
        %6497 = vperm.xlu0 %6496, %v6057
        %v6498 = vpop.permute.xlu0 %6497
        %6501 = vset.pattern.permute.xlu0 0
        %6502 = vperm.xlu0 %6501, %v6058
        %v6503 = vpop.permute.xlu0 %6502
        %6506 = vset.pattern.permute.xlu0 0
        %6507 = vperm.xlu0 %6506, %v6073
        %v6508 = vpop.permute.xlu0 %6507
        %6511 = vset.pattern.permute.xlu0 0
        %6512 = vperm.xlu0 %6511, %v6074
        %v6513 = vpop.permute.xlu0 %6512
        %6516 = vset.pattern.permute.xlu0 0
        %6517 = vperm.xlu0 %6516, %v6089
        %v6518 = vpop.permute.xlu0 %6517
        %6521 = vset.pattern.permute.xlu0 0
        %6522 = vperm.xlu0 %6521, %v6090
        %v6523 = vpop.permute.xlu0 %6522
        %6526 = vset.pattern.permute.xlu0 0
        %6527 = vperm.xlu0 %6526, %v6105
        %v6528 = vpop.permute.xlu0 %6527
        %6531 = vset.pattern.permute.xlu0 0
        %6532 = vperm.xlu0 %6531, %v6106
        %v6533 = vpop.permute.xlu0 %6532
        %6536 = vset.pattern.permute.xlu0 0
        %6537 = vperm.xlu0 %6536, %v6121
        %v6538 = vpop.permute.xlu0 %6537
        %6541 = vset.pattern.permute.xlu0 0
        %6542 = vperm.xlu0 %6541, %v6122
        %v6543 = vpop.permute.xlu0 %6542
        %6546 = vset.pattern.permute.xlu0 0
        %6547 = vperm.xlu0 %6546, %v6137
        %v6548 = vpop.permute.xlu0 %6547
        %6551 = vset.pattern.permute.xlu0 0
        %6552 = vperm.xlu0 %6551, %v6138
        %v6553 = vpop.permute.xlu0 %6552
        %6556 = vset.pattern.permute.xlu0 0
        %6557 = vperm.xlu0 %6556, %v6153
        %v6558 = vpop.permute.xlu0 %6557
        %6561 = vset.pattern.permute.xlu0 0
        %6562 = vperm.xlu0 %6561, %v6154
        %v6563 = vpop.permute.xlu0 %6562
        %6566 = vset.pattern.permute.xlu0 0
        %6567 = vperm.xlu0 %6566, %v6169
        %v6568 = vpop.permute.xlu0 %6567
        %6571 = vset.pattern.permute.xlu0 0
        %6572 = vperm.xlu0 %6571, %v6170
        %v6573 = vpop.permute.xlu0 %6572
        %6576 = vset.pattern.permute.xlu0 0
        %6577 = vperm.xlu0 %6576, %v6185
        %v6578 = vpop.permute.xlu0 %6577
        %6581 = vset.pattern.permute.xlu0 0
        %6582 = vperm.xlu0 %6581, %v6186
        %v6583 = vpop.permute.xlu0 %6582
        %6586 = vset.pattern.permute.xlu0 0
        %6587 = vperm.xlu0 %6586, %v6201
        %v6588 = vpop.permute.xlu0 %6587
        %6591 = vset.pattern.permute.xlu0 0
        %6592 = vperm.xlu0 %6591, %v6202
        %v6593 = vpop.permute.xlu0 %6592
        %6596 = vset.pattern.permute.xlu0 0
        %6597 = vperm.xlu0 %6596, %v6217
        %v6598 = vpop.permute.xlu0 %6597
        %6601 = vset.pattern.permute.xlu0 0
        %6602 = vperm.xlu0 %6601, %v6218
        %v6603 = vpop.permute.xlu0 %6602
        %6606 = vset.pattern.permute.xlu0 0
        %6607 = vperm.xlu0 %6606, %v6233
        %v6608 = vpop.permute.xlu0 %6607
        %6611 = vset.pattern.permute.xlu0 0
        %6612 = vperm.xlu0 %6611, %v6234
        %v6613 = vpop.permute.xlu0 %6612
        %6616 = vset.pattern.permute.xlu0 0
        %6617 = vperm.xlu0 %6616, %v6249
        %v6618 = vpop.permute.xlu0 %6617
        %6621 = vset.pattern.permute.xlu0 0
        %6622 = vperm.xlu0 %6621, %v6250
        %v6623 = vpop.permute.xlu0 %6622
        %6626 = vset.pattern.permute.xlu0 0
        %6627 = vperm.xlu0 %6626, %v6265
        %v6628 = vpop.permute.xlu0 %6627
        %6631 = vset.pattern.permute.xlu0 0
        %6632 = vperm.xlu0 %6631, %v6266
        %v6633 = vpop.permute.xlu0 %6632
        %6636 = vset.pattern.permute.xlu0 0
        %6637 = vperm.xlu0 %6636, %v6281
        %v6638 = vpop.permute.xlu0 %6637
        %6641 = vset.pattern.permute.xlu0 0
        %6642 = vperm.xlu0 %6641, %v6282
        %v6643 = vpop.permute.xlu0 %6642
        %6646 = vset.pattern.permute.xlu0 0
        %6647 = vperm.xlu0 %6646, %v6297
        %v6648 = vpop.permute.xlu0 %6647
        %6651 = vset.pattern.permute.xlu0 0
        %6652 = vperm.xlu0 %6651, %v6298
        %v6653 = vpop.permute.xlu0 %6652
        %6656 = vset.pattern.permute.xlu0 0
        %6657 = vperm.xlu0 %6656, %v6313
        %v6658 = vpop.permute.xlu0 %6657
        %6661 = vset.pattern.permute.xlu0 0
        %6662 = vperm.xlu0 %6661, %v6314
        %v6663 = vpop.permute.xlu0 %6662
        %6666 = vset.pattern.permute.xlu0 0
        %6667 = vperm.xlu0 %6666, %v6329
        %v6668 = vpop.permute.xlu0 %6667
        %6671 = vset.pattern.permute.xlu0 0
        %6672 = vperm.xlu0 %6671, %v6330
        %v6673 = vpop.permute.xlu0 %6672
        %6676 = vset.pattern.permute.xlu0 0
        %6677 = vperm.xlu0 %6676, %v6345
        %v6678 = vpop.permute.xlu0 %6677
        %6681 = vset.pattern.permute.xlu0 0
        %6682 = vperm.xlu0 %6681, %v6346
        %v6683 = vpop.permute.xlu0 %6682
        %6686 = vset.pattern.permute.xlu0 0
        %6687 = vperm.xlu0 %6686, %v6361
        %v6688 = vpop.permute.xlu0 %6687
        %6691 = vset.pattern.permute.xlu0 0
        %6692 = vperm.xlu0 %6691, %v6362
        %v6693 = vpop.permute.xlu0 %6692
        %6696 = vset.pattern.permute.xlu0 0
        %6697 = vperm.xlu0 %6696, %v6377
        %v6698 = vpop.permute.xlu0 %6697
        %6701 = vset.pattern.permute.xlu0 0
        %6702 = vperm.xlu0 %6701, %v6378
        %v6703 = vpop.permute.xlu0 %6702
        %6706 = vset.pattern.permute.xlu0 0
        %6707 = vperm.xlu0 %6706, %v6393
        %v6708 = vpop.permute.xlu0 %6707
        %6711 = vset.pattern.permute.xlu0 0
        %6712 = vperm.xlu0 %6711, %v6394
        %v6713 = vpop.permute.xlu0 %6712
        %v6715 = vmul.f32 %v6398, %v4193
        %v6716 = vmul.f32 %v6403, %v4194
        %v6717 = vmul.f32 %v6408, %v4195
        %v6718 = vmul.f32 %v6413, %v4196
        %v6719 = vmul.f32 %v6418, %v4197
        %v6720 = vmul.f32 %v6423, %v4198
        %v6721 = vmul.f32 %v6428, %v4199
        %v6722 = vmul.f32 %v6433, %v4200
        %v6723 = vmul.f32 %v6438, %v4201
        %v6724 = vmul.f32 %v6443, %v4202
        %v6725 = vmul.f32 %v6448, %v4203
        %v6726 = vmul.f32 %v6453, %v4204
        %v6727 = vmul.f32 %v6458, %v4205
        %v6728 = vmul.f32 %v6463, %v4206
        %v6729 = vmul.f32 %v6468, %v4207
        %v6730 = vmul.f32 %v6473, %v4208
        %v6731 = vmul.f32 %v6478, %v4209
        %v6732 = vmul.f32 %v6483, %v4210
        %v6733 = vmul.f32 %v6488, %v4211
        %v6734 = vmul.f32 %v6493, %v4212
        %v6735 = vmul.f32 %v6498, %v4213
        %v6736 = vmul.f32 %v6503, %v4214
        %v6737 = vmul.f32 %v6508, %v4215
        %v6738 = vmul.f32 %v6513, %v4216
        %v6739 = vmul.f32 %v6518, %v4217
        %v6740 = vmul.f32 %v6523, %v4218
        %v6741 = vmul.f32 %v6528, %v4219
        %v6742 = vmul.f32 %v6533, %v4220
        %v6743 = vmul.f32 %v6538, %v4221
        %v6744 = vmul.f32 %v6543, %v4222
        %v6745 = vmul.f32 %v6548, %v4223
        %v6746 = vmul.f32 %v6553, %v4224
        %v6747 = vmul.f32 %v6558, %v4225
        %v6748 = vmul.f32 %v6563, %v4226
        %v6749 = vmul.f32 %v6568, %v4227
        %v6750 = vmul.f32 %v6573, %v4228
        %v6751 = vmul.f32 %v6578, %v4229
        %v6752 = vmul.f32 %v6583, %v4230
        %v6753 = vmul.f32 %v6588, %v4231
        %v6754 = vmul.f32 %v6593, %v4232
        %v6755 = vmul.f32 %v6598, %v4233
        %v6756 = vmul.f32 %v6603, %v4234
        %v6757 = vmul.f32 %v6608, %v4235
        %v6758 = vmul.f32 %v6613, %v4236
        %v6759 = vmul.f32 %v6618, %v4237
        %v6760 = vmul.f32 %v6623, %v4238
        %v6761 = vmul.f32 %v6628, %v4239
        %v6762 = vmul.f32 %v6633, %v4240
        %v6763 = vmul.f32 %v6638, %v4241
        %v6764 = vmul.f32 %v6643, %v4242
        %v6765 = vmul.f32 %v6648, %v4243
        %v6766 = vmul.f32 %v6653, %v4244
        %v6767 = vmul.f32 %v6658, %v4245
        %v6768 = vmul.f32 %v6663, %v4246
        %v6769 = vmul.f32 %v6668, %v4247
        %v6770 = vmul.f32 %v6673, %v4248
        %v6771 = vmul.f32 %v6678, %v4249
        %v6772 = vmul.f32 %v6683, %v4250
        %v6773 = vmul.f32 %v6688, %v4251
        %v6774 = vmul.f32 %v6693, %v4252
        %v6775 = vmul.f32 %v6698, %v4253
        %v6776 = vmul.f32 %v6703, %v4254
        %v6777 = vmul.f32 %v6708, %v4255
        %v6778 = vmul.f32 %v6713, %v4256
        %v6779 = vsel %vm1079, %v6715, 0.0
        %v6780 = vsel %vm1079, %v6716, 0.0
        %v6781 = vadd.f32 %v6779, %v6780
        %v6782 = vrot.slane %v6781, 4
        %v6783 = vadd.f32 %v6781, %v6782
        %v6784 = vrot.slane %v6783, 2
        %v6785 = vadd.f32 %v6783, %v6784
        %v6786 = vrot.slane %v6785, 1
        %v6787 = vadd.f32 %v6785, %v6786
        %v6788 = vsel %vm1079, %v6717, 0.0
        %v6789 = vsel %vm1079, %v6718, 0.0
        %v6790 = vadd.f32 %v6788, %v6789
        %v6791 = vrot.slane %v6790, 4
        %v6792 = vadd.f32 %v6790, %v6791
        %v6793 = vrot.slane %v6792, 2
        %v6794 = vadd.f32 %v6792, %v6793
        %v6795 = vrot.slane %v6794, 1
        %v6796 = vadd.f32 %v6794, %v6795
        %v6797 = vsel %vm1079, %v6719, 0.0
        %v6798 = vsel %vm1079, %v6720, 0.0
        %v6799 = vadd.f32 %v6797, %v6798
        %v6800 = vrot.slane %v6799, 4
        %v6801 = vadd.f32 %v6799, %v6800
        %v6802 = vrot.slane %v6801, 2
        %v6803 = vadd.f32 %v6801, %v6802
        %v6804 = vrot.slane %v6803, 1
        %v6805 = vadd.f32 %v6803, %v6804
        %v6806 = vsel %vm1079, %v6721, 0.0
        %v6807 = vsel %vm1079, %v6722, 0.0
        %v6808 = vadd.f32 %v6806, %v6807
        %v6809 = vrot.slane %v6808, 4
        %v6810 = vadd.f32 %v6808, %v6809
        %v6811 = vrot.slane %v6810, 2
        %v6812 = vadd.f32 %v6810, %v6811
        %v6813 = vrot.slane %v6812, 1
        %v6814 = vadd.f32 %v6812, %v6813
        %v6815 = vsel %vm1079, %v6723, 0.0
        %v6816 = vsel %vm1079, %v6724, 0.0
        %v6817 = vadd.f32 %v6815, %v6816
        %v6818 = vrot.slane %v6817, 4
        %v6819 = vadd.f32 %v6817, %v6818
        %v6820 = vrot.slane %v6819, 2
        %v6821 = vadd.f32 %v6819, %v6820
        %v6822 = vrot.slane %v6821, 1
        %v6823 = vadd.f32 %v6821, %v6822
        %v6824 = vsel %vm1079, %v6725, 0.0
        %v6825 = vsel %vm1079, %v6726, 0.0
        %v6826 = vadd.f32 %v6824, %v6825
        %v6827 = vrot.slane %v6826, 4
        %v6828 = vadd.f32 %v6826, %v6827
        %v6829 = vrot.slane %v6828, 2
        %v6830 = vadd.f32 %v6828, %v6829
        %v6831 = vrot.slane %v6830, 1
        %v6832 = vadd.f32 %v6830, %v6831
        %v6833 = vsel %vm1079, %v6727, 0.0
        %v6834 = vsel %vm1079, %v6728, 0.0
        %v6835 = vadd.f32 %v6833, %v6834
        %v6836 = vrot.slane %v6835, 4
        %v6837 = vadd.f32 %v6835, %v6836
        %v6838 = vrot.slane %v6837, 2
        %v6839 = vadd.f32 %v6837, %v6838
        %v6840 = vrot.slane %v6839, 1
        %v6841 = vadd.f32 %v6839, %v6840
        %v6842 = vsel %vm1079, %v6729, 0.0
        %v6843 = vsel %vm1079, %v6730, 0.0
        %v6844 = vadd.f32 %v6842, %v6843
        %v6845 = vrot.slane %v6844, 4
        %v6846 = vadd.f32 %v6844, %v6845
        %v6847 = vrot.slane %v6846, 2
        %v6848 = vadd.f32 %v6846, %v6847
        %v6849 = vrot.slane %v6848, 1
        %v6850 = vadd.f32 %v6848, %v6849
        %v6851 = vsel %vm1079, %v6731, 0.0
        %v6852 = vsel %vm1079, %v6732, 0.0
        %v6853 = vadd.f32 %v6851, %v6852
        %v6854 = vrot.slane %v6853, 4
        %v6855 = vadd.f32 %v6853, %v6854
        %v6856 = vrot.slane %v6855, 2
        %v6857 = vadd.f32 %v6855, %v6856
        %v6858 = vrot.slane %v6857, 1
        %v6859 = vadd.f32 %v6857, %v6858
        %v6860 = vsel %vm1079, %v6733, 0.0
        %v6861 = vsel %vm1079, %v6734, 0.0
        %v6862 = vadd.f32 %v6860, %v6861
        %v6863 = vrot.slane %v6862, 4
        %v6864 = vadd.f32 %v6862, %v6863
        %v6865 = vrot.slane %v6864, 2
        %v6866 = vadd.f32 %v6864, %v6865
        %v6867 = vrot.slane %v6866, 1
        %v6868 = vadd.f32 %v6866, %v6867
        %v6869 = vsel %vm1079, %v6735, 0.0
        %v6870 = vsel %vm1079, %v6736, 0.0
        %v6871 = vadd.f32 %v6869, %v6870
        %v6872 = vrot.slane %v6871, 4
        %v6873 = vadd.f32 %v6871, %v6872
        %v6874 = vrot.slane %v6873, 2
        %v6875 = vadd.f32 %v6873, %v6874
        %v6876 = vrot.slane %v6875, 1
        %v6877 = vadd.f32 %v6875, %v6876
        %v6878 = vsel %vm1079, %v6737, 0.0
        %v6879 = vsel %vm1079, %v6738, 0.0
        %v6880 = vadd.f32 %v6878, %v6879
        %v6881 = vrot.slane %v6880, 4
        %v6882 = vadd.f32 %v6880, %v6881
        %v6883 = vrot.slane %v6882, 2
        %v6884 = vadd.f32 %v6882, %v6883
        %v6885 = vrot.slane %v6884, 1
        %v6886 = vadd.f32 %v6884, %v6885
        %v6887 = vsel %vm1079, %v6739, 0.0
        %v6888 = vsel %vm1079, %v6740, 0.0
        %v6889 = vadd.f32 %v6887, %v6888
        %v6890 = vrot.slane %v6889, 4
        %v6891 = vadd.f32 %v6889, %v6890
        %v6892 = vrot.slane %v6891, 2
        %v6893 = vadd.f32 %v6891, %v6892
        %v6894 = vrot.slane %v6893, 1
        %v6895 = vadd.f32 %v6893, %v6894
        %v6896 = vsel %vm1079, %v6741, 0.0
        %v6897 = vsel %vm1079, %v6742, 0.0
        %v6898 = vadd.f32 %v6896, %v6897
        %v6899 = vrot.slane %v6898, 4
        %v6900 = vadd.f32 %v6898, %v6899
        %v6901 = vrot.slane %v6900, 2
        %v6902 = vadd.f32 %v6900, %v6901
        %v6903 = vrot.slane %v6902, 1
        %v6904 = vadd.f32 %v6902, %v6903
        %v6905 = vsel %vm1079, %v6743, 0.0
        %v6906 = vsel %vm1079, %v6744, 0.0
        %v6907 = vadd.f32 %v6905, %v6906
        %v6908 = vrot.slane %v6907, 4
        %v6909 = vadd.f32 %v6907, %v6908
        %v6910 = vrot.slane %v6909, 2
        %v6911 = vadd.f32 %v6909, %v6910
        %v6912 = vrot.slane %v6911, 1
        %v6913 = vadd.f32 %v6911, %v6912
        %v6914 = vsel %vm1079, %v6745, 0.0
        %v6915 = vsel %vm1079, %v6746, 0.0
        %v6916 = vadd.f32 %v6914, %v6915
        %v6917 = vrot.slane %v6916, 4
        %v6918 = vadd.f32 %v6916, %v6917
        %v6919 = vrot.slane %v6918, 2
        %v6920 = vadd.f32 %v6918, %v6919
        %v6921 = vrot.slane %v6920, 1
        %v6922 = vadd.f32 %v6920, %v6921
        %v6923 = vsel %vm1079, %v6747, 0.0
        %v6924 = vsel %vm1079, %v6748, 0.0
        %v6925 = vadd.f32 %v6923, %v6924
        %v6926 = vrot.slane %v6925, 4
        %v6927 = vadd.f32 %v6925, %v6926
        %v6928 = vrot.slane %v6927, 2
        %v6929 = vadd.f32 %v6927, %v6928
        %v6930 = vrot.slane %v6929, 1
        %v6931 = vadd.f32 %v6929, %v6930
        %v6932 = vsel %vm1079, %v6749, 0.0
        %v6933 = vsel %vm1079, %v6750, 0.0
        %v6934 = vadd.f32 %v6932, %v6933
        %v6935 = vrot.slane %v6934, 4
        %v6936 = vadd.f32 %v6934, %v6935
        %v6937 = vrot.slane %v6936, 2
        %v6938 = vadd.f32 %v6936, %v6937
        %v6939 = vrot.slane %v6938, 1
        %v6940 = vadd.f32 %v6938, %v6939
        %v6941 = vsel %vm1079, %v6751, 0.0
        %v6942 = vsel %vm1079, %v6752, 0.0
        %v6943 = vadd.f32 %v6941, %v6942
        %v6944 = vrot.slane %v6943, 4
        %v6945 = vadd.f32 %v6943, %v6944
        %v6946 = vrot.slane %v6945, 2
        %v6947 = vadd.f32 %v6945, %v6946
        %v6948 = vrot.slane %v6947, 1
        %v6949 = vadd.f32 %v6947, %v6948
        %v6950 = vsel %vm1079, %v6753, 0.0
        %v6951 = vsel %vm1079, %v6754, 0.0
        %v6952 = vadd.f32 %v6950, %v6951
        %v6953 = vrot.slane %v6952, 4
        %v6954 = vadd.f32 %v6952, %v6953
        %v6955 = vrot.slane %v6954, 2
        %v6956 = vadd.f32 %v6954, %v6955
        %v6957 = vrot.slane %v6956, 1
        %v6958 = vadd.f32 %v6956, %v6957
        %v6959 = vsel %vm1079, %v6755, 0.0
        %v6960 = vsel %vm1079, %v6756, 0.0
        %v6961 = vadd.f32 %v6959, %v6960
        %v6962 = vrot.slane %v6961, 4
        %v6963 = vadd.f32 %v6961, %v6962
        %v6964 = vrot.slane %v6963, 2
        %v6965 = vadd.f32 %v6963, %v6964
        %v6966 = vrot.slane %v6965, 1
        %v6967 = vadd.f32 %v6965, %v6966
        %v6968 = vsel %vm1079, %v6757, 0.0
        %v6969 = vsel %vm1079, %v6758, 0.0
        %v6970 = vadd.f32 %v6968, %v6969
        %v6971 = vrot.slane %v6970, 4
        %v6972 = vadd.f32 %v6970, %v6971
        %v6973 = vrot.slane %v6972, 2
        %v6974 = vadd.f32 %v6972, %v6973
        %v6975 = vrot.slane %v6974, 1
        %v6976 = vadd.f32 %v6974, %v6975
        %v6977 = vsel %vm1079, %v6759, 0.0
        %v6978 = vsel %vm1079, %v6760, 0.0
        %v6979 = vadd.f32 %v6977, %v6978
        %v6980 = vrot.slane %v6979, 4
        %v6981 = vadd.f32 %v6979, %v6980
        %v6982 = vrot.slane %v6981, 2
        %v6983 = vadd.f32 %v6981, %v6982
        %v6984 = vrot.slane %v6983, 1
        %v6985 = vadd.f32 %v6983, %v6984
        %v6986 = vsel %vm1079, %v6761, 0.0
        %v6987 = vsel %vm1079, %v6762, 0.0
        %v6988 = vadd.f32 %v6986, %v6987
        %v6989 = vrot.slane %v6988, 4
        %v6990 = vadd.f32 %v6988, %v6989
        %v6991 = vrot.slane %v6990, 2
        %v6992 = vadd.f32 %v6990, %v6991
        %v6993 = vrot.slane %v6992, 1
        %v6994 = vadd.f32 %v6992, %v6993
        %v6995 = vsel %vm1079, %v6763, 0.0
        %v6996 = vsel %vm1079, %v6764, 0.0
        %v6997 = vadd.f32 %v6995, %v6996
        %v6998 = vrot.slane %v6997, 4
        %v6999 = vadd.f32 %v6997, %v6998
        %v7000 = vrot.slane %v6999, 2
        %v7001 = vadd.f32 %v6999, %v7000
        %v7002 = vrot.slane %v7001, 1
        %v7003 = vadd.f32 %v7001, %v7002
        %v7004 = vsel %vm1079, %v6765, 0.0
        %v7005 = vsel %vm1079, %v6766, 0.0
        %v7006 = vadd.f32 %v7004, %v7005
        %v7007 = vrot.slane %v7006, 4
        %v7008 = vadd.f32 %v7006, %v7007
        %v7009 = vrot.slane %v7008, 2
        %v7010 = vadd.f32 %v7008, %v7009
        %v7011 = vrot.slane %v7010, 1
        %v7012 = vadd.f32 %v7010, %v7011
        %v7013 = vsel %vm1079, %v6767, 0.0
        %v7014 = vsel %vm1079, %v6768, 0.0
        %v7015 = vadd.f32 %v7013, %v7014
        %v7016 = vrot.slane %v7015, 4
        %v7017 = vadd.f32 %v7015, %v7016
        %v7018 = vrot.slane %v7017, 2
        %v7019 = vadd.f32 %v7017, %v7018
        %v7020 = vrot.slane %v7019, 1
        %v7021 = vadd.f32 %v7019, %v7020
        %v7022 = vsel %vm1079, %v6769, 0.0
        %v7023 = vsel %vm1079, %v6770, 0.0
        %v7024 = vadd.f32 %v7022, %v7023
        %v7025 = vrot.slane %v7024, 4
        %v7026 = vadd.f32 %v7024, %v7025
        %v7027 = vrot.slane %v7026, 2
        %v7028 = vadd.f32 %v7026, %v7027
        %v7029 = vrot.slane %v7028, 1
        %v7030 = vadd.f32 %v7028, %v7029
        %v7031 = vsel %vm1079, %v6771, 0.0
        %v7032 = vsel %vm1079, %v6772, 0.0
        %v7033 = vadd.f32 %v7031, %v7032
        %v7034 = vrot.slane %v7033, 4
        %v7035 = vadd.f32 %v7033, %v7034
        %v7036 = vrot.slane %v7035, 2
        %v7037 = vadd.f32 %v7035, %v7036
        %v7038 = vrot.slane %v7037, 1
        %v7039 = vadd.f32 %v7037, %v7038
        %v7040 = vsel %vm1079, %v6773, 0.0
        %v7041 = vsel %vm1079, %v6774, 0.0
        %v7042 = vadd.f32 %v7040, %v7041
        %v7043 = vrot.slane %v7042, 4
        %v7044 = vadd.f32 %v7042, %v7043
        %v7045 = vrot.slane %v7044, 2
        %v7046 = vadd.f32 %v7044, %v7045
        %v7047 = vrot.slane %v7046, 1
        %v7048 = vadd.f32 %v7046, %v7047
        %v7049 = vsel %vm1079, %v6775, 0.0
        %v7050 = vsel %vm1079, %v6776, 0.0
        %v7051 = vadd.f32 %v7049, %v7050
        %v7052 = vrot.slane %v7051, 4
        %v7053 = vadd.f32 %v7051, %v7052
        %v7054 = vrot.slane %v7053, 2
        %v7055 = vadd.f32 %v7053, %v7054
        %v7056 = vrot.slane %v7055, 1
        %v7057 = vadd.f32 %v7055, %v7056
        %v7058 = vsel %vm1079, %v6777, 0.0
        %v7059 = vsel %vm1079, %v6778, 0.0
        %v7060 = vadd.f32 %v7058, %v7059
        %v7061 = vrot.slane %v7060, 4
        %v7062 = vadd.f32 %v7060, %v7061
        %v7063 = vrot.slane %v7062, 2
        %v7064 = vadd.f32 %v7062, %v7063
        %v7065 = vrot.slane %v7064, 1
        %v7066 = vadd.f32 %v7064, %v7065
        %7067 = vset.pattern.permute.xlu0 1
        %7068 = vperm.xlu0 %7067, %v5897
        %v7069 = vpop.permute.xlu0 %7068
        %7071 = vset.pattern.permute.xlu0 1
        %7072 = vperm.xlu0 %7071, %v5898
        %v7073 = vpop.permute.xlu0 %7072
        %7075 = vset.pattern.permute.xlu0 1
        %7076 = vperm.xlu0 %7075, %v5913
        %v7077 = vpop.permute.xlu0 %7076
        %7079 = vset.pattern.permute.xlu0 1
        %7080 = vperm.xlu0 %7079, %v5914
        %v7081 = vpop.permute.xlu0 %7080
        %7083 = vset.pattern.permute.xlu0 1
        %7084 = vperm.xlu0 %7083, %v5929
        %v7085 = vpop.permute.xlu0 %7084
        %7087 = vset.pattern.permute.xlu0 1
        %7088 = vperm.xlu0 %7087, %v5930
        %v7089 = vpop.permute.xlu0 %7088
        %7091 = vset.pattern.permute.xlu0 1
        %7092 = vperm.xlu0 %7091, %v5945
        %v7093 = vpop.permute.xlu0 %7092
        %7095 = vset.pattern.permute.xlu0 1
        %7096 = vperm.xlu0 %7095, %v5946
        %v7097 = vpop.permute.xlu0 %7096
        %7099 = vset.pattern.permute.xlu0 1
        %7100 = vperm.xlu0 %7099, %v5961
        %v7101 = vpop.permute.xlu0 %7100
        %7103 = vset.pattern.permute.xlu0 1
        %7104 = vperm.xlu0 %7103, %v5962
        %v7105 = vpop.permute.xlu0 %7104
        %7107 = vset.pattern.permute.xlu0 1
        %7108 = vperm.xlu0 %7107, %v5977
        %v7109 = vpop.permute.xlu0 %7108
        %7111 = vset.pattern.permute.xlu0 1
        %7112 = vperm.xlu0 %7111, %v5978
        %v7113 = vpop.permute.xlu0 %7112
        %7115 = vset.pattern.permute.xlu0 1
        %7116 = vperm.xlu0 %7115, %v5993
        %v7117 = vpop.permute.xlu0 %7116
        %7119 = vset.pattern.permute.xlu0 1
        %7120 = vperm.xlu0 %7119, %v5994
        %v7121 = vpop.permute.xlu0 %7120
        %7123 = vset.pattern.permute.xlu0 1
        %7124 = vperm.xlu0 %7123, %v6009
        %v7125 = vpop.permute.xlu0 %7124
        %7127 = vset.pattern.permute.xlu0 1
        %7128 = vperm.xlu0 %7127, %v6010
        %v7129 = vpop.permute.xlu0 %7128
        %7131 = vset.pattern.permute.xlu0 1
        %7132 = vperm.xlu0 %7131, %v6025
        %v7133 = vpop.permute.xlu0 %7132
        %7135 = vset.pattern.permute.xlu0 1
        %7136 = vperm.xlu0 %7135, %v6026
        %v7137 = vpop.permute.xlu0 %7136
        %7139 = vset.pattern.permute.xlu0 1
        %7140 = vperm.xlu0 %7139, %v6041
        %v7141 = vpop.permute.xlu0 %7140
        %7143 = vset.pattern.permute.xlu0 1
        %7144 = vperm.xlu0 %7143, %v6042
        %v7145 = vpop.permute.xlu0 %7144
        %7147 = vset.pattern.permute.xlu0 1
        %7148 = vperm.xlu0 %7147, %v6057
        %v7149 = vpop.permute.xlu0 %7148
        %7151 = vset.pattern.permute.xlu0 1
        %7152 = vperm.xlu0 %7151, %v6058
        %v7153 = vpop.permute.xlu0 %7152
        %7155 = vset.pattern.permute.xlu0 1
        %7156 = vperm.xlu0 %7155, %v6073
        %v7157 = vpop.permute.xlu0 %7156
        %7159 = vset.pattern.permute.xlu0 1
        %7160 = vperm.xlu0 %7159, %v6074
        %v7161 = vpop.permute.xlu0 %7160
        %7163 = vset.pattern.permute.xlu0 1
        %7164 = vperm.xlu0 %7163, %v6089
        %v7165 = vpop.permute.xlu0 %7164
        %7167 = vset.pattern.permute.xlu0 1
        %7168 = vperm.xlu0 %7167, %v6090
        %v7169 = vpop.permute.xlu0 %7168
        %7171 = vset.pattern.permute.xlu0 1
        %7172 = vperm.xlu0 %7171, %v6105
        %v7173 = vpop.permute.xlu0 %7172
        %7175 = vset.pattern.permute.xlu0 1
        %7176 = vperm.xlu0 %7175, %v6106
        %v7177 = vpop.permute.xlu0 %7176
        %7179 = vset.pattern.permute.xlu0 1
        %7180 = vperm.xlu0 %7179, %v6121
        %v7181 = vpop.permute.xlu0 %7180
        %7183 = vset.pattern.permute.xlu0 1
        %7184 = vperm.xlu0 %7183, %v6122
        %v7185 = vpop.permute.xlu0 %7184
        %7187 = vset.pattern.permute.xlu0 1
        %7188 = vperm.xlu0 %7187, %v6137
        %v7189 = vpop.permute.xlu0 %7188
        %7191 = vset.pattern.permute.xlu0 1
        %7192 = vperm.xlu0 %7191, %v6138
        %v7193 = vpop.permute.xlu0 %7192
        %7195 = vset.pattern.permute.xlu0 1
        %7196 = vperm.xlu0 %7195, %v6153
        %v7197 = vpop.permute.xlu0 %7196
        %7199 = vset.pattern.permute.xlu0 1
        %7200 = vperm.xlu0 %7199, %v6154
        %v7201 = vpop.permute.xlu0 %7200
        %7203 = vset.pattern.permute.xlu0 1
        %7204 = vperm.xlu0 %7203, %v6169
        %v7205 = vpop.permute.xlu0 %7204
        %7207 = vset.pattern.permute.xlu0 1
        %7208 = vperm.xlu0 %7207, %v6170
        %v7209 = vpop.permute.xlu0 %7208
        %7211 = vset.pattern.permute.xlu0 1
        %7212 = vperm.xlu0 %7211, %v6185
        %v7213 = vpop.permute.xlu0 %7212
        %7215 = vset.pattern.permute.xlu0 1
        %7216 = vperm.xlu0 %7215, %v6186
        %v7217 = vpop.permute.xlu0 %7216
        %7219 = vset.pattern.permute.xlu0 1
        %7220 = vperm.xlu0 %7219, %v6201
        %v7221 = vpop.permute.xlu0 %7220
        %7223 = vset.pattern.permute.xlu0 1
        %7224 = vperm.xlu0 %7223, %v6202
        %v7225 = vpop.permute.xlu0 %7224
        %7227 = vset.pattern.permute.xlu0 1
        %7228 = vperm.xlu0 %7227, %v6217
        %v7229 = vpop.permute.xlu0 %7228
        %7231 = vset.pattern.permute.xlu0 1
        %7232 = vperm.xlu0 %7231, %v6218
        %v7233 = vpop.permute.xlu0 %7232
        %7235 = vset.pattern.permute.xlu0 1
        %7236 = vperm.xlu0 %7235, %v6233
        %v7237 = vpop.permute.xlu0 %7236
        %7239 = vset.pattern.permute.xlu0 1
        %7240 = vperm.xlu0 %7239, %v6234
        %v7241 = vpop.permute.xlu0 %7240
        %7243 = vset.pattern.permute.xlu0 1
        %7244 = vperm.xlu0 %7243, %v6249
        %v7245 = vpop.permute.xlu0 %7244
        %7247 = vset.pattern.permute.xlu0 1
        %7248 = vperm.xlu0 %7247, %v6250
        %v7249 = vpop.permute.xlu0 %7248
        %7251 = vset.pattern.permute.xlu0 1
        %7252 = vperm.xlu0 %7251, %v6265
        %v7253 = vpop.permute.xlu0 %7252
        %7255 = vset.pattern.permute.xlu0 1
        %7256 = vperm.xlu0 %7255, %v6266
        %v7257 = vpop.permute.xlu0 %7256
        %7259 = vset.pattern.permute.xlu0 1
        %7260 = vperm.xlu0 %7259, %v6281
        %v7261 = vpop.permute.xlu0 %7260
        %7263 = vset.pattern.permute.xlu0 1
        %7264 = vperm.xlu0 %7263, %v6282
        %v7265 = vpop.permute.xlu0 %7264
        %7267 = vset.pattern.permute.xlu0 1
        %7268 = vperm.xlu0 %7267, %v6297
        %v7269 = vpop.permute.xlu0 %7268
        %7271 = vset.pattern.permute.xlu0 1
        %7272 = vperm.xlu0 %7271, %v6298
        %v7273 = vpop.permute.xlu0 %7272
        %7275 = vset.pattern.permute.xlu0 1
        %7276 = vperm.xlu0 %7275, %v6313
        %v7277 = vpop.permute.xlu0 %7276
        %7279 = vset.pattern.permute.xlu0 1
        %7280 = vperm.xlu0 %7279, %v6314
        %v7281 = vpop.permute.xlu0 %7280
        %7283 = vset.pattern.permute.xlu0 1
        %7284 = vperm.xlu0 %7283, %v6329
        %v7285 = vpop.permute.xlu0 %7284
        %7287 = vset.pattern.permute.xlu0 1
        %7288 = vperm.xlu0 %7287, %v6330
        %v7289 = vpop.permute.xlu0 %7288
        %7291 = vset.pattern.permute.xlu0 1
        %7292 = vperm.xlu0 %7291, %v6345
        %v7293 = vpop.permute.xlu0 %7292
        %7295 = vset.pattern.permute.xlu0 1
        %7296 = vperm.xlu0 %7295, %v6346
        %v7297 = vpop.permute.xlu0 %7296
        %7299 = vset.pattern.permute.xlu0 1
        %7300 = vperm.xlu0 %7299, %v6361
        %v7301 = vpop.permute.xlu0 %7300
        %7303 = vset.pattern.permute.xlu0 1
        %7304 = vperm.xlu0 %7303, %v6362
        %v7305 = vpop.permute.xlu0 %7304
        %7307 = vset.pattern.permute.xlu0 1
        %7308 = vperm.xlu0 %7307, %v6377
        %v7309 = vpop.permute.xlu0 %7308
        %7311 = vset.pattern.permute.xlu0 1
        %7312 = vperm.xlu0 %7311, %v6378
        %v7313 = vpop.permute.xlu0 %7312
        %7315 = vset.pattern.permute.xlu0 1
        %7316 = vperm.xlu0 %7315, %v6393
        %v7317 = vpop.permute.xlu0 %7316
        %7319 = vset.pattern.permute.xlu0 1
        %7320 = vperm.xlu0 %7319, %v6394
        %v7321 = vpop.permute.xlu0 %7320
        %v7323 = vmul.f32 %v7069, %v4193
        %v7324 = vmul.f32 %v7073, %v4194
        %v7325 = vmul.f32 %v7077, %v4195
        %v7326 = vmul.f32 %v7081, %v4196
        %v7327 = vmul.f32 %v7085, %v4197
        %v7328 = vmul.f32 %v7089, %v4198
        %v7329 = vmul.f32 %v7093, %v4199
        %v7330 = vmul.f32 %v7097, %v4200
        %v7331 = vmul.f32 %v7101, %v4201
        %v7332 = vmul.f32 %v7105, %v4202
        %v7333 = vmul.f32 %v7109, %v4203
        %v7334 = vmul.f32 %v7113, %v4204
        %v7335 = vmul.f32 %v7117, %v4205
        %v7336 = vmul.f32 %v7121, %v4206
        %v7337 = vmul.f32 %v7125, %v4207
        %v7338 = vmul.f32 %v7129, %v4208
        %v7339 = vmul.f32 %v7133, %v4209
        %v7340 = vmul.f32 %v7137, %v4210
        %v7341 = vmul.f32 %v7141, %v4211
        %v7342 = vmul.f32 %v7145, %v4212
        %v7343 = vmul.f32 %v7149, %v4213
        %v7344 = vmul.f32 %v7153, %v4214
        %v7345 = vmul.f32 %v7157, %v4215
        %v7346 = vmul.f32 %v7161, %v4216
        %v7347 = vmul.f32 %v7165, %v4217
        %v7348 = vmul.f32 %v7169, %v4218
        %v7349 = vmul.f32 %v7173, %v4219
        %v7350 = vmul.f32 %v7177, %v4220
        %v7351 = vmul.f32 %v7181, %v4221
        %v7352 = vmul.f32 %v7185, %v4222
        %v7353 = vmul.f32 %v7189, %v4223
        %v7354 = vmul.f32 %v7193, %v4224
        %v7355 = vmul.f32 %v7197, %v4225
        %v7356 = vmul.f32 %v7201, %v4226
        %v7357 = vmul.f32 %v7205, %v4227
        %v7358 = vmul.f32 %v7209, %v4228
        %v7359 = vmul.f32 %v7213, %v4229
        %v7360 = vmul.f32 %v7217, %v4230
        %v7361 = vmul.f32 %v7221, %v4231
        %v7362 = vmul.f32 %v7225, %v4232
        %v7363 = vmul.f32 %v7229, %v4233
        %v7364 = vmul.f32 %v7233, %v4234
        %v7365 = vmul.f32 %v7237, %v4235
        %v7366 = vmul.f32 %v7241, %v4236
        %v7367 = vmul.f32 %v7245, %v4237
        %v7368 = vmul.f32 %v7249, %v4238
        %v7369 = vmul.f32 %v7253, %v4239
        %v7370 = vmul.f32 %v7257, %v4240
        %v7371 = vmul.f32 %v7261, %v4241
        %v7372 = vmul.f32 %v7265, %v4242
        %v7373 = vmul.f32 %v7269, %v4243
        %v7374 = vmul.f32 %v7273, %v4244
        %v7375 = vmul.f32 %v7277, %v4245
        %v7376 = vmul.f32 %v7281, %v4246
        %v7377 = vmul.f32 %v7285, %v4247
        %v7378 = vmul.f32 %v7289, %v4248
        %v7379 = vmul.f32 %v7293, %v4249
        %v7380 = vmul.f32 %v7297, %v4250
        %v7381 = vmul.f32 %v7301, %v4251
        %v7382 = vmul.f32 %v7305, %v4252
        %v7383 = vmul.f32 %v7309, %v4253
        %v7384 = vmul.f32 %v7313, %v4254
        %v7385 = vmul.f32 %v7317, %v4255
        %v7386 = vmul.f32 %v7321, %v4256
        %vm7387 = vcmask 523520
        %v7388 = vsel %vm7387, %v7323, 0.0
        %v7389 = vsel %vm7387, %v7324, 0.0
        %v7390 = vadd.f32 %v7388, %v7389
        %v7391 = vrot.slane %v7390, 4
        %v7392 = vadd.f32 %v7390, %v7391
        %v7393 = vrot.slane %v7392, 2
        %v7394 = vadd.f32 %v7392, %v7393
        %v7395 = vrot.slane %v7394, 1
        %v7396 = vadd.f32 %v7394, %v7395
        %v7397 = vsel %vm7387, %v7325, 0.0
        %v7398 = vsel %vm7387, %v7326, 0.0
        %v7399 = vadd.f32 %v7397, %v7398
        %v7400 = vrot.slane %v7399, 4
        %v7401 = vadd.f32 %v7399, %v7400
        %v7402 = vrot.slane %v7401, 2
        %v7403 = vadd.f32 %v7401, %v7402
        %v7404 = vrot.slane %v7403, 1
        %v7405 = vadd.f32 %v7403, %v7404
        %v7406 = vsel %vm7387, %v7327, 0.0
        %v7407 = vsel %vm7387, %v7328, 0.0
        %v7408 = vadd.f32 %v7406, %v7407
        %v7409 = vrot.slane %v7408, 4
        %v7410 = vadd.f32 %v7408, %v7409
        %v7411 = vrot.slane %v7410, 2
        %v7412 = vadd.f32 %v7410, %v7411
        %v7413 = vrot.slane %v7412, 1
        %v7414 = vadd.f32 %v7412, %v7413
        %v7415 = vsel %vm7387, %v7329, 0.0
        %v7416 = vsel %vm7387, %v7330, 0.0
        %v7417 = vadd.f32 %v7415, %v7416
        %v7418 = vrot.slane %v7417, 4
        %v7419 = vadd.f32 %v7417, %v7418
        %v7420 = vrot.slane %v7419, 2
        %v7421 = vadd.f32 %v7419, %v7420
        %v7422 = vrot.slane %v7421, 1
        %v7423 = vadd.f32 %v7421, %v7422
        %v7424 = vsel %vm7387, %v7331, 0.0
        %v7425 = vsel %vm7387, %v7332, 0.0
        %v7426 = vadd.f32 %v7424, %v7425
        %v7427 = vrot.slane %v7426, 4
        %v7428 = vadd.f32 %v7426, %v7427
        %v7429 = vrot.slane %v7428, 2
        %v7430 = vadd.f32 %v7428, %v7429
        %v7431 = vrot.slane %v7430, 1
        %v7432 = vadd.f32 %v7430, %v7431
        %v7433 = vsel %vm7387, %v7333, 0.0
        %v7434 = vsel %vm7387, %v7334, 0.0
        %v7435 = vadd.f32 %v7433, %v7434
        %v7436 = vrot.slane %v7435, 4
        %v7437 = vadd.f32 %v7435, %v7436
        %v7438 = vrot.slane %v7437, 2
        %v7439 = vadd.f32 %v7437, %v7438
        %v7440 = vrot.slane %v7439, 1
        %v7441 = vadd.f32 %v7439, %v7440
        %v7442 = vsel %vm7387, %v7335, 0.0
        %v7443 = vsel %vm7387, %v7336, 0.0
        %v7444 = vadd.f32 %v7442, %v7443
        %v7445 = vrot.slane %v7444, 4
        %v7446 = vadd.f32 %v7444, %v7445
        %v7447 = vrot.slane %v7446, 2
        %v7448 = vadd.f32 %v7446, %v7447
        %v7449 = vrot.slane %v7448, 1
        %v7450 = vadd.f32 %v7448, %v7449
        %v7451 = vsel %vm7387, %v7337, 0.0
        %v7452 = vsel %vm7387, %v7338, 0.0
        %v7453 = vadd.f32 %v7451, %v7452
        %v7454 = vrot.slane %v7453, 4
        %v7455 = vadd.f32 %v7453, %v7454
        %v7456 = vrot.slane %v7455, 2
        %v7457 = vadd.f32 %v7455, %v7456
        %v7458 = vrot.slane %v7457, 1
        %v7459 = vadd.f32 %v7457, %v7458
        %v7460 = vsel %vm7387, %v7339, 0.0
        %v7461 = vsel %vm7387, %v7340, 0.0
        %v7462 = vadd.f32 %v7460, %v7461
        %v7463 = vrot.slane %v7462, 4
        %v7464 = vadd.f32 %v7462, %v7463
        %v7465 = vrot.slane %v7464, 2
        %v7466 = vadd.f32 %v7464, %v7465
        %v7467 = vrot.slane %v7466, 1
        %v7468 = vadd.f32 %v7466, %v7467
        %v7469 = vsel %vm7387, %v7341, 0.0
        %v7470 = vsel %vm7387, %v7342, 0.0
        %v7471 = vadd.f32 %v7469, %v7470
        %v7472 = vrot.slane %v7471, 4
        %v7473 = vadd.f32 %v7471, %v7472
        %v7474 = vrot.slane %v7473, 2
        %v7475 = vadd.f32 %v7473, %v7474
        %v7476 = vrot.slane %v7475, 1
        %v7477 = vadd.f32 %v7475, %v7476
        %v7478 = vsel %vm7387, %v7343, 0.0
        %v7479 = vsel %vm7387, %v7344, 0.0
        %v7480 = vadd.f32 %v7478, %v7479
        %v7481 = vrot.slane %v7480, 4
        %v7482 = vadd.f32 %v7480, %v7481
        %v7483 = vrot.slane %v7482, 2
        %v7484 = vadd.f32 %v7482, %v7483
        %v7485 = vrot.slane %v7484, 1
        %v7486 = vadd.f32 %v7484, %v7485
        %v7487 = vsel %vm7387, %v7345, 0.0
        %v7488 = vsel %vm7387, %v7346, 0.0
        %v7489 = vadd.f32 %v7487, %v7488
        %v7490 = vrot.slane %v7489, 4
        %v7491 = vadd.f32 %v7489, %v7490
        %v7492 = vrot.slane %v7491, 2
        %v7493 = vadd.f32 %v7491, %v7492
        %v7494 = vrot.slane %v7493, 1
        %v7495 = vadd.f32 %v7493, %v7494
        %v7496 = vsel %vm7387, %v7347, 0.0
        %v7497 = vsel %vm7387, %v7348, 0.0
        %v7498 = vadd.f32 %v7496, %v7497
        %v7499 = vrot.slane %v7498, 4
        %v7500 = vadd.f32 %v7498, %v7499
        %v7501 = vrot.slane %v7500, 2
        %v7502 = vadd.f32 %v7500, %v7501
        %v7503 = vrot.slane %v7502, 1
        %v7504 = vadd.f32 %v7502, %v7503
        %v7505 = vsel %vm7387, %v7349, 0.0
        %v7506 = vsel %vm7387, %v7350, 0.0
        %v7507 = vadd.f32 %v7505, %v7506
        %v7508 = vrot.slane %v7507, 4
        %v7509 = vadd.f32 %v7507, %v7508
        %v7510 = vrot.slane %v7509, 2
        %v7511 = vadd.f32 %v7509, %v7510
        %v7512 = vrot.slane %v7511, 1
        %v7513 = vadd.f32 %v7511, %v7512
        %v7514 = vsel %vm7387, %v7351, 0.0
        %v7515 = vsel %vm7387, %v7352, 0.0
        %v7516 = vadd.f32 %v7514, %v7515
        %v7517 = vrot.slane %v7516, 4
        %v7518 = vadd.f32 %v7516, %v7517
        %v7519 = vrot.slane %v7518, 2
        %v7520 = vadd.f32 %v7518, %v7519
        %v7521 = vrot.slane %v7520, 1
        %v7522 = vadd.f32 %v7520, %v7521
        %v7523 = vsel %vm7387, %v7353, 0.0
        %v7524 = vsel %vm7387, %v7354, 0.0
        %v7525 = vadd.f32 %v7523, %v7524
        %v7526 = vrot.slane %v7525, 4
        %v7527 = vadd.f32 %v7525, %v7526
        %v7528 = vrot.slane %v7527, 2
        %v7529 = vadd.f32 %v7527, %v7528
        %v7530 = vrot.slane %v7529, 1
        %v7531 = vadd.f32 %v7529, %v7530
        %v7532 = vsel %vm7387, %v7355, 0.0
        %v7533 = vsel %vm7387, %v7356, 0.0
        %v7534 = vadd.f32 %v7532, %v7533
        %v7535 = vrot.slane %v7534, 4
        %v7536 = vadd.f32 %v7534, %v7535
        %v7537 = vrot.slane %v7536, 2
        %v7538 = vadd.f32 %v7536, %v7537
        %v7539 = vrot.slane %v7538, 1
        %v7540 = vadd.f32 %v7538, %v7539
        %v7541 = vsel %vm7387, %v7357, 0.0
        %v7542 = vsel %vm7387, %v7358, 0.0
        %v7543 = vadd.f32 %v7541, %v7542
        %v7544 = vrot.slane %v7543, 4
        %v7545 = vadd.f32 %v7543, %v7544
        %v7546 = vrot.slane %v7545, 2
        %v7547 = vadd.f32 %v7545, %v7546
        %v7548 = vrot.slane %v7547, 1
        %v7549 = vadd.f32 %v7547, %v7548
        %v7550 = vsel %vm7387, %v7359, 0.0
        %v7551 = vsel %vm7387, %v7360, 0.0
        %v7552 = vadd.f32 %v7550, %v7551
        %v7553 = vrot.slane %v7552, 4
        %v7554 = vadd.f32 %v7552, %v7553
        %v7555 = vrot.slane %v7554, 2
        %v7556 = vadd.f32 %v7554, %v7555
        %v7557 = vrot.slane %v7556, 1
        %v7558 = vadd.f32 %v7556, %v7557
        %v7559 = vsel %vm7387, %v7361, 0.0
        %v7560 = vsel %vm7387, %v7362, 0.0
        %v7561 = vadd.f32 %v7559, %v7560
        %v7562 = vrot.slane %v7561, 4
        %v7563 = vadd.f32 %v7561, %v7562
        %v7564 = vrot.slane %v7563, 2
        %v7565 = vadd.f32 %v7563, %v7564
        %v7566 = vrot.slane %v7565, 1
        %v7567 = vadd.f32 %v7565, %v7566
        %v7568 = vsel %vm7387, %v7363, 0.0
        %v7569 = vsel %vm7387, %v7364, 0.0
        %v7570 = vadd.f32 %v7568, %v7569
        %v7571 = vrot.slane %v7570, 4
        %v7572 = vadd.f32 %v7570, %v7571
        %v7573 = vrot.slane %v7572, 2
        %v7574 = vadd.f32 %v7572, %v7573
        %v7575 = vrot.slane %v7574, 1
        %v7576 = vadd.f32 %v7574, %v7575
        %v7577 = vsel %vm7387, %v7365, 0.0
        %v7578 = vsel %vm7387, %v7366, 0.0
        %v7579 = vadd.f32 %v7577, %v7578
        %v7580 = vrot.slane %v7579, 4
        %v7581 = vadd.f32 %v7579, %v7580
        %v7582 = vrot.slane %v7581, 2
        %v7583 = vadd.f32 %v7581, %v7582
        %v7584 = vrot.slane %v7583, 1
        %v7585 = vadd.f32 %v7583, %v7584
        %v7586 = vsel %vm7387, %v7367, 0.0
        %v7587 = vsel %vm7387, %v7368, 0.0
        %v7588 = vadd.f32 %v7586, %v7587
        %v7589 = vrot.slane %v7588, 4
        %v7590 = vadd.f32 %v7588, %v7589
        %v7591 = vrot.slane %v7590, 2
        %v7592 = vadd.f32 %v7590, %v7591
        %v7593 = vrot.slane %v7592, 1
        %v7594 = vadd.f32 %v7592, %v7593
        %v7595 = vsel %vm7387, %v7369, 0.0
        %v7596 = vsel %vm7387, %v7370, 0.0
        %v7597 = vadd.f32 %v7595, %v7596
        %v7598 = vrot.slane %v7597, 4
        %v7599 = vadd.f32 %v7597, %v7598
        %v7600 = vrot.slane %v7599, 2
        %v7601 = vadd.f32 %v7599, %v7600
        %v7602 = vrot.slane %v7601, 1
        %v7603 = vadd.f32 %v7601, %v7602
        %v7604 = vsel %vm7387, %v7371, 0.0
        %v7605 = vsel %vm7387, %v7372, 0.0
        %v7606 = vadd.f32 %v7604, %v7605
        %v7607 = vrot.slane %v7606, 4
        %v7608 = vadd.f32 %v7606, %v7607
        %v7609 = vrot.slane %v7608, 2
        %v7610 = vadd.f32 %v7608, %v7609
        %v7611 = vrot.slane %v7610, 1
        %v7612 = vadd.f32 %v7610, %v7611
        %v7613 = vsel %vm7387, %v7373, 0.0
        %v7614 = vsel %vm7387, %v7374, 0.0
        %v7615 = vadd.f32 %v7613, %v7614
        %v7616 = vrot.slane %v7615, 4
        %v7617 = vadd.f32 %v7615, %v7616
        %v7618 = vrot.slane %v7617, 2
        %v7619 = vadd.f32 %v7617, %v7618
        %v7620 = vrot.slane %v7619, 1
        %v7621 = vadd.f32 %v7619, %v7620
        %v7622 = vsel %vm7387, %v7375, 0.0
        %v7623 = vsel %vm7387, %v7376, 0.0
        %v7624 = vadd.f32 %v7622, %v7623
        %v7625 = vrot.slane %v7624, 4
        %v7626 = vadd.f32 %v7624, %v7625
        %v7627 = vrot.slane %v7626, 2
        %v7628 = vadd.f32 %v7626, %v7627
        %v7629 = vrot.slane %v7628, 1
        %v7630 = vadd.f32 %v7628, %v7629
        %v7631 = vsel %vm7387, %v7377, 0.0
        %v7632 = vsel %vm7387, %v7378, 0.0
        %v7633 = vadd.f32 %v7631, %v7632
        %v7634 = vrot.slane %v7633, 4
        %v7635 = vadd.f32 %v7633, %v7634
        %v7636 = vrot.slane %v7635, 2
        %v7637 = vadd.f32 %v7635, %v7636
        %v7638 = vrot.slane %v7637, 1
        %v7639 = vadd.f32 %v7637, %v7638
        %v7640 = vsel %vm7387, %v7379, 0.0
        %v7641 = vsel %vm7387, %v7380, 0.0
        %v7642 = vadd.f32 %v7640, %v7641
        %v7643 = vrot.slane %v7642, 4
        %v7644 = vadd.f32 %v7642, %v7643
        %v7645 = vrot.slane %v7644, 2
        %v7646 = vadd.f32 %v7644, %v7645
        %v7647 = vrot.slane %v7646, 1
        %v7648 = vadd.f32 %v7646, %v7647
        %v7649 = vsel %vm7387, %v7381, 0.0
        %v7650 = vsel %vm7387, %v7382, 0.0
        %v7651 = vadd.f32 %v7649, %v7650
        %v7652 = vrot.slane %v7651, 4
        %v7653 = vadd.f32 %v7651, %v7652
        %v7654 = vrot.slane %v7653, 2
        %v7655 = vadd.f32 %v7653, %v7654
        %v7656 = vrot.slane %v7655, 1
        %v7657 = vadd.f32 %v7655, %v7656
        %v7658 = vsel %vm7387, %v7383, 0.0
        %v7659 = vsel %vm7387, %v7384, 0.0
        %v7660 = vadd.f32 %v7658, %v7659
        %v7661 = vrot.slane %v7660, 4
        %v7662 = vadd.f32 %v7660, %v7661
        %v7663 = vrot.slane %v7662, 2
        %v7664 = vadd.f32 %v7662, %v7663
        %v7665 = vrot.slane %v7664, 1
        %v7666 = vadd.f32 %v7664, %v7665
        %v7667 = vsel %vm7387, %v7385, 0.0
        %v7668 = vsel %vm7387, %v7386, 0.0
        %v7669 = vadd.f32 %v7667, %v7668
        %v7670 = vrot.slane %v7669, 4
        %v7671 = vadd.f32 %v7669, %v7670
        %v7672 = vrot.slane %v7671, 2
        %v7673 = vadd.f32 %v7671, %v7672
        %v7674 = vrot.slane %v7673, 1
        %v7675 = vadd.f32 %v7673, %v7674
        %7676 = vset.pattern.permute.xlu0 2
        %7677 = vperm.xlu0 %7676, %v5897
        %v7678 = vpop.permute.xlu0 %7677
        %7680 = vset.pattern.permute.xlu0 2
        %7681 = vperm.xlu0 %7680, %v5898
        %v7682 = vpop.permute.xlu0 %7681
        %7684 = vset.pattern.permute.xlu0 2
        %7685 = vperm.xlu0 %7684, %v5913
        %v7686 = vpop.permute.xlu0 %7685
        %7688 = vset.pattern.permute.xlu0 2
        %7689 = vperm.xlu0 %7688, %v5914
        %v7690 = vpop.permute.xlu0 %7689
        %7692 = vset.pattern.permute.xlu0 2
        %7693 = vperm.xlu0 %7692, %v5929
        %v7694 = vpop.permute.xlu0 %7693
        %7696 = vset.pattern.permute.xlu0 2
        %7697 = vperm.xlu0 %7696, %v5930
        %v7698 = vpop.permute.xlu0 %7697
        %7700 = vset.pattern.permute.xlu0 2
        %7701 = vperm.xlu0 %7700, %v5945
        %v7702 = vpop.permute.xlu0 %7701
        %7704 = vset.pattern.permute.xlu0 2
        %7705 = vperm.xlu0 %7704, %v5946
        %v7706 = vpop.permute.xlu0 %7705
        %7708 = vset.pattern.permute.xlu0 2
        %7709 = vperm.xlu0 %7708, %v5961
        %v7710 = vpop.permute.xlu0 %7709
        %7712 = vset.pattern.permute.xlu0 2
        %7713 = vperm.xlu0 %7712, %v5962
        %v7714 = vpop.permute.xlu0 %7713
        %7716 = vset.pattern.permute.xlu0 2
        %7717 = vperm.xlu0 %7716, %v5977
        %v7718 = vpop.permute.xlu0 %7717
        %7720 = vset.pattern.permute.xlu0 2
        %7721 = vperm.xlu0 %7720, %v5978
        %v7722 = vpop.permute.xlu0 %7721
        %7724 = vset.pattern.permute.xlu0 2
        %7725 = vperm.xlu0 %7724, %v5993
        %v7726 = vpop.permute.xlu0 %7725
        %7728 = vset.pattern.permute.xlu0 2
        %7729 = vperm.xlu0 %7728, %v5994
        %v7730 = vpop.permute.xlu0 %7729
        %7732 = vset.pattern.permute.xlu0 2
        %7733 = vperm.xlu0 %7732, %v6009
        %v7734 = vpop.permute.xlu0 %7733
        %7736 = vset.pattern.permute.xlu0 2
        %7737 = vperm.xlu0 %7736, %v6010
        %v7738 = vpop.permute.xlu0 %7737
        %7740 = vset.pattern.permute.xlu0 2
        %7741 = vperm.xlu0 %7740, %v6025
        %v7742 = vpop.permute.xlu0 %7741
        %7744 = vset.pattern.permute.xlu0 2
        %7745 = vperm.xlu0 %7744, %v6026
        %v7746 = vpop.permute.xlu0 %7745
        %7748 = vset.pattern.permute.xlu0 2
        %7749 = vperm.xlu0 %7748, %v6041
        %v7750 = vpop.permute.xlu0 %7749
        %7752 = vset.pattern.permute.xlu0 2
        %7753 = vperm.xlu0 %7752, %v6042
        %v7754 = vpop.permute.xlu0 %7753
        %7756 = vset.pattern.permute.xlu0 2
        %7757 = vperm.xlu0 %7756, %v6057
        %v7758 = vpop.permute.xlu0 %7757
        %7760 = vset.pattern.permute.xlu0 2
        %7761 = vperm.xlu0 %7760, %v6058
        %v7762 = vpop.permute.xlu0 %7761
        %7764 = vset.pattern.permute.xlu0 2
        %7765 = vperm.xlu0 %7764, %v6073
        %v7766 = vpop.permute.xlu0 %7765
        %7768 = vset.pattern.permute.xlu0 2
        %7769 = vperm.xlu0 %7768, %v6074
        %v7770 = vpop.permute.xlu0 %7769
        %7772 = vset.pattern.permute.xlu0 2
        %7773 = vperm.xlu0 %7772, %v6089
        %v7774 = vpop.permute.xlu0 %7773
        %7776 = vset.pattern.permute.xlu0 2
        %7777 = vperm.xlu0 %7776, %v6090
        %v7778 = vpop.permute.xlu0 %7777
        %7780 = vset.pattern.permute.xlu0 2
        %7781 = vperm.xlu0 %7780, %v6105
        %v7782 = vpop.permute.xlu0 %7781
        %7784 = vset.pattern.permute.xlu0 2
        %7785 = vperm.xlu0 %7784, %v6106
        %v7786 = vpop.permute.xlu0 %7785
        %7788 = vset.pattern.permute.xlu0 2
        %7789 = vperm.xlu0 %7788, %v6121
        %v7790 = vpop.permute.xlu0 %7789
        %7792 = vset.pattern.permute.xlu0 2
        %7793 = vperm.xlu0 %7792, %v6122
        %v7794 = vpop.permute.xlu0 %7793
        %7796 = vset.pattern.permute.xlu0 2
        %7797 = vperm.xlu0 %7796, %v6137
        %v7798 = vpop.permute.xlu0 %7797
        %7800 = vset.pattern.permute.xlu0 2
        %7801 = vperm.xlu0 %7800, %v6138
        %v7802 = vpop.permute.xlu0 %7801
        %7804 = vset.pattern.permute.xlu0 2
        %7805 = vperm.xlu0 %7804, %v6153
        %v7806 = vpop.permute.xlu0 %7805
        %7808 = vset.pattern.permute.xlu0 2
        %7809 = vperm.xlu0 %7808, %v6154
        %v7810 = vpop.permute.xlu0 %7809
        %7812 = vset.pattern.permute.xlu0 2
        %7813 = vperm.xlu0 %7812, %v6169
        %v7814 = vpop.permute.xlu0 %7813
        %7816 = vset.pattern.permute.xlu0 2
        %7817 = vperm.xlu0 %7816, %v6170
        %v7818 = vpop.permute.xlu0 %7817
        %7820 = vset.pattern.permute.xlu0 2
        %7821 = vperm.xlu0 %7820, %v6185
        %v7822 = vpop.permute.xlu0 %7821
        %7824 = vset.pattern.permute.xlu0 2
        %7825 = vperm.xlu0 %7824, %v6186
        %v7826 = vpop.permute.xlu0 %7825
        %7828 = vset.pattern.permute.xlu0 2
        %7829 = vperm.xlu0 %7828, %v6201
        %v7830 = vpop.permute.xlu0 %7829
        %7832 = vset.pattern.permute.xlu0 2
        %7833 = vperm.xlu0 %7832, %v6202
        %v7834 = vpop.permute.xlu0 %7833
        %7836 = vset.pattern.permute.xlu0 2
        %7837 = vperm.xlu0 %7836, %v6217
        %v7838 = vpop.permute.xlu0 %7837
        %7840 = vset.pattern.permute.xlu0 2
        %7841 = vperm.xlu0 %7840, %v6218
        %v7842 = vpop.permute.xlu0 %7841
        %7844 = vset.pattern.permute.xlu0 2
        %7845 = vperm.xlu0 %7844, %v6233
        %v7846 = vpop.permute.xlu0 %7845
        %7848 = vset.pattern.permute.xlu0 2
        %7849 = vperm.xlu0 %7848, %v6234
        %v7850 = vpop.permute.xlu0 %7849
        %7852 = vset.pattern.permute.xlu0 2
        %7853 = vperm.xlu0 %7852, %v6249
        %v7854 = vpop.permute.xlu0 %7853
        %7856 = vset.pattern.permute.xlu0 2
        %7857 = vperm.xlu0 %7856, %v6250
        %v7858 = vpop.permute.xlu0 %7857
        %7860 = vset.pattern.permute.xlu0 2
        %7861 = vperm.xlu0 %7860, %v6265
        %v7862 = vpop.permute.xlu0 %7861
        %7864 = vset.pattern.permute.xlu0 2
        %7865 = vperm.xlu0 %7864, %v6266
        %v7866 = vpop.permute.xlu0 %7865
        %7868 = vset.pattern.permute.xlu0 2
        %7869 = vperm.xlu0 %7868, %v6281
        %v7870 = vpop.permute.xlu0 %7869
        %7872 = vset.pattern.permute.xlu0 2
        %7873 = vperm.xlu0 %7872, %v6282
        %v7874 = vpop.permute.xlu0 %7873
        %7876 = vset.pattern.permute.xlu0 2
        %7877 = vperm.xlu0 %7876, %v6297
        %v7878 = vpop.permute.xlu0 %7877
        %7880 = vset.pattern.permute.xlu0 2
        %7881 = vperm.xlu0 %7880, %v6298
        %v7882 = vpop.permute.xlu0 %7881
        %7884 = vset.pattern.permute.xlu0 2
        %7885 = vperm.xlu0 %7884, %v6313
        %v7886 = vpop.permute.xlu0 %7885
        %7888 = vset.pattern.permute.xlu0 2
        %7889 = vperm.xlu0 %7888, %v6314
        %v7890 = vpop.permute.xlu0 %7889
        %7892 = vset.pattern.permute.xlu0 2
        %7893 = vperm.xlu0 %7892, %v6329
        %v7894 = vpop.permute.xlu0 %7893
        %7896 = vset.pattern.permute.xlu0 2
        %7897 = vperm.xlu0 %7896, %v6330
        %v7898 = vpop.permute.xlu0 %7897
        %7900 = vset.pattern.permute.xlu0 2
        %7901 = vperm.xlu0 %7900, %v6345
        %v7902 = vpop.permute.xlu0 %7901
        %7904 = vset.pattern.permute.xlu0 2
        %7905 = vperm.xlu0 %7904, %v6346
        %v7906 = vpop.permute.xlu0 %7905
        %7908 = vset.pattern.permute.xlu0 2
        %7909 = vperm.xlu0 %7908, %v6361
        %v7910 = vpop.permute.xlu0 %7909
        %7912 = vset.pattern.permute.xlu0 2
        %7913 = vperm.xlu0 %7912, %v6362
        %v7914 = vpop.permute.xlu0 %7913
        %7916 = vset.pattern.permute.xlu0 2
        %7917 = vperm.xlu0 %7916, %v6377
        %v7918 = vpop.permute.xlu0 %7917
        %7920 = vset.pattern.permute.xlu0 2
        %7921 = vperm.xlu0 %7920, %v6378
        %v7922 = vpop.permute.xlu0 %7921
        %7924 = vset.pattern.permute.xlu0 2
        %7925 = vperm.xlu0 %7924, %v6393
        %v7926 = vpop.permute.xlu0 %7925
        %7928 = vset.pattern.permute.xlu0 2
        %7929 = vperm.xlu0 %7928, %v6394
        %v7930 = vpop.permute.xlu0 %7929
        %v7932 = vmul.f32 %v7678, %v4193
        %v7933 = vmul.f32 %v7682, %v4194
        %v7934 = vmul.f32 %v7686, %v4195
        %v7935 = vmul.f32 %v7690, %v4196
        %v7936 = vmul.f32 %v7694, %v4197
        %v7937 = vmul.f32 %v7698, %v4198
        %v7938 = vmul.f32 %v7702, %v4199
        %v7939 = vmul.f32 %v7706, %v4200
        %v7940 = vmul.f32 %v7710, %v4201
        %v7941 = vmul.f32 %v7714, %v4202
        %v7942 = vmul.f32 %v7718, %v4203
        %v7943 = vmul.f32 %v7722, %v4204
        %v7944 = vmul.f32 %v7726, %v4205
        %v7945 = vmul.f32 %v7730, %v4206
        %v7946 = vmul.f32 %v7734, %v4207
        %v7947 = vmul.f32 %v7738, %v4208
        %v7948 = vmul.f32 %v7742, %v4209
        %v7949 = vmul.f32 %v7746, %v4210
        %v7950 = vmul.f32 %v7750, %v4211
        %v7951 = vmul.f32 %v7754, %v4212
        %v7952 = vmul.f32 %v7758, %v4213
        %v7953 = vmul.f32 %v7762, %v4214
        %v7954 = vmul.f32 %v7766, %v4215
        %v7955 = vmul.f32 %v7770, %v4216
        %v7956 = vmul.f32 %v7774, %v4217
        %v7957 = vmul.f32 %v7778, %v4218
        %v7958 = vmul.f32 %v7782, %v4219
        %v7959 = vmul.f32 %v7786, %v4220
        %v7960 = vmul.f32 %v7790, %v4221
        %v7961 = vmul.f32 %v7794, %v4222
        %v7962 = vmul.f32 %v7798, %v4223
        %v7963 = vmul.f32 %v7802, %v4224
        %v7964 = vmul.f32 %v7806, %v4225
        %v7965 = vmul.f32 %v7810, %v4226
        %v7966 = vmul.f32 %v7814, %v4227
        %v7967 = vmul.f32 %v7818, %v4228
        %v7968 = vmul.f32 %v7822, %v4229
        %v7969 = vmul.f32 %v7826, %v4230
        %v7970 = vmul.f32 %v7830, %v4231
        %v7971 = vmul.f32 %v7834, %v4232
        %v7972 = vmul.f32 %v7838, %v4233
        %v7973 = vmul.f32 %v7842, %v4234
        %v7974 = vmul.f32 %v7846, %v4235
        %v7975 = vmul.f32 %v7850, %v4236
        %v7976 = vmul.f32 %v7854, %v4237
        %v7977 = vmul.f32 %v7858, %v4238
        %v7978 = vmul.f32 %v7862, %v4239
        %v7979 = vmul.f32 %v7866, %v4240
        %v7980 = vmul.f32 %v7870, %v4241
        %v7981 = vmul.f32 %v7874, %v4242
        %v7982 = vmul.f32 %v7878, %v4243
        %v7983 = vmul.f32 %v7882, %v4244
        %v7984 = vmul.f32 %v7886, %v4245
        %v7985 = vmul.f32 %v7890, %v4246
        %v7986 = vmul.f32 %v7894, %v4247
        %v7987 = vmul.f32 %v7898, %v4248
        %v7988 = vmul.f32 %v7902, %v4249
        %v7989 = vmul.f32 %v7906, %v4250
        %v7990 = vmul.f32 %v7910, %v4251
        %v7991 = vmul.f32 %v7914, %v4252
        %v7992 = vmul.f32 %v7918, %v4253
        %v7993 = vmul.f32 %v7922, %v4254
        %v7994 = vmul.f32 %v7926, %v4255
        %v7995 = vmul.f32 %v7930, %v4256
        %vm7996 = vcmask 785920
        %v7997 = vsel %vm7996, %v7932, 0.0
        %v7998 = vsel %vm7996, %v7933, 0.0
        %v7999 = vadd.f32 %v7997, %v7998
        %v8000 = vrot.slane %v7999, 4
        %v8001 = vadd.f32 %v7999, %v8000
        %v8002 = vrot.slane %v8001, 2
        %v8003 = vadd.f32 %v8001, %v8002
        %v8004 = vrot.slane %v8003, 1
        %v8005 = vadd.f32 %v8003, %v8004
        %v8006 = vsel %vm7996, %v7934, 0.0
        %v8007 = vsel %vm7996, %v7935, 0.0
        %v8008 = vadd.f32 %v8006, %v8007
        %v8009 = vrot.slane %v8008, 4
        %v8010 = vadd.f32 %v8008, %v8009
        %v8011 = vrot.slane %v8010, 2
        %v8012 = vadd.f32 %v8010, %v8011
        %v8013 = vrot.slane %v8012, 1
        %v8014 = vadd.f32 %v8012, %v8013
        %v8015 = vsel %vm7996, %v7936, 0.0
        %v8016 = vsel %vm7996, %v7937, 0.0
        %v8017 = vadd.f32 %v8015, %v8016
        %v8018 = vrot.slane %v8017, 4
        %v8019 = vadd.f32 %v8017, %v8018
        %v8020 = vrot.slane %v8019, 2
        %v8021 = vadd.f32 %v8019, %v8020
        %v8022 = vrot.slane %v8021, 1
        %v8023 = vadd.f32 %v8021, %v8022
        %v8024 = vsel %vm7996, %v7938, 0.0
        %v8025 = vsel %vm7996, %v7939, 0.0
        %v8026 = vadd.f32 %v8024, %v8025
        %v8027 = vrot.slane %v8026, 4
        %v8028 = vadd.f32 %v8026, %v8027
        %v8029 = vrot.slane %v8028, 2
        %v8030 = vadd.f32 %v8028, %v8029
        %v8031 = vrot.slane %v8030, 1
        %v8032 = vadd.f32 %v8030, %v8031
        %v8033 = vsel %vm7996, %v7940, 0.0
        %v8034 = vsel %vm7996, %v7941, 0.0
        %v8035 = vadd.f32 %v8033, %v8034
        %v8036 = vrot.slane %v8035, 4
        %v8037 = vadd.f32 %v8035, %v8036
        %v8038 = vrot.slane %v8037, 2
        %v8039 = vadd.f32 %v8037, %v8038
        %v8040 = vrot.slane %v8039, 1
        %v8041 = vadd.f32 %v8039, %v8040
        %v8042 = vsel %vm7996, %v7942, 0.0
        %v8043 = vsel %vm7996, %v7943, 0.0
        %v8044 = vadd.f32 %v8042, %v8043
        %v8045 = vrot.slane %v8044, 4
        %v8046 = vadd.f32 %v8044, %v8045
        %v8047 = vrot.slane %v8046, 2
        %v8048 = vadd.f32 %v8046, %v8047
        %v8049 = vrot.slane %v8048, 1
        %v8050 = vadd.f32 %v8048, %v8049
        %v8051 = vsel %vm7996, %v7944, 0.0
        %v8052 = vsel %vm7996, %v7945, 0.0
        %v8053 = vadd.f32 %v8051, %v8052
        %v8054 = vrot.slane %v8053, 4
        %v8055 = vadd.f32 %v8053, %v8054
        %v8056 = vrot.slane %v8055, 2
        %v8057 = vadd.f32 %v8055, %v8056
        %v8058 = vrot.slane %v8057, 1
        %v8059 = vadd.f32 %v8057, %v8058
        %v8060 = vsel %vm7996, %v7946, 0.0
        %v8061 = vsel %vm7996, %v7947, 0.0
        %v8062 = vadd.f32 %v8060, %v8061
        %v8063 = vrot.slane %v8062, 4
        %v8064 = vadd.f32 %v8062, %v8063
        %v8065 = vrot.slane %v8064, 2
        %v8066 = vadd.f32 %v8064, %v8065
        %v8067 = vrot.slane %v8066, 1
        %v8068 = vadd.f32 %v8066, %v8067
        %v8069 = vsel %vm7996, %v7948, 0.0
        %v8070 = vsel %vm7996, %v7949, 0.0
        %v8071 = vadd.f32 %v8069, %v8070
        %v8072 = vrot.slane %v8071, 4
        %v8073 = vadd.f32 %v8071, %v8072
        %v8074 = vrot.slane %v8073, 2
        %v8075 = vadd.f32 %v8073, %v8074
        %v8076 = vrot.slane %v8075, 1
        %v8077 = vadd.f32 %v8075, %v8076
        %v8078 = vsel %vm7996, %v7950, 0.0
        %v8079 = vsel %vm7996, %v7951, 0.0
        %v8080 = vadd.f32 %v8078, %v8079
        %v8081 = vrot.slane %v8080, 4
        %v8082 = vadd.f32 %v8080, %v8081
        %v8083 = vrot.slane %v8082, 2
        %v8084 = vadd.f32 %v8082, %v8083
        %v8085 = vrot.slane %v8084, 1
        %v8086 = vadd.f32 %v8084, %v8085
        %v8087 = vsel %vm7996, %v7952, 0.0
        %v8088 = vsel %vm7996, %v7953, 0.0
        %v8089 = vadd.f32 %v8087, %v8088
        %v8090 = vrot.slane %v8089, 4
        %v8091 = vadd.f32 %v8089, %v8090
        %v8092 = vrot.slane %v8091, 2
        %v8093 = vadd.f32 %v8091, %v8092
        %v8094 = vrot.slane %v8093, 1
        %v8095 = vadd.f32 %v8093, %v8094
        %v8096 = vsel %vm7996, %v7954, 0.0
        %v8097 = vsel %vm7996, %v7955, 0.0
        %v8098 = vadd.f32 %v8096, %v8097
        %v8099 = vrot.slane %v8098, 4
        %v8100 = vadd.f32 %v8098, %v8099
        %v8101 = vrot.slane %v8100, 2
        %v8102 = vadd.f32 %v8100, %v8101
        %v8103 = vrot.slane %v8102, 1
        %v8104 = vadd.f32 %v8102, %v8103
        %v8105 = vsel %vm7996, %v7956, 0.0
        %v8106 = vsel %vm7996, %v7957, 0.0
        %v8107 = vadd.f32 %v8105, %v8106
        %v8108 = vrot.slane %v8107, 4
        %v8109 = vadd.f32 %v8107, %v8108
        %v8110 = vrot.slane %v8109, 2
        %v8111 = vadd.f32 %v8109, %v8110
        %v8112 = vrot.slane %v8111, 1
        %v8113 = vadd.f32 %v8111, %v8112
        %v8114 = vsel %vm7996, %v7958, 0.0
        %v8115 = vsel %vm7996, %v7959, 0.0
        %v8116 = vadd.f32 %v8114, %v8115
        %v8117 = vrot.slane %v8116, 4
        %v8118 = vadd.f32 %v8116, %v8117
        %v8119 = vrot.slane %v8118, 2
        %v8120 = vadd.f32 %v8118, %v8119
        %v8121 = vrot.slane %v8120, 1
        %v8122 = vadd.f32 %v8120, %v8121
        %v8123 = vsel %vm7996, %v7960, 0.0
        %v8124 = vsel %vm7996, %v7961, 0.0
        %v8125 = vadd.f32 %v8123, %v8124
        %v8126 = vrot.slane %v8125, 4
        %v8127 = vadd.f32 %v8125, %v8126
        %v8128 = vrot.slane %v8127, 2
        %v8129 = vadd.f32 %v8127, %v8128
        %v8130 = vrot.slane %v8129, 1
        %v8131 = vadd.f32 %v8129, %v8130
        %v8132 = vsel %vm7996, %v7962, 0.0
        %v8133 = vsel %vm7996, %v7963, 0.0
        %v8134 = vadd.f32 %v8132, %v8133
        %v8135 = vrot.slane %v8134, 4
        %v8136 = vadd.f32 %v8134, %v8135
        %v8137 = vrot.slane %v8136, 2
        %v8138 = vadd.f32 %v8136, %v8137
        %v8139 = vrot.slane %v8138, 1
        %v8140 = vadd.f32 %v8138, %v8139
        %v8141 = vsel %vm7996, %v7964, 0.0
        %v8142 = vsel %vm7996, %v7965, 0.0
        %v8143 = vadd.f32 %v8141, %v8142
        %v8144 = vrot.slane %v8143, 4
        %v8145 = vadd.f32 %v8143, %v8144
        %v8146 = vrot.slane %v8145, 2
        %v8147 = vadd.f32 %v8145, %v8146
        %v8148 = vrot.slane %v8147, 1
        %v8149 = vadd.f32 %v8147, %v8148
        %v8150 = vsel %vm7996, %v7966, 0.0
        %v8151 = vsel %vm7996, %v7967, 0.0
        %v8152 = vadd.f32 %v8150, %v8151
        %v8153 = vrot.slane %v8152, 4
        %v8154 = vadd.f32 %v8152, %v8153
        %v8155 = vrot.slane %v8154, 2
        %v8156 = vadd.f32 %v8154, %v8155
        %v8157 = vrot.slane %v8156, 1
        %v8158 = vadd.f32 %v8156, %v8157
        %v8159 = vsel %vm7996, %v7968, 0.0
        %v8160 = vsel %vm7996, %v7969, 0.0
        %v8161 = vadd.f32 %v8159, %v8160
        %v8162 = vrot.slane %v8161, 4
        %v8163 = vadd.f32 %v8161, %v8162
        %v8164 = vrot.slane %v8163, 2
        %v8165 = vadd.f32 %v8163, %v8164
        %v8166 = vrot.slane %v8165, 1
        %v8167 = vadd.f32 %v8165, %v8166
        %v8168 = vsel %vm7996, %v7970, 0.0
        %v8169 = vsel %vm7996, %v7971, 0.0
        %v8170 = vadd.f32 %v8168, %v8169
        %v8171 = vrot.slane %v8170, 4
        %v8172 = vadd.f32 %v8170, %v8171
        %v8173 = vrot.slane %v8172, 2
        %v8174 = vadd.f32 %v8172, %v8173
        %v8175 = vrot.slane %v8174, 1
        %v8176 = vadd.f32 %v8174, %v8175
        %v8177 = vsel %vm7996, %v7972, 0.0
        %v8178 = vsel %vm7996, %v7973, 0.0
        %v8179 = vadd.f32 %v8177, %v8178
        %v8180 = vrot.slane %v8179, 4
        %v8181 = vadd.f32 %v8179, %v8180
        %v8182 = vrot.slane %v8181, 2
        %v8183 = vadd.f32 %v8181, %v8182
        %v8184 = vrot.slane %v8183, 1
        %v8185 = vadd.f32 %v8183, %v8184
        %v8186 = vsel %vm7996, %v7974, 0.0
        %v8187 = vsel %vm7996, %v7975, 0.0
        %v8188 = vadd.f32 %v8186, %v8187
        %v8189 = vrot.slane %v8188, 4
        %v8190 = vadd.f32 %v8188, %v8189
        %v8191 = vrot.slane %v8190, 2
        %v8192 = vadd.f32 %v8190, %v8191
        %v8193 = vrot.slane %v8192, 1
        %v8194 = vadd.f32 %v8192, %v8193
        %v8195 = vsel %vm7996, %v7976, 0.0
        %v8196 = vsel %vm7996, %v7977, 0.0
        %v8197 = vadd.f32 %v8195, %v8196
        %v8198 = vrot.slane %v8197, 4
        %v8199 = vadd.f32 %v8197, %v8198
        %v8200 = vrot.slane %v8199, 2
        %v8201 = vadd.f32 %v8199, %v8200
        %v8202 = vrot.slane %v8201, 1
        %v8203 = vadd.f32 %v8201, %v8202
        %v8204 = vsel %vm7996, %v7978, 0.0
        %v8205 = vsel %vm7996, %v7979, 0.0
        %v8206 = vadd.f32 %v8204, %v8205
        %v8207 = vrot.slane %v8206, 4
        %v8208 = vadd.f32 %v8206, %v8207
        %v8209 = vrot.slane %v8208, 2
        %v8210 = vadd.f32 %v8208, %v8209
        %v8211 = vrot.slane %v8210, 1
        %v8212 = vadd.f32 %v8210, %v8211
        %v8213 = vsel %vm7996, %v7980, 0.0
        %v8214 = vsel %vm7996, %v7981, 0.0
        %v8215 = vadd.f32 %v8213, %v8214
        %v8216 = vrot.slane %v8215, 4
        %v8217 = vadd.f32 %v8215, %v8216
        %v8218 = vrot.slane %v8217, 2
        %v8219 = vadd.f32 %v8217, %v8218
        %v8220 = vrot.slane %v8219, 1
        %v8221 = vadd.f32 %v8219, %v8220
        %v8222 = vsel %vm7996, %v7982, 0.0
        %v8223 = vsel %vm7996, %v7983, 0.0
        %v8224 = vadd.f32 %v8222, %v8223
        %v8225 = vrot.slane %v8224, 4
        %v8226 = vadd.f32 %v8224, %v8225
        %v8227 = vrot.slane %v8226, 2
        %v8228 = vadd.f32 %v8226, %v8227
        %v8229 = vrot.slane %v8228, 1
        %v8230 = vadd.f32 %v8228, %v8229
        %v8231 = vsel %vm7996, %v7984, 0.0
        %v8232 = vsel %vm7996, %v7985, 0.0
        %v8233 = vadd.f32 %v8231, %v8232
        %v8234 = vrot.slane %v8233, 4
        %v8235 = vadd.f32 %v8233, %v8234
        %v8236 = vrot.slane %v8235, 2
        %v8237 = vadd.f32 %v8235, %v8236
        %v8238 = vrot.slane %v8237, 1
        %v8239 = vadd.f32 %v8237, %v8238
        %v8240 = vsel %vm7996, %v7986, 0.0
        %v8241 = vsel %vm7996, %v7987, 0.0
        %v8242 = vadd.f32 %v8240, %v8241
        %v8243 = vrot.slane %v8242, 4
        %v8244 = vadd.f32 %v8242, %v8243
        %v8245 = vrot.slane %v8244, 2
        %v8246 = vadd.f32 %v8244, %v8245
        %v8247 = vrot.slane %v8246, 1
        %v8248 = vadd.f32 %v8246, %v8247
        %v8249 = vsel %vm7996, %v7988, 0.0
        %v8250 = vsel %vm7996, %v7989, 0.0
        %v8251 = vadd.f32 %v8249, %v8250
        %v8252 = vrot.slane %v8251, 4
        %v8253 = vadd.f32 %v8251, %v8252
        %v8254 = vrot.slane %v8253, 2
        %v8255 = vadd.f32 %v8253, %v8254
        %v8256 = vrot.slane %v8255, 1
        %v8257 = vadd.f32 %v8255, %v8256
        %v8258 = vsel %vm7996, %v7990, 0.0
        %v8259 = vsel %vm7996, %v7991, 0.0
        %v8260 = vadd.f32 %v8258, %v8259
        %v8261 = vrot.slane %v8260, 4
        %v8262 = vadd.f32 %v8260, %v8261
        %v8263 = vrot.slane %v8262, 2
        %v8264 = vadd.f32 %v8262, %v8263
        %v8265 = vrot.slane %v8264, 1
        %v8266 = vadd.f32 %v8264, %v8265
        %v8267 = vsel %vm7996, %v7992, 0.0
        %v8268 = vsel %vm7996, %v7993, 0.0
        %v8269 = vadd.f32 %v8267, %v8268
        %v8270 = vrot.slane %v8269, 4
        %v8271 = vadd.f32 %v8269, %v8270
        %v8272 = vrot.slane %v8271, 2
        %v8273 = vadd.f32 %v8271, %v8272
        %v8274 = vrot.slane %v8273, 1
        %v8275 = vadd.f32 %v8273, %v8274
        %v8276 = vsel %vm7996, %v7994, 0.0
        %v8277 = vsel %vm7996, %v7995, 0.0
        %v8278 = vadd.f32 %v8276, %v8277
        %v8279 = vrot.slane %v8278, 4
        %v8280 = vadd.f32 %v8278, %v8279
        %v8281 = vrot.slane %v8280, 2
        %v8282 = vadd.f32 %v8280, %v8281
        %v8283 = vrot.slane %v8282, 1
        %v8284 = vadd.f32 %v8282, %v8283
        %8285 = vset.pattern.permute.xlu0 3
        %8286 = vperm.xlu0 %8285, %v5897
        %v8287 = vpop.permute.xlu0 %8286
        %8289 = vset.pattern.permute.xlu0 3
        %8290 = vperm.xlu0 %8289, %v5898
        %v8291 = vpop.permute.xlu0 %8290
        %8293 = vset.pattern.permute.xlu0 3
        %8294 = vperm.xlu0 %8293, %v5913
        %v8295 = vpop.permute.xlu0 %8294
        %8297 = vset.pattern.permute.xlu0 3
        %8298 = vperm.xlu0 %8297, %v5914
        %v8299 = vpop.permute.xlu0 %8298
        %8301 = vset.pattern.permute.xlu0 3
        %8302 = vperm.xlu0 %8301, %v5929
        %v8303 = vpop.permute.xlu0 %8302
        %8305 = vset.pattern.permute.xlu0 3
        %8306 = vperm.xlu0 %8305, %v5930
        %v8307 = vpop.permute.xlu0 %8306
        %8309 = vset.pattern.permute.xlu0 3
        %8310 = vperm.xlu0 %8309, %v5945
        %v8311 = vpop.permute.xlu0 %8310
        %8313 = vset.pattern.permute.xlu0 3
        %8314 = vperm.xlu0 %8313, %v5946
        %v8315 = vpop.permute.xlu0 %8314
        %8317 = vset.pattern.permute.xlu0 3
        %8318 = vperm.xlu0 %8317, %v5961
        %v8319 = vpop.permute.xlu0 %8318
        %8321 = vset.pattern.permute.xlu0 3
        %8322 = vperm.xlu0 %8321, %v5962
        %v8323 = vpop.permute.xlu0 %8322
        %8325 = vset.pattern.permute.xlu0 3
        %8326 = vperm.xlu0 %8325, %v5977
        %v8327 = vpop.permute.xlu0 %8326
        %8329 = vset.pattern.permute.xlu0 3
        %8330 = vperm.xlu0 %8329, %v5978
        %v8331 = vpop.permute.xlu0 %8330
        %8333 = vset.pattern.permute.xlu0 3
        %8334 = vperm.xlu0 %8333, %v5993
        %v8335 = vpop.permute.xlu0 %8334
        %8337 = vset.pattern.permute.xlu0 3
        %8338 = vperm.xlu0 %8337, %v5994
        %v8339 = vpop.permute.xlu0 %8338
        %8341 = vset.pattern.permute.xlu0 3
        %8342 = vperm.xlu0 %8341, %v6009
        %v8343 = vpop.permute.xlu0 %8342
        %8345 = vset.pattern.permute.xlu0 3
        %8346 = vperm.xlu0 %8345, %v6010
        %v8347 = vpop.permute.xlu0 %8346
        %8349 = vset.pattern.permute.xlu0 3
        %8350 = vperm.xlu0 %8349, %v6025
        %v8351 = vpop.permute.xlu0 %8350
        %8353 = vset.pattern.permute.xlu0 3
        %8354 = vperm.xlu0 %8353, %v6026
        %v8355 = vpop.permute.xlu0 %8354
        %8357 = vset.pattern.permute.xlu0 3
        %8358 = vperm.xlu0 %8357, %v6041
        %v8359 = vpop.permute.xlu0 %8358
        %8361 = vset.pattern.permute.xlu0 3
        %8362 = vperm.xlu0 %8361, %v6042
        %v8363 = vpop.permute.xlu0 %8362
        %8365 = vset.pattern.permute.xlu0 3
        %8366 = vperm.xlu0 %8365, %v6057
        %v8367 = vpop.permute.xlu0 %8366
        %8369 = vset.pattern.permute.xlu0 3
        %8370 = vperm.xlu0 %8369, %v6058
        %v8371 = vpop.permute.xlu0 %8370
        %8373 = vset.pattern.permute.xlu0 3
        %8374 = vperm.xlu0 %8373, %v6073
        %v8375 = vpop.permute.xlu0 %8374
        %8377 = vset.pattern.permute.xlu0 3
        %8378 = vperm.xlu0 %8377, %v6074
        %v8379 = vpop.permute.xlu0 %8378
        %8381 = vset.pattern.permute.xlu0 3
        %8382 = vperm.xlu0 %8381, %v6089
        %v8383 = vpop.permute.xlu0 %8382
        %8385 = vset.pattern.permute.xlu0 3
        %8386 = vperm.xlu0 %8385, %v6090
        %v8387 = vpop.permute.xlu0 %8386
        %8389 = vset.pattern.permute.xlu0 3
        %8390 = vperm.xlu0 %8389, %v6105
        %v8391 = vpop.permute.xlu0 %8390
        %8393 = vset.pattern.permute.xlu0 3
        %8394 = vperm.xlu0 %8393, %v6106
        %v8395 = vpop.permute.xlu0 %8394
        %8397 = vset.pattern.permute.xlu0 3
        %8398 = vperm.xlu0 %8397, %v6121
        %v8399 = vpop.permute.xlu0 %8398
        %8401 = vset.pattern.permute.xlu0 3
        %8402 = vperm.xlu0 %8401, %v6122
        %v8403 = vpop.permute.xlu0 %8402
        %8405 = vset.pattern.permute.xlu0 3
        %8406 = vperm.xlu0 %8405, %v6137
        %v8407 = vpop.permute.xlu0 %8406
        %8409 = vset.pattern.permute.xlu0 3
        %8410 = vperm.xlu0 %8409, %v6138
        %v8411 = vpop.permute.xlu0 %8410
        %8413 = vset.pattern.permute.xlu0 3
        %8414 = vperm.xlu0 %8413, %v6153
        %v8415 = vpop.permute.xlu0 %8414
        %8417 = vset.pattern.permute.xlu0 3
        %8418 = vperm.xlu0 %8417, %v6154
        %v8419 = vpop.permute.xlu0 %8418
        %8421 = vset.pattern.permute.xlu0 3
        %8422 = vperm.xlu0 %8421, %v6169
        %v8423 = vpop.permute.xlu0 %8422
        %8425 = vset.pattern.permute.xlu0 3
        %8426 = vperm.xlu0 %8425, %v6170
        %v8427 = vpop.permute.xlu0 %8426
        %8429 = vset.pattern.permute.xlu0 3
        %8430 = vperm.xlu0 %8429, %v6185
        %v8431 = vpop.permute.xlu0 %8430
        %8433 = vset.pattern.permute.xlu0 3
        %8434 = vperm.xlu0 %8433, %v6186
        %v8435 = vpop.permute.xlu0 %8434
        %8437 = vset.pattern.permute.xlu0 3
        %8438 = vperm.xlu0 %8437, %v6201
        %v8439 = vpop.permute.xlu0 %8438
        %8441 = vset.pattern.permute.xlu0 3
        %8442 = vperm.xlu0 %8441, %v6202
        %v8443 = vpop.permute.xlu0 %8442
        %8445 = vset.pattern.permute.xlu0 3
        %8446 = vperm.xlu0 %8445, %v6217
        %v8447 = vpop.permute.xlu0 %8446
        %8449 = vset.pattern.permute.xlu0 3
        %8450 = vperm.xlu0 %8449, %v6218
        %v8451 = vpop.permute.xlu0 %8450
        %8453 = vset.pattern.permute.xlu0 3
        %8454 = vperm.xlu0 %8453, %v6233
        %v8455 = vpop.permute.xlu0 %8454
        %8457 = vset.pattern.permute.xlu0 3
        %8458 = vperm.xlu0 %8457, %v6234
        %v8459 = vpop.permute.xlu0 %8458
        %8461 = vset.pattern.permute.xlu0 3
        %8462 = vperm.xlu0 %8461, %v6249
        %v8463 = vpop.permute.xlu0 %8462
        %8465 = vset.pattern.permute.xlu0 3
        %8466 = vperm.xlu0 %8465, %v6250
        %v8467 = vpop.permute.xlu0 %8466
        %8469 = vset.pattern.permute.xlu0 3
        %8470 = vperm.xlu0 %8469, %v6265
        %v8471 = vpop.permute.xlu0 %8470
        %8473 = vset.pattern.permute.xlu0 3
        %8474 = vperm.xlu0 %8473, %v6266
        %v8475 = vpop.permute.xlu0 %8474
        %8477 = vset.pattern.permute.xlu0 3
        %8478 = vperm.xlu0 %8477, %v6281
        %v8479 = vpop.permute.xlu0 %8478
        %8481 = vset.pattern.permute.xlu0 3
        %8482 = vperm.xlu0 %8481, %v6282
        %v8483 = vpop.permute.xlu0 %8482
        %8485 = vset.pattern.permute.xlu0 3
        %8486 = vperm.xlu0 %8485, %v6297
        %v8487 = vpop.permute.xlu0 %8486
        %8489 = vset.pattern.permute.xlu0 3
        %8490 = vperm.xlu0 %8489, %v6298
        %v8491 = vpop.permute.xlu0 %8490
        %8493 = vset.pattern.permute.xlu0 3
        %8494 = vperm.xlu0 %8493, %v6313
        %v8495 = vpop.permute.xlu0 %8494
        %8497 = vset.pattern.permute.xlu0 3
        %8498 = vperm.xlu0 %8497, %v6314
        %v8499 = vpop.permute.xlu0 %8498
        %8501 = vset.pattern.permute.xlu0 3
        %8502 = vperm.xlu0 %8501, %v6329
        %v8503 = vpop.permute.xlu0 %8502
        %8505 = vset.pattern.permute.xlu0 3
        %8506 = vperm.xlu0 %8505, %v6330
        %v8507 = vpop.permute.xlu0 %8506
        %8509 = vset.pattern.permute.xlu0 3
        %8510 = vperm.xlu0 %8509, %v6345
        %v8511 = vpop.permute.xlu0 %8510
        %8513 = vset.pattern.permute.xlu0 3
        %8514 = vperm.xlu0 %8513, %v6346
        %v8515 = vpop.permute.xlu0 %8514
        %8517 = vset.pattern.permute.xlu0 3
        %8518 = vperm.xlu0 %8517, %v6361
        %v8519 = vpop.permute.xlu0 %8518
        %8521 = vset.pattern.permute.xlu0 3
        %8522 = vperm.xlu0 %8521, %v6362
        %v8523 = vpop.permute.xlu0 %8522
        %8525 = vset.pattern.permute.xlu0 3
        %8526 = vperm.xlu0 %8525, %v6377
        %v8527 = vpop.permute.xlu0 %8526
        %8529 = vset.pattern.permute.xlu0 3
        %8530 = vperm.xlu0 %8529, %v6378
        %v8531 = vpop.permute.xlu0 %8530
        %8533 = vset.pattern.permute.xlu0 3
        %8534 = vperm.xlu0 %8533, %v6393
        %v8535 = vpop.permute.xlu0 %8534
        %8537 = vset.pattern.permute.xlu0 3
        %8538 = vperm.xlu0 %8537, %v6394
        %v8539 = vpop.permute.xlu0 %8538
        %v8541 = vmul.f32 %v8287, %v4193
        %v8542 = vmul.f32 %v8291, %v4194
        %v8543 = vmul.f32 %v8295, %v4195
        %v8544 = vmul.f32 %v8299, %v4196
        %v8545 = vmul.f32 %v8303, %v4197
        %v8546 = vmul.f32 %v8307, %v4198
        %v8547 = vmul.f32 %v8311, %v4199
        %v8548 = vmul.f32 %v8315, %v4200
        %v8549 = vmul.f32 %v8319, %v4201
        %v8550 = vmul.f32 %v8323, %v4202
        %v8551 = vmul.f32 %v8327, %v4203
        %v8552 = vmul.f32 %v8331, %v4204
        %v8553 = vmul.f32 %v8335, %v4205
        %v8554 = vmul.f32 %v8339, %v4206
        %v8555 = vmul.f32 %v8343, %v4207
        %v8556 = vmul.f32 %v8347, %v4208
        %v8557 = vmul.f32 %v8351, %v4209
        %v8558 = vmul.f32 %v8355, %v4210
        %v8559 = vmul.f32 %v8359, %v4211
        %v8560 = vmul.f32 %v8363, %v4212
        %v8561 = vmul.f32 %v8367, %v4213
        %v8562 = vmul.f32 %v8371, %v4214
        %v8563 = vmul.f32 %v8375, %v4215
        %v8564 = vmul.f32 %v8379, %v4216
        %v8565 = vmul.f32 %v8383, %v4217
        %v8566 = vmul.f32 %v8387, %v4218
        %v8567 = vmul.f32 %v8391, %v4219
        %v8568 = vmul.f32 %v8395, %v4220
        %v8569 = vmul.f32 %v8399, %v4221
        %v8570 = vmul.f32 %v8403, %v4222
        %v8571 = vmul.f32 %v8407, %v4223
        %v8572 = vmul.f32 %v8411, %v4224
        %v8573 = vmul.f32 %v8415, %v4225
        %v8574 = vmul.f32 %v8419, %v4226
        %v8575 = vmul.f32 %v8423, %v4227
        %v8576 = vmul.f32 %v8427, %v4228
        %v8577 = vmul.f32 %v8431, %v4229
        %v8578 = vmul.f32 %v8435, %v4230
        %v8579 = vmul.f32 %v8439, %v4231
        %v8580 = vmul.f32 %v8443, %v4232
        %v8581 = vmul.f32 %v8447, %v4233
        %v8582 = vmul.f32 %v8451, %v4234
        %v8583 = vmul.f32 %v8455, %v4235
        %v8584 = vmul.f32 %v8459, %v4236
        %v8585 = vmul.f32 %v8463, %v4237
        %v8586 = vmul.f32 %v8467, %v4238
        %v8587 = vmul.f32 %v8471, %v4239
        %v8588 = vmul.f32 %v8475, %v4240
        %v8589 = vmul.f32 %v8479, %v4241
        %v8590 = vmul.f32 %v8483, %v4242
        %v8591 = vmul.f32 %v8487, %v4243
        %v8592 = vmul.f32 %v8491, %v4244
        %v8593 = vmul.f32 %v8495, %v4245
        %v8594 = vmul.f32 %v8499, %v4246
        %v8595 = vmul.f32 %v8503, %v4247
        %v8596 = vmul.f32 %v8507, %v4248
        %v8597 = vmul.f32 %v8511, %v4249
        %v8598 = vmul.f32 %v8515, %v4250
        %v8599 = vmul.f32 %v8519, %v4251
        %v8600 = vmul.f32 %v8523, %v4252
        %v8601 = vmul.f32 %v8527, %v4253
        %v8602 = vmul.f32 %v8531, %v4254
        %v8603 = vmul.f32 %v8535, %v4255
        %v8604 = vmul.f32 %v8539, %v4256
        %vm8605 = vcmask 1048320
        %v8606 = vsel %vm8605, %v8541, 0.0
        %v8607 = vsel %vm8605, %v8542, 0.0
        %v8608 = vadd.f32 %v8606, %v8607
        %v8609 = vrot.slane %v8608, 4
        %v8610 = vadd.f32 %v8608, %v8609
        %v8611 = vrot.slane %v8610, 2
        %v8612 = vadd.f32 %v8610, %v8611
        %v8613 = vrot.slane %v8612, 1
        %v8614 = vadd.f32 %v8612, %v8613
        %v8615 = vsel %vm8605, %v8543, 0.0
        %v8616 = vsel %vm8605, %v8544, 0.0
        %v8617 = vadd.f32 %v8615, %v8616
        %v8618 = vrot.slane %v8617, 4
        %v8619 = vadd.f32 %v8617, %v8618
        %v8620 = vrot.slane %v8619, 2
        %v8621 = vadd.f32 %v8619, %v8620
        %v8622 = vrot.slane %v8621, 1
        %v8623 = vadd.f32 %v8621, %v8622
        %v8624 = vsel %vm8605, %v8545, 0.0
        %v8625 = vsel %vm8605, %v8546, 0.0
        %v8626 = vadd.f32 %v8624, %v8625
        %v8627 = vrot.slane %v8626, 4
        %v8628 = vadd.f32 %v8626, %v8627
        %v8629 = vrot.slane %v8628, 2
        %v8630 = vadd.f32 %v8628, %v8629
        %v8631 = vrot.slane %v8630, 1
        %v8632 = vadd.f32 %v8630, %v8631
        %v8633 = vsel %vm8605, %v8547, 0.0
        %v8634 = vsel %vm8605, %v8548, 0.0
        %v8635 = vadd.f32 %v8633, %v8634
        %v8636 = vrot.slane %v8635, 4
        %v8637 = vadd.f32 %v8635, %v8636
        %v8638 = vrot.slane %v8637, 2
        %v8639 = vadd.f32 %v8637, %v8638
        %v8640 = vrot.slane %v8639, 1
        %v8641 = vadd.f32 %v8639, %v8640
        %v8642 = vsel %vm8605, %v8549, 0.0
        %v8643 = vsel %vm8605, %v8550, 0.0
        %v8644 = vadd.f32 %v8642, %v8643
        %v8645 = vrot.slane %v8644, 4
        %v8646 = vadd.f32 %v8644, %v8645
        %v8647 = vrot.slane %v8646, 2
        %v8648 = vadd.f32 %v8646, %v8647
        %v8649 = vrot.slane %v8648, 1
        %v8650 = vadd.f32 %v8648, %v8649
        %v8651 = vsel %vm8605, %v8551, 0.0
        %v8652 = vsel %vm8605, %v8552, 0.0
        %v8653 = vadd.f32 %v8651, %v8652
        %v8654 = vrot.slane %v8653, 4
        %v8655 = vadd.f32 %v8653, %v8654
        %v8656 = vrot.slane %v8655, 2
        %v8657 = vadd.f32 %v8655, %v8656
        %v8658 = vrot.slane %v8657, 1
        %v8659 = vadd.f32 %v8657, %v8658
        %v8660 = vsel %vm8605, %v8553, 0.0
        %v8661 = vsel %vm8605, %v8554, 0.0
        %v8662 = vadd.f32 %v8660, %v8661
        %v8663 = vrot.slane %v8662, 4
        %v8664 = vadd.f32 %v8662, %v8663
        %v8665 = vrot.slane %v8664, 2
        %v8666 = vadd.f32 %v8664, %v8665
        %v8667 = vrot.slane %v8666, 1
        %v8668 = vadd.f32 %v8666, %v8667
        %v8669 = vsel %vm8605, %v8555, 0.0
        %v8670 = vsel %vm8605, %v8556, 0.0
        %v8671 = vadd.f32 %v8669, %v8670
        %v8672 = vrot.slane %v8671, 4
        %v8673 = vadd.f32 %v8671, %v8672
        %v8674 = vrot.slane %v8673, 2
        %v8675 = vadd.f32 %v8673, %v8674
        %v8676 = vrot.slane %v8675, 1
        %v8677 = vadd.f32 %v8675, %v8676
        %v8678 = vsel %vm8605, %v8557, 0.0
        %v8679 = vsel %vm8605, %v8558, 0.0
        %v8680 = vadd.f32 %v8678, %v8679
        %v8681 = vrot.slane %v8680, 4
        %v8682 = vadd.f32 %v8680, %v8681
        %v8683 = vrot.slane %v8682, 2
        %v8684 = vadd.f32 %v8682, %v8683
        %v8685 = vrot.slane %v8684, 1
        %v8686 = vadd.f32 %v8684, %v8685
        %v8687 = vsel %vm8605, %v8559, 0.0
        %v8688 = vsel %vm8605, %v8560, 0.0
        %v8689 = vadd.f32 %v8687, %v8688
        %v8690 = vrot.slane %v8689, 4
        %v8691 = vadd.f32 %v8689, %v8690
        %v8692 = vrot.slane %v8691, 2
        %v8693 = vadd.f32 %v8691, %v8692
        %v8694 = vrot.slane %v8693, 1
        %v8695 = vadd.f32 %v8693, %v8694
        %v8696 = vsel %vm8605, %v8561, 0.0
        %v8697 = vsel %vm8605, %v8562, 0.0
        %v8698 = vadd.f32 %v8696, %v8697
        %v8699 = vrot.slane %v8698, 4
        %v8700 = vadd.f32 %v8698, %v8699
        %v8701 = vrot.slane %v8700, 2
        %v8702 = vadd.f32 %v8700, %v8701
        %v8703 = vrot.slane %v8702, 1
        %v8704 = vadd.f32 %v8702, %v8703
        %v8705 = vsel %vm8605, %v8563, 0.0
        %v8706 = vsel %vm8605, %v8564, 0.0
        %v8707 = vadd.f32 %v8705, %v8706
        %v8708 = vrot.slane %v8707, 4
        %v8709 = vadd.f32 %v8707, %v8708
        %v8710 = vrot.slane %v8709, 2
        %v8711 = vadd.f32 %v8709, %v8710
        %v8712 = vrot.slane %v8711, 1
        %v8713 = vadd.f32 %v8711, %v8712
        %v8714 = vsel %vm8605, %v8565, 0.0
        %v8715 = vsel %vm8605, %v8566, 0.0
        %v8716 = vadd.f32 %v8714, %v8715
        %v8717 = vrot.slane %v8716, 4
        %v8718 = vadd.f32 %v8716, %v8717
        %v8719 = vrot.slane %v8718, 2
        %v8720 = vadd.f32 %v8718, %v8719
        %v8721 = vrot.slane %v8720, 1
        %v8722 = vadd.f32 %v8720, %v8721
        %v8723 = vsel %vm8605, %v8567, 0.0
        %v8724 = vsel %vm8605, %v8568, 0.0
        %v8725 = vadd.f32 %v8723, %v8724
        %v8726 = vrot.slane %v8725, 4
        %v8727 = vadd.f32 %v8725, %v8726
        %v8728 = vrot.slane %v8727, 2
        %v8729 = vadd.f32 %v8727, %v8728
        %v8730 = vrot.slane %v8729, 1
        %v8731 = vadd.f32 %v8729, %v8730
        %v8732 = vsel %vm8605, %v8569, 0.0
        %v8733 = vsel %vm8605, %v8570, 0.0
        %v8734 = vadd.f32 %v8732, %v8733
        %v8735 = vrot.slane %v8734, 4
        %v8736 = vadd.f32 %v8734, %v8735
        %v8737 = vrot.slane %v8736, 2
        %v8738 = vadd.f32 %v8736, %v8737
        %v8739 = vrot.slane %v8738, 1
        %v8740 = vadd.f32 %v8738, %v8739
        %v8741 = vsel %vm8605, %v8571, 0.0
        %v8742 = vsel %vm8605, %v8572, 0.0
        %v8743 = vadd.f32 %v8741, %v8742
        %v8744 = vrot.slane %v8743, 4
        %v8745 = vadd.f32 %v8743, %v8744
        %v8746 = vrot.slane %v8745, 2
        %v8747 = vadd.f32 %v8745, %v8746
        %v8748 = vrot.slane %v8747, 1
        %v8749 = vadd.f32 %v8747, %v8748
        %v8750 = vsel %vm8605, %v8573, 0.0
        %v8751 = vsel %vm8605, %v8574, 0.0
        %v8752 = vadd.f32 %v8750, %v8751
        %v8753 = vrot.slane %v8752, 4
        %v8754 = vadd.f32 %v8752, %v8753
        %v8755 = vrot.slane %v8754, 2
        %v8756 = vadd.f32 %v8754, %v8755
        %v8757 = vrot.slane %v8756, 1
        %v8758 = vadd.f32 %v8756, %v8757
        %v8759 = vsel %vm8605, %v8575, 0.0
        %v8760 = vsel %vm8605, %v8576, 0.0
        %v8761 = vadd.f32 %v8759, %v8760
        %v8762 = vrot.slane %v8761, 4
        %v8763 = vadd.f32 %v8761, %v8762
        %v8764 = vrot.slane %v8763, 2
        %v8765 = vadd.f32 %v8763, %v8764
        %v8766 = vrot.slane %v8765, 1
        %v8767 = vadd.f32 %v8765, %v8766
        %v8768 = vsel %vm8605, %v8577, 0.0
        %v8769 = vsel %vm8605, %v8578, 0.0
        %v8770 = vadd.f32 %v8768, %v8769
        %v8771 = vrot.slane %v8770, 4
        %v8772 = vadd.f32 %v8770, %v8771
        %v8773 = vrot.slane %v8772, 2
        %v8774 = vadd.f32 %v8772, %v8773
        %v8775 = vrot.slane %v8774, 1
        %v8776 = vadd.f32 %v8774, %v8775
        %v8777 = vsel %vm8605, %v8579, 0.0
        %v8778 = vsel %vm8605, %v8580, 0.0
        %v8779 = vadd.f32 %v8777, %v8778
        %v8780 = vrot.slane %v8779, 4
        %v8781 = vadd.f32 %v8779, %v8780
        %v8782 = vrot.slane %v8781, 2
        %v8783 = vadd.f32 %v8781, %v8782
        %v8784 = vrot.slane %v8783, 1
        %v8785 = vadd.f32 %v8783, %v8784
        %v8786 = vsel %vm8605, %v8581, 0.0
        %v8787 = vsel %vm8605, %v8582, 0.0
        %v8788 = vadd.f32 %v8786, %v8787
        %v8789 = vrot.slane %v8788, 4
        %v8790 = vadd.f32 %v8788, %v8789
        %v8791 = vrot.slane %v8790, 2
        %v8792 = vadd.f32 %v8790, %v8791
        %v8793 = vrot.slane %v8792, 1
        %v8794 = vadd.f32 %v8792, %v8793
        %v8795 = vsel %vm8605, %v8583, 0.0
        %v8796 = vsel %vm8605, %v8584, 0.0
        %v8797 = vadd.f32 %v8795, %v8796
        %v8798 = vrot.slane %v8797, 4
        %v8799 = vadd.f32 %v8797, %v8798
        %v8800 = vrot.slane %v8799, 2
        %v8801 = vadd.f32 %v8799, %v8800
        %v8802 = vrot.slane %v8801, 1
        %v8803 = vadd.f32 %v8801, %v8802
        %v8804 = vsel %vm8605, %v8585, 0.0
        %v8805 = vsel %vm8605, %v8586, 0.0
        %v8806 = vadd.f32 %v8804, %v8805
        %v8807 = vrot.slane %v8806, 4
        %v8808 = vadd.f32 %v8806, %v8807
        %v8809 = vrot.slane %v8808, 2
        %v8810 = vadd.f32 %v8808, %v8809
        %v8811 = vrot.slane %v8810, 1
        %v8812 = vadd.f32 %v8810, %v8811
        %v8813 = vsel %vm8605, %v8587, 0.0
        %v8814 = vsel %vm8605, %v8588, 0.0
        %v8815 = vadd.f32 %v8813, %v8814
        %v8816 = vrot.slane %v8815, 4
        %v8817 = vadd.f32 %v8815, %v8816
        %v8818 = vrot.slane %v8817, 2
        %v8819 = vadd.f32 %v8817, %v8818
        %v8820 = vrot.slane %v8819, 1
        %v8821 = vadd.f32 %v8819, %v8820
        %v8822 = vsel %vm8605, %v8589, 0.0
        %v8823 = vsel %vm8605, %v8590, 0.0
        %v8824 = vadd.f32 %v8822, %v8823
        %v8825 = vrot.slane %v8824, 4
        %v8826 = vadd.f32 %v8824, %v8825
        %v8827 = vrot.slane %v8826, 2
        %v8828 = vadd.f32 %v8826, %v8827
        %v8829 = vrot.slane %v8828, 1
        %v8830 = vadd.f32 %v8828, %v8829
        %v8831 = vsel %vm8605, %v8591, 0.0
        %v8832 = vsel %vm8605, %v8592, 0.0
        %v8833 = vadd.f32 %v8831, %v8832
        %v8834 = vrot.slane %v8833, 4
        %v8835 = vadd.f32 %v8833, %v8834
        %v8836 = vrot.slane %v8835, 2
        %v8837 = vadd.f32 %v8835, %v8836
        %v8838 = vrot.slane %v8837, 1
        %v8839 = vadd.f32 %v8837, %v8838
        %v8840 = vsel %vm8605, %v8593, 0.0
        %v8841 = vsel %vm8605, %v8594, 0.0
        %v8842 = vadd.f32 %v8840, %v8841
        %v8843 = vrot.slane %v8842, 4
        %v8844 = vadd.f32 %v8842, %v8843
        %v8845 = vrot.slane %v8844, 2
        %v8846 = vadd.f32 %v8844, %v8845
        %v8847 = vrot.slane %v8846, 1
        %v8848 = vadd.f32 %v8846, %v8847
        %v8849 = vsel %vm8605, %v8595, 0.0
        %v8850 = vsel %vm8605, %v8596, 0.0
        %v8851 = vadd.f32 %v8849, %v8850
        %v8852 = vrot.slane %v8851, 4
        %v8853 = vadd.f32 %v8851, %v8852
        %v8854 = vrot.slane %v8853, 2
        %v8855 = vadd.f32 %v8853, %v8854
        %v8856 = vrot.slane %v8855, 1
        %v8857 = vadd.f32 %v8855, %v8856
        %v8858 = vsel %vm8605, %v8597, 0.0
        %v8859 = vsel %vm8605, %v8598, 0.0
        %v8860 = vadd.f32 %v8858, %v8859
        %v8861 = vrot.slane %v8860, 4
        %v8862 = vadd.f32 %v8860, %v8861
        %v8863 = vrot.slane %v8862, 2
        %v8864 = vadd.f32 %v8862, %v8863
        %v8865 = vrot.slane %v8864, 1
        %v8866 = vadd.f32 %v8864, %v8865
        %v8867 = vsel %vm8605, %v8599, 0.0
        %v8868 = vsel %vm8605, %v8600, 0.0
        %v8869 = vadd.f32 %v8867, %v8868
        %v8870 = vrot.slane %v8869, 4
        %v8871 = vadd.f32 %v8869, %v8870
        %v8872 = vrot.slane %v8871, 2
        %v8873 = vadd.f32 %v8871, %v8872
        %v8874 = vrot.slane %v8873, 1
        %v8875 = vadd.f32 %v8873, %v8874
        %v8876 = vsel %vm8605, %v8601, 0.0
        %v8877 = vsel %vm8605, %v8602, 0.0
        %v8878 = vadd.f32 %v8876, %v8877
        %v8879 = vrot.slane %v8878, 4
        %v8880 = vadd.f32 %v8878, %v8879
        %v8881 = vrot.slane %v8880, 2
        %v8882 = vadd.f32 %v8880, %v8881
        %v8883 = vrot.slane %v8882, 1
        %v8884 = vadd.f32 %v8882, %v8883
        %v8885 = vsel %vm8605, %v8603, 0.0
        %v8886 = vsel %vm8605, %v8604, 0.0
        %v8887 = vadd.f32 %v8885, %v8886
        %v8888 = vrot.slane %v8887, 4
        %v8889 = vadd.f32 %v8887, %v8888
        %v8890 = vrot.slane %v8889, 2
        %v8891 = vadd.f32 %v8889, %v8890
        %v8892 = vrot.slane %v8891, 1
        %v8893 = vadd.f32 %v8891, %v8892
        %v8926 = vsel %vm3182, %v6796, %v6787
        %v8927 = vsel %vm3184, %v6805, %v8926
        %v8928 = vsel %vm3186, %v6814, %v8927
        %v8929 = vsel %vm3188, %v6823, %v8928
        %v8930 = vsel %vm3190, %v6832, %v8929
        %v8931 = vsel %vm3192, %v6841, %v8930
        %v8932 = vsel %vm3194, %v6850, %v8931
        %v8933 = vsel %vm3182, %v6868, %v6859
        %v8934 = vsel %vm3184, %v6877, %v8933
        %v8935 = vsel %vm3186, %v6886, %v8934
        %v8936 = vsel %vm3188, %v6895, %v8935
        %v8937 = vsel %vm3190, %v6904, %v8936
        %v8938 = vsel %vm3192, %v6913, %v8937
        %v8939 = vsel %vm3194, %v6922, %v8938
        %v8940 = vsel %vm3182, %v6940, %v6931
        %v8941 = vsel %vm3184, %v6949, %v8940
        %v8942 = vsel %vm3186, %v6958, %v8941
        %v8943 = vsel %vm3188, %v6967, %v8942
        %v8944 = vsel %vm3190, %v6976, %v8943
        %v8945 = vsel %vm3192, %v6985, %v8944
        %v8946 = vsel %vm3194, %v6994, %v8945
        %v8947 = vsel %vm3182, %v7012, %v7003
        %v8948 = vsel %vm3184, %v7021, %v8947
        %v8949 = vsel %vm3186, %v7030, %v8948
        %v8950 = vsel %vm3188, %v7039, %v8949
        %v8951 = vsel %vm3190, %v7048, %v8950
        %v8952 = vsel %vm3192, %v7057, %v8951
        %v8953 = vsel %vm3194, %v7066, %v8952
        %v8990 = vsel %vm3182, %v7405, %v7396
        %v8991 = vsel %vm3184, %v7414, %v8990
        %v8992 = vsel %vm3186, %v7423, %v8991
        %v8993 = vsel %vm3188, %v7432, %v8992
        %v8994 = vsel %vm3190, %v7441, %v8993
        %v8995 = vsel %vm3192, %v7450, %v8994
        %v8996 = vsel %vm3194, %v7459, %v8995
        %v8997 = vsel %vm3182, %v7477, %v7468
        %v8998 = vsel %vm3184, %v7486, %v8997
        %v8999 = vsel %vm3186, %v7495, %v8998
        %v9000 = vsel %vm3188, %v7504, %v8999
        %v9001 = vsel %vm3190, %v7513, %v9000
        %v9002 = vsel %vm3192, %v7522, %v9001
        %v9003 = vsel %vm3194, %v7531, %v9002
        %v9004 = vsel %vm3182, %v7549, %v7540
        %v9005 = vsel %vm3184, %v7558, %v9004
        %v9006 = vsel %vm3186, %v7567, %v9005
        %v9007 = vsel %vm3188, %v7576, %v9006
        %v9008 = vsel %vm3190, %v7585, %v9007
        %v9009 = vsel %vm3192, %v7594, %v9008
        %v9010 = vsel %vm3194, %v7603, %v9009
        %v9011 = vsel %vm3182, %v7621, %v7612
        %v9012 = vsel %vm3184, %v7630, %v9011
        %v9013 = vsel %vm3186, %v7639, %v9012
        %v9014 = vsel %vm3188, %v7648, %v9013
        %v9015 = vsel %vm3190, %v7657, %v9014
        %v9016 = vsel %vm3192, %v7666, %v9015
        %v9017 = vsel %vm3194, %v7675, %v9016
        %v9054 = vsel %vm3182, %v8014, %v8005
        %v9055 = vsel %vm3184, %v8023, %v9054
        %v9056 = vsel %vm3186, %v8032, %v9055
        %v9057 = vsel %vm3188, %v8041, %v9056
        %v9058 = vsel %vm3190, %v8050, %v9057
        %v9059 = vsel %vm3192, %v8059, %v9058
        %v9060 = vsel %vm3194, %v8068, %v9059
        %v9061 = vsel %vm3182, %v8086, %v8077
        %v9062 = vsel %vm3184, %v8095, %v9061
        %v9063 = vsel %vm3186, %v8104, %v9062
        %v9064 = vsel %vm3188, %v8113, %v9063
        %v9065 = vsel %vm3190, %v8122, %v9064
        %v9066 = vsel %vm3192, %v8131, %v9065
        %v9067 = vsel %vm3194, %v8140, %v9066
        %v9068 = vsel %vm3182, %v8158, %v8149
        %v9069 = vsel %vm3184, %v8167, %v9068
        %v9070 = vsel %vm3186, %v8176, %v9069
        %v9071 = vsel %vm3188, %v8185, %v9070
        %v9072 = vsel %vm3190, %v8194, %v9071
        %v9073 = vsel %vm3192, %v8203, %v9072
        %v9074 = vsel %vm3194, %v8212, %v9073
        %v9075 = vsel %vm3182, %v8230, %v8221
        %v9076 = vsel %vm3184, %v8239, %v9075
        %v9077 = vsel %vm3186, %v8248, %v9076
        %v9078 = vsel %vm3188, %v8257, %v9077
        %v9079 = vsel %vm3190, %v8266, %v9078
        %v9080 = vsel %vm3192, %v8275, %v9079
        %v9081 = vsel %vm3194, %v8284, %v9080
        %v9118 = vsel %vm3182, %v8623, %v8614
        %v9119 = vsel %vm3184, %v8632, %v9118
        %v9120 = vsel %vm3186, %v8641, %v9119
        %v9121 = vsel %vm3188, %v8650, %v9120
        %v9122 = vsel %vm3190, %v8659, %v9121
        %v9123 = vsel %vm3192, %v8668, %v9122
        %v9124 = vsel %vm3194, %v8677, %v9123
        %v9125 = vsel %vm3182, %v8695, %v8686
        %v9126 = vsel %vm3184, %v8704, %v9125
        %v9127 = vsel %vm3186, %v8713, %v9126
        %v9128 = vsel %vm3188, %v8722, %v9127
        %v9129 = vsel %vm3190, %v8731, %v9128
        %v9130 = vsel %vm3192, %v8740, %v9129
        %v9131 = vsel %vm3194, %v8749, %v9130
        %v9132 = vsel %vm3182, %v8767, %v8758
        %v9133 = vsel %vm3184, %v8776, %v9132
        %v9134 = vsel %vm3186, %v8785, %v9133
        %v9135 = vsel %vm3188, %v8794, %v9134
        %v9136 = vsel %vm3190, %v8803, %v9135
        %v9137 = vsel %vm3192, %v8812, %v9136
        %v9138 = vsel %vm3194, %v8821, %v9137
        %v9139 = vsel %vm3182, %v8839, %v8830
        %v9140 = vsel %vm3184, %v8848, %v9139
        %v9141 = vsel %vm3186, %v8857, %v9140
        %v9142 = vsel %vm3188, %v8866, %v9141
        %v9143 = vsel %vm3190, %v8875, %v9142
        %v9144 = vsel %vm3192, %v8884, %v9143
        %v9145 = vsel %vm3194, %v8893, %v9144
        %v9150 = vsel %vm1079, %v8932, %v8996
        %v9151 = vsel %vm1079, %v8939, %v9003
        %v9152 = vsel %vm1079, %v8946, %v9010
        %v9153 = vsel %vm1079, %v8953, %v9017
        %vm9154 = vcmask 523264
        %v9155 = vsel %vm9154, %v9150, %v9060
        %v9156 = vsel %vm9154, %v9151, %v9067
        %v9157 = vsel %vm9154, %v9152, %v9074
        %v9158 = vsel %vm9154, %v9153, %v9081
        %vm9159 = vcmask 785408
        %v9160 = vsel %vm9159, %v9155, %v9124
        %v9161 = vsel %vm9159, %v9156, %v9131
        %v9162 = vsel %vm9159, %v9157, %v9138
        %v9163 = vsel %vm9159, %v9158, %v9145
        %v9164 = vadd.f32 %v9160, %v822
        %v9165 = vadd.f32 %v9161, %v822
        %v9166 = vadd.f32 %v9162, %v822
        %v9167 = vadd.f32 %v9163, %v822
        %v9168 = vpack.c.bf16 %v9165, %v9164
        %v9169 = vpack.c.bf16 %v9167, %v9166
        %v9186 = vunpack.c.l.b16 %v708
        %v9187 = vunpack.c.h.b16 %v708
        %v9188 = vunpack.c.l.b16 %v710
        %v9189 = vunpack.c.h.b16 %v710
        %v9190 = vunpack.c.l.b16 %v712
        %v9191 = vunpack.c.h.b16 %v712
        %v9192 = vunpack.c.l.b16 %v714
        %v9193 = vunpack.c.h.b16 %v714
        %v9194 = vunpack.c.l.b16 %v716
        %v9195 = vunpack.c.h.b16 %v716
        %v9196 = vunpack.c.l.b16 %v718
        %v9197 = vunpack.c.h.b16 %v718
        %v9198 = vunpack.c.l.b16 %v720
        %v9199 = vunpack.c.h.b16 %v720
        %v9200 = vunpack.c.l.b16 %v722
        %v9201 = vunpack.c.h.b16 %v722
        %v9202 = vunpack.c.l.b16 %v724
        %v9203 = vunpack.c.h.b16 %v724
        %v9204 = vunpack.c.l.b16 %v726
        %v9205 = vunpack.c.h.b16 %v726
        %v9206 = vunpack.c.l.b16 %v728
        %v9207 = vunpack.c.h.b16 %v728
        %v9208 = vunpack.c.l.b16 %v730
        %v9209 = vunpack.c.h.b16 %v730
        %v9210 = vunpack.c.l.b16 %v732
        %v9211 = vunpack.c.h.b16 %v732
        %v9212 = vunpack.c.l.b16 %v734
        %v9213 = vunpack.c.h.b16 %v734
        %v9214 = vunpack.c.l.b16 %v736
        %v9215 = vunpack.c.h.b16 %v736
        %v9216 = vunpack.c.l.b16 %v738
        %v9217 = vunpack.c.h.b16 %v738
        %v9218 = vpack.c.b16 %v9188, %v9186
        %v9219 = vpack.c.b16 %v9189, %v9187
        %v9220 = vpack.c.b16 %v9192, %v9190
        %v9221 = vpack.c.b16 %v9193, %v9191
        %v9222 = vpack.c.b16 %v9196, %v9194
        %v9223 = vpack.c.b16 %v9197, %v9195
        %v9224 = vpack.c.b16 %v9200, %v9198
        %v9225 = vpack.c.b16 %v9201, %v9199
        %v9226 = vpack.c.b16 %v9204, %v9202
        %v9227 = vpack.c.b16 %v9205, %v9203
        %v9228 = vpack.c.b16 %v9208, %v9206
        %v9229 = vpack.c.b16 %v9209, %v9207
        %v9230 = vpack.c.b16 %v9212, %v9210
        %v9231 = vpack.c.b16 %v9213, %v9211
        %v9232 = vpack.c.b16 %v9216, %v9214
        %v9233 = vpack.c.b16 %v9217, %v9215
        %9250 = vmatpush.bf16.msra.mxu0 %v9232
        %9251 = vmatpush.bf16.msra.mxu0 %v9230
        %9252 = vmatpush.bf16.msra.mxu0 %v9228
        %9253 = vmatpush.bf16.msra.mxu0 %v9226
        %9254 = vmatpush.bf16.msra.mxu0 %v9224
        %9255 = vmatpush.bf16.msra.mxu0 %v9222
        %9256 = vmatpush.bf16.msra.mxu0 %v9220
        %9257 = vmatpush.bf16.msra.mxu0 %v9218
        %9258 = vmatmul.bf16.gmra.mxu0 %v9168
        %v9259 = vpop.f32.mrf.mxu0
        %v9260 = vadd.f32 0.0, %v9259
        %v9261 = vpop.f32.mrf.mxu0
        %v9262 = vadd.f32 0.0, %v9261
        %9263 = vmatmul.bf16.gmra.mxu0 %v9169
        %v9264 = vpop.f32.mrf.mxu0
        %v9265 = vadd.f32 0.0, %v9264
        %v9266 = vpop.f32.mrf.mxu0
        %v9267 = vadd.f32 0.0, %v9266
        %9268 = vdwg.mxu0
        %9269 = vmatpush.bf16.msra.mxu0 %v9233
        %9270 = vmatpush.bf16.msra.mxu0 %v9231
        %9271 = vmatpush.bf16.msra.mxu0 %v9229
        %9272 = vmatpush.bf16.msra.mxu0 %v9227
        %9273 = vmatpush.bf16.msra.mxu0 %v9225
        %9274 = vmatpush.bf16.msra.mxu0 %v9223
        %9275 = vmatpush.bf16.msra.mxu0 %v9221
        %9276 = vmatpush.bf16.msra.mxu0 %v9219
        %9277 = vmatmul.bf16.gmra.mxu0 %v9168
        %v9278 = vpop.f32.mrf.mxu0
        %v9279 = vadd.f32 0.0, %v9278
        %v9280 = vpop.f32.mrf.mxu0
        %v9281 = vadd.f32 0.0, %v9280
        %9282 = vmatmul.bf16.gmra.mxu0 %v9169
        %v9283 = vpop.f32.mrf.mxu0
        %v9284 = vadd.f32 0.0, %v9283
        %v9285 = vpop.f32.mrf.mxu0
        %v9286 = vadd.f32 0.0, %v9285
        %9287 = vdwg.mxu0
        %v9288 = vperm.slane %v820, 2
        %v9289 = vadd.f32 %v9260, %v9288
        %v9290 = vadd.f32 %v9262, %v9288
        %v9291 = vadd.f32 %v9265, %v9288
        %v9292 = vadd.f32 %v9267, %v9288
        %v9293 = vperm.slane %v820, 3
        %v9294 = vadd.f32 %v9279, %v9293
        %v9295 = vadd.f32 %v9281, %v9293
        %v9296 = vadd.f32 %v9284, %v9293
        %v9297 = vadd.f32 %v9286, %v9293
        %v9298 = vpack.c.bf16 %v9161, %v9160
        %v9299 = vpack.c.bf16 %v9163, %v9162
        %v9300 = vperm.slane %v820, 4
        %v9317 = vunpack.c.l.b16 %v709
        %v9318 = vunpack.c.l.b16 %v711
        %v9319 = vunpack.c.l.b16 %v713
        %v9320 = vunpack.c.l.b16 %v715
        %v9321 = vunpack.c.l.b16 %v717
        %v9322 = vunpack.c.l.b16 %v719
        %v9323 = vunpack.c.l.b16 %v721
        %v9324 = vunpack.c.l.b16 %v723
        %v9325 = vunpack.c.l.b16 %v725
        %v9326 = vunpack.c.l.b16 %v727
        %v9327 = vunpack.c.l.b16 %v729
        %v9328 = vunpack.c.l.b16 %v731
        %v9329 = vunpack.c.l.b16 %v733
        %v9330 = vunpack.c.l.b16 %v735
        %v9331 = vunpack.c.l.b16 %v737
        %v9332 = vunpack.c.l.b16 %v739
        %v9333 = vpack.c.b16 %v9318, %v9317
        %v9334 = vpack.c.b16 %v9320, %v9319
        %v9335 = vpack.c.b16 %v9322, %v9321
        %v9336 = vpack.c.b16 %v9324, %v9323
        %v9337 = vpack.c.b16 %v9326, %v9325
        %v9338 = vpack.c.b16 %v9328, %v9327
        %v9339 = vpack.c.b16 %v9330, %v9329
        %v9340 = vpack.c.b16 %v9332, %v9331
        %9349 = vmatpush.bf16.msra.mxu0 %v9340
        %9350 = vmatpush.bf16.msra.mxu0 %v9339
        %9351 = vmatpush.bf16.msra.mxu0 %v9338
        %9352 = vmatpush.bf16.msra.mxu0 %v9337
        %9353 = vmatpush.bf16.msra.mxu0 %v9336
        %9354 = vmatpush.bf16.msra.mxu0 %v9335
        %9355 = vmatpush.bf16.msra.mxu0 %v9334
        %9356 = vmatpush.bf16.msra.mxu0 %v9333
        %9357 = vmatmul.bf16.gmra.mxu0 %v9298
        %v9358 = vpop.f32.mrf.mxu0
        %v9359 = vadd.f32 %v9300, %v9358
        %v9360 = vpop.f32.mrf.mxu0
        %v9361 = vadd.f32 %v9300, %v9360
        %9362 = vmatmul.bf16.gmra.mxu0 %v9299
        %v9363 = vpop.f32.mrf.mxu0
        %v9364 = vadd.f32 %v9300, %v9363
        %v9365 = vpop.f32.mrf.mxu0
        %v9366 = vadd.f32 %v9300, %v9365
        %9367 = vdwg.mxu0
        %v9368 = vmul.f32 %v9289, 0.17677669
        %v9369 = vmul.f32 %v9290, 0.17677669
        %v9370 = vmul.f32 %v9291, 0.17677669
        %v9371 = vmul.f32 %v9292, 0.17677669
        %v9372 = vpack.c.bf16 %v9368, %v9368
        %v9373 = vpack.c.bf16 %v9369, %v9369
        %v9374 = vpack.c.bf16 %v9370, %v9370
        %v9375 = vpack.c.bf16 %v9371, %v9371
        %v9376 = vpack.c.bf16 %v9294, %v9294
        %v9377 = vpack.c.bf16 %v9295, %v9295
        %v9378 = vpack.c.bf16 %v9296, %v9296
        %v9379 = vpack.c.bf16 %v9297, %v9297
        %v9381 = vsel %vm1079, %v9372, 0
        %v9384 = vsel %vm1079, %v9376, 0
        %9386 = vmatpush.bf16.xpose.msra.mxu0 0
        %9387 = vmatpush.bf16.xpose.msra.mxu0 0
        %9388 = vmatpush.bf16.xpose.msra.mxu0 0
        %9389 = vmatpush.bf16.xpose.msra.mxu0 0
        %9390 = vmatpush.bf16.xpose.msra.mxu0 0
        %9391 = vmatpush.bf16.xpose.msra.mxu0 0
        %9392 = vmatpush.bf16.xpose.msra.mxu0 0
        %9393 = vmatpush.bf16.xpose.msra.mxu0 %v9384
        %9394 = vmatmul.bf16.gmra.mxu0 %v9381
        %v9395 = vpop.f32.mrf.mxu0
        %v9396 = vadd.f32 0.0, %v9395
        %v9397 = vpop.f32.mrf.mxu0
        %9398 = vdwg.mxu0
        %v9400 = vsel %vm1079, %v9373, 0
        %v9403 = vsel %vm1079, %v9377, 0
        %9405 = vmatpush.bf16.xpose.msra.mxu0 0
        %9406 = vmatpush.bf16.xpose.msra.mxu0 0
        %9407 = vmatpush.bf16.xpose.msra.mxu0 0
        %9408 = vmatpush.bf16.xpose.msra.mxu0 0
        %9409 = vmatpush.bf16.xpose.msra.mxu0 0
        %9410 = vmatpush.bf16.xpose.msra.mxu0 0
        %9411 = vmatpush.bf16.xpose.msra.mxu0 0
        %9412 = vmatpush.bf16.xpose.msra.mxu0 %v9403
        %9413 = vmatmul.bf16.gmra.mxu0 %v9400
        %v9414 = vpop.f32.mrf.mxu0
        %v9415 = vadd.f32 0.0, %v9414
        %v9416 = vpop.f32.mrf.mxu0
        %9417 = vdwg.mxu0
        %v9419 = vsel %vm1079, %v9374, 0
        %v9422 = vsel %vm1079, %v9378, 0
        %9424 = vmatpush.bf16.xpose.msra.mxu0 0
        %9425 = vmatpush.bf16.xpose.msra.mxu0 0
        %9426 = vmatpush.bf16.xpose.msra.mxu0 0
        %9427 = vmatpush.bf16.xpose.msra.mxu0 0
        %9428 = vmatpush.bf16.xpose.msra.mxu0 0
        %9429 = vmatpush.bf16.xpose.msra.mxu0 0
        %9430 = vmatpush.bf16.xpose.msra.mxu0 0
        %9431 = vmatpush.bf16.xpose.msra.mxu0 %v9422
        %9432 = vmatmul.bf16.gmra.mxu0 %v9419
        %v9433 = vpop.f32.mrf.mxu0
        %v9434 = vadd.f32 0.0, %v9433
        %v9435 = vpop.f32.mrf.mxu0
        %9436 = vdwg.mxu0
        %v9438 = vsel %vm1079, %v9375, 0
        %v9441 = vsel %vm1079, %v9379, 0
        %9443 = vmatpush.bf16.xpose.msra.mxu0 0
        %9444 = vmatpush.bf16.xpose.msra.mxu0 0
        %9445 = vmatpush.bf16.xpose.msra.mxu0 0
        %9446 = vmatpush.bf16.xpose.msra.mxu0 0
        %9447 = vmatpush.bf16.xpose.msra.mxu0 0
        %9448 = vmatpush.bf16.xpose.msra.mxu0 0
        %9449 = vmatpush.bf16.xpose.msra.mxu0 0
        %9450 = vmatpush.bf16.xpose.msra.mxu0 %v9441
        %9451 = vmatmul.bf16.gmra.mxu0 %v9438
        %v9452 = vpop.f32.mrf.mxu0
        %v9453 = vadd.f32 0.0, %v9452
        %v9454 = vpop.f32.mrf.mxu0
        %9455 = vdwg.mxu0
        %vm9456 = vcmask 64512
        %v9457 = vsel %vm9456, %v9396, -inf
        %9458 = vmax.xlane.f32.xlu0 %v9457
        %v9459 = vpop.xlane.xlu0 %9458
        %v9460 = vsel %vm9456, %v9415, -inf
        %9461 = vmax.xlane.f32.xlu0 %v9460
        %v9462 = vpop.xlane.xlu0 %9461
        %v9463 = vsel %vm9456, %v9434, -inf
        %9464 = vmax.xlane.f32.xlu0 %v9463
        %v9465 = vpop.xlane.xlu0 %9464
        %v9466 = vsel %vm9456, %v9453, -inf
        %9467 = vmax.xlane.f32.xlu0 %v9466
        %v9468 = vpop.xlane.xlu0 %9467
        %v9469 = vsub.f32 %v9396, %v9459
        %v9470 = vsub.f32 %v9415, %v9462
        %v9471 = vsub.f32 %v9434, %v9465
        %v9472 = vsub.f32 %v9453, %v9468
        %v9473 = vmul.f32 %v9469, 1.442695
        %v9474 = vpow.pop %v9473
        %v9475 = vmul.f32 %v9470, 1.442695
        %v9476 = vpow.pop %v9475
        %v9477 = vmul.f32 %v9471, 1.442695
        %v9478 = vpow.pop %v9477
        %v9479 = vmul.f32 %v9472, 1.442695
        %v9480 = vpow.pop %v9479
        %v9481 = vsel %vm9456, %v9474, 0.0
        %9482 = vadd.xlane.f32.xlu0 %v9481
        %v9483 = vpop.xlane.xlu0 %9482
        %v9484 = vsel %vm9456, %v9476, 0.0
        %9485 = vadd.xlane.f32.xlu0 %v9484
        %v9486 = vpop.xlane.xlu0 %9485
        %v9487 = vsel %vm9456, %v9478, 0.0
        %9488 = vadd.xlane.f32.xlu0 %v9487
        %v9489 = vpop.xlane.xlu0 %9488
        %v9490 = vsel %vm9456, %v9480, 0.0
        %9491 = vadd.xlane.f32.xlu0 %v9490
        %v9492 = vpop.xlane.xlu0 %9491
        %v9493 = vrcp.pop %v9483
        %v9494 = vmul.f32 %v9483, %v9493
        %v9495 = vsub.f32 1.0, %v9494
        %v9496 = vmul.f32 %v9493, %v9495
        %v9497 = vadd.f32 %v9493, %v9496
        %vm9498 = vweird.f32 %v9483
        %vm9499 = vweird.f32 %v9493
        %vm9500 = vmor %vm9498, %vm9499
        %v9501 = vsel %vm9500, %v9493, %v9497
        %v9502 = vand.u32 2147483647, %v9483
        %vm9503 = vcmp.eq.f32.partialorder %v9502, 8.507059e+37
        %v9504 = vand.u32 %v9483, 2147483648
        %v9505 = vor.u32 1.1754944e-38, %v9504
        %v9506 = vsel %vm9503, %v9505, %v9501
        %v9507 = vmul.f32 %v9474, %v9506
        %v9508 = vrcp.pop %v9486
        %v9509 = vmul.f32 %v9486, %v9508
        %v9510 = vsub.f32 1.0, %v9509
        %v9511 = vmul.f32 %v9508, %v9510
        %v9512 = vadd.f32 %v9508, %v9511
        %vm9513 = vweird.f32 %v9486
        %vm9514 = vweird.f32 %v9508
        %vm9515 = vmor %vm9513, %vm9514
        %v9516 = vsel %vm9515, %v9508, %v9512
        %v9517 = vand.u32 2147483647, %v9486
        %vm9518 = vcmp.eq.f32.partialorder %v9517, 8.507059e+37
        %v9519 = vand.u32 %v9486, 2147483648
        %v9520 = vor.u32 1.1754944e-38, %v9519
        %v9521 = vsel %vm9518, %v9520, %v9516
        %v9522 = vmul.f32 %v9476, %v9521
        %v9523 = vrcp.pop %v9489
        %v9524 = vmul.f32 %v9489, %v9523
        %v9525 = vsub.f32 1.0, %v9524
        %v9526 = vmul.f32 %v9523, %v9525
        %v9527 = vadd.f32 %v9523, %v9526
        %vm9528 = vweird.f32 %v9489
        %vm9529 = vweird.f32 %v9523
        %vm9530 = vmor %vm9528, %vm9529
        %v9531 = vsel %vm9530, %v9523, %v9527
        %v9532 = vand.u32 2147483647, %v9489
        %vm9533 = vcmp.eq.f32.partialorder %v9532, 8.507059e+37
        %v9534 = vand.u32 %v9489, 2147483648
        %v9535 = vor.u32 1.1754944e-38, %v9534
        %v9536 = vsel %vm9533, %v9535, %v9531
        %v9537 = vmul.f32 %v9478, %v9536
        %v9538 = vrcp.pop %v9492
        %v9539 = vmul.f32 %v9492, %v9538
        %v9540 = vsub.f32 1.0, %v9539
        %v9541 = vmul.f32 %v9538, %v9540
        %v9542 = vadd.f32 %v9538, %v9541
        %vm9543 = vweird.f32 %v9492
        %vm9544 = vweird.f32 %v9538
        %vm9545 = vmor %vm9543, %vm9544
        %v9546 = vsel %vm9545, %v9538, %v9542
        %v9547 = vand.u32 2147483647, %v9492
        %vm9548 = vcmp.eq.f32.partialorder %v9547, 8.507059e+37
        %v9549 = vand.u32 %v9492, 2147483648
        %v9550 = vor.u32 1.1754944e-38, %v9549
        %v9551 = vsel %vm9548, %v9550, %v9546
        %v9552 = vmul.f32 %v9480, %v9551
        %v9553 = vpack.c.bf16 %v9507, %v9507
        %v9554 = vpack.c.bf16 %v9522, %v9522
        %v9555 = vpack.c.bf16 %v9537, %v9537
        %v9556 = vpack.c.bf16 %v9552, %v9552
        %v9557 = vpack.c.bf16 %v9359, %v9359
        %v9558 = vpack.c.bf16 %v9361, %v9361
        %v9559 = vpack.c.bf16 %v9364, %v9364
        %v9560 = vpack.c.bf16 %v9366, %v9366
        %v9562 = vsel %vm9456, %v9553, 0
        %vm9564 = vcmask 1043456
        %v9566 = vsel %vm9564, %v9557, 0
        %9568 = vmatpush.bf16.msra.mxu0 0
        %9569 = vmatpush.bf16.msra.mxu0 0
        %9570 = vmatpush.bf16.msra.mxu0 0
        %9571 = vmatpush.bf16.msra.mxu0 0
        %9572 = vmatpush.bf16.msra.mxu0 0
        %9573 = vmatpush.bf16.msra.mxu0 0
        %9574 = vmatpush.bf16.msra.mxu0 0
        %9575 = vmatpush.bf16.msra.mxu0 %v9566
        %9576 = vmatmul.bf16.gmra.mxu0 %v9562
        %v9577 = vpop.f32.mrf.mxu0
        %v9578 = vadd.f32 0.0, %v9577
        %v9579 = vpop.f32.mrf.mxu0
        %9580 = vdwg.mxu0
        %v9582 = vsel %vm9456, %v9554, 0
        %v9585 = vsel %vm9564, %v9558, 0
        %9587 = vmatpush.bf16.msra.mxu0 0
        %9588 = vmatpush.bf16.msra.mxu0 0
        %9589 = vmatpush.bf16.msra.mxu0 0
        %9590 = vmatpush.bf16.msra.mxu0 0
        %9591 = vmatpush.bf16.msra.mxu0 0
        %9592 = vmatpush.bf16.msra.mxu0 0
        %9593 = vmatpush.bf16.msra.mxu0 0
        %9594 = vmatpush.bf16.msra.mxu0 %v9585
        %9595 = vmatmul.bf16.gmra.mxu0 %v9582
        %v9596 = vpop.f32.mrf.mxu0
        %v9597 = vadd.f32 0.0, %v9596
        %v9598 = vpop.f32.mrf.mxu0
        %9599 = vdwg.mxu0
        %v9601 = vsel %vm9456, %v9555, 0
        %v9604 = vsel %vm9564, %v9559, 0
        %9606 = vmatpush.bf16.msra.mxu0 0
        %9607 = vmatpush.bf16.msra.mxu0 0
        %9608 = vmatpush.bf16.msra.mxu0 0
        %9609 = vmatpush.bf16.msra.mxu0 0
        %9610 = vmatpush.bf16.msra.mxu0 0
        %9611 = vmatpush.bf16.msra.mxu0 0
        %9612 = vmatpush.bf16.msra.mxu0 0
        %9613 = vmatpush.bf16.msra.mxu0 %v9604
        %9614 = vmatmul.bf16.gmra.mxu0 %v9601
        %v9615 = vpop.f32.mrf.mxu0
        %v9616 = vadd.f32 0.0, %v9615
        %v9617 = vpop.f32.mrf.mxu0
        %9618 = vdwg.mxu0
        %v9620 = vsel %vm9456, %v9556, 0
        %v9623 = vsel %vm9564, %v9560, 0
        %9625 = vmatpush.bf16.msra.mxu0 0
        %9626 = vmatpush.bf16.msra.mxu0 0
        %9627 = vmatpush.bf16.msra.mxu0 0
        %9628 = vmatpush.bf16.msra.mxu0 0
        %9629 = vmatpush.bf16.msra.mxu0 0
        %9630 = vmatpush.bf16.msra.mxu0 0
        %9631 = vmatpush.bf16.msra.mxu0 0
        %9632 = vmatpush.bf16.msra.mxu0 %v9623
        %9633 = vmatmul.bf16.gmra.mxu0 %v9620
        %v9634 = vpop.f32.mrf.mxu0
        %v9635 = vadd.f32 0.0, %v9634
        %v9636 = vpop.f32.mrf.mxu0
        %9637 = vdwg.mxu0
        %v9639 = vunpack.c.l.b16 %v9372
        %v9640 = vpack.c.b16 %v9639, %v9639
        %9641 = vrot.lane.b32.xlu0 %v9640, 96
        %v9642 = vpop.permute.xlu0 %9641
        %v9644 = vunpack.c.l.b16 %v9376
        %v9645 = vpack.c.b16 %v9644, %v9644
        %9646 = vrot.lane.b32.xlu0 %v9645, 96
        %v9647 = vpop.permute.xlu0 %9646
        %v9649 = vsel %vm1079, %v9642, 0
        %v9652 = vsel %vm1079, %v9647, 0
        %9654 = vmatpush.bf16.xpose.msra.mxu0 0
        %9655 = vmatpush.bf16.xpose.msra.mxu0 0
        %9656 = vmatpush.bf16.xpose.msra.mxu0 0
        %9657 = vmatpush.bf16.xpose.msra.mxu0 0
        %9658 = vmatpush.bf16.xpose.msra.mxu0 0
        %9659 = vmatpush.bf16.xpose.msra.mxu0 0
        %9660 = vmatpush.bf16.xpose.msra.mxu0 0
        %9661 = vmatpush.bf16.xpose.msra.mxu0 %v9652
        %9662 = vmatmul.bf16.gmra.mxu0 %v9649
        %v9663 = vpop.f32.mrf.mxu0
        %v9664 = vadd.f32 0.0, %v9663
        %v9665 = vpop.f32.mrf.mxu0
        %9666 = vdwg.mxu0
        %v9668 = vunpack.c.l.b16 %v9373
        %v9669 = vpack.c.b16 %v9668, %v9668
        %9670 = vrot.lane.b32.xlu0 %v9669, 96
        %v9671 = vpop.permute.xlu0 %9670
        %v9673 = vunpack.c.l.b16 %v9377
        %v9674 = vpack.c.b16 %v9673, %v9673
        %9675 = vrot.lane.b32.xlu0 %v9674, 96
        %v9676 = vpop.permute.xlu0 %9675
        %v9678 = vsel %vm1079, %v9671, 0
        %v9681 = vsel %vm1079, %v9676, 0
        %9683 = vmatpush.bf16.xpose.msra.mxu0 0
        %9684 = vmatpush.bf16.xpose.msra.mxu0 0
        %9685 = vmatpush.bf16.xpose.msra.mxu0 0
        %9686 = vmatpush.bf16.xpose.msra.mxu0 0
        %9687 = vmatpush.bf16.xpose.msra.mxu0 0
        %9688 = vmatpush.bf16.xpose.msra.mxu0 0
        %9689 = vmatpush.bf16.xpose.msra.mxu0 0
        %9690 = vmatpush.bf16.xpose.msra.mxu0 %v9681
        %9691 = vmatmul.bf16.gmra.mxu0 %v9678
        %v9692 = vpop.f32.mrf.mxu0
        %v9693 = vadd.f32 0.0, %v9692
        %v9694 = vpop.f32.mrf.mxu0
        %9695 = vdwg.mxu0
        %v9697 = vunpack.c.l.b16 %v9374
        %v9698 = vpack.c.b16 %v9697, %v9697
        %9699 = vrot.lane.b32.xlu0 %v9698, 96
        %v9700 = vpop.permute.xlu0 %9699
        %v9702 = vunpack.c.l.b16 %v9378
        %v9703 = vpack.c.b16 %v9702, %v9702
        %9704 = vrot.lane.b32.xlu0 %v9703, 96
        %v9705 = vpop.permute.xlu0 %9704
        %v9707 = vsel %vm1079, %v9700, 0
        %v9710 = vsel %vm1079, %v9705, 0
        %9712 = vmatpush.bf16.xpose.msra.mxu0 0
        %9713 = vmatpush.bf16.xpose.msra.mxu0 0
        %9714 = vmatpush.bf16.xpose.msra.mxu0 0
        %9715 = vmatpush.bf16.xpose.msra.mxu0 0
        %9716 = vmatpush.bf16.xpose.msra.mxu0 0
        %9717 = vmatpush.bf16.xpose.msra.mxu0 0
        %9718 = vmatpush.bf16.xpose.msra.mxu0 0
        %9719 = vmatpush.bf16.xpose.msra.mxu0 %v9710
        %9720 = vmatmul.bf16.gmra.mxu0 %v9707
        %v9721 = vpop.f32.mrf.mxu0
        %v9722 = vadd.f32 0.0, %v9721
        %v9723 = vpop.f32.mrf.mxu0
        %9724 = vdwg.mxu0
        %v9726 = vunpack.c.l.b16 %v9375
        %v9727 = vpack.c.b16 %v9726, %v9726
        %9728 = vrot.lane.b32.xlu0 %v9727, 96
        %v9729 = vpop.permute.xlu0 %9728
        %v9731 = vunpack.c.l.b16 %v9379
        %v9732 = vpack.c.b16 %v9731, %v9731
        %9733 = vrot.lane.b32.xlu0 %v9732, 96
        %v9734 = vpop.permute.xlu0 %9733
        %v9736 = vsel %vm1079, %v9729, 0
        %v9739 = vsel %vm1079, %v9734, 0
        %9741 = vmatpush.bf16.xpose.msra.mxu0 0
        %9742 = vmatpush.bf16.xpose.msra.mxu0 0
        %9743 = vmatpush.bf16.xpose.msra.mxu0 0
        %9744 = vmatpush.bf16.xpose.msra.mxu0 0
        %9745 = vmatpush.bf16.xpose.msra.mxu0 0
        %9746 = vmatpush.bf16.xpose.msra.mxu0 0
        %9747 = vmatpush.bf16.xpose.msra.mxu0 0
        %9748 = vmatpush.bf16.xpose.msra.mxu0 %v9739
        %9749 = vmatmul.bf16.gmra.mxu0 %v9736
        %v9750 = vpop.f32.mrf.mxu0
        %v9751 = vadd.f32 0.0, %v9750
        %v9752 = vpop.f32.mrf.mxu0
        %9753 = vdwg.mxu0
        %v9754 = vsel %vm9456, %v9664, -inf
        %9755 = vmax.xlane.f32.xlu0 %v9754
        %v9756 = vpop.xlane.xlu0 %9755
        %v9757 = vsel %vm9456, %v9693, -inf
        %9758 = vmax.xlane.f32.xlu0 %v9757
        %v9759 = vpop.xlane.xlu0 %9758
        %v9760 = vsel %vm9456, %v9722, -inf
        %9761 = vmax.xlane.f32.xlu0 %v9760
        %v9762 = vpop.xlane.xlu0 %9761
        %v9763 = vsel %vm9456, %v9751, -inf
        %9764 = vmax.xlane.f32.xlu0 %v9763
        %v9765 = vpop.xlane.xlu0 %9764
        %v9766 = vsub.f32 %v9664, %v9756
        %v9767 = vsub.f32 %v9693, %v9759
        %v9768 = vsub.f32 %v9722, %v9762
        %v9769 = vsub.f32 %v9751, %v9765
        %v9770 = vmul.f32 %v9766, 1.442695
        %v9771 = vpow.pop %v9770
        %v9772 = vmul.f32 %v9767, 1.442695
        %v9773 = vpow.pop %v9772
        %v9774 = vmul.f32 %v9768, 1.442695
        %v9775 = vpow.pop %v9774
        %v9776 = vmul.f32 %v9769, 1.442695
        %v9777 = vpow.pop %v9776
        %v9778 = vsel %vm9456, %v9771, 0.0
        %9779 = vadd.xlane.f32.xlu0 %v9778
        %v9780 = vpop.xlane.xlu0 %9779
        %v9781 = vsel %vm9456, %v9773, 0.0
        %9782 = vadd.xlane.f32.xlu0 %v9781
        %v9783 = vpop.xlane.xlu0 %9782
        %v9784 = vsel %vm9456, %v9775, 0.0
        %9785 = vadd.xlane.f32.xlu0 %v9784
        %v9786 = vpop.xlane.xlu0 %9785
        %v9787 = vsel %vm9456, %v9777, 0.0
        %9788 = vadd.xlane.f32.xlu0 %v9787
        %v9789 = vpop.xlane.xlu0 %9788
        %v9790 = vrcp.pop %v9780
        %v9791 = vmul.f32 %v9780, %v9790
        %v9792 = vsub.f32 1.0, %v9791
        %v9793 = vmul.f32 %v9790, %v9792
        %v9794 = vadd.f32 %v9790, %v9793
        %vm9795 = vweird.f32 %v9780
        %vm9796 = vweird.f32 %v9790
        %vm9797 = vmor %vm9795, %vm9796
        %v9798 = vsel %vm9797, %v9790, %v9794
        %v9799 = vand.u32 2147483647, %v9780
        %vm9800 = vcmp.eq.f32.partialorder %v9799, 8.507059e+37
        %v9801 = vand.u32 %v9780, 2147483648
        %v9802 = vor.u32 1.1754944e-38, %v9801
        %v9803 = vsel %vm9800, %v9802, %v9798
        %v9804 = vmul.f32 %v9771, %v9803
        %v9805 = vrcp.pop %v9783
        %v9806 = vmul.f32 %v9783, %v9805
        %v9807 = vsub.f32 1.0, %v9806
        %v9808 = vmul.f32 %v9805, %v9807
        %v9809 = vadd.f32 %v9805, %v9808
        %vm9810 = vweird.f32 %v9783
        %vm9811 = vweird.f32 %v9805
        %vm9812 = vmor %vm9810, %vm9811
        %v9813 = vsel %vm9812, %v9805, %v9809
        %v9814 = vand.u32 2147483647, %v9783
        %vm9815 = vcmp.eq.f32.partialorder %v9814, 8.507059e+37
        %v9816 = vand.u32 %v9783, 2147483648
        %v9817 = vor.u32 1.1754944e-38, %v9816
        %v9818 = vsel %vm9815, %v9817, %v9813
        %v9819 = vmul.f32 %v9773, %v9818
        %v9820 = vrcp.pop %v9786
        %v9821 = vmul.f32 %v9786, %v9820
        %v9822 = vsub.f32 1.0, %v9821
        %v9823 = vmul.f32 %v9820, %v9822
        %v9824 = vadd.f32 %v9820, %v9823
        %vm9825 = vweird.f32 %v9786
        %vm9826 = vweird.f32 %v9820
        %vm9827 = vmor %vm9825, %vm9826
        %v9828 = vsel %vm9827, %v9820, %v9824
        %v9829 = vand.u32 2147483647, %v9786
        %vm9830 = vcmp.eq.f32.partialorder %v9829, 8.507059e+37
        %v9831 = vand.u32 %v9786, 2147483648
        %v9832 = vor.u32 1.1754944e-38, %v9831
        %v9833 = vsel %vm9830, %v9832, %v9828
        %v9834 = vmul.f32 %v9775, %v9833
        %v9835 = vrcp.pop %v9789
        %v9836 = vmul.f32 %v9789, %v9835
        %v9837 = vsub.f32 1.0, %v9836
        %v9838 = vmul.f32 %v9835, %v9837
        %v9839 = vadd.f32 %v9835, %v9838
        %vm9840 = vweird.f32 %v9789
        %vm9841 = vweird.f32 %v9835
        %vm9842 = vmor %vm9840, %vm9841
        %v9843 = vsel %vm9842, %v9835, %v9839
        %v9844 = vand.u32 2147483647, %v9789
        %vm9845 = vcmp.eq.f32.partialorder %v9844, 8.507059e+37
        %v9846 = vand.u32 %v9789, 2147483648
        %v9847 = vor.u32 1.1754944e-38, %v9846
        %v9848 = vsel %vm9845, %v9847, %v9843
        %v9849 = vmul.f32 %v9777, %v9848
        %v9850 = vpack.c.bf16 %v9804, %v9804
        %v9851 = vpack.c.bf16 %v9819, %v9819
        %v9852 = vpack.c.bf16 %v9834, %v9834
        %v9853 = vpack.c.bf16 %v9849, %v9849
        %v9855 = vunpack.c.l.b16 %v9557
        %v9856 = vpack.c.b16 %v9855, %v9855
        %9857 = vrot.lane.b32.xlu0 %v9856, 96
        %v9858 = vpop.permute.xlu0 %9857
        %v9860 = vsel %vm9456, %v9850, 0
        %v9863 = vsel %vm9564, %v9858, 0
        %9865 = vmatpush.bf16.msra.mxu0 0
        %9866 = vmatpush.bf16.msra.mxu0 0
        %9867 = vmatpush.bf16.msra.mxu0 0
        %9868 = vmatpush.bf16.msra.mxu0 0
        %9869 = vmatpush.bf16.msra.mxu0 0
        %9870 = vmatpush.bf16.msra.mxu0 0
        %9871 = vmatpush.bf16.msra.mxu0 0
        %9872 = vmatpush.bf16.msra.mxu0 %v9863
        %9873 = vmatmul.bf16.gmra.mxu0 %v9860
        %v9874 = vpop.f32.mrf.mxu0
        %v9875 = vadd.f32 0.0, %v9874
        %v9876 = vpop.f32.mrf.mxu0
        %9877 = vdwg.mxu0
        %v9879 = vunpack.c.l.b16 %v9558
        %v9880 = vpack.c.b16 %v9879, %v9879
        %9881 = vrot.lane.b32.xlu0 %v9880, 96
        %v9882 = vpop.permute.xlu0 %9881
        %v9884 = vsel %vm9456, %v9851, 0
        %v9887 = vsel %vm9564, %v9882, 0
        %9889 = vmatpush.bf16.msra.mxu0 0
        %9890 = vmatpush.bf16.msra.mxu0 0
        %9891 = vmatpush.bf16.msra.mxu0 0
        %9892 = vmatpush.bf16.msra.mxu0 0
        %9893 = vmatpush.bf16.msra.mxu0 0
        %9894 = vmatpush.bf16.msra.mxu0 0
        %9895 = vmatpush.bf16.msra.mxu0 0
        %9896 = vmatpush.bf16.msra.mxu0 %v9887
        %9897 = vmatmul.bf16.gmra.mxu0 %v9884
        %v9898 = vpop.f32.mrf.mxu0
        %v9899 = vadd.f32 0.0, %v9898
        %v9900 = vpop.f32.mrf.mxu0
        %9901 = vdwg.mxu0
        %v9903 = vunpack.c.l.b16 %v9559
        %v9904 = vpack.c.b16 %v9903, %v9903
        %9905 = vrot.lane.b32.xlu0 %v9904, 96
        %v9906 = vpop.permute.xlu0 %9905
        %v9908 = vsel %vm9456, %v9852, 0
        %v9911 = vsel %vm9564, %v9906, 0
        %9913 = vmatpush.bf16.msra.mxu0 0
        %9914 = vmatpush.bf16.msra.mxu0 0
        %9915 = vmatpush.bf16.msra.mxu0 0
        %9916 = vmatpush.bf16.msra.mxu0 0
        %9917 = vmatpush.bf16.msra.mxu0 0
        %9918 = vmatpush.bf16.msra.mxu0 0
        %9919 = vmatpush.bf16.msra.mxu0 0
        %9920 = vmatpush.bf16.msra.mxu0 %v9911
        %9921 = vmatmul.bf16.gmra.mxu0 %v9908
        %v9922 = vpop.f32.mrf.mxu0
        %v9923 = vadd.f32 0.0, %v9922
        %v9924 = vpop.f32.mrf.mxu0
        %9925 = vdwg.mxu0
        %v9927 = vunpack.c.l.b16 %v9560
        %v9928 = vpack.c.b16 %v9927, %v9927
        %9929 = vrot.lane.b32.xlu0 %v9928, 96
        %v9930 = vpop.permute.xlu0 %9929
        %v9932 = vsel %vm9456, %v9853, 0
        %v9935 = vsel %vm9564, %v9930, 0
        %9937 = vmatpush.bf16.msra.mxu0 0
        %9938 = vmatpush.bf16.msra.mxu0 0
        %9939 = vmatpush.bf16.msra.mxu0 0
        %9940 = vmatpush.bf16.msra.mxu0 0
        %9941 = vmatpush.bf16.msra.mxu0 0
        %9942 = vmatpush.bf16.msra.mxu0 0
        %9943 = vmatpush.bf16.msra.mxu0 0
        %9944 = vmatpush.bf16.msra.mxu0 %v9935
        %9945 = vmatmul.bf16.gmra.mxu0 %v9932
        %v9946 = vpop.f32.mrf.mxu0
        %v9947 = vadd.f32 0.0, %v9946
        %v9948 = vpop.f32.mrf.mxu0
        %9949 = vdwg.mxu0
        %9950 = vrot.lane.b32.xlu0 %v9640, 64
        %v9951 = vpop.permute.xlu0 %9950
        %9952 = vrot.lane.b32.xlu0 %v9645, 64
        %v9953 = vpop.permute.xlu0 %9952
        %v9955 = vsel %vm1079, %v9951, 0
        %v9958 = vsel %vm1079, %v9953, 0
        %9960 = vmatpush.bf16.xpose.msra.mxu0 0
        %9961 = vmatpush.bf16.xpose.msra.mxu0 0
        %9962 = vmatpush.bf16.xpose.msra.mxu0 0
        %9963 = vmatpush.bf16.xpose.msra.mxu0 0
        %9964 = vmatpush.bf16.xpose.msra.mxu0 0
        %9965 = vmatpush.bf16.xpose.msra.mxu0 0
        %9966 = vmatpush.bf16.xpose.msra.mxu0 0
        %9967 = vmatpush.bf16.xpose.msra.mxu0 %v9958
        %9968 = vmatmul.bf16.gmra.mxu0 %v9955
        %v9969 = vpop.f32.mrf.mxu0
        %v9970 = vadd.f32 0.0, %v9969
        %v9971 = vpop.f32.mrf.mxu0
        %9972 = vdwg.mxu0
        %9973 = vrot.lane.b32.xlu0 %v9669, 64
        %v9974 = vpop.permute.xlu0 %9973
        %9975 = vrot.lane.b32.xlu0 %v9674, 64
        %v9976 = vpop.permute.xlu0 %9975
        %v9978 = vsel %vm1079, %v9974, 0
        %v9981 = vsel %vm1079, %v9976, 0
        %9983 = vmatpush.bf16.xpose.msra.mxu0 0
        %9984 = vmatpush.bf16.xpose.msra.mxu0 0
        %9985 = vmatpush.bf16.xpose.msra.mxu0 0
        %9986 = vmatpush.bf16.xpose.msra.mxu0 0
        %9987 = vmatpush.bf16.xpose.msra.mxu0 0
        %9988 = vmatpush.bf16.xpose.msra.mxu0 0
        %9989 = vmatpush.bf16.xpose.msra.mxu0 0
        %9990 = vmatpush.bf16.xpose.msra.mxu0 %v9981
        %9991 = vmatmul.bf16.gmra.mxu0 %v9978
        %v9992 = vpop.f32.mrf.mxu0
        %v9993 = vadd.f32 0.0, %v9992
        %v9994 = vpop.f32.mrf.mxu0
        %9995 = vdwg.mxu0
        %9996 = vrot.lane.b32.xlu0 %v9698, 64
        %v9997 = vpop.permute.xlu0 %9996
        %9998 = vrot.lane.b32.xlu0 %v9703, 64
        %v9999 = vpop.permute.xlu0 %9998
        %v10001 = vsel %vm1079, %v9997, 0
        %v10004 = vsel %vm1079, %v9999, 0
        %10006 = vmatpush.bf16.xpose.msra.mxu0 0
        %10007 = vmatpush.bf16.xpose.msra.mxu0 0
        %10008 = vmatpush.bf16.xpose.msra.mxu0 0
        %10009 = vmatpush.bf16.xpose.msra.mxu0 0
        %10010 = vmatpush.bf16.xpose.msra.mxu0 0
        %10011 = vmatpush.bf16.xpose.msra.mxu0 0
        %10012 = vmatpush.bf16.xpose.msra.mxu0 0
        %10013 = vmatpush.bf16.xpose.msra.mxu0 %v10004
        %10014 = vmatmul.bf16.gmra.mxu0 %v10001
        %v10015 = vpop.f32.mrf.mxu0
        %v10016 = vadd.f32 0.0, %v10015
        %v10017 = vpop.f32.mrf.mxu0
        %10018 = vdwg.mxu0
        %10019 = vrot.lane.b32.xlu0 %v9727, 64
        %v10020 = vpop.permute.xlu0 %10019
        %10021 = vrot.lane.b32.xlu0 %v9732, 64
        %v10022 = vpop.permute.xlu0 %10021
        %v10024 = vsel %vm1079, %v10020, 0
        %v10027 = vsel %vm1079, %v10022, 0
        %10029 = vmatpush.bf16.xpose.msra.mxu0 0
        %10030 = vmatpush.bf16.xpose.msra.mxu0 0
        %10031 = vmatpush.bf16.xpose.msra.mxu0 0
        %10032 = vmatpush.bf16.xpose.msra.mxu0 0
        %10033 = vmatpush.bf16.xpose.msra.mxu0 0
        %10034 = vmatpush.bf16.xpose.msra.mxu0 0
        %10035 = vmatpush.bf16.xpose.msra.mxu0 0
        %10036 = vmatpush.bf16.xpose.msra.mxu0 %v10027
        %10037 = vmatmul.bf16.gmra.mxu0 %v10024
        %v10038 = vpop.f32.mrf.mxu0
        %v10039 = vadd.f32 0.0, %v10038
        %v10040 = vpop.f32.mrf.mxu0
        %10041 = vdwg.mxu0
        %v10042 = vsel %vm9456, %v9970, -inf
        %10043 = vmax.xlane.f32.xlu0 %v10042
        %v10044 = vpop.xlane.xlu0 %10043
        %v10045 = vsel %vm9456, %v9993, -inf
        %10046 = vmax.xlane.f32.xlu0 %v10045
        %v10047 = vpop.xlane.xlu0 %10046
        %v10048 = vsel %vm9456, %v10016, -inf
        %10049 = vmax.xlane.f32.xlu0 %v10048
        %v10050 = vpop.xlane.xlu0 %10049
        %v10051 = vsel %vm9456, %v10039, -inf
        %10052 = vmax.xlane.f32.xlu0 %v10051
        %v10053 = vpop.xlane.xlu0 %10052
        %v10054 = vsub.f32 %v9970, %v10044
        %v10055 = vsub.f32 %v9993, %v10047
        %v10056 = vsub.f32 %v10016, %v10050
        %v10057 = vsub.f32 %v10039, %v10053
        %v10058 = vmul.f32 %v10054, 1.442695
        %v10059 = vpow.pop %v10058
        %v10060 = vmul.f32 %v10055, 1.442695
        %v10061 = vpow.pop %v10060
        %v10062 = vmul.f32 %v10056, 1.442695
        %v10063 = vpow.pop %v10062
        %v10064 = vmul.f32 %v10057, 1.442695
        %v10065 = vpow.pop %v10064
        %v10066 = vsel %vm9456, %v10059, 0.0
        %10067 = vadd.xlane.f32.xlu0 %v10066
        %v10068 = vpop.xlane.xlu0 %10067
        %v10069 = vsel %vm9456, %v10061, 0.0
        %10070 = vadd.xlane.f32.xlu0 %v10069
        %v10071 = vpop.xlane.xlu0 %10070
        %v10072 = vsel %vm9456, %v10063, 0.0
        %10073 = vadd.xlane.f32.xlu0 %v10072
        %v10074 = vpop.xlane.xlu0 %10073
        %v10075 = vsel %vm9456, %v10065, 0.0
        %10076 = vadd.xlane.f32.xlu0 %v10075
        %v10077 = vpop.xlane.xlu0 %10076
        %v10078 = vrcp.pop %v10068
        %v10079 = vmul.f32 %v10068, %v10078
        %v10080 = vsub.f32 1.0, %v10079
        %v10081 = vmul.f32 %v10078, %v10080
        %v10082 = vadd.f32 %v10078, %v10081
        %vm10083 = vweird.f32 %v10068
        %vm10084 = vweird.f32 %v10078
        %vm10085 = vmor %vm10083, %vm10084
        %v10086 = vsel %vm10085, %v10078, %v10082
        %v10087 = vand.u32 2147483647, %v10068
        %vm10088 = vcmp.eq.f32.partialorder %v10087, 8.507059e+37
        %v10089 = vand.u32 %v10068, 2147483648
        %v10090 = vor.u32 1.1754944e-38, %v10089
        %v10091 = vsel %vm10088, %v10090, %v10086
        %v10092 = vmul.f32 %v10059, %v10091
        %v10093 = vrcp.pop %v10071
        %v10094 = vmul.f32 %v10071, %v10093
        %v10095 = vsub.f32 1.0, %v10094
        %v10096 = vmul.f32 %v10093, %v10095
        %v10097 = vadd.f32 %v10093, %v10096
        %vm10098 = vweird.f32 %v10071
        %vm10099 = vweird.f32 %v10093
        %vm10100 = vmor %vm10098, %vm10099
        %v10101 = vsel %vm10100, %v10093, %v10097
        %v10102 = vand.u32 2147483647, %v10071
        %vm10103 = vcmp.eq.f32.partialorder %v10102, 8.507059e+37
        %v10104 = vand.u32 %v10071, 2147483648
        %v10105 = vor.u32 1.1754944e-38, %v10104
        %v10106 = vsel %vm10103, %v10105, %v10101
        %v10107 = vmul.f32 %v10061, %v10106
        %v10108 = vrcp.pop %v10074
        %v10109 = vmul.f32 %v10074, %v10108
        %v10110 = vsub.f32 1.0, %v10109
        %v10111 = vmul.f32 %v10108, %v10110
        %v10112 = vadd.f32 %v10108, %v10111
        %vm10113 = vweird.f32 %v10074
        %vm10114 = vweird.f32 %v10108
        %vm10115 = vmor %vm10113, %vm10114
        %v10116 = vsel %vm10115, %v10108, %v10112
        %v10117 = vand.u32 2147483647, %v10074
        %vm10118 = vcmp.eq.f32.partialorder %v10117, 8.507059e+37
        %v10119 = vand.u32 %v10074, 2147483648
        %v10120 = vor.u32 1.1754944e-38, %v10119
        %v10121 = vsel %vm10118, %v10120, %v10116
        %v10122 = vmul.f32 %v10063, %v10121
        %v10123 = vrcp.pop %v10077
        %v10124 = vmul.f32 %v10077, %v10123
        %v10125 = vsub.f32 1.0, %v10124
        %v10126 = vmul.f32 %v10123, %v10125
        %v10127 = vadd.f32 %v10123, %v10126
        %vm10128 = vweird.f32 %v10077
        %vm10129 = vweird.f32 %v10123
        %vm10130 = vmor %vm10128, %vm10129
        %v10131 = vsel %vm10130, %v10123, %v10127
        %v10132 = vand.u32 2147483647, %v10077
        %vm10133 = vcmp.eq.f32.partialorder %v10132, 8.507059e+37
        %v10134 = vand.u32 %v10077, 2147483648
        %v10135 = vor.u32 1.1754944e-38, %v10134
        %v10136 = vsel %vm10133, %v10135, %v10131
        %v10137 = vmul.f32 %v10065, %v10136
        %v10138 = vpack.c.bf16 %v10092, %v10092
        %v10139 = vpack.c.bf16 %v10107, %v10107
        %v10140 = vpack.c.bf16 %v10122, %v10122
        %v10141 = vpack.c.bf16 %v10137, %v10137
        %10142 = vrot.lane.b32.xlu0 %v9856, 64
        %v10143 = vpop.permute.xlu0 %10142
        %v10145 = vsel %vm9456, %v10138, 0
        %v10148 = vsel %vm9564, %v10143, 0
        %10150 = vmatpush.bf16.msra.mxu0 0
        %10151 = vmatpush.bf16.msra.mxu0 0
        %10152 = vmatpush.bf16.msra.mxu0 0
        %10153 = vmatpush.bf16.msra.mxu0 0
        %10154 = vmatpush.bf16.msra.mxu0 0
        %10155 = vmatpush.bf16.msra.mxu0 0
        %10156 = vmatpush.bf16.msra.mxu0 0
        %10157 = vmatpush.bf16.msra.mxu0 %v10148
        %10158 = vmatmul.bf16.gmra.mxu0 %v10145
        %v10159 = vpop.f32.mrf.mxu0
        %v10160 = vadd.f32 0.0, %v10159
        %v10161 = vpop.f32.mrf.mxu0
        %10162 = vdwg.mxu0
        %10163 = vrot.lane.b32.xlu0 %v9880, 64
        %v10164 = vpop.permute.xlu0 %10163
        %v10166 = vsel %vm9456, %v10139, 0
        %v10169 = vsel %vm9564, %v10164, 0
        %10171 = vmatpush.bf16.msra.mxu0 0
        %10172 = vmatpush.bf16.msra.mxu0 0
        %10173 = vmatpush.bf16.msra.mxu0 0
        %10174 = vmatpush.bf16.msra.mxu0 0
        %10175 = vmatpush.bf16.msra.mxu0 0
        %10176 = vmatpush.bf16.msra.mxu0 0
        %10177 = vmatpush.bf16.msra.mxu0 0
        %10178 = vmatpush.bf16.msra.mxu0 %v10169
        %10179 = vmatmul.bf16.gmra.mxu0 %v10166
        %v10180 = vpop.f32.mrf.mxu0
        %v10181 = vadd.f32 0.0, %v10180
        %v10182 = vpop.f32.mrf.mxu0
        %10183 = vdwg.mxu0
        %10184 = vrot.lane.b32.xlu0 %v9904, 64
        %v10185 = vpop.permute.xlu0 %10184
        %v10187 = vsel %vm9456, %v10140, 0
        %v10190 = vsel %vm9564, %v10185, 0
        %10192 = vmatpush.bf16.msra.mxu0 0
        %10193 = vmatpush.bf16.msra.mxu0 0
        %10194 = vmatpush.bf16.msra.mxu0 0
        %10195 = vmatpush.bf16.msra.mxu0 0
        %10196 = vmatpush.bf16.msra.mxu0 0
        %10197 = vmatpush.bf16.msra.mxu0 0
        %10198 = vmatpush.bf16.msra.mxu0 0
        %10199 = vmatpush.bf16.msra.mxu0 %v10190
        %10200 = vmatmul.bf16.gmra.mxu0 %v10187
        %v10201 = vpop.f32.mrf.mxu0
        %v10202 = vadd.f32 0.0, %v10201
        %v10203 = vpop.f32.mrf.mxu0
        %10204 = vdwg.mxu0
        %10205 = vrot.lane.b32.xlu0 %v9928, 64
        %v10206 = vpop.permute.xlu0 %10205
        %v10208 = vsel %vm9456, %v10141, 0
        %v10211 = vsel %vm9564, %v10206, 0
        %10213 = vmatpush.bf16.msra.mxu0 0
        %10214 = vmatpush.bf16.msra.mxu0 0
        %10215 = vmatpush.bf16.msra.mxu0 0
        %10216 = vmatpush.bf16.msra.mxu0 0
        %10217 = vmatpush.bf16.msra.mxu0 0
        %10218 = vmatpush.bf16.msra.mxu0 0
        %10219 = vmatpush.bf16.msra.mxu0 0
        %10220 = vmatpush.bf16.msra.mxu0 %v10211
        %10221 = vmatmul.bf16.gmra.mxu0 %v10208
        %v10222 = vpop.f32.mrf.mxu0
        %v10223 = vadd.f32 0.0, %v10222
        %v10224 = vpop.f32.mrf.mxu0
        %10225 = vdwg.mxu0
        %10226 = vrot.lane.b32.xlu0 %v9640, 32
        %v10227 = vpop.permute.xlu0 %10226
        %10228 = vrot.lane.b32.xlu0 %v9645, 32
        %v10229 = vpop.permute.xlu0 %10228
        %v10231 = vsel %vm1079, %v10227, 0
        %v10234 = vsel %vm1079, %v10229, 0
        %10236 = vmatpush.bf16.xpose.msra.mxu0 0
        %10237 = vmatpush.bf16.xpose.msra.mxu0 0
        %10238 = vmatpush.bf16.xpose.msra.mxu0 0
        %10239 = vmatpush.bf16.xpose.msra.mxu0 0
        %10240 = vmatpush.bf16.xpose.msra.mxu0 0
        %10241 = vmatpush.bf16.xpose.msra.mxu0 0
        %10242 = vmatpush.bf16.xpose.msra.mxu0 0
        %10243 = vmatpush.bf16.xpose.msra.mxu0 %v10234
        %10244 = vmatmul.bf16.gmra.mxu0 %v10231
        %v10245 = vpop.f32.mrf.mxu0
        %v10246 = vadd.f32 0.0, %v10245
        %v10247 = vpop.f32.mrf.mxu0
        %10248 = vdwg.mxu0
        %10249 = vrot.lane.b32.xlu0 %v9669, 32
        %v10250 = vpop.permute.xlu0 %10249
        %10251 = vrot.lane.b32.xlu0 %v9674, 32
        %v10252 = vpop.permute.xlu0 %10251
        %v10254 = vsel %vm1079, %v10250, 0
        %v10257 = vsel %vm1079, %v10252, 0
        %10259 = vmatpush.bf16.xpose.msra.mxu0 0
        %10260 = vmatpush.bf16.xpose.msra.mxu0 0
        %10261 = vmatpush.bf16.xpose.msra.mxu0 0
        %10262 = vmatpush.bf16.xpose.msra.mxu0 0
        %10263 = vmatpush.bf16.xpose.msra.mxu0 0
        %10264 = vmatpush.bf16.xpose.msra.mxu0 0
        %10265 = vmatpush.bf16.xpose.msra.mxu0 0
        %10266 = vmatpush.bf16.xpose.msra.mxu0 %v10257
        %10267 = vmatmul.bf16.gmra.mxu0 %v10254
        %v10268 = vpop.f32.mrf.mxu0
        %v10269 = vadd.f32 0.0, %v10268
        %v10270 = vpop.f32.mrf.mxu0
        %10271 = vdwg.mxu0
        %10272 = vrot.lane.b32.xlu0 %v9698, 32
        %v10273 = vpop.permute.xlu0 %10272
        %10274 = vrot.lane.b32.xlu0 %v9703, 32
        %v10275 = vpop.permute.xlu0 %10274
        %v10277 = vsel %vm1079, %v10273, 0
        %v10280 = vsel %vm1079, %v10275, 0
        %10282 = vmatpush.bf16.xpose.msra.mxu0 0
        %10283 = vmatpush.bf16.xpose.msra.mxu0 0
        %10284 = vmatpush.bf16.xpose.msra.mxu0 0
        %10285 = vmatpush.bf16.xpose.msra.mxu0 0
        %10286 = vmatpush.bf16.xpose.msra.mxu0 0
        %10287 = vmatpush.bf16.xpose.msra.mxu0 0
        %10288 = vmatpush.bf16.xpose.msra.mxu0 0
        %10289 = vmatpush.bf16.xpose.msra.mxu0 %v10280
        %10290 = vmatmul.bf16.gmra.mxu0 %v10277
        %v10291 = vpop.f32.mrf.mxu0
        %v10292 = vadd.f32 0.0, %v10291
        %v10293 = vpop.f32.mrf.mxu0
        %10294 = vdwg.mxu0
        %10295 = vrot.lane.b32.xlu0 %v9727, 32
        %v10296 = vpop.permute.xlu0 %10295
        %10297 = vrot.lane.b32.xlu0 %v9732, 32
        %v10298 = vpop.permute.xlu0 %10297
        %v10300 = vsel %vm1079, %v10296, 0
        %v10303 = vsel %vm1079, %v10298, 0
        %10305 = vmatpush.bf16.xpose.msra.mxu0 0
        %10306 = vmatpush.bf16.xpose.msra.mxu0 0
        %10307 = vmatpush.bf16.xpose.msra.mxu0 0
        %10308 = vmatpush.bf16.xpose.msra.mxu0 0
        %10309 = vmatpush.bf16.xpose.msra.mxu0 0
        %10310 = vmatpush.bf16.xpose.msra.mxu0 0
        %10311 = vmatpush.bf16.xpose.msra.mxu0 0
        %10312 = vmatpush.bf16.xpose.msra.mxu0 %v10303
        %10313 = vmatmul.bf16.gmra.mxu0 %v10300
        %v10314 = vpop.f32.mrf.mxu0
        %v10315 = vadd.f32 0.0, %v10314
        %v10316 = vpop.f32.mrf.mxu0
        %10317 = vdwg.mxu0
        %v10318 = vsel %vm9456, %v10246, -inf
        %10319 = vmax.xlane.f32.xlu0 %v10318
        %v10320 = vpop.xlane.xlu0 %10319
        %v10321 = vsel %vm9456, %v10269, -inf
        %10322 = vmax.xlane.f32.xlu0 %v10321
        %v10323 = vpop.xlane.xlu0 %10322
        %v10324 = vsel %vm9456, %v10292, -inf
        %10325 = vmax.xlane.f32.xlu0 %v10324
        %v10326 = vpop.xlane.xlu0 %10325
        %v10327 = vsel %vm9456, %v10315, -inf
        %10328 = vmax.xlane.f32.xlu0 %v10327
        %v10329 = vpop.xlane.xlu0 %10328
        %v10330 = vsub.f32 %v10246, %v10320
        %v10331 = vsub.f32 %v10269, %v10323
        %v10332 = vsub.f32 %v10292, %v10326
        %v10333 = vsub.f32 %v10315, %v10329
        %v10334 = vmul.f32 %v10330, 1.442695
        %v10335 = vpow.pop %v10334
        %v10336 = vmul.f32 %v10331, 1.442695
        %v10337 = vpow.pop %v10336
        %v10338 = vmul.f32 %v10332, 1.442695
        %v10339 = vpow.pop %v10338
        %v10340 = vmul.f32 %v10333, 1.442695
        %v10341 = vpow.pop %v10340
        %v10342 = vsel %vm9456, %v10335, 0.0
        %10343 = vadd.xlane.f32.xlu0 %v10342
        %v10344 = vpop.xlane.xlu0 %10343
        %v10345 = vsel %vm9456, %v10337, 0.0
        %10346 = vadd.xlane.f32.xlu0 %v10345
        %v10347 = vpop.xlane.xlu0 %10346
        %v10348 = vsel %vm9456, %v10339, 0.0
        %10349 = vadd.xlane.f32.xlu0 %v10348
        %v10350 = vpop.xlane.xlu0 %10349
        %v10351 = vsel %vm9456, %v10341, 0.0
        %10352 = vadd.xlane.f32.xlu0 %v10351
        %v10353 = vpop.xlane.xlu0 %10352
        %v10354 = vrcp.pop %v10344
        %v10355 = vmul.f32 %v10344, %v10354
        %v10356 = vsub.f32 1.0, %v10355
        %v10357 = vmul.f32 %v10354, %v10356
        %v10358 = vadd.f32 %v10354, %v10357
        %vm10359 = vweird.f32 %v10344
        %vm10360 = vweird.f32 %v10354
        %vm10361 = vmor %vm10359, %vm10360
        %v10362 = vsel %vm10361, %v10354, %v10358
        %v10363 = vand.u32 2147483647, %v10344
        %vm10364 = vcmp.eq.f32.partialorder %v10363, 8.507059e+37
        %v10365 = vand.u32 %v10344, 2147483648
        %v10366 = vor.u32 1.1754944e-38, %v10365
        %v10367 = vsel %vm10364, %v10366, %v10362
        %v10368 = vmul.f32 %v10335, %v10367
        %v10369 = vrcp.pop %v10347
        %v10370 = vmul.f32 %v10347, %v10369
        %v10371 = vsub.f32 1.0, %v10370
        %v10372 = vmul.f32 %v10369, %v10371
        %v10373 = vadd.f32 %v10369, %v10372
        %vm10374 = vweird.f32 %v10347
        %vm10375 = vweird.f32 %v10369
        %vm10376 = vmor %vm10374, %vm10375
        %v10377 = vsel %vm10376, %v10369, %v10373
        %v10378 = vand.u32 2147483647, %v10347
        %vm10379 = vcmp.eq.f32.partialorder %v10378, 8.507059e+37
        %v10380 = vand.u32 %v10347, 2147483648
        %v10381 = vor.u32 1.1754944e-38, %v10380
        %v10382 = vsel %vm10379, %v10381, %v10377
        %v10383 = vmul.f32 %v10337, %v10382
        %v10384 = vrcp.pop %v10350
        %v10385 = vmul.f32 %v10350, %v10384
        %v10386 = vsub.f32 1.0, %v10385
        %v10387 = vmul.f32 %v10384, %v10386
        %v10388 = vadd.f32 %v10384, %v10387
        %vm10389 = vweird.f32 %v10350
        %vm10390 = vweird.f32 %v10384
        %vm10391 = vmor %vm10389, %vm10390
        %v10392 = vsel %vm10391, %v10384, %v10388
        %v10393 = vand.u32 2147483647, %v10350
        %vm10394 = vcmp.eq.f32.partialorder %v10393, 8.507059e+37
        %v10395 = vand.u32 %v10350, 2147483648
        %v10396 = vor.u32 1.1754944e-38, %v10395
        %v10397 = vsel %vm10394, %v10396, %v10392
        %v10398 = vmul.f32 %v10339, %v10397
        %v10399 = vrcp.pop %v10353
        %v10400 = vmul.f32 %v10353, %v10399
        %v10401 = vsub.f32 1.0, %v10400
        %v10402 = vmul.f32 %v10399, %v10401
        %v10403 = vadd.f32 %v10399, %v10402
        %vm10404 = vweird.f32 %v10353
        %vm10405 = vweird.f32 %v10399
        %vm10406 = vmor %vm10404, %vm10405
        %v10407 = vsel %vm10406, %v10399, %v10403
        %v10408 = vand.u32 2147483647, %v10353
        %vm10409 = vcmp.eq.f32.partialorder %v10408, 8.507059e+37
        %v10410 = vand.u32 %v10353, 2147483648
        %v10411 = vor.u32 1.1754944e-38, %v10410
        %v10412 = vsel %vm10409, %v10411, %v10407
        %v10413 = vmul.f32 %v10341, %v10412
        %v10414 = vpack.c.bf16 %v10368, %v10368
        %v10415 = vpack.c.bf16 %v10383, %v10383
        %v10416 = vpack.c.bf16 %v10398, %v10398
        %v10417 = vpack.c.bf16 %v10413, %v10413
        %10418 = vrot.lane.b32.xlu0 %v9856, 32
        %v10419 = vpop.permute.xlu0 %10418
        %v10421 = vsel %vm9456, %v10414, 0
        %v10424 = vsel %vm9564, %v10419, 0
        %10426 = vmatpush.bf16.msra.mxu0 0
        %10427 = vmatpush.bf16.msra.mxu0 0
        %10428 = vmatpush.bf16.msra.mxu0 0
        %10429 = vmatpush.bf16.msra.mxu0 0
        %10430 = vmatpush.bf16.msra.mxu0 0
        %10431 = vmatpush.bf16.msra.mxu0 0
        %10432 = vmatpush.bf16.msra.mxu0 0
        %10433 = vmatpush.bf16.msra.mxu0 %v10424
        %10434 = vmatmul.bf16.gmra.mxu0 %v10421
        %v10435 = vpop.f32.mrf.mxu0
        %v10436 = vadd.f32 0.0, %v10435
        %v10437 = vpop.f32.mrf.mxu0
        %10438 = vdwg.mxu0
        %10439 = vrot.lane.b32.xlu0 %v9880, 32
        %v10440 = vpop.permute.xlu0 %10439
        %v10442 = vsel %vm9456, %v10415, 0
        %v10445 = vsel %vm9564, %v10440, 0
        %10447 = vmatpush.bf16.msra.mxu0 0
        %10448 = vmatpush.bf16.msra.mxu0 0
        %10449 = vmatpush.bf16.msra.mxu0 0
        %10450 = vmatpush.bf16.msra.mxu0 0
        %10451 = vmatpush.bf16.msra.mxu0 0
        %10452 = vmatpush.bf16.msra.mxu0 0
        %10453 = vmatpush.bf16.msra.mxu0 0
        %10454 = vmatpush.bf16.msra.mxu0 %v10445
        %10455 = vmatmul.bf16.gmra.mxu0 %v10442
        %v10456 = vpop.f32.mrf.mxu0
        %v10457 = vadd.f32 0.0, %v10456
        %v10458 = vpop.f32.mrf.mxu0
        %10459 = vdwg.mxu0
        %10460 = vrot.lane.b32.xlu0 %v9904, 32
        %v10461 = vpop.permute.xlu0 %10460
        %v10463 = vsel %vm9456, %v10416, 0
        %v10466 = vsel %vm9564, %v10461, 0
        %10468 = vmatpush.bf16.msra.mxu0 0
        %10469 = vmatpush.bf16.msra.mxu0 0
        %10470 = vmatpush.bf16.msra.mxu0 0
        %10471 = vmatpush.bf16.msra.mxu0 0
        %10472 = vmatpush.bf16.msra.mxu0 0
        %10473 = vmatpush.bf16.msra.mxu0 0
        %10474 = vmatpush.bf16.msra.mxu0 0
        %10475 = vmatpush.bf16.msra.mxu0 %v10466
        %10476 = vmatmul.bf16.gmra.mxu0 %v10463
        %v10477 = vpop.f32.mrf.mxu0
        %v10478 = vadd.f32 0.0, %v10477
        %v10479 = vpop.f32.mrf.mxu0
        %10480 = vdwg.mxu0
        %10481 = vrot.lane.b32.xlu0 %v9928, 32
        %v10482 = vpop.permute.xlu0 %10481
        %v10484 = vsel %vm9456, %v10417, 0
        %v10487 = vsel %vm9564, %v10482, 0
        %10489 = vmatpush.bf16.msra.mxu0 0
        %10490 = vmatpush.bf16.msra.mxu0 0
        %10491 = vmatpush.bf16.msra.mxu0 0
        %10492 = vmatpush.bf16.msra.mxu0 0
        %10493 = vmatpush.bf16.msra.mxu0 0
        %10494 = vmatpush.bf16.msra.mxu0 0
        %10495 = vmatpush.bf16.msra.mxu0 0
        %10496 = vmatpush.bf16.msra.mxu0 %v10487
        %10497 = vmatmul.bf16.gmra.mxu0 %v10484
        %v10498 = vpop.f32.mrf.mxu0
        %v10499 = vadd.f32 0.0, %v10498
        %v10500 = vpop.f32.mrf.mxu0
        %10501 = vdwg.mxu0
        %10506 = vrot.lane.b32.xlu0 %v9875, 32
        %v10507 = vpop.permute.xlu0 %10506
        %10508 = vrot.lane.b32.xlu0 %v9899, 32
        %v10509 = vpop.permute.xlu0 %10508
        %10510 = vrot.lane.b32.xlu0 %v9923, 32
        %v10511 = vpop.permute.xlu0 %10510
        %10512 = vrot.lane.b32.xlu0 %v9947, 32
        %v10513 = vpop.permute.xlu0 %10512
        %10522 = vrot.lane.b32.xlu0 %v10160, 64
        %v10523 = vpop.permute.xlu0 %10522
        %10524 = vrot.lane.b32.xlu0 %v10181, 64
        %v10525 = vpop.permute.xlu0 %10524
        %10526 = vrot.lane.b32.xlu0 %v10202, 64
        %v10527 = vpop.permute.xlu0 %10526
        %10528 = vrot.lane.b32.xlu0 %v10223, 64
        %v10529 = vpop.permute.xlu0 %10528
        %10538 = vrot.lane.b32.xlu0 %v10436, 96
        %v10539 = vpop.permute.xlu0 %10538
        %10540 = vrot.lane.b32.xlu0 %v10457, 96
        %v10541 = vpop.permute.xlu0 %10540
        %10542 = vrot.lane.b32.xlu0 %v10478, 96
        %v10543 = vpop.permute.xlu0 %10542
        %10544 = vrot.lane.b32.xlu0 %v10499, 96
        %v10545 = vpop.permute.xlu0 %10544
        %v10550 = vsel %vm1079, %v9578, %v10507
        %v10551 = vsel %vm1079, %v9597, %v10509
        %v10552 = vsel %vm1079, %v9616, %v10511
        %v10553 = vsel %vm1079, %v9635, %v10513
        %v10554 = vsel %vm9154, %v10550, %v10523
        %v10555 = vsel %vm9154, %v10551, %v10525
        %v10556 = vsel %vm9154, %v10552, %v10527
        %v10557 = vsel %vm9154, %v10553, %v10529
        %v10558 = vsel %vm9159, %v10554, %v10539
        %v10559 = vsel %vm9159, %v10555, %v10541
        %v10560 = vsel %vm9159, %v10556, %v10543
        %v10561 = vsel %vm9159, %v10557, %v10545
        %v10562 = vpack.c.bf16 %v10559, %v10558
        %v10563 = vpack.c.bf16 %v10561, %v10560
        %v10564 = vperm.slane %v820, 5
        %v10581 = vunpack.c.l.b16 %v740
        %v10582 = vunpack.c.l.b16 %v741
        %v10583 = vunpack.c.l.b16 %v742
        %v10584 = vunpack.c.l.b16 %v743
        %v10585 = vunpack.c.l.b16 %v744
        %v10586 = vunpack.c.l.b16 %v745
        %v10587 = vunpack.c.l.b16 %v746
        %v10588 = vunpack.c.l.b16 %v747
        %v10589 = vunpack.c.l.b16 %v748
        %v10590 = vunpack.c.l.b16 %v749
        %v10591 = vunpack.c.l.b16 %v750
        %v10592 = vunpack.c.l.b16 %v751
        %v10593 = vunpack.c.l.b16 %v752
        %v10594 = vunpack.c.l.b16 %v753
        %v10595 = vunpack.c.l.b16 %v754
        %v10596 = vunpack.c.l.b16 %v755
        %v10597 = vpack.c.b16 %v10582, %v10581
        %v10598 = vpack.c.b16 %v10584, %v10583
        %v10599 = vpack.c.b16 %v10586, %v10585
        %v10600 = vpack.c.b16 %v10588, %v10587
        %v10601 = vpack.c.b16 %v10590, %v10589
        %v10602 = vpack.c.b16 %v10592, %v10591
        %v10603 = vpack.c.b16 %v10594, %v10593
        %v10604 = vpack.c.b16 %v10596, %v10595
        %10613 = vmatpush.bf16.msra.mxu0 %v10604
        %10614 = vmatpush.bf16.msra.mxu0 %v10603
        %10615 = vmatpush.bf16.msra.mxu0 %v10602
        %10616 = vmatpush.bf16.msra.mxu0 %v10601
        %10617 = vmatpush.bf16.msra.mxu0 %v10600
        %10618 = vmatpush.bf16.msra.mxu0 %v10599
        %10619 = vmatpush.bf16.msra.mxu0 %v10598
        %10620 = vmatpush.bf16.msra.mxu0 %v10597
        %10621 = vmatmul.bf16.gmra.mxu0 %v10562
        %v10622 = vpop.f32.mrf.mxu0
        %v10623 = vadd.f32 %v10564, %v10622
        %v10624 = vpop.f32.mrf.mxu0
        %v10625 = vadd.f32 %v10564, %v10624
        %10626 = vmatmul.bf16.gmra.mxu0 %v10563
        %v10627 = vpop.f32.mrf.mxu0
        %v10628 = vadd.f32 %v10564, %v10627
        %v10629 = vpop.f32.mrf.mxu0
        %v10630 = vadd.f32 %v10564, %v10629
        %10631 = vdwg.mxu0
        %v10632 = vadd.f32 %v9160, %v10623
        %v10633 = vadd.f32 %v9161, %v10625
        %v10634 = vadd.f32 %v9162, %v10628
        %v10635 = vadd.f32 %v9163, %v10630
        %10636 = vadd.xlane.f32.xlu0 %v10632
        %v10637 = vpop.xlane.xlu0 %10636
        %10638 = vadd.xlane.f32.xlu0 %v10633
        %v10639 = vpop.xlane.xlu0 %10638
        %10640 = vadd.xlane.f32.xlu0 %v10634
        %v10641 = vpop.xlane.xlu0 %10640
        %10642 = vadd.xlane.f32.xlu0 %v10635
        %v10643 = vpop.xlane.xlu0 %10642
        %v10644 = vrcp.pop 128.0
        %v10645 = vmul.f32 128.0, %v10644
        %v10646 = vsub.f32 1.0, %v10645
        %v10647 = vmul.f32 %v10644, %v10646
        %v10648 = vadd.f32 %v10644, %v10647
        %vm10649 = vweird.f32 %v10644
        %v10650 = vsel %vm10649, %v10644, %v10648
        %v10651 = vmul.f32 %v10637, %v10650
        %v10652 = vmul.f32 %v10639, %v10650
        %v10653 = vmul.f32 %v10641, %v10650
        %v10654 = vmul.f32 %v10643, %v10650
        %v10655 = vsub.f32 %v10632, %v10651
        %v10656 = vsub.f32 %v10633, %v10652
        %v10657 = vsub.f32 %v10634, %v10653
        %v10658 = vsub.f32 %v10635, %v10654
        %v10659 = vmul.f32 %v10655, %v10655
        %v10660 = vmul.f32 %v10656, %v10656
        %v10661 = vmul.f32 %v10657, %v10657
        %v10662 = vmul.f32 %v10658, %v10658
        %10663 = vadd.xlane.f32.xlu0 %v10659
        %v10664 = vpop.xlane.xlu0 %10663
        %10665 = vadd.xlane.f32.xlu0 %v10660
        %v10666 = vpop.xlane.xlu0 %10665
        %10667 = vadd.xlane.f32.xlu0 %v10661
        %v10668 = vpop.xlane.xlu0 %10667
        %10669 = vadd.xlane.f32.xlu0 %v10662
        %v10670 = vpop.xlane.xlu0 %10669
        %v10671 = vmul.f32 %v10664, %v10650
        %v10672 = vmul.f32 %v10666, %v10650
        %v10673 = vmul.f32 %v10668, %v10650
        %v10674 = vmul.f32 %v10670, %v10650
        %v10675 = vadd.f32 %v10671, 1e-05
        %v10676 = vadd.f32 %v10672, 1e-05
        %v10677 = vadd.f32 %v10673, 1e-05
        %v10678 = vadd.f32 %v10674, 1e-05
        %v10679 = vrsqrt.pop %v10675
        %v10680 = vmul.f32 %v10679, %v10675
        %v10681 = vmul.f32 %v10680, %v10679
        %v10682 = vmul.f32 0.5, %v10681
        %v10683 = vsub.f32 1.5, %v10682
        %v10684 = vmul.f32 %v10679, %v10683
        %vm10685 = vweird.f32 %v10675
        %vm10686 = vweird.f32 %v10679
        %vm10687 = vmor %vm10685, %vm10686
        %v10688 = vsel %vm10687, %v10679, %v10684
        %v10689 = vrsqrt.pop %v10676
        %v10690 = vmul.f32 %v10689, %v10676
        %v10691 = vmul.f32 %v10690, %v10689
        %v10692 = vmul.f32 0.5, %v10691
        %v10693 = vsub.f32 1.5, %v10692
        %v10694 = vmul.f32 %v10689, %v10693
        %vm10695 = vweird.f32 %v10676
        %vm10696 = vweird.f32 %v10689
        %vm10697 = vmor %vm10695, %vm10696
        %v10698 = vsel %vm10697, %v10689, %v10694
        %v10699 = vrsqrt.pop %v10677
        %v10700 = vmul.f32 %v10699, %v10677
        %v10701 = vmul.f32 %v10700, %v10699
        %v10702 = vmul.f32 0.5, %v10701
        %v10703 = vsub.f32 1.5, %v10702
        %v10704 = vmul.f32 %v10699, %v10703
        %vm10705 = vweird.f32 %v10677
        %vm10706 = vweird.f32 %v10699
        %vm10707 = vmor %vm10705, %vm10706
        %v10708 = vsel %vm10707, %v10699, %v10704
        %v10709 = vrsqrt.pop %v10678
        %v10710 = vmul.f32 %v10709, %v10678
        %v10711 = vmul.f32 %v10710, %v10709
        %v10712 = vmul.f32 0.5, %v10711
        %v10713 = vsub.f32 1.5, %v10712
        %v10714 = vmul.f32 %v10709, %v10713
        %vm10715 = vweird.f32 %v10678
        %vm10716 = vweird.f32 %v10709
        %vm10717 = vmor %vm10715, %vm10716
        %v10718 = vsel %vm10717, %v10709, %v10714
        %v10719 = vmul.f32 %v10655, %v10688
        %v10720 = vmul.f32 %v10656, %v10698
        %v10721 = vmul.f32 %v10657, %v10708
        %v10722 = vmul.f32 %v10658, %v10718
        %v10723 = vperm.slane %v820, 6
        %v10724 = vmul.f32 %v10719, %v10723
        %v10725 = vmul.f32 %v10720, %v10723
        %v10726 = vmul.f32 %v10721, %v10723
        %v10727 = vmul.f32 %v10722, %v10723
        %v10728 = vperm.slane %v820, 7
        %v10729 = vadd.f32 %v10724, %v10728
        %v10730 = vadd.f32 %v10725, %v10728
        %v10731 = vadd.f32 %v10726, %v10728
        %v10732 = vadd.f32 %v10727, %v10728
        %v10733 = vpack.c.bf16 %v10730, %v10729
        %v10734 = vpack.c.bf16 %v10732, %v10731
        %v10735 = vperm.slane %v821, 0
        %v10752 = vunpack.c.l.b16 %v756
        %v10753 = vunpack.c.l.b16 %v757
        %v10754 = vunpack.c.l.b16 %v758
        %v10755 = vunpack.c.l.b16 %v759
        %v10756 = vunpack.c.l.b16 %v760
        %v10757 = vunpack.c.l.b16 %v761
        %v10758 = vunpack.c.l.b16 %v762
        %v10759 = vunpack.c.l.b16 %v763
        %v10760 = vunpack.c.l.b16 %v764
        %v10761 = vunpack.c.l.b16 %v765
        %v10762 = vunpack.c.l.b16 %v766
        %v10763 = vunpack.c.l.b16 %v767
        %v10764 = vunpack.c.l.b16 %v768
        %v10765 = vunpack.c.l.b16 %v769
        %v10766 = vunpack.c.l.b16 %v770
        %v10767 = vunpack.c.l.b16 %v771
        %v10768 = vpack.c.b16 %v10753, %v10752
        %v10769 = vpack.c.b16 %v10755, %v10754
        %v10770 = vpack.c.b16 %v10757, %v10756
        %v10771 = vpack.c.b16 %v10759, %v10758
        %v10772 = vpack.c.b16 %v10761, %v10760
        %v10773 = vpack.c.b16 %v10763, %v10762
        %v10774 = vpack.c.b16 %v10765, %v10764
        %v10775 = vpack.c.b16 %v10767, %v10766
        %10784 = vmatpush.bf16.msra.mxu0 %v10775
        %10785 = vmatpush.bf16.msra.mxu0 %v10774
        %10786 = vmatpush.bf16.msra.mxu0 %v10773
        %10787 = vmatpush.bf16.msra.mxu0 %v10772
        %10788 = vmatpush.bf16.msra.mxu0 %v10771
        %10789 = vmatpush.bf16.msra.mxu0 %v10770
        %10790 = vmatpush.bf16.msra.mxu0 %v10769
        %10791 = vmatpush.bf16.msra.mxu0 %v10768
        %10792 = vmatmul.bf16.gmra.mxu0 %v10733
        %v10793 = vpop.f32.mrf.mxu0
        %v10794 = vadd.f32 %v10735, %v10793
        %v10795 = vpop.f32.mrf.mxu0
        %v10796 = vadd.f32 %v10735, %v10795
        %10797 = vmatmul.bf16.gmra.mxu0 %v10734
        %v10798 = vpop.f32.mrf.mxu0
        %v10799 = vadd.f32 %v10735, %v10798
        %v10800 = vpop.f32.mrf.mxu0
        %v10801 = vadd.f32 %v10735, %v10800
        %10802 = vdwg.mxu0
        %v10803 = vmax.f32 %v10794, 0.0
        %v10804 = vmax.f32 %v10796, 0.0
        %v10805 = vmax.f32 %v10799, 0.0
        %v10806 = vmax.f32 %v10801, 0.0
        %v10807 = vpack.c.bf16 %v10804, %v10803
        %v10808 = vpack.c.bf16 %v10806, %v10805
        %v10809 = vperm.slane %v821, 1
        %v10826 = vunpack.c.l.b16 %v772
        %v10827 = vunpack.c.l.b16 %v773
        %v10828 = vunpack.c.l.b16 %v774
        %v10829 = vunpack.c.l.b16 %v775
        %v10830 = vunpack.c.l.b16 %v776
        %v10831 = vunpack.c.l.b16 %v777
        %v10832 = vunpack.c.l.b16 %v778
        %v10833 = vunpack.c.l.b16 %v779
        %v10834 = vunpack.c.l.b16 %v780
        %v10835 = vunpack.c.l.b16 %v781
        %v10836 = vunpack.c.l.b16 %v782
        %v10837 = vunpack.c.l.b16 %v783
        %v10838 = vunpack.c.l.b16 %v784
        %v10839 = vunpack.c.l.b16 %v785
        %v10840 = vunpack.c.l.b16 %v786
        %v10841 = vunpack.c.l.b16 %v787
        %v10842 = vpack.c.b16 %v10827, %v10826
        %v10843 = vpack.c.b16 %v10829, %v10828
        %v10844 = vpack.c.b16 %v10831, %v10830
        %v10845 = vpack.c.b16 %v10833, %v10832
        %v10846 = vpack.c.b16 %v10835, %v10834
        %v10847 = vpack.c.b16 %v10837, %v10836
        %v10848 = vpack.c.b16 %v10839, %v10838
        %v10849 = vpack.c.b16 %v10841, %v10840
        %10858 = vmatpush.bf16.msra.mxu0 %v10849
        %10859 = vmatpush.bf16.msra.mxu0 %v10848
        %10860 = vmatpush.bf16.msra.mxu0 %v10847
        %10861 = vmatpush.bf16.msra.mxu0 %v10846
        %10862 = vmatpush.bf16.msra.mxu0 %v10845
        %10863 = vmatpush.bf16.msra.mxu0 %v10844
        %10864 = vmatpush.bf16.msra.mxu0 %v10843
        %10865 = vmatpush.bf16.msra.mxu0 %v10842
        %10866 = vmatmul.bf16.gmra.mxu0 %v10807
        %v10867 = vpop.f32.mrf.mxu0
        %v10868 = vadd.f32 %v10809, %v10867
        %v10869 = vpop.f32.mrf.mxu0
        %v10870 = vadd.f32 %v10809, %v10869
        %10871 = vmatmul.bf16.gmra.mxu0 %v10808
        %v10872 = vpop.f32.mrf.mxu0
        %v10873 = vadd.f32 %v10809, %v10872
        %v10874 = vpop.f32.mrf.mxu0
        %v10875 = vadd.f32 %v10809, %v10874
        %10876 = vdwg.mxu0
        %v10877 = vadd.f32 %v10729, %v10868
        %v10878 = vadd.f32 %v10730, %v10870
        %v10879 = vadd.f32 %v10731, %v10873
        %v10880 = vadd.f32 %v10732, %v10875
        %10881 = vadd.xlane.f32.xlu0 %v10877
        %v10882 = vpop.xlane.xlu0 %10881
        %10883 = vadd.xlane.f32.xlu0 %v10878
        %v10884 = vpop.xlane.xlu0 %10883
        %10885 = vadd.xlane.f32.xlu0 %v10879
        %v10886 = vpop.xlane.xlu0 %10885
        %10887 = vadd.xlane.f32.xlu0 %v10880
        %v10888 = vpop.xlane.xlu0 %10887
        %v10889 = vmul.f32 %v10882, %v10650
        %v10890 = vmul.f32 %v10884, %v10650
        %v10891 = vmul.f32 %v10886, %v10650
        %v10892 = vmul.f32 %v10888, %v10650
        %v10893 = vsub.f32 %v10877, %v10889
        %v10894 = vsub.f32 %v10878, %v10890
        %v10895 = vsub.f32 %v10879, %v10891
        %v10896 = vsub.f32 %v10880, %v10892
        %v10897 = vmul.f32 %v10893, %v10893
        %v10898 = vmul.f32 %v10894, %v10894
        %v10899 = vmul.f32 %v10895, %v10895
        %v10900 = vmul.f32 %v10896, %v10896
        %10901 = vadd.xlane.f32.xlu0 %v10897
        %v10902 = vpop.xlane.xlu0 %10901
        %10903 = vadd.xlane.f32.xlu0 %v10898
        %v10904 = vpop.xlane.xlu0 %10903
        %10905 = vadd.xlane.f32.xlu0 %v10899
        %v10906 = vpop.xlane.xlu0 %10905
        %10907 = vadd.xlane.f32.xlu0 %v10900
        %v10908 = vpop.xlane.xlu0 %10907
        %v10909 = vmul.f32 %v10902, %v10650
        %v10910 = vmul.f32 %v10904, %v10650
        %v10911 = vmul.f32 %v10906, %v10650
        %v10912 = vmul.f32 %v10908, %v10650
        %v10913 = vadd.f32 %v10909, 1e-05
        %v10914 = vadd.f32 %v10910, 1e-05
        %v10915 = vadd.f32 %v10911, 1e-05
        %v10916 = vadd.f32 %v10912, 1e-05
        %v10917 = vrsqrt.pop %v10913
        %v10918 = vmul.f32 %v10917, %v10913
        %v10919 = vmul.f32 %v10918, %v10917
        %v10920 = vmul.f32 0.5, %v10919
        %v10921 = vsub.f32 1.5, %v10920
        %v10922 = vmul.f32 %v10917, %v10921
        %vm10923 = vweird.f32 %v10913
        %vm10924 = vweird.f32 %v10917
        %vm10925 = vmor %vm10923, %vm10924
        %v10926 = vsel %vm10925, %v10917, %v10922
        %v10927 = vrsqrt.pop %v10914
        %v10928 = vmul.f32 %v10927, %v10914
        %v10929 = vmul.f32 %v10928, %v10927
        %v10930 = vmul.f32 0.5, %v10929
        %v10931 = vsub.f32 1.5, %v10930
        %v10932 = vmul.f32 %v10927, %v10931
        %vm10933 = vweird.f32 %v10914
        %vm10934 = vweird.f32 %v10927
        %vm10935 = vmor %vm10933, %vm10934
        %v10936 = vsel %vm10935, %v10927, %v10932
        %v10937 = vrsqrt.pop %v10915
        %v10938 = vmul.f32 %v10937, %v10915
        %v10939 = vmul.f32 %v10938, %v10937
        %v10940 = vmul.f32 0.5, %v10939
        %v10941 = vsub.f32 1.5, %v10940
        %v10942 = vmul.f32 %v10937, %v10941
        %vm10943 = vweird.f32 %v10915
        %vm10944 = vweird.f32 %v10937
        %vm10945 = vmor %vm10943, %vm10944
        %v10946 = vsel %vm10945, %v10937, %v10942
        %v10947 = vrsqrt.pop %v10916
        %v10948 = vmul.f32 %v10947, %v10916
        %v10949 = vmul.f32 %v10948, %v10947
        %v10950 = vmul.f32 0.5, %v10949
        %v10951 = vsub.f32 1.5, %v10950
        %v10952 = vmul.f32 %v10947, %v10951
        %vm10953 = vweird.f32 %v10916
        %vm10954 = vweird.f32 %v10947
        %vm10955 = vmor %vm10953, %vm10954
        %v10956 = vsel %vm10955, %v10947, %v10952
        %v10957 = vmul.f32 %v10893, %v10926
        %v10958 = vmul.f32 %v10894, %v10936
        %v10959 = vmul.f32 %v10895, %v10946
        %v10960 = vmul.f32 %v10896, %v10956
        %v10961 = vperm.slane %v821, 2
        %v10962 = vmul.f32 %v10957, %v10961
        %v10963 = vmul.f32 %v10958, %v10961
        %v10964 = vmul.f32 %v10959, %v10961
        %v10965 = vmul.f32 %v10960, %v10961
        %v10966 = vperm.slane %v821, 3
        %v10967 = vadd.f32 %v10962, %v10966
        %v10968 = vadd.f32 %v10963, %v10966
        %v10969 = vadd.f32 %v10964, %v10966
        %v10970 = vadd.f32 %v10965, %v10966
        %v10971 = vpack.c.bf16 %v10968, %v10967
        %v10972 = vpack.c.bf16 %v10970, %v10969
        %v10973 = vperm.slane %v821, 4
        %v10990 = vunpack.c.l.b16 %v788
        %v10991 = vunpack.c.l.b16 %v789
        %v10992 = vunpack.c.l.b16 %v790
        %v10993 = vunpack.c.l.b16 %v791
        %v10994 = vunpack.c.l.b16 %v792
        %v10995 = vunpack.c.l.b16 %v793
        %v10996 = vunpack.c.l.b16 %v794
        %v10997 = vunpack.c.l.b16 %v795
        %v10998 = vunpack.c.l.b16 %v796
        %v10999 = vunpack.c.l.b16 %v797
        %v11000 = vunpack.c.l.b16 %v798
        %v11001 = vunpack.c.l.b16 %v799
        %v11002 = vunpack.c.l.b16 %v800
        %v11003 = vunpack.c.l.b16 %v801
        %v11004 = vunpack.c.l.b16 %v802
        %v11005 = vunpack.c.l.b16 %v803
        %v11006 = vpack.c.b16 %v10991, %v10990
        %v11007 = vpack.c.b16 %v10993, %v10992
        %v11008 = vpack.c.b16 %v10995, %v10994
        %v11009 = vpack.c.b16 %v10997, %v10996
        %v11010 = vpack.c.b16 %v10999, %v10998
        %v11011 = vpack.c.b16 %v11001, %v11000
        %v11012 = vpack.c.b16 %v11003, %v11002
        %v11013 = vpack.c.b16 %v11005, %v11004
        %11022 = vmatpush.bf16.msra.mxu0 %v11013
        %11023 = vmatpush.bf16.msra.mxu0 %v11012
        %11024 = vmatpush.bf16.msra.mxu0 %v11011
        %11025 = vmatpush.bf16.msra.mxu0 %v11010
        %11026 = vmatpush.bf16.msra.mxu0 %v11009
        %11027 = vmatpush.bf16.msra.mxu0 %v11008
        %11028 = vmatpush.bf16.msra.mxu0 %v11007
        %11029 = vmatpush.bf16.msra.mxu0 %v11006
        %11030 = vmatmul.bf16.gmra.mxu0 %v10971
        %v11031 = vpop.f32.mrf.mxu0
        %v11032 = vadd.f32 %v10973, %v11031
        %v11033 = vpop.f32.mrf.mxu0
        %v11034 = vadd.f32 %v10973, %v11033
        %11035 = vmatmul.bf16.gmra.mxu0 %v10972
        %v11036 = vpop.f32.mrf.mxu0
        %v11037 = vadd.f32 %v10973, %v11036
        %v11038 = vpop.f32.mrf.mxu0
        %v11039 = vadd.f32 %v10973, %v11038
        %11040 = vdwg.mxu0
        %v11041 = vmax.f32 %v11032, 0.0
        %v11042 = vmax.f32 %v11034, 0.0
        %v11043 = vmax.f32 %v11037, 0.0
        %v11044 = vmax.f32 %v11039, 0.0
        %v11045 = vpack.c.bf16 %v11042, %v11041
        %v11046 = vpack.c.bf16 %v11044, %v11043
        %v11047 = vperm.slane %v821, 5
        %v11064 = vunpack.c.l.b16 %v804
        %v11065 = vunpack.c.l.b16 %v805
        %v11066 = vunpack.c.l.b16 %v806
        %v11067 = vunpack.c.l.b16 %v807
        %v11068 = vunpack.c.l.b16 %v808
        %v11069 = vunpack.c.l.b16 %v809
        %v11070 = vunpack.c.l.b16 %v810
        %v11071 = vunpack.c.l.b16 %v811
        %v11072 = vunpack.c.l.b16 %v812
        %v11073 = vunpack.c.l.b16 %v813
        %v11074 = vunpack.c.l.b16 %v814
        %v11075 = vunpack.c.l.b16 %v815
        %v11076 = vunpack.c.l.b16 %v816
        %v11077 = vunpack.c.l.b16 %v817
        %v11078 = vunpack.c.l.b16 %v818
        %v11079 = vunpack.c.l.b16 %v819
        %v11080 = vpack.c.b16 %v11065, %v11064
        %v11081 = vpack.c.b16 %v11067, %v11066
        %v11082 = vpack.c.b16 %v11069, %v11068
        %v11083 = vpack.c.b16 %v11071, %v11070
        %v11084 = vpack.c.b16 %v11073, %v11072
        %v11085 = vpack.c.b16 %v11075, %v11074
        %v11086 = vpack.c.b16 %v11077, %v11076
        %v11087 = vpack.c.b16 %v11079, %v11078
        %11096 = vmatpush.bf16.msra.mxu0 %v11087
        %11097 = vmatpush.bf16.msra.mxu0 %v11086
        %11098 = vmatpush.bf16.msra.mxu0 %v11085
        %11099 = vmatpush.bf16.msra.mxu0 %v11084
        %11100 = vmatpush.bf16.msra.mxu0 %v11083
        %11101 = vmatpush.bf16.msra.mxu0 %v11082
        %11102 = vmatpush.bf16.msra.mxu0 %v11081
        %11103 = vmatpush.bf16.msra.mxu0 %v11080
        %11104 = vmatmul.bf16.gmra.mxu0 %v11045
        %v11105 = vpop.f32.mrf.mxu0
        %v11106 = vadd.f32 %v11047, %v11105
        %v11107 = vpop.f32.mrf.mxu0
        %v11108 = vadd.f32 %v11047, %v11107
        %11109 = vmatmul.bf16.gmra.mxu0 %v11046
        %v11110 = vpop.f32.mrf.mxu0
        %v11111 = vadd.f32 %v11047, %v11110
        %v11112 = vpop.f32.mrf.mxu0
        %v11113 = vadd.f32 %v11047, %v11112
        %11114 = vdwg.mxu0
        %v11115 = vxor.u32 %v11106, 2147483648
        %v11116 = vxor.u32 %v11108, 2147483648
        %v11117 = vxor.u32 %v11111, 2147483648
        %v11118 = vxor.u32 %v11113, 2147483648
        %v11119 = vmul.f32 %v11115, 1.442695
        %v11120 = vpow.pop %v11119
        %v11121 = vmul.f32 %v11116, 1.442695
        %v11122 = vpow.pop %v11121
        %v11123 = vmul.f32 %v11117, 1.442695
        %v11124 = vpow.pop %v11123
        %v11125 = vmul.f32 %v11118, 1.442695
        %v11126 = vpow.pop %v11125
        %v11127 = vadd.f32 %v11120, 1.0
        %v11128 = vadd.f32 %v11122, 1.0
        %v11129 = vadd.f32 %v11124, 1.0
        %v11130 = vadd.f32 %v11126, 1.0
        %v11131 = vrcp.pop %v11127
        %v11132 = vmul.f32 %v11127, %v11131
        %v11133 = vsub.f32 1.0, %v11132
        %v11134 = vmul.f32 %v11131, %v11133
        %v11135 = vadd.f32 %v11131, %v11134
        %vm11136 = vweird.f32 %v11127
        %vm11137 = vweird.f32 %v11131
        %vm11138 = vmor %vm11136, %vm11137
        %v11139 = vsel %vm11138, %v11131, %v11135
        %v11140 = vand.u32 2147483647, %v11127
        %vm11141 = vcmp.eq.f32.partialorder %v11140, 8.507059e+37
        %v11142 = vand.u32 %v11127, 2147483648
        %v11143 = vor.u32 1.1754944e-38, %v11142
        %v11144 = vsel %vm11141, %v11143, %v11139
        %v11145 = vmul.f32 1.0, %v11144
        %v11146 = vrcp.pop %v11128
        %v11147 = vmul.f32 %v11128, %v11146
        %v11148 = vsub.f32 1.0, %v11147
        %v11149 = vmul.f32 %v11146, %v11148
        %v11150 = vadd.f32 %v11146, %v11149
        %vm11151 = vweird.f32 %v11128
        %vm11152 = vweird.f32 %v11146
        %vm11153 = vmor %vm11151, %vm11152
        %v11154 = vsel %vm11153, %v11146, %v11150
        %v11155 = vand.u32 2147483647, %v11128
        %vm11156 = vcmp.eq.f32.partialorder %v11155, 8.507059e+37
        %v11157 = vand.u32 %v11128, 2147483648
        %v11158 = vor.u32 1.1754944e-38, %v11157
        %v11159 = vsel %vm11156, %v11158, %v11154
        %v11160 = vmul.f32 1.0, %v11159
        %v11161 = vrcp.pop %v11129
        %v11162 = vmul.f32 %v11129, %v11161
        %v11163 = vsub.f32 1.0, %v11162
        %v11164 = vmul.f32 %v11161, %v11163
        %v11165 = vadd.f32 %v11161, %v11164
        %vm11166 = vweird.f32 %v11129
        %vm11167 = vweird.f32 %v11161
        %vm11168 = vmor %vm11166, %vm11167
        %v11169 = vsel %vm11168, %v11161, %v11165
        %v11170 = vand.u32 2147483647, %v11129
        %vm11171 = vcmp.eq.f32.partialorder %v11170, 8.507059e+37
        %v11172 = vand.u32 %v11129, 2147483648
        %v11173 = vor.u32 1.1754944e-38, %v11172
        %v11174 = vsel %vm11171, %v11173, %v11169
        %v11175 = vmul.f32 1.0, %v11174
        %v11176 = vrcp.pop %v11130
        %v11177 = vmul.f32 %v11130, %v11176
        %v11178 = vsub.f32 1.0, %v11177
        %v11179 = vmul.f32 %v11176, %v11178
        %v11180 = vadd.f32 %v11176, %v11179
        %vm11181 = vweird.f32 %v11130
        %vm11182 = vweird.f32 %v11176
        %vm11183 = vmor %vm11181, %vm11182
        %v11184 = vsel %vm11183, %v11176, %v11180
        %v11185 = vand.u32 2147483647, %v11130
        %vm11186 = vcmp.eq.f32.partialorder %v11185, 8.507059e+37
        %v11187 = vand.u32 %v11130, 2147483648
        %v11188 = vor.u32 1.1754944e-38, %v11187
        %v11189 = vsel %vm11186, %v11188, %v11184
        %v11190 = vmul.f32 1.0, %v11189
        %11192 = vset.pattern.permute.xlu0 0
        %11193 = vperm.xlu0 %11192, %v11145
        %v11194 = vpop.permute.xlu0 %11193
        %11197 = vset.pattern.permute.xlu0 0
        %11198 = vperm.xlu0 %11197, %v11160
        %v11199 = vpop.permute.xlu0 %11198
        %11202 = vset.pattern.permute.xlu0 0
        %11203 = vperm.xlu0 %11202, %v11175
        %v11204 = vpop.permute.xlu0 %11203
        %11207 = vset.pattern.permute.xlu0 0
        %11208 = vperm.xlu0 %11207, %v11190
        %v11209 = vpop.permute.xlu0 %11208
        %v11211 = vmul.f32 %v10967, %v11194
        %v11212 = vmul.f32 %v10968, %v11199
        %v11213 = vmul.f32 %v10969, %v11204
        %v11214 = vmul.f32 %v10970, %v11209
        %11215 = vset.pattern.permute.xlu0 1
        %11216 = vperm.xlu0 %11215, %v11145
        %v11217 = vpop.permute.xlu0 %11216
        %11219 = vset.pattern.permute.xlu0 1
        %11220 = vperm.xlu0 %11219, %v11160
        %v11221 = vpop.permute.xlu0 %11220
        %11223 = vset.pattern.permute.xlu0 1
        %11224 = vperm.xlu0 %11223, %v11175
        %v11225 = vpop.permute.xlu0 %11224
        %11227 = vset.pattern.permute.xlu0 1
        %11228 = vperm.xlu0 %11227, %v11190
        %v11229 = vpop.permute.xlu0 %11228
        %v11231 = vmul.f32 %v10967, %v11217
        %v11232 = vmul.f32 %v10968, %v11221
        %v11233 = vmul.f32 %v10969, %v11225
        %v11234 = vmul.f32 %v10970, %v11229
        %11235 = vst [vmem:[%s602] sm:$0xff] %v11211
        %11236 = vst [vmem:[%s602 + $0x8] sm:$0xff] %v11212
        %11237 = vst [vmem:[%s602 + $0x10] sm:$0xff] %v11213
        %11238 = vst [vmem:[%s602 + $0x18] sm:$0xff] %v11214
        %11239 = vst [vmem:[%s609] sm:$0xff] %v11231
        %11240 = vst [vmem:[%s609 + $0x8] sm:$0xff] %v11232
        %11241 = vst [vmem:[%s609 + $0x10] sm:$0xff] %v11233
        %11242 = vst [vmem:[%s609 + $0x18] sm:$0xff] %v11234
        %s11243 = sand.u32 %s365, 1
        %s11244 = scalar_lea.sflag [#allocation4], %s11243
        %s11245 = sand.u32 %s365, 1
        %s11246 = smul.addr %s11245, 32
        %s11247 = scalar_lea.vmem [#allocation11], %s11246
        %s11248 = sand.u32 %s391, 1
        %s11249 = scalar_lea.sflag [#allocation13], %s11248
        %s11250 = sand.u32 %s391, 1
        %s11251 = smul.addr %s11250, 32
        %s11252 = scalar_lea.vmem [#allocation12], %s11251
        // Predicated region
        $region101: #{tpu_custom_call.1} parent=79 // pred_check
          %p11253 = pneg %p375
        $region102: #{tpu_custom_call.1} parent=79 // pred_check_branch
          %11255 = sbr.rel (%p11253) target = $region104
        $region103: #{tpu_custom_call.1} parent=79 // pred_region
          %s11256 = smul.u32 4, %s37
          %11258 = vsyncadd %s11244, 0
          %s11259 = smul.addr %s11256, 8
          %s11260 = scalar_lea.hbm %s15, %s11259
          %s11261 = sshll.u32 %s11247, 4
          %s11262 = int_to_ptr.vmem [resolvable:$true] %s11261
          %s11263 = sshll.u32 %s11260, 4
          %s11264 = int_to_ptr.hbm [resolvable:$true] %s11263
          %11269 = dma.vmem_to_hbm [thread:$0]  %s11262, 512, %s11264, %s11244, 128, 128, 8
        $region104: #{tpu_custom_call.1} parent=79 // pred_fallthru
          _
        // Predicated region
        $region105: #{tpu_custom_call.1} parent=79 // pred_check
          %p11270 = pneg %p401
        $region106: #{tpu_custom_call.1} parent=79 // pred_check_branch
          %11272 = sbr.rel (%p11270) target = $region108
        $region107: #{tpu_custom_call.1} parent=79 // pred_region
          %s11273 = smul.u32 4, %s37
          %11275 = vsyncadd %s11249, 0
          %s11276 = smul.addr %s11273, 8
          %s11277 = scalar_lea.hbm %s16, %s11276
          %s11278 = sshll.u32 %s11252, 4
          %s11279 = int_to_ptr.vmem [resolvable:$true] %s11278
          %s11280 = sshll.u32 %s11277, 4
          %s11281 = int_to_ptr.hbm [resolvable:$true] %s11280
          %11286 = dma.vmem_to_hbm [thread:$0]  %s11279, 512, %s11281, %s11249, 128, 128, 8
        $region108: #{tpu_custom_call.1} parent=79 // pred_fallthru
          _
      $region80: #{tpu_custom_call.1} parent=5 // pred_fallthru
        _
      %p11287 = scmp.le.s32.totalorder 2, %s32
      // Predicated region
      $region109: #{tpu_custom_call.1} parent=5 // pred_check
        %p11288 = pneg %p11287
      $region110: #{tpu_custom_call.1} parent=5 // pred_check_branch
        %11290 = sbr.rel (%p11288) target = $region112
      $region111: #{tpu_custom_call.1} parent=5 // pred_region
        %s11291 = ssub.s32 %s32, 2
        // Predicated region
        $region113: #{tpu_custom_call.1} parent=111 // pred_check
          %p11292 = pneg %p381
        $region114: #{tpu_custom_call.1} parent=111 // pred_check_branch
          %11294 = sbr.rel (%p11292) target = $region116
        $region115: #{tpu_custom_call.1} parent=111 // pred_region
          %s11295 = sand.u32 %s366, 1
          %s11296 = scalar_lea.sflag [#allocation4], %s11295
          %s11297 = sand.u32 %s366, 1
          %s11298 = smul.addr %s11297, 32
          %s11299 = scalar_lea.vmem [#allocation11], %s11298
          %11301 = dma.done %s11296, 512
        $region116: #{tpu_custom_call.1} parent=111 // pred_fallthru
          _
        // Predicated region
        $region117: #{tpu_custom_call.1} parent=111 // pred_check
          %p11302 = pneg %p407
        $region118: #{tpu_custom_call.1} parent=111 // pred_check_branch
          %11304 = sbr.rel (%p11302) target = $region120
        $region119: #{tpu_custom_call.1} parent=111 // pred_region
          %s11305 = sand.u32 %s392, 1
          %s11306 = scalar_lea.sflag [#allocation13], %s11305
          %s11307 = sand.u32 %s392, 1
          %s11308 = smul.addr %s11307, 32
          %s11309 = scalar_lea.vmem [#allocation12], %s11308
          %11311 = dma.done %s11306, 512
        $region120: #{tpu_custom_call.1} parent=111 // pred_fallthru
          _
      $region112: #{tpu_custom_call.1} parent=5 // pred_fallthru
        _
    $region6: #{tpu_custom_call.1} parent=1 // loop_footer
      %s36 = sadd.s32 1, %s32
    $region7: #{tpu_custom_call.1} parent=1 // loop_footer_branch
      %31 = sbr.rel target = $region3
    $region8: #{tpu_custom_call.1} parent=1 // loop_exit
      _
    %11312 = vsyncpa [#allocation3], 1
    %s11313 = scalar_lea.sflag [#allocation3], 1
    %11314 = vsyncpa %s11313, 1
    %11315 = vsyncpa [#allocation6], 1
    %11316 = vsyncpa [#allocation9], 1
    %11317 = vsyncpa [#allocation4], 1
    %s11318 = scalar_lea.sflag [#allocation4], 1
    %11319 = vsyncpa %s11318, 1
    %11320 = vsyncpa [#allocation13], 1
    %s11321 = scalar_lea.sflag [#allocation13], 1
    %11322 = vsyncpa %s11321, 1

</llo_original>
